<compile_context>
chip_gen: v5e
topology: v5e:2x2
jax: 0.10.0
libtpu: 0.0.40
codegen_flags: <defaults>
</compile_context>

<pallas_src>
import functools

import jax
import jax.numpy as jnp
from jax.experimental import pallas as pl
from jax.experimental.pallas import tpu as pltpu

HIDDEN = [500, 400, 300, 200, 100, 50]
BN_EPS = 1e-5
LANE = 128
MXU_ROWS = 256          # full MXU height on v6e/v7x
NEG_BIG = -1e30
VMEM_LIMIT_BYTES = 48 * 1024 * 1024   # < v7x 64 MiB physical, > v5e 16 MiB scoped default


def _round_up(n, m):
    return ((n + m - 1) // m) * m


# ------------------------------- kernel --------------------------------------


def _mlp_kernel(x_ref, *refs):
    """refs = (W1, b1, ..., W7, b7, o_ref).

    W* are bf16 (in_pad, out_pad); b* f32 (1, out_pad).  The last bias holds
    NEG_BIG in its padded lanes, so no explicit logit mask is needed.
    """
    o_ref = refs[-1]
    params = refs[:-1]
    n_layers = len(params) // 2

    h = x_ref[...]  # bf16 (TILE_B, in_pad)

    # Hidden layers: Linear -> ReLU (BN affine already folded into the next layer's W/b).
    for li in range(n_layers - 1):
        w = params[2 * li][...]
        b = params[2 * li + 1][...]
        a = jnp.dot(h, w, preferred_element_type=jnp.float32) + b
        h = jnp.maximum(a, 0.0).astype(jnp.bfloat16)

    # Output layer + numerically-stable softmax.  Padded bias lanes are NEG_BIG
    # (and padded weight columns are zero), so padded logits drop out for free.
    w = params[-2][...]
    b = params[-1][...]
    logits = jnp.dot(h, w, preferred_element_type=jnp.float32) + b

    m = jnp.max(logits, axis=-1, keepdims=True)
    e = jnp.exp(logits - m)
    denom = jnp.sum(e, axis=-1, keepdims=True)
    o_ref[...] = e * pl.reciprocal(denom, approx=True)


# ------------------------------ wrapper ---------------------------------------


@functools.partial(jax.jit, static_argnames=("output_size", "tile_b"))
def _fc_forward_jit(x, flat_params, output_size, tile_b):
    batch, in_feat = x.shape
    in_pad = flat_params[0].shape[0]
    out_pad = flat_params[-1].shape[1]
    batch_pad = _round_up(max(batch, tile_b), tile_b)

    # Pad + cast x to bf16 on the host side of the kernel (halves x DMA bytes,
    # drops the per-step cast inside the kernel; matmuls already run in bf16).
    x_p = jnp.zeros((batch_pad, in_pad), jnp.bfloat16).at[:batch, :in_feat].set(
        x.astype(jnp.bfloat16))

    grid = (batch_pad // tile_b,)
    x_spec = pl.BlockSpec((tile_b, in_pad), lambda i: (i, 0))
    out_spec = pl.BlockSpec((tile_b, out_pad), lambda i: (i, 0))
    # Weights/biases: full-array blocks with a constant index_map -> stay resident
    # in VMEM across grid steps (no re-DMA).
    param_specs = [pl.BlockSpec(p.shape, lambda i: (0, 0)) for p in flat_params]

    y_pad = pl.pallas_call(
        _mlp_kernel,
        out_shape=jax.ShapeDtypeStruct((batch_pad, out_pad), jnp.float32),
        grid=grid,
        in_specs=[x_spec] + param_specs,
        out_specs=out_spec,
        compiler_params=pltpu.CompilerParams(
            dimension_semantics=("parallel",),
            vmem_limit_bytes=VMEM_LIMIT_BYTES),
    )(x_p, *flat_params)
    return y_pad[:batch, :output_size]


def fc_classifier_forward(x, flat_params, output_size, tile_b=512):
    """Chooses an effective batch tile (multiple of 256, >=2 grid steps when the
    batch allows, no gross over-padding of small batches) and runs the kernel."""
    batch = x.shape[0]
    bp = _round_up(max(batch, 1), MXU_ROWS)
    t = min(_round_up(tile_b, MXU_ROWS), bp)
    t = max(MXU_ROWS, (t // MXU_ROWS) * MXU_ROWS)
    # Prefer >= 2 grid steps so the "parallel" batch axis can shard across both
    # TensorCores on v7x.
    if bp >= 2 * MXU_ROWS and _round_up(batch, t) // t < 2:
        t = max(MXU_ROWS, ((t // 2) // MXU_ROWS) * MXU_ROWS)
    return _fc_forward_jit(x, flat_params, output_size, t)


# -------------------------- parameter construction ----------------------------


def make_linears(key, input_size, output_size):
    """Deterministic init mirroring torch.nn.Linear shapes (stored as (in, out))."""
    dims = [input_size] + HIDDEN + [output_size]
    params = []
    for li in range(len(dims) - 1):
        fan_in, fan_out = dims[li], dims[li + 1]
        key, kw, kb = jax.random.split(key, 3)
        bound = 1.0 / float(fan_in) ** 0.5
        w = jax.random.uniform(kw, (fan_in, fan_out), jnp.float32, -bound, bound)
        b = jax.random.uniform(kb, (fan_out,), jnp.float32, -bound, bound)
        params.append((w, b))
    return params


def make_bn_affine(num_features):
    # Fresh nn.BatchNorm1d (eval mode): gamma=1, beta=0, running_mean=0, running_var=1.
    gamma = jnp.ones((num_features,), jnp.float32)
    beta = jnp.zeros((num_features,), jnp.float32)
    running_mean = jnp.zeros((num_features,), jnp.float32)
    running_var = jnp.ones((num_features,), jnp.float32)
    scale = gamma / jnp.sqrt(running_var + BN_EPS)
    shift = beta - running_mean * scale
    return scale, shift


def fold_and_pad_params(linears, bn_affines, input_size, output_size):
    """Fold eval-mode BN affine into the next Linear, pad feature dims to 128,
    bf16 weights, and bake the padded-logit mask into the final bias."""
    dims = [input_size] + HIDDEN + [output_size]
    flat = []
    n = len(linears)
    for li in range(n):
        w, b = linears[li]
        if li > 0:
            scale, shift = bn_affines[li - 1]
            b = b + shift @ w          # uses the original (unscaled) w
            w = w * scale[:, None]
        in_pad = _round_up(dims[li], LANE)
        out_pad = _round_up(dims[li + 1], LANE)
        is_last = li == n - 1
        pad_val = NEG_BIG if is_last else 0.0
        w_p = jnp.zeros((in_pad, out_pad), jnp.float32).at[:w.shape[0], :w.shape[1]].set(w)
        b_p = jnp.full((1, out_pad), pad_val, jnp.float32).at[0, :b.shape[0]].set(b)
        flat.append(w_p.astype(jnp.bfloat16))   # padded rows/cols are exactly 0
        flat.append(b_p)
    return tuple(flat)


# ------------------------------ reference -------------------------------------


def reference_forward(x, flat_params, output_size):
    """Plain-JAX reference using the same folded/padded bf16 parameters."""
    batch, in_feat = x.shape
    in_pad = flat_params[0].shape[0]
    h = jnp.zeros((batch, in_pad), jnp.bfloat16).at[:, :in_feat].set(
        x.astype(jnp.bfloat16))
    n = len(flat_params) // 2
    for li in range(n - 1):
        w = flat_params[2 * li]
        b = flat_params[2 * li + 1]
        a = jnp.dot(h, w, preferred_element_type=jnp.float32) + b
        h = jnp.maximum(a, 0.0).astype(jnp.bfloat16)
    w = flat_params[-2]
    b = flat_params[-1]
    logits = jnp.dot(h, w, preferred_element_type=jnp.float32) + b
    logits = logits[:, :output_size]    # drops the NEG_BIG padded lanes
    return jax.nn.softmax(logits, axis=-1)


# --------------------------------- main ----------------------------------------


if __name__ == "__main__":
    input_size = 64      # small stand-in for MNIST's 784
    output_size = 10
    batch = 1024         # 2 grid steps of 512-row tiles (v7x: one per TensorCore)

    key = jax.random.PRNGKey(0)
    key, kx = jax.random.split(key)
    x = jax.random.normal(kx, (batch, input_size), jnp.float32)

    linears = make_linears(key, input_size, output_size)
    bn_affines = [make_bn_affine(d) for d in HIDDEN]
    flat_params = fold_and_pad_params(linears, bn_affines, input_size, output_size)

    y = fc_classifier_forward(x, flat_params, output_size)
    y = jax.block_until_ready(y)

    y_ref = reference_forward(x, flat_params, output_size)

    assert y.shape == (batch, output_size)
    assert bool(jnp.all(jnp.isfinite(y)))
    assert jnp.allclose(jnp.sum(y, axis=-1), 1.0, atol=5e-3)
    assert jnp.allclose(y, y_ref, atol=2e-3, rtol=5e-3)

    print("KERNEL_OK")
</pallas_src>

<mosaic_0001>
module attributes {stable_mosaic.version = 11 : i64} {
  func.func @_mlp_kernel(%arg0: i32, %arg1: memref<512x128xbf16, #tpu.memory_space<vmem>>, %arg2: memref<128x512xbf16, #tpu.memory_space<vmem>>, %arg3: memref<1x512xf32, #tpu.memory_space<vmem>>, %arg4: memref<512x512xbf16, #tpu.memory_space<vmem>>, %arg5: memref<1x512xf32, #tpu.memory_space<vmem>>, %arg6: memref<512x384xbf16, #tpu.memory_space<vmem>>, %arg7: memref<1x384xf32, #tpu.memory_space<vmem>>, %arg8: memref<384x256xbf16, #tpu.memory_space<vmem>>, %arg9: memref<1x256xf32, #tpu.memory_space<vmem>>, %arg10: memref<256x128xbf16, #tpu.memory_space<vmem>>, %arg11: memref<1x128xf32, #tpu.memory_space<vmem>>, %arg12: memref<128x128xbf16, #tpu.memory_space<vmem>>, %arg13: memref<1x128xf32, #tpu.memory_space<vmem>>, %arg14: memref<128x128xbf16, #tpu.memory_space<vmem>>, %arg15: memref<1x128xf32, #tpu.memory_space<vmem>>, %arg16: memref<512x128xf32, #tpu.memory_space<vmem>>) attributes {dimension_semantics = [#tpu.dimension_semantics<parallel>], iteration_bounds = array<i64: 2>, scalar_prefetch = 0 : i64, scratch_operands = 0 : i64, tpu.core_type = #tpu.core_type<tc>, window_params = [{transform_indices = @transform_0, window_bounds = array<i64: 512, 128>}, {pipeline_mode = #tpu.pipeline_mode<synchronous>, transform_indices = @transform_1, window_bounds = array<i64: 128, 512>}, {pipeline_mode = #tpu.pipeline_mode<synchronous>, transform_indices = @transform_2, window_bounds = array<i64: 1, 512>}, {pipeline_mode = #tpu.pipeline_mode<synchronous>, transform_indices = @transform_3, window_bounds = array<i64: 512, 512>}, {pipeline_mode = #tpu.pipeline_mode<synchronous>, transform_indices = @transform_4, window_bounds = array<i64: 1, 512>}, {pipeline_mode = #tpu.pipeline_mode<synchronous>, transform_indices = @transform_5, window_bounds = array<i64: 512, 384>}, {pipeline_mode = #tpu.pipeline_mode<synchronous>, transform_indices = @transform_6, window_bounds = array<i64: 1, 384>}, {pipeline_mode = #tpu.pipeline_mode<synchronous>, transform_indices = @transform_7, window_bounds = array<i64: 384, 256>}, {pipeline_mode = #tpu.pipeline_mode<synchronous>, transform_indices = @transform_8, window_bounds = array<i64: 1, 256>}, {pipeline_mode = #tpu.pipeline_mode<synchronous>, transform_indices = @transform_9, window_bounds = array<i64: 256, 128>}, {pipeline_mode = #tpu.pipeline_mode<synchronous>, transform_indices = @transform_10, window_bounds = array<i64: 1, 128>}, {pipeline_mode = #tpu.pipeline_mode<synchronous>, transform_indices = @transform_11, window_bounds = array<i64: 128, 128>}, {pipeline_mode = #tpu.pipeline_mode<synchronous>, transform_indices = @transform_12, window_bounds = array<i64: 1, 128>}, {pipeline_mode = #tpu.pipeline_mode<synchronous>, transform_indices = @transform_13, window_bounds = array<i64: 128, 128>}, {pipeline_mode = #tpu.pipeline_mode<synchronous>, transform_indices = @transform_14, window_bounds = array<i64: 1, 128>}, {transform_indices = @transform_15, window_bounds = array<i64: 512, 128>}]} {
    %c0 = arith.constant 0 : index
    %c0_0 = arith.constant 0 : index
    %0 = vector.load %arg1[%c0, %c0_0] : memref<512x128xbf16, #tpu.memory_space<vmem>>, vector<512x128xbf16>
    %c0_1 = arith.constant 0 : index
    %c0_2 = arith.constant 0 : index
    %1 = vector.load %arg2[%c0_1, %c0_2] : memref<128x512xbf16, #tpu.memory_space<vmem>>, vector<128x512xbf16>
    %c0_3 = arith.constant 0 : index
    %c0_4 = arith.constant 0 : index
    %2 = vector.load %arg3[%c0_3, %c0_4] : memref<1x512xf32, #tpu.memory_space<vmem>>, vector<1x512xf32>
    %cst = arith.constant dense<0.000000e+00> : vector<512x512xf32>
    %3 = tpu.matmul %0, %1, %cst {dimension_numbers = #tpu.dot_dimension_numbers<[1], [0], [0], [1], [0, 0, 1, 1], [], []>} : vector<512x128xbf16>, vector<128x512xbf16>, vector<512x512xf32> -> vector<512x512xf32>
    %4 = vector.broadcast %2 : vector<1x512xf32> to vector<512x512xf32>
    %5 = arith.addf %3, %4 : vector<512x512xf32>
    %cst_5 = arith.constant 0.000000e+00 : f32
    %6 = vector.broadcast %cst_5 : f32 to vector<512x512xf32>
    %7 = arith.maximumf %5, %6 : vector<512x512xf32>
    %8 = arith.truncf %7 : vector<512x512xf32> to vector<512x512xbf16>
    %c0_6 = arith.constant 0 : index
    %c0_7 = arith.constant 0 : index
    %9 = vector.load %arg4[%c0_6, %c0_7] : memref<512x512xbf16, #tpu.memory_space<vmem>>, vector<512x512xbf16>
    %c0_8 = arith.constant 0 : index
    %c0_9 = arith.constant 0 : index
    %10 = vector.load %arg5[%c0_8, %c0_9] : memref<1x512xf32, #tpu.memory_space<vmem>>, vector<1x512xf32>
    %cst_10 = arith.constant dense<0.000000e+00> : vector<512x512xf32>
    %11 = tpu.matmul %8, %9, %cst_10 {dimension_numbers = #tpu.dot_dimension_numbers<[1], [0], [0], [1], [0, 0, 1, 1], [], []>} : vector<512x512xbf16>, vector<512x512xbf16>, vector<512x512xf32> -> vector<512x512xf32>
    %12 = vector.broadcast %10 : vector<1x512xf32> to vector<512x512xf32>
    %13 = arith.addf %11, %12 : vector<512x512xf32>
    %cst_11 = arith.constant 0.000000e+00 : f32
    %14 = vector.broadcast %cst_11 : f32 to vector<512x512xf32>
    %15 = arith.maximumf %13, %14 : vector<512x512xf32>
    %16 = arith.truncf %15 : vector<512x512xf32> to vector<512x512xbf16>
    %c0_12 = arith.constant 0 : index
    %c0_13 = arith.constant 0 : index
    %17 = vector.load %arg6[%c0_12, %c0_13] : memref<512x384xbf16, #tpu.memory_space<vmem>>, vector<512x384xbf16>
    %c0_14 = arith.constant 0 : index
    %c0_15 = arith.constant 0 : index
    %18 = vector.load %arg7[%c0_14, %c0_15] : memref<1x384xf32, #tpu.memory_space<vmem>>, vector<1x384xf32>
    %cst_16 = arith.constant dense<0.000000e+00> : vector<512x384xf32>
    %19 = tpu.matmul %16, %17, %cst_16 {dimension_numbers = #tpu.dot_dimension_numbers<[1], [0], [0], [1], [0, 0, 1, 1], [], []>} : vector<512x512xbf16>, vector<512x384xbf16>, vector<512x384xf32> -> vector<512x384xf32>
    %20 = vector.broadcast %18 : vector<1x384xf32> to vector<512x384xf32>
    %21 = arith.addf %19, %20 : vector<512x384xf32>
    %cst_17 = arith.constant 0.000000e+00 : f32
    %22 = vector.broadcast %cst_17 : f32 to vector<512x384xf32>
    %23 = arith.maximumf %21, %22 : vector<512x384xf32>
    %24 = arith.truncf %23 : vector<512x384xf32> to vector<512x384xbf16>
    %c0_18 = arith.constant 0 : index
    %c0_19 = arith.constant 0 : index
    %25 = vector.load %arg8[%c0_18, %c0_19] : memref<384x256xbf16, #tpu.memory_space<vmem>>, vector<384x256xbf16>
    %c0_20 = arith.constant 0 : index
    %c0_21 = arith.constant 0 : index
    %26 = vector.load %arg9[%c0_20, %c0_21] : memref<1x256xf32, #tpu.memory_space<vmem>>, vector<1x256xf32>
    %cst_22 = arith.constant dense<0.000000e+00> : vector<512x256xf32>
    %27 = tpu.matmul %24, %25, %cst_22 {dimension_numbers = #tpu.dot_dimension_numbers<[1], [0], [0], [1], [0, 0, 1, 1], [], []>} : vector<512x384xbf16>, vector<384x256xbf16>, vector<512x256xf32> -> vector<512x256xf32>
    %28 = vector.broadcast %26 : vector<1x256xf32> to vector<512x256xf32>
    %29 = arith.addf %27, %28 : vector<512x256xf32>
    %cst_23 = arith.constant 0.000000e+00 : f32
    %30 = vector.broadcast %cst_23 : f32 to vector<512x256xf32>
    %31 = arith.maximumf %29, %30 : vector<512x256xf32>
    %32 = arith.truncf %31 : vector<512x256xf32> to vector<512x256xbf16>
    %c0_24 = arith.constant 0 : index
    %c0_25 = arith.constant 0 : index
    %33 = vector.load %arg10[%c0_24, %c0_25] : memref<256x128xbf16, #tpu.memory_space<vmem>>, vector<256x128xbf16>
    %c0_26 = arith.constant 0 : index
    %c0_27 = arith.constant 0 : index
    %34 = vector.load %arg11[%c0_26, %c0_27] : memref<1x128xf32, #tpu.memory_space<vmem>>, vector<1x128xf32>
    %cst_28 = arith.constant dense<0.000000e+00> : vector<512x128xf32>
    %35 = tpu.matmul %32, %33, %cst_28 {dimension_numbers = #tpu.dot_dimension_numbers<[1], [0], [0], [1], [0, 0, 1, 1], [], []>} : vector<512x256xbf16>, vector<256x128xbf16>, vector<512x128xf32> -> vector<512x128xf32>
    %36 = vector.broadcast %34 : vector<1x128xf32> to vector<512x128xf32>
    %37 = arith.addf %35, %36 : vector<512x128xf32>
    %cst_29 = arith.constant 0.000000e+00 : f32
    %38 = vector.broadcast %cst_29 : f32 to vector<512x128xf32>
    %39 = arith.maximumf %37, %38 : vector<512x128xf32>
    %40 = arith.truncf %39 : vector<512x128xf32> to vector<512x128xbf16>
    %c0_30 = arith.constant 0 : index
    %c0_31 = arith.constant 0 : index
    %41 = vector.load %arg12[%c0_30, %c0_31] : memref<128x128xbf16, #tpu.memory_space<vmem>>, vector<128x128xbf16>
    %c0_32 = arith.constant 0 : index
    %c0_33 = arith.constant 0 : index
    %42 = vector.load %arg13[%c0_32, %c0_33] : memref<1x128xf32, #tpu.memory_space<vmem>>, vector<1x128xf32>
    %cst_34 = arith.constant dense<0.000000e+00> : vector<512x128xf32>
    %43 = tpu.matmul %40, %41, %cst_34 {dimension_numbers = #tpu.dot_dimension_numbers<[1], [0], [0], [1], [0, 0, 1, 1], [], []>} : vector<512x128xbf16>, vector<128x128xbf16>, vector<512x128xf32> -> vector<512x128xf32>
    %44 = vector.broadcast %42 : vector<1x128xf32> to vector<512x128xf32>
    %45 = arith.addf %43, %44 : vector<512x128xf32>
    %cst_35 = arith.constant 0.000000e+00 : f32
    %46 = vector.broadcast %cst_35 : f32 to vector<512x128xf32>
    %47 = arith.maximumf %45, %46 : vector<512x128xf32>
    %48 = arith.truncf %47 : vector<512x128xf32> to vector<512x128xbf16>
    %c0_36 = arith.constant 0 : index
    %c0_37 = arith.constant 0 : index
    %49 = vector.load %arg14[%c0_36, %c0_37] : memref<128x128xbf16, #tpu.memory_space<vmem>>, vector<128x128xbf16>
    %c0_38 = arith.constant 0 : index
    %c0_39 = arith.constant 0 : index
    %50 = vector.load %arg15[%c0_38, %c0_39] : memref<1x128xf32, #tpu.memory_space<vmem>>, vector<1x128xf32>
    %cst_40 = arith.constant dense<0.000000e+00> : vector<512x128xf32>
    %51 = tpu.matmul %48, %49, %cst_40 {dimension_numbers = #tpu.dot_dimension_numbers<[1], [0], [0], [1], [0, 0, 1, 1], [], []>} : vector<512x128xbf16>, vector<128x128xbf16>, vector<512x128xf32> -> vector<512x128xf32>
    %52 = vector.broadcast %50 : vector<1x128xf32> to vector<512x128xf32>
    %53 = arith.addf %51, %52 : vector<512x128xf32>
    %cst_41 = arith.constant dense<0xFF800000> : vector<512xf32>
    %54 = vector.multi_reduction <maximumf>, %53, %cst_41 [1] : vector<512x128xf32> to vector<512xf32>
    %55 = vector.shape_cast %54 : vector<512xf32> to vector<512x1xf32>
    %56 = vector.broadcast %55 : vector<512x1xf32> to vector<512x128xf32>
    %57 = arith.subf %53, %56 : vector<512x128xf32>
    %58 = math.exp %57 : vector<512x128xf32>
    %cst_42 = arith.constant dense<0.000000e+00> : vector<512xf32>
    %59 = vector.multi_reduction <add>, %58, %cst_42 [1] : vector<512x128xf32> to vector<512xf32>
    %60 = vector.shape_cast %59 : vector<512xf32> to vector<512x1xf32>
    %61 = tpu.reciprocal %60 {approx = true} : vector<512x1xf32> -> vector<512x1xf32>
    %62 = vector.broadcast %61 : vector<512x1xf32> to vector<512x128xf32>
    %63 = arith.mulf %58, %62 : vector<512x128xf32>
    %c0_43 = arith.constant 0 : index
    %c0_44 = arith.constant 0 : index
    %64 = vector.load %arg16[%c0_43, %c0_44] : memref<512x128xf32, #tpu.memory_space<vmem>>, vector<512x128xf32>
    tpu.vector_store %arg16[%c0_43, %c0_44], %63 {strides = array<i32>} : memref<512x128xf32, #tpu.memory_space<vmem>>, vector<512x128xf32>,
    return
  }
  func.func @transform_0(%arg0: i32) -> (i32, i32) {
    %c0_i32 = arith.constant 0 : i32
    %c0_i32_0 = arith.constant 0 : i32
    return %arg0, %c0_i32 : i32, i32
  }
  func.func @transform_1(%arg0: i32) -> (i32, i32) {
    %c0_i32 = arith.constant 0 : i32
    %c0_i32_0 = arith.constant 0 : i32
    %c0_i32_1 = arith.constant 0 : i32
    return %c0_i32, %c0_i32_0 : i32, i32
  }
  func.func @transform_2(%arg0: i32) -> (i32, i32) {
    %c0_i32 = arith.constant 0 : i32
    %c0_i32_0 = arith.constant 0 : i32
    %c0_i32_1 = arith.constant 0 : i32
    return %c0_i32, %c0_i32_0 : i32, i32
  }
  func.func @transform_3(%arg0: i32) -> (i32, i32) {
    %c0_i32 = arith.constant 0 : i32
    %c0_i32_0 = arith.constant 0 : i32
    %c0_i32_1 = arith.constant 0 : i32
    return %c0_i32, %c0_i32_0 : i32, i32
  }
  func.func @transform_4(%arg0: i32) -> (i32, i32) {
    %c0_i32 = arith.constant 0 : i32
    %c0_i32_0 = arith.constant 0 : i32
    %c0_i32_1 = arith.constant 0 : i32
    return %c0_i32, %c0_i32_0 : i32, i32
  }
  func.func @transform_5(%arg0: i32) -> (i32, i32) {
    %c0_i32 = arith.constant 0 : i32
    %c0_i32_0 = arith.constant 0 : i32
    %c0_i32_1 = arith.constant 0 : i32
    return %c0_i32, %c0_i32_0 : i32, i32
  }
  func.func @transform_6(%arg0: i32) -> (i32, i32) {
    %c0_i32 = arith.constant 0 : i32
    %c0_i32_0 = arith.constant 0 : i32
    %c0_i32_1 = arith.constant 0 : i32
    return %c0_i32, %c0_i32_0 : i32, i32
  }
  func.func @transform_7(%arg0: i32) -> (i32, i32) {
    %c0_i32 = arith.constant 0 : i32
    %c0_i32_0 = arith.constant 0 : i32
    %c0_i32_1 = arith.constant 0 : i32
    return %c0_i32, %c0_i32_0 : i32, i32
  }
  func.func @transform_8(%arg0: i32) -> (i32, i32) {
    %c0_i32 = arith.constant 0 : i32
    %c0_i32_0 = arith.constant 0 : i32
    %c0_i32_1 = arith.constant 0 : i32
    return %c0_i32, %c0_i32_0 : i32, i32
  }
  func.func @transform_9(%arg0: i32) -> (i32, i32) {
    %c0_i32 = arith.constant 0 : i32
    %c0_i32_0 = arith.constant 0 : i32
    %c0_i32_1 = arith.constant 0 : i32
    return %c0_i32, %c0_i32_0 : i32, i32
  }
  func.func @transform_10(%arg0: i32) -> (i32, i32) {
    %c0_i32 = arith.constant 0 : i32
    %c0_i32_0 = arith.constant 0 : i32
    %c0_i32_1 = arith.constant 0 : i32
    return %c0_i32, %c0_i32_0 : i32, i32
  }
  func.func @transform_11(%arg0: i32) -> (i32, i32) {
    %c0_i32 = arith.constant 0 : i32
    %c0_i32_0 = arith.constant 0 : i32
    %c0_i32_1 = arith.constant 0 : i32
    return %c0_i32, %c0_i32_0 : i32, i32
  }
  func.func @transform_12(%arg0: i32) -> (i32, i32) {
    %c0_i32 = arith.constant 0 : i32
    %c0_i32_0 = arith.constant 0 : i32
    %c0_i32_1 = arith.constant 0 : i32
    return %c0_i32, %c0_i32_0 : i32, i32
  }
  func.func @transform_13(%arg0: i32) -> (i32, i32) {
    %c0_i32 = arith.constant 0 : i32
    %c0_i32_0 = arith.constant 0 : i32
    %c0_i32_1 = arith.constant 0 : i32
    return %c0_i32, %c0_i32_0 : i32, i32
  }
  func.func @transform_14(%arg0: i32) -> (i32, i32) {
    %c0_i32 = arith.constant 0 : i32
    %c0_i32_0 = arith.constant 0 : i32
    %c0_i32_1 = arith.constant 0 : i32
    return %c0_i32, %c0_i32_0 : i32, i32
  }
  func.func @transform_15(%arg0: i32) -> (i32, i32) {
    %c0_i32 = arith.constant 0 : i32
    %c0_i32_0 = arith.constant 0 : i32
    return %arg0, %c0_i32 : i32, i32
  }
}

</mosaic_0001>

<llo_original>
// kernel: _fc_forward_jit.1
$region0: #{_fc_forward_jit.1}
  #allocation0 [shape = 'u32[]', space=smem, size = 0x4, offset = 0x4, fixed_abs, tag = 'smem constant byte address 0x4 - core index']
  #allocation1 [shape = 'u32[72,128]{1,0:T(1,128)}', space=vmem, size = 0x9000, scoped, tag = 'internal scratch']
  %s0 = inlined_call_operand.vmem [shape: bf16[1024,128], index: 0, kind: input, shape index: {}]
  %s1 = inlined_call_operand.vmem [shape: bf16[128,512], index: 1, kind: input, shape index: {}]
  %s2 = inlined_call_operand.vmem [shape: f32[1,512], index: 2, kind: input, shape index: {}]
  %s3 = inlined_call_operand.vmem [shape: bf16[512,512], index: 3, kind: input, shape index: {}]
  %s4 = inlined_call_operand.vmem [shape: f32[1,512], index: 4, kind: input, shape index: {}]
  %s5 = inlined_call_operand.vmem [shape: bf16[512,384], index: 5, kind: input, shape index: {}]
  %s6 = inlined_call_operand.vmem [shape: f32[1,384], index: 6, kind: input, shape index: {}]
  %s7 = inlined_call_operand.vmem [shape: bf16[384,256], index: 7, kind: input, shape index: {}]
  %s8 = inlined_call_operand.vmem [shape: f32[1,256], index: 8, kind: input, shape index: {}]
  %s9 = inlined_call_operand.vmem [shape: bf16[256,128], index: 9, kind: input, shape index: {}]
  %s10 = inlined_call_operand.vmem [shape: f32[1,128], index: 10, kind: input, shape index: {}]
  %s11 = inlined_call_operand.vmem [shape: bf16[128,128], index: 11, kind: input, shape index: {}]
  %s12 = inlined_call_operand.vmem [shape: f32[1,128], index: 12, kind: input, shape index: {}]
  %s13 = inlined_call_operand.vmem [shape: bf16[128,128], index: 13, kind: input, shape index: {}]
  %s14 = inlined_call_operand.vmem [shape: f32[1,128], index: 14, kind: input, shape index: {}]
  %s15 = inlined_call_operand.vmem [shape: f32[1024,128], index: 15, kind: output, shape index: {}]
  %s16 = sld [smem:[#allocation0]]
  $region93: #{_fc_forward_jit.1} parent=0
    _
  %s18 = ssub.s32 1, %s16
  %s19 = scalar_select 0, %s18, %s16
  loop: start=0, step=1, limit=4
  $region2: #{_fc_forward_jit.1} parent=0 // loop_pre_header
    _
  $region3: #{_fc_forward_jit.1} parent=0 // loop_header
    %s21 = sphi 0, %s25
    %p22 = scmp.ge.s32.totalorder %s21, 4
    %s31 = sphi 0, %s33
    %s34 = sphi 0, %s31
    %s35 = sphi 0, %s34
    %s51 = sphi 0, %s35
    %s55 = sphi 0, %s55
    %s57 = sphi 0, %s55
    %s58 = sphi 0, %s57
    %s72 = sphi 0, %s58
    %s76 = sphi 0, %s76
    %s78 = sphi 0, %s76
    %s79 = sphi 0, %s78
    %s93 = sphi 0, %s79
    %s97 = sphi 0, %s97
    %s99 = sphi 0, %s97
    %s100 = sphi 0, %s99
    %s114 = sphi 0, %s100
    %s118 = sphi 0, %s118
    %s120 = sphi 0, %s118
    %s121 = sphi 0, %s120
    %s135 = sphi 0, %s121
    %s139 = sphi 0, %s139
    %s141 = sphi 0, %s139
    %s142 = sphi 0, %s141
    %s156 = sphi 0, %s142
    %s160 = sphi 0, %s160
    %s162 = sphi 0, %s160
    %s163 = sphi 0, %s162
    %s177 = sphi 0, %s163
    %s181 = sphi 0, %s181
    %s183 = sphi 0, %s181
    %s184 = sphi 0, %s183
    %s198 = sphi 0, %s184
    %s202 = sphi 0, %s202
    %s204 = sphi 0, %s202
    %s205 = sphi 0, %s204
    %s219 = sphi 0, %s205
    %s223 = sphi 0, %s223
    %s225 = sphi 0, %s223
    %s226 = sphi 0, %s225
    %s240 = sphi 0, %s226
    %s244 = sphi 0, %s244
    %s246 = sphi 0, %s244
    %s247 = sphi 0, %s246
    %s261 = sphi 0, %s247
    %s265 = sphi 0, %s265
    %s267 = sphi 0, %s265
    %s268 = sphi 0, %s267
    %s282 = sphi 0, %s268
    %s286 = sphi 0, %s286
    %s288 = sphi 0, %s286
    %s289 = sphi 0, %s288
    %s303 = sphi 0, %s289
    %s307 = sphi 0, %s307
    %s309 = sphi 0, %s307
    %s310 = sphi 0, %s309
    %s324 = sphi 0, %s310
    %s328 = sphi 0, %s328
    %s330 = sphi 0, %s328
    %s331 = sphi 0, %s330
    %s345 = sphi 0, %s331
    %s351 = sphi 0, %s353
    %s354 = sphi 0, %s351
    %s355 = sphi 0, %s354
    %s371 = sphi 0, %s355
  $region4: #{_fc_forward_jit.1} parent=0 // loop_header_branch
    %24 = sbr.rel (%p22) target = $region8
  $region5: #{_fc_forward_jit.1} parent=0 // loop_body
    %s26 = ssub.s32 %s21, 1
    %s27 = ssub.s32 %s21, 2
    %s28 = sadd.s32 %s21, 1
    %s29 = ssub.s32 %s21, %s28
    %p30 = scmp.eq.s32.totalorder %s29, 0
    %s32 = sadd.s32 %s31, 1
    %s33 = scalar_select %p30, %s31, %s32
    %p36 = pneg %p30
    %p37 = scmp.eq.s32.totalorder %s21, 1
    %p38 = por %p36, %p37
    %p39 = scmp.ne.s32.totalorder %s31, %s34
    %p40 = scmp.eq.s32.totalorder %s21, 0
    %p41 = por %p39, %p40
    %p42 = scmp.ne.s32.totalorder %s31, %s34
    %p43 = scmp.eq.s32.totalorder %s26, 1
    %p44 = por %p42, %p43
    %p45 = scmp.ne.s32.totalorder %s34, %s35
    %p46 = scmp.eq.s32.totalorder %s26, 0
    %p47 = por %p45, %p46
    %p48 = scmp.ne.s32.totalorder %s34, %s35
    %p49 = scmp.eq.s32.totalorder %s27, 1
    %p50 = por %p48, %p49
    %p52 = scmp.ne.s32.totalorder %s35, %s51
    %p53 = scmp.eq.s32.totalorder %s27, 0
    %p54 = por %p52, %p53
    %s56 = sadd.s32 %s55, 1
    %p59 = scmp.eq.s32.totalorder %s21, 1
    %p60 = scmp.ne.s32.totalorder %s55, %s57
    %p61 = scmp.eq.s32.totalorder %s21, 0
    %p62 = por %p60, %p61
    %p63 = scmp.ne.s32.totalorder %s55, %s57
    %p64 = scmp.eq.s32.totalorder %s26, 1
    %p65 = por %p63, %p64
    %p66 = scmp.ne.s32.totalorder %s57, %s58
    %p67 = scmp.eq.s32.totalorder %s26, 0
    %p68 = por %p66, %p67
    %p69 = scmp.ne.s32.totalorder %s57, %s58
    %p70 = scmp.eq.s32.totalorder %s27, 1
    %p71 = por %p69, %p70
    %p73 = scmp.ne.s32.totalorder %s58, %s72
    %p74 = scmp.eq.s32.totalorder %s27, 0
    %p75 = por %p73, %p74
    %s77 = sadd.s32 %s76, 1
    %p80 = scmp.eq.s32.totalorder %s21, 1
    %p81 = scmp.ne.s32.totalorder %s76, %s78
    %p82 = scmp.eq.s32.totalorder %s21, 0
    %p83 = por %p81, %p82
    %p84 = scmp.ne.s32.totalorder %s76, %s78
    %p85 = scmp.eq.s32.totalorder %s26, 1
    %p86 = por %p84, %p85
    %p87 = scmp.ne.s32.totalorder %s78, %s79
    %p88 = scmp.eq.s32.totalorder %s26, 0
    %p89 = por %p87, %p88
    %p90 = scmp.ne.s32.totalorder %s78, %s79
    %p91 = scmp.eq.s32.totalorder %s27, 1
    %p92 = por %p90, %p91
    %p94 = scmp.ne.s32.totalorder %s79, %s93
    %p95 = scmp.eq.s32.totalorder %s27, 0
    %p96 = por %p94, %p95
    %s98 = sadd.s32 %s97, 1
    %p101 = scmp.eq.s32.totalorder %s21, 1
    %p102 = scmp.ne.s32.totalorder %s97, %s99
    %p103 = scmp.eq.s32.totalorder %s21, 0
    %p104 = por %p102, %p103
    %p105 = scmp.ne.s32.totalorder %s97, %s99
    %p106 = scmp.eq.s32.totalorder %s26, 1
    %p107 = por %p105, %p106
    %p108 = scmp.ne.s32.totalorder %s99, %s100
    %p109 = scmp.eq.s32.totalorder %s26, 0
    %p110 = por %p108, %p109
    %p111 = scmp.ne.s32.totalorder %s99, %s100
    %p112 = scmp.eq.s32.totalorder %s27, 1
    %p113 = por %p111, %p112
    %p115 = scmp.ne.s32.totalorder %s100, %s114
    %p116 = scmp.eq.s32.totalorder %s27, 0
    %p117 = por %p115, %p116
    %s119 = sadd.s32 %s118, 1
    %p122 = scmp.eq.s32.totalorder %s21, 1
    %p123 = scmp.ne.s32.totalorder %s118, %s120
    %p124 = scmp.eq.s32.totalorder %s21, 0
    %p125 = por %p123, %p124
    %p126 = scmp.ne.s32.totalorder %s118, %s120
    %p127 = scmp.eq.s32.totalorder %s26, 1
    %p128 = por %p126, %p127
    %p129 = scmp.ne.s32.totalorder %s120, %s121
    %p130 = scmp.eq.s32.totalorder %s26, 0
    %p131 = por %p129, %p130
    %p132 = scmp.ne.s32.totalorder %s120, %s121
    %p133 = scmp.eq.s32.totalorder %s27, 1
    %p134 = por %p132, %p133
    %p136 = scmp.ne.s32.totalorder %s121, %s135
    %p137 = scmp.eq.s32.totalorder %s27, 0
    %p138 = por %p136, %p137
    %s140 = sadd.s32 %s139, 1
    %p143 = scmp.eq.s32.totalorder %s21, 1
    %p144 = scmp.ne.s32.totalorder %s139, %s141
    %p145 = scmp.eq.s32.totalorder %s21, 0
    %p146 = por %p144, %p145
    %p147 = scmp.ne.s32.totalorder %s139, %s141
    %p148 = scmp.eq.s32.totalorder %s26, 1
    %p149 = por %p147, %p148
    %p150 = scmp.ne.s32.totalorder %s141, %s142
    %p151 = scmp.eq.s32.totalorder %s26, 0
    %p152 = por %p150, %p151
    %p153 = scmp.ne.s32.totalorder %s141, %s142
    %p154 = scmp.eq.s32.totalorder %s27, 1
    %p155 = por %p153, %p154
    %p157 = scmp.ne.s32.totalorder %s142, %s156
    %p158 = scmp.eq.s32.totalorder %s27, 0
    %p159 = por %p157, %p158
    %s161 = sadd.s32 %s160, 1
    %p164 = scmp.eq.s32.totalorder %s21, 1
    %p165 = scmp.ne.s32.totalorder %s160, %s162
    %p166 = scmp.eq.s32.totalorder %s21, 0
    %p167 = por %p165, %p166
    %p168 = scmp.ne.s32.totalorder %s160, %s162
    %p169 = scmp.eq.s32.totalorder %s26, 1
    %p170 = por %p168, %p169
    %p171 = scmp.ne.s32.totalorder %s162, %s163
    %p172 = scmp.eq.s32.totalorder %s26, 0
    %p173 = por %p171, %p172
    %p174 = scmp.ne.s32.totalorder %s162, %s163
    %p175 = scmp.eq.s32.totalorder %s27, 1
    %p176 = por %p174, %p175
    %p178 = scmp.ne.s32.totalorder %s163, %s177
    %p179 = scmp.eq.s32.totalorder %s27, 0
    %p180 = por %p178, %p179
    %s182 = sadd.s32 %s181, 1
    %p185 = scmp.eq.s32.totalorder %s21, 1
    %p186 = scmp.ne.s32.totalorder %s181, %s183
    %p187 = scmp.eq.s32.totalorder %s21, 0
    %p188 = por %p186, %p187
    %p189 = scmp.ne.s32.totalorder %s181, %s183
    %p190 = scmp.eq.s32.totalorder %s26, 1
    %p191 = por %p189, %p190
    %p192 = scmp.ne.s32.totalorder %s183, %s184
    %p193 = scmp.eq.s32.totalorder %s26, 0
    %p194 = por %p192, %p193
    %p195 = scmp.ne.s32.totalorder %s183, %s184
    %p196 = scmp.eq.s32.totalorder %s27, 1
    %p197 = por %p195, %p196
    %p199 = scmp.ne.s32.totalorder %s184, %s198
    %p200 = scmp.eq.s32.totalorder %s27, 0
    %p201 = por %p199, %p200
    %s203 = sadd.s32 %s202, 1
    %p206 = scmp.eq.s32.totalorder %s21, 1
    %p207 = scmp.ne.s32.totalorder %s202, %s204
    %p208 = scmp.eq.s32.totalorder %s21, 0
    %p209 = por %p207, %p208
    %p210 = scmp.ne.s32.totalorder %s202, %s204
    %p211 = scmp.eq.s32.totalorder %s26, 1
    %p212 = por %p210, %p211
    %p213 = scmp.ne.s32.totalorder %s204, %s205
    %p214 = scmp.eq.s32.totalorder %s26, 0
    %p215 = por %p213, %p214
    %p216 = scmp.ne.s32.totalorder %s204, %s205
    %p217 = scmp.eq.s32.totalorder %s27, 1
    %p218 = por %p216, %p217
    %p220 = scmp.ne.s32.totalorder %s205, %s219
    %p221 = scmp.eq.s32.totalorder %s27, 0
    %p222 = por %p220, %p221
    %s224 = sadd.s32 %s223, 1
    %p227 = scmp.eq.s32.totalorder %s21, 1
    %p228 = scmp.ne.s32.totalorder %s223, %s225
    %p229 = scmp.eq.s32.totalorder %s21, 0
    %p230 = por %p228, %p229
    %p231 = scmp.ne.s32.totalorder %s223, %s225
    %p232 = scmp.eq.s32.totalorder %s26, 1
    %p233 = por %p231, %p232
    %p234 = scmp.ne.s32.totalorder %s225, %s226
    %p235 = scmp.eq.s32.totalorder %s26, 0
    %p236 = por %p234, %p235
    %p237 = scmp.ne.s32.totalorder %s225, %s226
    %p238 = scmp.eq.s32.totalorder %s27, 1
    %p239 = por %p237, %p238
    %p241 = scmp.ne.s32.totalorder %s226, %s240
    %p242 = scmp.eq.s32.totalorder %s27, 0
    %p243 = por %p241, %p242
    %s245 = sadd.s32 %s244, 1
    %p248 = scmp.eq.s32.totalorder %s21, 1
    %p249 = scmp.ne.s32.totalorder %s244, %s246
    %p250 = scmp.eq.s32.totalorder %s21, 0
    %p251 = por %p249, %p250
    %p252 = scmp.ne.s32.totalorder %s244, %s246
    %p253 = scmp.eq.s32.totalorder %s26, 1
    %p254 = por %p252, %p253
    %p255 = scmp.ne.s32.totalorder %s246, %s247
    %p256 = scmp.eq.s32.totalorder %s26, 0
    %p257 = por %p255, %p256
    %p258 = scmp.ne.s32.totalorder %s246, %s247
    %p259 = scmp.eq.s32.totalorder %s27, 1
    %p260 = por %p258, %p259
    %p262 = scmp.ne.s32.totalorder %s247, %s261
    %p263 = scmp.eq.s32.totalorder %s27, 0
    %p264 = por %p262, %p263
    %s266 = sadd.s32 %s265, 1
    %p269 = scmp.eq.s32.totalorder %s21, 1
    %p270 = scmp.ne.s32.totalorder %s265, %s267
    %p271 = scmp.eq.s32.totalorder %s21, 0
    %p272 = por %p270, %p271
    %p273 = scmp.ne.s32.totalorder %s265, %s267
    %p274 = scmp.eq.s32.totalorder %s26, 1
    %p275 = por %p273, %p274
    %p276 = scmp.ne.s32.totalorder %s267, %s268
    %p277 = scmp.eq.s32.totalorder %s26, 0
    %p278 = por %p276, %p277
    %p279 = scmp.ne.s32.totalorder %s267, %s268
    %p280 = scmp.eq.s32.totalorder %s27, 1
    %p281 = por %p279, %p280
    %p283 = scmp.ne.s32.totalorder %s268, %s282
    %p284 = scmp.eq.s32.totalorder %s27, 0
    %p285 = por %p283, %p284
    %s287 = sadd.s32 %s286, 1
    %p290 = scmp.eq.s32.totalorder %s21, 1
    %p291 = scmp.ne.s32.totalorder %s286, %s288
    %p292 = scmp.eq.s32.totalorder %s21, 0
    %p293 = por %p291, %p292
    %p294 = scmp.ne.s32.totalorder %s286, %s288
    %p295 = scmp.eq.s32.totalorder %s26, 1
    %p296 = por %p294, %p295
    %p297 = scmp.ne.s32.totalorder %s288, %s289
    %p298 = scmp.eq.s32.totalorder %s26, 0
    %p299 = por %p297, %p298
    %p300 = scmp.ne.s32.totalorder %s288, %s289
    %p301 = scmp.eq.s32.totalorder %s27, 1
    %p302 = por %p300, %p301
    %p304 = scmp.ne.s32.totalorder %s289, %s303
    %p305 = scmp.eq.s32.totalorder %s27, 0
    %p306 = por %p304, %p305
    %s308 = sadd.s32 %s307, 1
    %p311 = scmp.eq.s32.totalorder %s21, 1
    %p312 = scmp.ne.s32.totalorder %s307, %s309
    %p313 = scmp.eq.s32.totalorder %s21, 0
    %p314 = por %p312, %p313
    %p315 = scmp.ne.s32.totalorder %s307, %s309
    %p316 = scmp.eq.s32.totalorder %s26, 1
    %p317 = por %p315, %p316
    %p318 = scmp.ne.s32.totalorder %s309, %s310
    %p319 = scmp.eq.s32.totalorder %s26, 0
    %p320 = por %p318, %p319
    %p321 = scmp.ne.s32.totalorder %s309, %s310
    %p322 = scmp.eq.s32.totalorder %s27, 1
    %p323 = por %p321, %p322
    %p325 = scmp.ne.s32.totalorder %s310, %s324
    %p326 = scmp.eq.s32.totalorder %s27, 0
    %p327 = por %p325, %p326
    %s329 = sadd.s32 %s328, 1
    %p332 = scmp.eq.s32.totalorder %s21, 1
    %p333 = scmp.ne.s32.totalorder %s328, %s330
    %p334 = scmp.eq.s32.totalorder %s21, 0
    %p335 = por %p333, %p334
    %p336 = scmp.ne.s32.totalorder %s328, %s330
    %p337 = scmp.eq.s32.totalorder %s26, 1
    %p338 = por %p336, %p337
    %p339 = scmp.ne.s32.totalorder %s330, %s331
    %p340 = scmp.eq.s32.totalorder %s26, 0
    %p341 = por %p339, %p340
    %p342 = scmp.ne.s32.totalorder %s330, %s331
    %p343 = scmp.eq.s32.totalorder %s27, 1
    %p344 = por %p342, %p343
    %p346 = scmp.ne.s32.totalorder %s331, %s345
    %p347 = scmp.eq.s32.totalorder %s27, 0
    %p348 = por %p346, %p347
    %s349 = ssub.s32 %s21, %s28
    %p350 = scmp.eq.s32.totalorder %s349, 0
    %s352 = sadd.s32 %s351, 1
    %s353 = scalar_select %p350, %s351, %s352
    %p356 = pneg %p350
    %p357 = scmp.eq.s32.totalorder %s21, 1
    %p358 = por %p356, %p357
    %p359 = scmp.ne.s32.totalorder %s351, %s354
    %p360 = scmp.eq.s32.totalorder %s21, 0
    %p361 = por %p359, %p360
    %p362 = scmp.ne.s32.totalorder %s351, %s354
    %p363 = scmp.eq.s32.totalorder %s26, 1
    %p364 = por %p362, %p363
    %p365 = scmp.ne.s32.totalorder %s354, %s355
    %p366 = scmp.eq.s32.totalorder %s26, 0
    %p367 = por %p365, %p366
    %p368 = scmp.ne.s32.totalorder %s354, %s355
    %p369 = scmp.eq.s32.totalorder %s27, 1
    %p370 = por %p368, %p369
    %p372 = scmp.ne.s32.totalorder %s355, %s371
    %p373 = scmp.eq.s32.totalorder %s27, 0
    %p374 = por %p372, %p373
    %p375 = scmp.le.s32.totalorder 1, %s21
    %p376 = scmp.lt.s32.totalorder %s21, 3
    %p377 = pnand %p375, %p376
    %p378 = pneg %p377
    // Predicated region
    $region9: #{_fc_forward_jit.1} parent=5 // pred_check
      _
    $region10: #{_fc_forward_jit.1} parent=5 // pred_check_branch
      %380 = sbr.rel (%p377) target = $region12
    $region11: #{_fc_forward_jit.1} parent=5 // pred_region
      %s381 = ssub.s32 %s21, 1
      // Predicated region
      $region13: #{_fc_forward_jit.1} parent=11 // pred_check
        %p382 = pneg %p68
      $region14: #{_fc_forward_jit.1} parent=11 // pred_check_branch
        %384 = sbr.rel (%p382) target = $region16
      $region15: #{_fc_forward_jit.1} parent=11 // pred_region
        _
      $region16: #{_fc_forward_jit.1} parent=11 // pred_fallthru
        _
      // Predicated region
      $region17: #{_fc_forward_jit.1} parent=11 // pred_check
        %p385 = pneg %p89
      $region18: #{_fc_forward_jit.1} parent=11 // pred_check_branch
        %387 = sbr.rel (%p385) target = $region20
      $region19: #{_fc_forward_jit.1} parent=11 // pred_region
        _
      $region20: #{_fc_forward_jit.1} parent=11 // pred_fallthru
        _
      // Predicated region
      $region21: #{_fc_forward_jit.1} parent=11 // pred_check
        %p388 = pneg %p110
      $region22: #{_fc_forward_jit.1} parent=11 // pred_check_branch
        %390 = sbr.rel (%p388) target = $region24
      $region23: #{_fc_forward_jit.1} parent=11 // pred_region
        _
      $region24: #{_fc_forward_jit.1} parent=11 // pred_fallthru
        _
      // Predicated region
      $region25: #{_fc_forward_jit.1} parent=11 // pred_check
        %p391 = pneg %p131
      $region26: #{_fc_forward_jit.1} parent=11 // pred_check_branch
        %393 = sbr.rel (%p391) target = $region28
      $region27: #{_fc_forward_jit.1} parent=11 // pred_region
        _
      $region28: #{_fc_forward_jit.1} parent=11 // pred_fallthru
        _
      // Predicated region
      $region29: #{_fc_forward_jit.1} parent=11 // pred_check
        %p394 = pneg %p152
      $region30: #{_fc_forward_jit.1} parent=11 // pred_check_branch
        %396 = sbr.rel (%p394) target = $region32
      $region31: #{_fc_forward_jit.1} parent=11 // pred_region
        _
      $region32: #{_fc_forward_jit.1} parent=11 // pred_fallthru
        _
      // Predicated region
      $region33: #{_fc_forward_jit.1} parent=11 // pred_check
        %p397 = pneg %p173
      $region34: #{_fc_forward_jit.1} parent=11 // pred_check_branch
        %399 = sbr.rel (%p397) target = $region36
      $region35: #{_fc_forward_jit.1} parent=11 // pred_region
        _
      $region36: #{_fc_forward_jit.1} parent=11 // pred_fallthru
        _
      // Predicated region
      $region37: #{_fc_forward_jit.1} parent=11 // pred_check
        %p400 = pneg %p194
      $region38: #{_fc_forward_jit.1} parent=11 // pred_check_branch
        %402 = sbr.rel (%p400) target = $region40
      $region39: #{_fc_forward_jit.1} parent=11 // pred_region
        _
      $region40: #{_fc_forward_jit.1} parent=11 // pred_fallthru
        _
      // Predicated region
      $region41: #{_fc_forward_jit.1} parent=11 // pred_check
        %p403 = pneg %p215
      $region42: #{_fc_forward_jit.1} parent=11 // pred_check_branch
        %405 = sbr.rel (%p403) target = $region44
      $region43: #{_fc_forward_jit.1} parent=11 // pred_region
        _
      $region44: #{_fc_forward_jit.1} parent=11 // pred_fallthru
        _
      // Predicated region
      $region45: #{_fc_forward_jit.1} parent=11 // pred_check
        %p406 = pneg %p236
      $region46: #{_fc_forward_jit.1} parent=11 // pred_check_branch
        %408 = sbr.rel (%p406) target = $region48
      $region47: #{_fc_forward_jit.1} parent=11 // pred_region
        _
      $region48: #{_fc_forward_jit.1} parent=11 // pred_fallthru
        _
      // Predicated region
      $region49: #{_fc_forward_jit.1} parent=11 // pred_check
        %p409 = pneg %p257
      $region50: #{_fc_forward_jit.1} parent=11 // pred_check_branch
        %411 = sbr.rel (%p409) target = $region52
      $region51: #{_fc_forward_jit.1} parent=11 // pred_region
        _
      $region52: #{_fc_forward_jit.1} parent=11 // pred_fallthru
        _
      // Predicated region
      $region53: #{_fc_forward_jit.1} parent=11 // pred_check
        %p412 = pneg %p278
      $region54: #{_fc_forward_jit.1} parent=11 // pred_check_branch
        %414 = sbr.rel (%p412) target = $region56
      $region55: #{_fc_forward_jit.1} parent=11 // pred_region
        _
      $region56: #{_fc_forward_jit.1} parent=11 // pred_fallthru
        _
      // Predicated region
      $region57: #{_fc_forward_jit.1} parent=11 // pred_check
        %p415 = pneg %p299
      $region58: #{_fc_forward_jit.1} parent=11 // pred_check_branch
        %417 = sbr.rel (%p415) target = $region60
      $region59: #{_fc_forward_jit.1} parent=11 // pred_region
        _
      $region60: #{_fc_forward_jit.1} parent=11 // pred_fallthru
        _
      // Predicated region
      $region61: #{_fc_forward_jit.1} parent=11 // pred_check
        %p418 = pneg %p320
      $region62: #{_fc_forward_jit.1} parent=11 // pred_check_branch
        %420 = sbr.rel (%p418) target = $region64
      $region63: #{_fc_forward_jit.1} parent=11 // pred_region
        _
      $region64: #{_fc_forward_jit.1} parent=11 // pred_fallthru
        _
      // Predicated region
      $region65: #{_fc_forward_jit.1} parent=11 // pred_check
        %p421 = pneg %p341
      $region66: #{_fc_forward_jit.1} parent=11 // pred_check_branch
        %423 = sbr.rel (%p421) target = $region68
      $region67: #{_fc_forward_jit.1} parent=11 // pred_region
        _
      $region68: #{_fc_forward_jit.1} parent=11 // pred_fallthru
        _
    $region12: #{_fc_forward_jit.1} parent=5 // pred_fallthru
      _
    %p424 = scmp.lt.s32.totalorder %s21, 2
    // Predicated region
    $region69: #{_fc_forward_jit.1} parent=5 // pred_check
      %p425 = pneg %p424
    $region70: #{_fc_forward_jit.1} parent=5 // pred_check_branch
      %427 = sbr.rel (%p425) target = $region72
    $region71: #{_fc_forward_jit.1} parent=5 // pred_region
      // Predicated region
      $region73: #{_fc_forward_jit.1} parent=71 // pred_check
        %p428 = pneg %p41
      $region74: #{_fc_forward_jit.1} parent=71 // pred_check_branch
        %430 = sbr.rel (%p428) target = $region76
      $region75: #{_fc_forward_jit.1} parent=71 // pred_region
        %s431 = smul.u32 64, %s21
        %p432 = scmp.lt.s32.totalorder %s431, 127
        %s433 = scalar_select %p432, %s431, 127
        %s434 = smul.addr %s433, 4
        %s435 = scalar_lea.vmem %s0, %s434
        %s436 = smul.u32 64, %s21
      $region76: #{_fc_forward_jit.1} parent=71 // pred_fallthru
        _
    $region72: #{_fc_forward_jit.1} parent=5 // pred_fallthru
      _
    %p437 = scmp.le.s32.totalorder 1, %s21
    %p438 = scmp.lt.s32.totalorder %s21, 3
    %p439 = pnand %p437, %p438
    %p440 = pneg %p439
    // Predicated region
    $region77: #{_fc_forward_jit.1} parent=5 // pred_check
      _
    $region78: #{_fc_forward_jit.1} parent=5 // pred_check_branch
      %442 = sbr.rel (%p439) target = $region80
    $region79: #{_fc_forward_jit.1} parent=5 // pred_region
      %s443 = ssub.s32 %s21, 1
      %s444 = smul.u32 64, %s26
      %p445 = scmp.lt.s32.totalorder %s444, 127
      %s446 = scalar_select %p445, %s444, 127
      %s447 = smul.addr %s446, 4
      %s448 = scalar_lea.vmem %s0, %s447
      %p449 = pneg %p47
      %p450 = pneg %p44
      %p451 = pneg %p68
      %p452 = pneg %p65
      %p453 = pneg %p89
      %p454 = pneg %p86
      %p455 = pneg %p110
      %p456 = pneg %p107
      %p457 = pneg %p131
      %p458 = pneg %p128
      %p459 = pneg %p152
      %p460 = pneg %p149
      %p461 = pneg %p173
      %p462 = pneg %p170
      %p463 = pneg %p194
      %p464 = pneg %p191
      %p465 = pneg %p215
      %p466 = pneg %p212
      %p467 = pneg %p236
      %p468 = pneg %p233
      %p469 = pneg %p257
      %p470 = pneg %p254
      %p471 = pneg %p278
      %p472 = pneg %p275
      %p473 = pneg %p299
      %p474 = pneg %p296
      %p475 = pneg %p320
      %p476 = pneg %p317
      %p477 = pneg %p341
      %p478 = pneg %p338
      %p479 = pneg %p367
      %p480 = pneg %p364
      %s481 = smul.u32 64, %s26
      %p482 = scmp.lt.s32.totalorder %s481, 127
      %s483 = scalar_select %p482, %s481, 127
      %s484 = smul.addr %s483, 8
      %s485 = scalar_lea.vmem %s15, %s484
      %s486 = smul.u32 64, %s26
      %p487 = scmp.lt.s32.totalorder %s486, 127
      %s488 = scalar_select %p487, %s486, 127
      %s489 = smul.addr %s488, 4
      %s490 = scalar_lea.vmem %s0, %s489
      %s491 = smul.u32 64, %s26
      %s492 = smul.u32 64, %s26
      %p493 = scmp.lt.s32.totalorder %s492, 127
      %s494 = scalar_select %p493, %s492, 127
      %s495 = smul.addr %s494, 8
      %s496 = scalar_lea.vmem %s15, %s495
      %s497 = smul.u32 64, %s26
      %v498 = vld [vmem:[%s490] sm:$0xf]
      %v499 = vld [vmem:[%s490 + $0x4] sm:$0xf]
      %v500 = vld [vmem:[%s490 + $0x8] sm:$0xf]
      %v501 = vld [vmem:[%s490 + $0xc] sm:$0xf]
      %v502 = vld [vmem:[%s490 + $0x10] sm:$0xf]
      %v503 = vld [vmem:[%s490 + $0x14] sm:$0xf]
      %v504 = vld [vmem:[%s490 + $0x18] sm:$0xf]
      %v505 = vld [vmem:[%s490 + $0x1c] sm:$0xf]
      %v506 = vld [vmem:[%s490 + $0x20] sm:$0xf]
      %v507 = vld [vmem:[%s490 + $0x24] sm:$0xf]
      %v508 = vld [vmem:[%s490 + $0x28] sm:$0xf]
      %v509 = vld [vmem:[%s490 + $0x2c] sm:$0xf]
      %v510 = vld [vmem:[%s490 + $0x30] sm:$0xf]
      %v511 = vld [vmem:[%s490 + $0x34] sm:$0xf]
      %v512 = vld [vmem:[%s490 + $0x38] sm:$0xf]
      %v513 = vld [vmem:[%s490 + $0x3c] sm:$0xf]
      %v514 = vld [vmem:[%s490 + $0x40] sm:$0xf]
      %v515 = vld [vmem:[%s490 + $0x44] sm:$0xf]
      %v516 = vld [vmem:[%s490 + $0x48] sm:$0xf]
      %v517 = vld [vmem:[%s490 + $0x4c] sm:$0xf]
      %v518 = vld [vmem:[%s490 + $0x50] sm:$0xf]
      %v519 = vld [vmem:[%s490 + $0x54] sm:$0xf]
      %v520 = vld [vmem:[%s490 + $0x58] sm:$0xf]
      %v521 = vld [vmem:[%s490 + $0x5c] sm:$0xf]
      %v522 = vld [vmem:[%s490 + $0x60] sm:$0xf]
      %v523 = vld [vmem:[%s490 + $0x64] sm:$0xf]
      %v524 = vld [vmem:[%s490 + $0x68] sm:$0xf]
      %v525 = vld [vmem:[%s490 + $0x6c] sm:$0xf]
      %v526 = vld [vmem:[%s490 + $0x70] sm:$0xf]
      %v527 = vld [vmem:[%s490 + $0x74] sm:$0xf]
      %v528 = vld [vmem:[%s490 + $0x78] sm:$0xf]
      %v529 = vld [vmem:[%s490 + $0x7c] sm:$0xf]
      %v530 = vld [vmem:[%s490 + $0x80] sm:$0xf]
      %v531 = vld [vmem:[%s490 + $0x84] sm:$0xf]
      %v532 = vld [vmem:[%s490 + $0x88] sm:$0xf]
      %v533 = vld [vmem:[%s490 + $0x8c] sm:$0xf]
      %v534 = vld [vmem:[%s490 + $0x90] sm:$0xf]
      %v535 = vld [vmem:[%s490 + $0x94] sm:$0xf]
      %v536 = vld [vmem:[%s490 + $0x98] sm:$0xf]
      %v537 = vld [vmem:[%s490 + $0x9c] sm:$0xf]
      %v538 = vld [vmem:[%s490 + $0xa0] sm:$0xf]
      %v539 = vld [vmem:[%s490 + $0xa4] sm:$0xf]
      %v540 = vld [vmem:[%s490 + $0xa8] sm:$0xf]
      %v541 = vld [vmem:[%s490 + $0xac] sm:$0xf]
      %v542 = vld [vmem:[%s490 + $0xb0] sm:$0xf]
      %v543 = vld [vmem:[%s490 + $0xb4] sm:$0xf]
      %v544 = vld [vmem:[%s490 + $0xb8] sm:$0xf]
      %v545 = vld [vmem:[%s490 + $0xbc] sm:$0xf]
      %v546 = vld [vmem:[%s490 + $0xc0] sm:$0xf]
      %v547 = vld [vmem:[%s490 + $0xc4] sm:$0xf]
      %v548 = vld [vmem:[%s490 + $0xc8] sm:$0xf]
      %v549 = vld [vmem:[%s490 + $0xcc] sm:$0xf]
      %v550 = vld [vmem:[%s490 + $0xd0] sm:$0xf]
      %v551 = vld [vmem:[%s490 + $0xd4] sm:$0xf]
      %v552 = vld [vmem:[%s490 + $0xd8] sm:$0xf]
      %v553 = vld [vmem:[%s490 + $0xdc] sm:$0xf]
      %v554 = vld [vmem:[%s490 + $0xe0] sm:$0xf]
      %v555 = vld [vmem:[%s490 + $0xe4] sm:$0xf]
      %v556 = vld [vmem:[%s490 + $0xe8] sm:$0xf]
      %v557 = vld [vmem:[%s490 + $0xec] sm:$0xf]
      %v558 = vld [vmem:[%s490 + $0xf0] sm:$0xf]
      %v559 = vld [vmem:[%s490 + $0xf4] sm:$0xf]
      %v560 = vld [vmem:[%s490 + $0xf8] sm:$0xf]
      %v561 = vld [vmem:[%s490 + $0xfc] sm:$0xf]
      %v562 = vld [vmem:[%s1] sm:$0xff]
      %v563 = vld [vmem:[%s1 + $0x8] sm:$0xff]
      %v564 = vld [vmem:[%s1 + $0x10] sm:$0xff]
      %v565 = vld [vmem:[%s1 + $0x18] sm:$0xff]
      %v566 = vld [vmem:[%s1 + $0x20] sm:$0xff]
      %v567 = vld [vmem:[%s1 + $0x28] sm:$0xff]
      %v568 = vld [vmem:[%s1 + $0x30] sm:$0xff]
      %v569 = vld [vmem:[%s1 + $0x38] sm:$0xff]
      %v570 = vld [vmem:[%s1 + $0x40] sm:$0xff]
      %v571 = vld [vmem:[%s1 + $0x48] sm:$0xff]
      %v572 = vld [vmem:[%s1 + $0x50] sm:$0xff]
      %v573 = vld [vmem:[%s1 + $0x58] sm:$0xff]
      %v574 = vld [vmem:[%s1 + $0x60] sm:$0xff]
      %v575 = vld [vmem:[%s1 + $0x68] sm:$0xff]
      %v576 = vld [vmem:[%s1 + $0x70] sm:$0xff]
      %v577 = vld [vmem:[%s1 + $0x78] sm:$0xff]
      %v578 = vld [vmem:[%s1 + $0x80] sm:$0xff]
      %v579 = vld [vmem:[%s1 + $0x88] sm:$0xff]
      %v580 = vld [vmem:[%s1 + $0x90] sm:$0xff]
      %v581 = vld [vmem:[%s1 + $0x98] sm:$0xff]
      %v582 = vld [vmem:[%s1 + $0xa0] sm:$0xff]
      %v583 = vld [vmem:[%s1 + $0xa8] sm:$0xff]
      %v584 = vld [vmem:[%s1 + $0xb0] sm:$0xff]
      %v585 = vld [vmem:[%s1 + $0xb8] sm:$0xff]
      %v586 = vld [vmem:[%s1 + $0xc0] sm:$0xff]
      %v587 = vld [vmem:[%s1 + $0xc8] sm:$0xff]
      %v588 = vld [vmem:[%s1 + $0xd0] sm:$0xff]
      %v589 = vld [vmem:[%s1 + $0xd8] sm:$0xff]
      %v590 = vld [vmem:[%s1 + $0xe0] sm:$0xff]
      %v591 = vld [vmem:[%s1 + $0xe8] sm:$0xff]
      %v592 = vld [vmem:[%s1 + $0xf0] sm:$0xff]
      %v593 = vld [vmem:[%s1 + $0xf8] sm:$0xff]
      %v594 = vld [vmem:[%s2] sm:$0xf]
      %v596 = vperm.slane %v594, 0
      %v597 = vperm.slane %v594, 1
      %v598 = vperm.slane %v594, 2
      %v599 = vperm.slane %v594, 3
      %v668 = vunpack.c.l.b16 %v498
      %v669 = vunpack.c.l.b16 %v499
      %v670 = vunpack.c.l.b16 %v500
      %v671 = vunpack.c.l.b16 %v501
      %v672 = vunpack.c.l.b16 %v502
      %v673 = vunpack.c.l.b16 %v503
      %v674 = vunpack.c.l.b16 %v504
      %v675 = vunpack.c.l.b16 %v505
      %v676 = vunpack.c.l.b16 %v506
      %v677 = vunpack.c.l.b16 %v507
      %v678 = vunpack.c.l.b16 %v508
      %v679 = vunpack.c.l.b16 %v509
      %v680 = vunpack.c.l.b16 %v510
      %v681 = vunpack.c.l.b16 %v511
      %v682 = vunpack.c.l.b16 %v512
      %v683 = vunpack.c.l.b16 %v513
      %v684 = vunpack.c.l.b16 %v514
      %v685 = vunpack.c.l.b16 %v515
      %v686 = vunpack.c.l.b16 %v516
      %v687 = vunpack.c.l.b16 %v517
      %v688 = vunpack.c.l.b16 %v518
      %v689 = vunpack.c.l.b16 %v519
      %v690 = vunpack.c.l.b16 %v520
      %v691 = vunpack.c.l.b16 %v521
      %v692 = vunpack.c.l.b16 %v522
      %v693 = vunpack.c.l.b16 %v523
      %v694 = vunpack.c.l.b16 %v524
      %v695 = vunpack.c.l.b16 %v525
      %v696 = vunpack.c.l.b16 %v526
      %v697 = vunpack.c.l.b16 %v527
      %v698 = vunpack.c.l.b16 %v528
      %v699 = vunpack.c.l.b16 %v529
      %v700 = vunpack.c.l.b16 %v530
      %v701 = vunpack.c.l.b16 %v531
      %v702 = vunpack.c.l.b16 %v532
      %v703 = vunpack.c.l.b16 %v533
      %v704 = vunpack.c.l.b16 %v534
      %v705 = vunpack.c.l.b16 %v535
      %v706 = vunpack.c.l.b16 %v536
      %v707 = vunpack.c.l.b16 %v537
      %v708 = vunpack.c.l.b16 %v538
      %v709 = vunpack.c.l.b16 %v539
      %v710 = vunpack.c.l.b16 %v540
      %v711 = vunpack.c.l.b16 %v541
      %v712 = vunpack.c.l.b16 %v542
      %v713 = vunpack.c.l.b16 %v543
      %v714 = vunpack.c.l.b16 %v544
      %v715 = vunpack.c.l.b16 %v545
      %v716 = vunpack.c.l.b16 %v546
      %v717 = vunpack.c.l.b16 %v547
      %v718 = vunpack.c.l.b16 %v548
      %v719 = vunpack.c.l.b16 %v549
      %v720 = vunpack.c.l.b16 %v550
      %v721 = vunpack.c.l.b16 %v551
      %v722 = vunpack.c.l.b16 %v552
      %v723 = vunpack.c.l.b16 %v553
      %v724 = vunpack.c.l.b16 %v554
      %v725 = vunpack.c.l.b16 %v555
      %v726 = vunpack.c.l.b16 %v556
      %v727 = vunpack.c.l.b16 %v557
      %v728 = vunpack.c.l.b16 %v558
      %v729 = vunpack.c.l.b16 %v559
      %v730 = vunpack.c.l.b16 %v560
      %v731 = vunpack.c.l.b16 %v561
      %v732 = vpack.c.b16 %v669, %v668
      %v733 = vpack.c.b16 %v671, %v670
      %v734 = vpack.c.b16 %v673, %v672
      %v735 = vpack.c.b16 %v675, %v674
      %v736 = vpack.c.b16 %v677, %v676
      %v737 = vpack.c.b16 %v679, %v678
      %v738 = vpack.c.b16 %v681, %v680
      %v739 = vpack.c.b16 %v683, %v682
      %v740 = vpack.c.b16 %v685, %v684
      %v741 = vpack.c.b16 %v687, %v686
      %v742 = vpack.c.b16 %v689, %v688
      %v743 = vpack.c.b16 %v691, %v690
      %v744 = vpack.c.b16 %v693, %v692
      %v745 = vpack.c.b16 %v695, %v694
      %v746 = vpack.c.b16 %v697, %v696
      %v747 = vpack.c.b16 %v699, %v698
      %v748 = vpack.c.b16 %v701, %v700
      %v749 = vpack.c.b16 %v703, %v702
      %v750 = vpack.c.b16 %v705, %v704
      %v751 = vpack.c.b16 %v707, %v706
      %v752 = vpack.c.b16 %v709, %v708
      %v753 = vpack.c.b16 %v711, %v710
      %v754 = vpack.c.b16 %v713, %v712
      %v755 = vpack.c.b16 %v715, %v714
      %v756 = vpack.c.b16 %v717, %v716
      %v757 = vpack.c.b16 %v719, %v718
      %v758 = vpack.c.b16 %v721, %v720
      %v759 = vpack.c.b16 %v723, %v722
      %v760 = vpack.c.b16 %v725, %v724
      %v761 = vpack.c.b16 %v727, %v726
      %v762 = vpack.c.b16 %v729, %v728
      %v763 = vpack.c.b16 %v731, %v730
      %v828 = vunpack.c.l.b16 %v562
      %v829 = vunpack.c.h.b16 %v562
      %v830 = vunpack.c.l.b16 %v563
      %v831 = vunpack.c.h.b16 %v563
      %v832 = vunpack.c.l.b16 %v564
      %v833 = vunpack.c.h.b16 %v564
      %v834 = vunpack.c.l.b16 %v565
      %v835 = vunpack.c.h.b16 %v565
      %v836 = vunpack.c.l.b16 %v566
      %v837 = vunpack.c.h.b16 %v566
      %v838 = vunpack.c.l.b16 %v567
      %v839 = vunpack.c.h.b16 %v567
      %v840 = vunpack.c.l.b16 %v568
      %v841 = vunpack.c.h.b16 %v568
      %v842 = vunpack.c.l.b16 %v569
      %v843 = vunpack.c.h.b16 %v569
      %v844 = vunpack.c.l.b16 %v570
      %v845 = vunpack.c.h.b16 %v570
      %v846 = vunpack.c.l.b16 %v571
      %v847 = vunpack.c.h.b16 %v571
      %v848 = vunpack.c.l.b16 %v572
      %v849 = vunpack.c.h.b16 %v572
      %v850 = vunpack.c.l.b16 %v573
      %v851 = vunpack.c.h.b16 %v573
      %v852 = vunpack.c.l.b16 %v574
      %v853 = vunpack.c.h.b16 %v574
      %v854 = vunpack.c.l.b16 %v575
      %v855 = vunpack.c.h.b16 %v575
      %v856 = vunpack.c.l.b16 %v576
      %v857 = vunpack.c.h.b16 %v576
      %v858 = vunpack.c.l.b16 %v577
      %v859 = vunpack.c.h.b16 %v577
      %v860 = vunpack.c.l.b16 %v578
      %v861 = vunpack.c.h.b16 %v578
      %v862 = vunpack.c.l.b16 %v579
      %v863 = vunpack.c.h.b16 %v579
      %v864 = vunpack.c.l.b16 %v580
      %v865 = vunpack.c.h.b16 %v580
      %v866 = vunpack.c.l.b16 %v581
      %v867 = vunpack.c.h.b16 %v581
      %v868 = vunpack.c.l.b16 %v582
      %v869 = vunpack.c.h.b16 %v582
      %v870 = vunpack.c.l.b16 %v583
      %v871 = vunpack.c.h.b16 %v583
      %v872 = vunpack.c.l.b16 %v584
      %v873 = vunpack.c.h.b16 %v584
      %v874 = vunpack.c.l.b16 %v585
      %v875 = vunpack.c.h.b16 %v585
      %v876 = vunpack.c.l.b16 %v586
      %v877 = vunpack.c.h.b16 %v586
      %v878 = vunpack.c.l.b16 %v587
      %v879 = vunpack.c.h.b16 %v587
      %v880 = vunpack.c.l.b16 %v588
      %v881 = vunpack.c.h.b16 %v588
      %v882 = vunpack.c.l.b16 %v589
      %v883 = vunpack.c.h.b16 %v589
      %v884 = vunpack.c.l.b16 %v590
      %v885 = vunpack.c.h.b16 %v590
      %v886 = vunpack.c.l.b16 %v591
      %v887 = vunpack.c.h.b16 %v591
      %v888 = vunpack.c.l.b16 %v592
      %v889 = vunpack.c.h.b16 %v592
      %v890 = vunpack.c.l.b16 %v593
      %v891 = vunpack.c.h.b16 %v593
      %v892 = vpack.c.b16 %v832, %v828
      %v893 = vpack.c.b16 %v833, %v829
      %v894 = vpack.c.b16 %v834, %v830
      %v895 = vpack.c.b16 %v835, %v831
      %v896 = vpack.c.b16 %v840, %v836
      %v897 = vpack.c.b16 %v841, %v837
      %v898 = vpack.c.b16 %v842, %v838
      %v899 = vpack.c.b16 %v843, %v839
      %v900 = vpack.c.b16 %v848, %v844
      %v901 = vpack.c.b16 %v849, %v845
      %v902 = vpack.c.b16 %v850, %v846
      %v903 = vpack.c.b16 %v851, %v847
      %v904 = vpack.c.b16 %v856, %v852
      %v905 = vpack.c.b16 %v857, %v853
      %v906 = vpack.c.b16 %v858, %v854
      %v907 = vpack.c.b16 %v859, %v855
      %v908 = vpack.c.b16 %v864, %v860
      %v909 = vpack.c.b16 %v865, %v861
      %v910 = vpack.c.b16 %v866, %v862
      %v911 = vpack.c.b16 %v867, %v863
      %v912 = vpack.c.b16 %v872, %v868
      %v913 = vpack.c.b16 %v873, %v869
      %v914 = vpack.c.b16 %v874, %v870
      %v915 = vpack.c.b16 %v875, %v871
      %v916 = vpack.c.b16 %v880, %v876
      %v917 = vpack.c.b16 %v881, %v877
      %v918 = vpack.c.b16 %v882, %v878
      %v919 = vpack.c.b16 %v883, %v879
      %v920 = vpack.c.b16 %v888, %v884
      %v921 = vpack.c.b16 %v889, %v885
      %v922 = vpack.c.b16 %v890, %v886
      %v923 = vpack.c.b16 %v891, %v887
      %956 = vmatpush.bf16.msra.mxu0 %v920
      %957 = vmatpush.bf16.msra.mxu0 %v916
      %958 = vmatpush.bf16.msra.mxu0 %v912
      %959 = vmatpush.bf16.msra.mxu0 %v908
      %960 = vmatpush.bf16.msra.mxu0 %v904
      %961 = vmatpush.bf16.msra.mxu0 %v900
      %962 = vmatpush.bf16.msra.mxu0 %v896
      %963 = vmatpush.bf16.msra.mxu0 %v892
      %964 = vmatmul.bf16.gmra.mxu0 %v732
      %v965 = vpop.f32.mrf.mxu0
      %v966 = vadd.f32 %v596, %v965
      %v967 = vpop.f32.mrf.mxu0
      %v968 = vadd.f32 %v596, %v967
      %969 = vmatmul.bf16.gmra.mxu0 %v733
      %v970 = vpop.f32.mrf.mxu0
      %v971 = vadd.f32 %v596, %v970
      %v972 = vpop.f32.mrf.mxu0
      %v973 = vadd.f32 %v596, %v972
      %974 = vmatmul.bf16.gmra.mxu0 %v734
      %v975 = vpop.f32.mrf.mxu0
      %v976 = vadd.f32 %v596, %v975
      %v977 = vpop.f32.mrf.mxu0
      %v978 = vadd.f32 %v596, %v977
      %979 = vmatmul.bf16.gmra.mxu0 %v735
      %v980 = vpop.f32.mrf.mxu0
      %v981 = vadd.f32 %v596, %v980
      %v982 = vpop.f32.mrf.mxu0
      %v983 = vadd.f32 %v596, %v982
      %984 = vmatmul.bf16.gmra.mxu0 %v736
      %v985 = vpop.f32.mrf.mxu0
      %v986 = vadd.f32 %v596, %v985
      %v987 = vpop.f32.mrf.mxu0
      %v988 = vadd.f32 %v596, %v987
      %989 = vmatmul.bf16.gmra.mxu0 %v737
      %v990 = vpop.f32.mrf.mxu0
      %v991 = vadd.f32 %v596, %v990
      %v992 = vpop.f32.mrf.mxu0
      %v993 = vadd.f32 %v596, %v992
      %994 = vmatmul.bf16.gmra.mxu0 %v738
      %v995 = vpop.f32.mrf.mxu0
      %v996 = vadd.f32 %v596, %v995
      %v997 = vpop.f32.mrf.mxu0
      %v998 = vadd.f32 %v596, %v997
      %999 = vmatmul.bf16.gmra.mxu0 %v739
      %v1000 = vpop.f32.mrf.mxu0
      %v1001 = vadd.f32 %v596, %v1000
      %v1002 = vpop.f32.mrf.mxu0
      %v1003 = vadd.f32 %v596, %v1002
      %1004 = vmatmul.bf16.gmra.mxu0 %v740
      %v1005 = vpop.f32.mrf.mxu0
      %v1006 = vadd.f32 %v596, %v1005
      %v1007 = vpop.f32.mrf.mxu0
      %v1008 = vadd.f32 %v596, %v1007
      %1009 = vmatmul.bf16.gmra.mxu0 %v741
      %v1010 = vpop.f32.mrf.mxu0
      %v1011 = vadd.f32 %v596, %v1010
      %v1012 = vpop.f32.mrf.mxu0
      %v1013 = vadd.f32 %v596, %v1012
      %1014 = vmatmul.bf16.gmra.mxu0 %v742
      %v1015 = vpop.f32.mrf.mxu0
      %v1016 = vadd.f32 %v596, %v1015
      %v1017 = vpop.f32.mrf.mxu0
      %v1018 = vadd.f32 %v596, %v1017
      %1019 = vmatmul.bf16.gmra.mxu0 %v743
      %v1020 = vpop.f32.mrf.mxu0
      %v1021 = vadd.f32 %v596, %v1020
      %v1022 = vpop.f32.mrf.mxu0
      %v1023 = vadd.f32 %v596, %v1022
      %1024 = vmatmul.bf16.gmra.mxu0 %v744
      %v1025 = vpop.f32.mrf.mxu0
      %v1026 = vadd.f32 %v596, %v1025
      %v1027 = vpop.f32.mrf.mxu0
      %v1028 = vadd.f32 %v596, %v1027
      %1029 = vmatmul.bf16.gmra.mxu0 %v745
      %v1030 = vpop.f32.mrf.mxu0
      %v1031 = vadd.f32 %v596, %v1030
      %v1032 = vpop.f32.mrf.mxu0
      %v1033 = vadd.f32 %v596, %v1032
      %1034 = vmatmul.bf16.gmra.mxu0 %v746
      %v1035 = vpop.f32.mrf.mxu0
      %v1036 = vadd.f32 %v596, %v1035
      %v1037 = vpop.f32.mrf.mxu0
      %v1038 = vadd.f32 %v596, %v1037
      %1039 = vmatmul.bf16.gmra.mxu0 %v747
      %v1040 = vpop.f32.mrf.mxu0
      %v1041 = vadd.f32 %v596, %v1040
      %v1042 = vpop.f32.mrf.mxu0
      %v1043 = vadd.f32 %v596, %v1042
      %1044 = vmatmul.bf16.gmra.mxu0 %v748
      %v1045 = vpop.f32.mrf.mxu0
      %v1046 = vadd.f32 %v596, %v1045
      %v1047 = vpop.f32.mrf.mxu0
      %v1048 = vadd.f32 %v596, %v1047
      %1049 = vmatmul.bf16.gmra.mxu0 %v749
      %v1050 = vpop.f32.mrf.mxu0
      %v1051 = vadd.f32 %v596, %v1050
      %v1052 = vpop.f32.mrf.mxu0
      %v1053 = vadd.f32 %v596, %v1052
      %1054 = vmatmul.bf16.gmra.mxu0 %v750
      %v1055 = vpop.f32.mrf.mxu0
      %v1056 = vadd.f32 %v596, %v1055
      %v1057 = vpop.f32.mrf.mxu0
      %v1058 = vadd.f32 %v596, %v1057
      %1059 = vmatmul.bf16.gmra.mxu0 %v751
      %v1060 = vpop.f32.mrf.mxu0
      %v1061 = vadd.f32 %v596, %v1060
      %v1062 = vpop.f32.mrf.mxu0
      %v1063 = vadd.f32 %v596, %v1062
      %1064 = vmatmul.bf16.gmra.mxu0 %v752
      %v1065 = vpop.f32.mrf.mxu0
      %v1066 = vadd.f32 %v596, %v1065
      %v1067 = vpop.f32.mrf.mxu0
      %v1068 = vadd.f32 %v596, %v1067
      %1069 = vmatmul.bf16.gmra.mxu0 %v753
      %v1070 = vpop.f32.mrf.mxu0
      %v1071 = vadd.f32 %v596, %v1070
      %v1072 = vpop.f32.mrf.mxu0
      %v1073 = vadd.f32 %v596, %v1072
      %1074 = vmatmul.bf16.gmra.mxu0 %v754
      %v1075 = vpop.f32.mrf.mxu0
      %v1076 = vadd.f32 %v596, %v1075
      %v1077 = vpop.f32.mrf.mxu0
      %v1078 = vadd.f32 %v596, %v1077
      %1079 = vmatmul.bf16.gmra.mxu0 %v755
      %v1080 = vpop.f32.mrf.mxu0
      %v1081 = vadd.f32 %v596, %v1080
      %v1082 = vpop.f32.mrf.mxu0
      %v1083 = vadd.f32 %v596, %v1082
      %1084 = vmatmul.bf16.gmra.mxu0 %v756
      %v1085 = vpop.f32.mrf.mxu0
      %v1086 = vadd.f32 %v596, %v1085
      %v1087 = vpop.f32.mrf.mxu0
      %v1088 = vadd.f32 %v596, %v1087
      %1089 = vmatmul.bf16.gmra.mxu0 %v757
      %v1090 = vpop.f32.mrf.mxu0
      %v1091 = vadd.f32 %v596, %v1090
      %v1092 = vpop.f32.mrf.mxu0
      %v1093 = vadd.f32 %v596, %v1092
      %1094 = vmatmul.bf16.gmra.mxu0 %v758
      %v1095 = vpop.f32.mrf.mxu0
      %v1096 = vadd.f32 %v596, %v1095
      %v1097 = vpop.f32.mrf.mxu0
      %v1098 = vadd.f32 %v596, %v1097
      %1099 = vmatmul.bf16.gmra.mxu0 %v759
      %v1100 = vpop.f32.mrf.mxu0
      %v1101 = vadd.f32 %v596, %v1100
      %v1102 = vpop.f32.mrf.mxu0
      %v1103 = vadd.f32 %v596, %v1102
      %1104 = vmatmul.bf16.gmra.mxu0 %v760
      %v1105 = vpop.f32.mrf.mxu0
      %v1106 = vadd.f32 %v596, %v1105
      %v1107 = vpop.f32.mrf.mxu0
      %v1108 = vadd.f32 %v596, %v1107
      %1109 = vmatmul.bf16.gmra.mxu0 %v761
      %v1110 = vpop.f32.mrf.mxu0
      %v1111 = vadd.f32 %v596, %v1110
      %v1112 = vpop.f32.mrf.mxu0
      %v1113 = vadd.f32 %v596, %v1112
      %1114 = vmatmul.bf16.gmra.mxu0 %v762
      %v1115 = vpop.f32.mrf.mxu0
      %v1116 = vadd.f32 %v596, %v1115
      %v1117 = vpop.f32.mrf.mxu0
      %v1118 = vadd.f32 %v596, %v1117
      %1119 = vmatmul.bf16.gmra.mxu0 %v763
      %v1120 = vpop.f32.mrf.mxu0
      %v1121 = vadd.f32 %v596, %v1120
      %v1122 = vpop.f32.mrf.mxu0
      %v1123 = vadd.f32 %v596, %v1122
      %1124 = vdwg.mxu0
      %1125 = vmatpush.bf16.msra.mxu0 %v921
      %1126 = vmatpush.bf16.msra.mxu0 %v917
      %1127 = vmatpush.bf16.msra.mxu0 %v913
      %1128 = vmatpush.bf16.msra.mxu0 %v909
      %1129 = vmatpush.bf16.msra.mxu0 %v905
      %1130 = vmatpush.bf16.msra.mxu0 %v901
      %1131 = vmatpush.bf16.msra.mxu0 %v897
      %1132 = vmatpush.bf16.msra.mxu0 %v893
      %1133 = vmatmul.bf16.gmra.mxu0 %v732
      %v1134 = vpop.f32.mrf.mxu0
      %v1135 = vadd.f32 %v597, %v1134
      %v1136 = vpop.f32.mrf.mxu0
      %v1137 = vadd.f32 %v597, %v1136
      %1138 = vmatmul.bf16.gmra.mxu0 %v733
      %v1139 = vpop.f32.mrf.mxu0
      %v1140 = vadd.f32 %v597, %v1139
      %v1141 = vpop.f32.mrf.mxu0
      %v1142 = vadd.f32 %v597, %v1141
      %1143 = vmatmul.bf16.gmra.mxu0 %v734
      %v1144 = vpop.f32.mrf.mxu0
      %v1145 = vadd.f32 %v597, %v1144
      %v1146 = vpop.f32.mrf.mxu0
      %v1147 = vadd.f32 %v597, %v1146
      %1148 = vmatmul.bf16.gmra.mxu0 %v735
      %v1149 = vpop.f32.mrf.mxu0
      %v1150 = vadd.f32 %v597, %v1149
      %v1151 = vpop.f32.mrf.mxu0
      %v1152 = vadd.f32 %v597, %v1151
      %1153 = vmatmul.bf16.gmra.mxu0 %v736
      %v1154 = vpop.f32.mrf.mxu0
      %v1155 = vadd.f32 %v597, %v1154
      %v1156 = vpop.f32.mrf.mxu0
      %v1157 = vadd.f32 %v597, %v1156
      %1158 = vmatmul.bf16.gmra.mxu0 %v737
      %v1159 = vpop.f32.mrf.mxu0
      %v1160 = vadd.f32 %v597, %v1159
      %v1161 = vpop.f32.mrf.mxu0
      %v1162 = vadd.f32 %v597, %v1161
      %1163 = vmatmul.bf16.gmra.mxu0 %v738
      %v1164 = vpop.f32.mrf.mxu0
      %v1165 = vadd.f32 %v597, %v1164
      %v1166 = vpop.f32.mrf.mxu0
      %v1167 = vadd.f32 %v597, %v1166
      %1168 = vmatmul.bf16.gmra.mxu0 %v739
      %v1169 = vpop.f32.mrf.mxu0
      %v1170 = vadd.f32 %v597, %v1169
      %v1171 = vpop.f32.mrf.mxu0
      %v1172 = vadd.f32 %v597, %v1171
      %1173 = vmatmul.bf16.gmra.mxu0 %v740
      %v1174 = vpop.f32.mrf.mxu0
      %v1175 = vadd.f32 %v597, %v1174
      %v1176 = vpop.f32.mrf.mxu0
      %v1177 = vadd.f32 %v597, %v1176
      %1178 = vmatmul.bf16.gmra.mxu0 %v741
      %v1179 = vpop.f32.mrf.mxu0
      %v1180 = vadd.f32 %v597, %v1179
      %v1181 = vpop.f32.mrf.mxu0
      %v1182 = vadd.f32 %v597, %v1181
      %1183 = vmatmul.bf16.gmra.mxu0 %v742
      %v1184 = vpop.f32.mrf.mxu0
      %v1185 = vadd.f32 %v597, %v1184
      %v1186 = vpop.f32.mrf.mxu0
      %v1187 = vadd.f32 %v597, %v1186
      %1188 = vmatmul.bf16.gmra.mxu0 %v743
      %v1189 = vpop.f32.mrf.mxu0
      %v1190 = vadd.f32 %v597, %v1189
      %v1191 = vpop.f32.mrf.mxu0
      %v1192 = vadd.f32 %v597, %v1191
      %1193 = vmatmul.bf16.gmra.mxu0 %v744
      %v1194 = vpop.f32.mrf.mxu0
      %v1195 = vadd.f32 %v597, %v1194
      %v1196 = vpop.f32.mrf.mxu0
      %v1197 = vadd.f32 %v597, %v1196
      %1198 = vmatmul.bf16.gmra.mxu0 %v745
      %v1199 = vpop.f32.mrf.mxu0
      %v1200 = vadd.f32 %v597, %v1199
      %v1201 = vpop.f32.mrf.mxu0
      %v1202 = vadd.f32 %v597, %v1201
      %1203 = vmatmul.bf16.gmra.mxu0 %v746
      %v1204 = vpop.f32.mrf.mxu0
      %v1205 = vadd.f32 %v597, %v1204
      %v1206 = vpop.f32.mrf.mxu0
      %v1207 = vadd.f32 %v597, %v1206
      %1208 = vmatmul.bf16.gmra.mxu0 %v747
      %v1209 = vpop.f32.mrf.mxu0
      %v1210 = vadd.f32 %v597, %v1209
      %v1211 = vpop.f32.mrf.mxu0
      %v1212 = vadd.f32 %v597, %v1211
      %1213 = vmatmul.bf16.gmra.mxu0 %v748
      %v1214 = vpop.f32.mrf.mxu0
      %v1215 = vadd.f32 %v597, %v1214
      %v1216 = vpop.f32.mrf.mxu0
      %v1217 = vadd.f32 %v597, %v1216
      %1218 = vmatmul.bf16.gmra.mxu0 %v749
      %v1219 = vpop.f32.mrf.mxu0
      %v1220 = vadd.f32 %v597, %v1219
      %v1221 = vpop.f32.mrf.mxu0
      %v1222 = vadd.f32 %v597, %v1221
      %1223 = vmatmul.bf16.gmra.mxu0 %v750
      %v1224 = vpop.f32.mrf.mxu0
      %v1225 = vadd.f32 %v597, %v1224
      %v1226 = vpop.f32.mrf.mxu0
      %v1227 = vadd.f32 %v597, %v1226
      %1228 = vmatmul.bf16.gmra.mxu0 %v751
      %v1229 = vpop.f32.mrf.mxu0
      %v1230 = vadd.f32 %v597, %v1229
      %v1231 = vpop.f32.mrf.mxu0
      %v1232 = vadd.f32 %v597, %v1231
      %1233 = vmatmul.bf16.gmra.mxu0 %v752
      %v1234 = vpop.f32.mrf.mxu0
      %v1235 = vadd.f32 %v597, %v1234
      %v1236 = vpop.f32.mrf.mxu0
      %v1237 = vadd.f32 %v597, %v1236
      %1238 = vmatmul.bf16.gmra.mxu0 %v753
      %v1239 = vpop.f32.mrf.mxu0
      %v1240 = vadd.f32 %v597, %v1239
      %v1241 = vpop.f32.mrf.mxu0
      %v1242 = vadd.f32 %v597, %v1241
      %1243 = vmatmul.bf16.gmra.mxu0 %v754
      %v1244 = vpop.f32.mrf.mxu0
      %v1245 = vadd.f32 %v597, %v1244
      %v1246 = vpop.f32.mrf.mxu0
      %v1247 = vadd.f32 %v597, %v1246
      %1248 = vmatmul.bf16.gmra.mxu0 %v755
      %v1249 = vpop.f32.mrf.mxu0
      %v1250 = vadd.f32 %v597, %v1249
      %v1251 = vpop.f32.mrf.mxu0
      %v1252 = vadd.f32 %v597, %v1251
      %1253 = vmatmul.bf16.gmra.mxu0 %v756
      %v1254 = vpop.f32.mrf.mxu0
      %v1255 = vadd.f32 %v597, %v1254
      %v1256 = vpop.f32.mrf.mxu0
      %v1257 = vadd.f32 %v597, %v1256
      %1258 = vmatmul.bf16.gmra.mxu0 %v757
      %v1259 = vpop.f32.mrf.mxu0
      %v1260 = vadd.f32 %v597, %v1259
      %v1261 = vpop.f32.mrf.mxu0
      %v1262 = vadd.f32 %v597, %v1261
      %1263 = vmatmul.bf16.gmra.mxu0 %v758
      %v1264 = vpop.f32.mrf.mxu0
      %v1265 = vadd.f32 %v597, %v1264
      %v1266 = vpop.f32.mrf.mxu0
      %v1267 = vadd.f32 %v597, %v1266
      %1268 = vmatmul.bf16.gmra.mxu0 %v759
      %v1269 = vpop.f32.mrf.mxu0
      %v1270 = vadd.f32 %v597, %v1269
      %v1271 = vpop.f32.mrf.mxu0
      %v1272 = vadd.f32 %v597, %v1271
      %1273 = vmatmul.bf16.gmra.mxu0 %v760
      %v1274 = vpop.f32.mrf.mxu0
      %v1275 = vadd.f32 %v597, %v1274
      %v1276 = vpop.f32.mrf.mxu0
      %v1277 = vadd.f32 %v597, %v1276
      %1278 = vmatmul.bf16.gmra.mxu0 %v761
      %v1279 = vpop.f32.mrf.mxu0
      %v1280 = vadd.f32 %v597, %v1279
      %v1281 = vpop.f32.mrf.mxu0
      %v1282 = vadd.f32 %v597, %v1281
      %1283 = vmatmul.bf16.gmra.mxu0 %v762
      %v1284 = vpop.f32.mrf.mxu0
      %v1285 = vadd.f32 %v597, %v1284
      %v1286 = vpop.f32.mrf.mxu0
      %v1287 = vadd.f32 %v597, %v1286
      %1288 = vmatmul.bf16.gmra.mxu0 %v763
      %v1289 = vpop.f32.mrf.mxu0
      %v1290 = vadd.f32 %v597, %v1289
      %v1291 = vpop.f32.mrf.mxu0
      %v1292 = vadd.f32 %v597, %v1291
      %1293 = vdwg.mxu0
      %1294 = vmatpush.bf16.msra.mxu0 %v922
      %1295 = vmatpush.bf16.msra.mxu0 %v918
      %1296 = vmatpush.bf16.msra.mxu0 %v914
      %1297 = vmatpush.bf16.msra.mxu0 %v910
      %1298 = vmatpush.bf16.msra.mxu0 %v906
      %1299 = vmatpush.bf16.msra.mxu0 %v902
      %1300 = vmatpush.bf16.msra.mxu0 %v898
      %1301 = vmatpush.bf16.msra.mxu0 %v894
      %1302 = vmatmul.bf16.gmra.mxu0 %v732
      %v1303 = vpop.f32.mrf.mxu0
      %v1304 = vadd.f32 %v598, %v1303
      %v1305 = vpop.f32.mrf.mxu0
      %v1306 = vadd.f32 %v598, %v1305
      %1307 = vmatmul.bf16.gmra.mxu0 %v733
      %v1308 = vpop.f32.mrf.mxu0
      %v1309 = vadd.f32 %v598, %v1308
      %v1310 = vpop.f32.mrf.mxu0
      %v1311 = vadd.f32 %v598, %v1310
      %1312 = vmatmul.bf16.gmra.mxu0 %v734
      %v1313 = vpop.f32.mrf.mxu0
      %v1314 = vadd.f32 %v598, %v1313
      %v1315 = vpop.f32.mrf.mxu0
      %v1316 = vadd.f32 %v598, %v1315
      %1317 = vmatmul.bf16.gmra.mxu0 %v735
      %v1318 = vpop.f32.mrf.mxu0
      %v1319 = vadd.f32 %v598, %v1318
      %v1320 = vpop.f32.mrf.mxu0
      %v1321 = vadd.f32 %v598, %v1320
      %1322 = vmatmul.bf16.gmra.mxu0 %v736
      %v1323 = vpop.f32.mrf.mxu0
      %v1324 = vadd.f32 %v598, %v1323
      %v1325 = vpop.f32.mrf.mxu0
      %v1326 = vadd.f32 %v598, %v1325
      %1327 = vmatmul.bf16.gmra.mxu0 %v737
      %v1328 = vpop.f32.mrf.mxu0
      %v1329 = vadd.f32 %v598, %v1328
      %v1330 = vpop.f32.mrf.mxu0
      %v1331 = vadd.f32 %v598, %v1330
      %1332 = vmatmul.bf16.gmra.mxu0 %v738
      %v1333 = vpop.f32.mrf.mxu0
      %v1334 = vadd.f32 %v598, %v1333
      %v1335 = vpop.f32.mrf.mxu0
      %v1336 = vadd.f32 %v598, %v1335
      %1337 = vmatmul.bf16.gmra.mxu0 %v739
      %v1338 = vpop.f32.mrf.mxu0
      %v1339 = vadd.f32 %v598, %v1338
      %v1340 = vpop.f32.mrf.mxu0
      %v1341 = vadd.f32 %v598, %v1340
      %1342 = vmatmul.bf16.gmra.mxu0 %v740
      %v1343 = vpop.f32.mrf.mxu0
      %v1344 = vadd.f32 %v598, %v1343
      %v1345 = vpop.f32.mrf.mxu0
      %v1346 = vadd.f32 %v598, %v1345
      %1347 = vmatmul.bf16.gmra.mxu0 %v741
      %v1348 = vpop.f32.mrf.mxu0
      %v1349 = vadd.f32 %v598, %v1348
      %v1350 = vpop.f32.mrf.mxu0
      %v1351 = vadd.f32 %v598, %v1350
      %1352 = vmatmul.bf16.gmra.mxu0 %v742
      %v1353 = vpop.f32.mrf.mxu0
      %v1354 = vadd.f32 %v598, %v1353
      %v1355 = vpop.f32.mrf.mxu0
      %v1356 = vadd.f32 %v598, %v1355
      %1357 = vmatmul.bf16.gmra.mxu0 %v743
      %v1358 = vpop.f32.mrf.mxu0
      %v1359 = vadd.f32 %v598, %v1358
      %v1360 = vpop.f32.mrf.mxu0
      %v1361 = vadd.f32 %v598, %v1360
      %1362 = vmatmul.bf16.gmra.mxu0 %v744
      %v1363 = vpop.f32.mrf.mxu0
      %v1364 = vadd.f32 %v598, %v1363
      %v1365 = vpop.f32.mrf.mxu0
      %v1366 = vadd.f32 %v598, %v1365
      %1367 = vmatmul.bf16.gmra.mxu0 %v745
      %v1368 = vpop.f32.mrf.mxu0
      %v1369 = vadd.f32 %v598, %v1368
      %v1370 = vpop.f32.mrf.mxu0
      %v1371 = vadd.f32 %v598, %v1370
      %1372 = vmatmul.bf16.gmra.mxu0 %v746
      %v1373 = vpop.f32.mrf.mxu0
      %v1374 = vadd.f32 %v598, %v1373
      %v1375 = vpop.f32.mrf.mxu0
      %v1376 = vadd.f32 %v598, %v1375
      %1377 = vmatmul.bf16.gmra.mxu0 %v747
      %v1378 = vpop.f32.mrf.mxu0
      %v1379 = vadd.f32 %v598, %v1378
      %v1380 = vpop.f32.mrf.mxu0
      %v1381 = vadd.f32 %v598, %v1380
      %1382 = vmatmul.bf16.gmra.mxu0 %v748
      %v1383 = vpop.f32.mrf.mxu0
      %v1384 = vadd.f32 %v598, %v1383
      %v1385 = vpop.f32.mrf.mxu0
      %v1386 = vadd.f32 %v598, %v1385
      %1387 = vmatmul.bf16.gmra.mxu0 %v749
      %v1388 = vpop.f32.mrf.mxu0
      %v1389 = vadd.f32 %v598, %v1388
      %v1390 = vpop.f32.mrf.mxu0
      %v1391 = vadd.f32 %v598, %v1390
      %1392 = vmatmul.bf16.gmra.mxu0 %v750
      %v1393 = vpop.f32.mrf.mxu0
      %v1394 = vadd.f32 %v598, %v1393
      %v1395 = vpop.f32.mrf.mxu0
      %v1396 = vadd.f32 %v598, %v1395
      %1397 = vmatmul.bf16.gmra.mxu0 %v751
      %v1398 = vpop.f32.mrf.mxu0
      %v1399 = vadd.f32 %v598, %v1398
      %v1400 = vpop.f32.mrf.mxu0
      %v1401 = vadd.f32 %v598, %v1400
      %1402 = vmatmul.bf16.gmra.mxu0 %v752
      %v1403 = vpop.f32.mrf.mxu0
      %v1404 = vadd.f32 %v598, %v1403
      %v1405 = vpop.f32.mrf.mxu0
      %v1406 = vadd.f32 %v598, %v1405
      %1407 = vmatmul.bf16.gmra.mxu0 %v753
      %v1408 = vpop.f32.mrf.mxu0
      %v1409 = vadd.f32 %v598, %v1408
      %v1410 = vpop.f32.mrf.mxu0
      %v1411 = vadd.f32 %v598, %v1410
      %1412 = vmatmul.bf16.gmra.mxu0 %v754
      %v1413 = vpop.f32.mrf.mxu0
      %v1414 = vadd.f32 %v598, %v1413
      %v1415 = vpop.f32.mrf.mxu0
      %v1416 = vadd.f32 %v598, %v1415
      %1417 = vmatmul.bf16.gmra.mxu0 %v755
      %v1418 = vpop.f32.mrf.mxu0
      %v1419 = vadd.f32 %v598, %v1418
      %v1420 = vpop.f32.mrf.mxu0
      %v1421 = vadd.f32 %v598, %v1420
      %1422 = vmatmul.bf16.gmra.mxu0 %v756
      %v1423 = vpop.f32.mrf.mxu0
      %v1424 = vadd.f32 %v598, %v1423
      %v1425 = vpop.f32.mrf.mxu0
      %v1426 = vadd.f32 %v598, %v1425
      %1427 = vmatmul.bf16.gmra.mxu0 %v757
      %v1428 = vpop.f32.mrf.mxu0
      %v1429 = vadd.f32 %v598, %v1428
      %v1430 = vpop.f32.mrf.mxu0
      %v1431 = vadd.f32 %v598, %v1430
      %1432 = vmatmul.bf16.gmra.mxu0 %v758
      %v1433 = vpop.f32.mrf.mxu0
      %v1434 = vadd.f32 %v598, %v1433
      %v1435 = vpop.f32.mrf.mxu0
      %v1436 = vadd.f32 %v598, %v1435
      %1437 = vmatmul.bf16.gmra.mxu0 %v759
      %v1438 = vpop.f32.mrf.mxu0
      %v1439 = vadd.f32 %v598, %v1438
      %v1440 = vpop.f32.mrf.mxu0
      %v1441 = vadd.f32 %v598, %v1440
      %1442 = vmatmul.bf16.gmra.mxu0 %v760
      %v1443 = vpop.f32.mrf.mxu0
      %v1444 = vadd.f32 %v598, %v1443
      %v1445 = vpop.f32.mrf.mxu0
      %v1446 = vadd.f32 %v598, %v1445
      %1447 = vmatmul.bf16.gmra.mxu0 %v761
      %v1448 = vpop.f32.mrf.mxu0
      %v1449 = vadd.f32 %v598, %v1448
      %v1450 = vpop.f32.mrf.mxu0
      %v1451 = vadd.f32 %v598, %v1450
      %1452 = vmatmul.bf16.gmra.mxu0 %v762
      %v1453 = vpop.f32.mrf.mxu0
      %v1454 = vadd.f32 %v598, %v1453
      %v1455 = vpop.f32.mrf.mxu0
      %v1456 = vadd.f32 %v598, %v1455
      %1457 = vmatmul.bf16.gmra.mxu0 %v763
      %v1458 = vpop.f32.mrf.mxu0
      %v1459 = vadd.f32 %v598, %v1458
      %v1460 = vpop.f32.mrf.mxu0
      %v1461 = vadd.f32 %v598, %v1460
      %1462 = vdwg.mxu0
      %1463 = vmatpush.bf16.msra.mxu0 %v923
      %1464 = vmatpush.bf16.msra.mxu0 %v919
      %1465 = vmatpush.bf16.msra.mxu0 %v915
      %1466 = vmatpush.bf16.msra.mxu0 %v911
      %1467 = vmatpush.bf16.msra.mxu0 %v907
      %1468 = vmatpush.bf16.msra.mxu0 %v903
      %1469 = vmatpush.bf16.msra.mxu0 %v899
      %1470 = vmatpush.bf16.msra.mxu0 %v895
      %1471 = vmatmul.bf16.gmra.mxu0 %v732
      %v1472 = vpop.f32.mrf.mxu0
      %v1473 = vadd.f32 %v599, %v1472
      %v1474 = vpop.f32.mrf.mxu0
      %v1475 = vadd.f32 %v599, %v1474
      %1476 = vmatmul.bf16.gmra.mxu0 %v733
      %v1477 = vpop.f32.mrf.mxu0
      %v1478 = vadd.f32 %v599, %v1477
      %v1479 = vpop.f32.mrf.mxu0
      %v1480 = vadd.f32 %v599, %v1479
      %1481 = vmatmul.bf16.gmra.mxu0 %v734
      %v1482 = vpop.f32.mrf.mxu0
      %v1483 = vadd.f32 %v599, %v1482
      %v1484 = vpop.f32.mrf.mxu0
      %v1485 = vadd.f32 %v599, %v1484
      %1486 = vmatmul.bf16.gmra.mxu0 %v735
      %v1487 = vpop.f32.mrf.mxu0
      %v1488 = vadd.f32 %v599, %v1487
      %v1489 = vpop.f32.mrf.mxu0
      %v1490 = vadd.f32 %v599, %v1489
      %1491 = vmatmul.bf16.gmra.mxu0 %v736
      %v1492 = vpop.f32.mrf.mxu0
      %v1493 = vadd.f32 %v599, %v1492
      %v1494 = vpop.f32.mrf.mxu0
      %v1495 = vadd.f32 %v599, %v1494
      %1496 = vmatmul.bf16.gmra.mxu0 %v737
      %v1497 = vpop.f32.mrf.mxu0
      %v1498 = vadd.f32 %v599, %v1497
      %v1499 = vpop.f32.mrf.mxu0
      %v1500 = vadd.f32 %v599, %v1499
      %1501 = vmatmul.bf16.gmra.mxu0 %v738
      %v1502 = vpop.f32.mrf.mxu0
      %v1503 = vadd.f32 %v599, %v1502
      %v1504 = vpop.f32.mrf.mxu0
      %v1505 = vadd.f32 %v599, %v1504
      %1506 = vmatmul.bf16.gmra.mxu0 %v739
      %v1507 = vpop.f32.mrf.mxu0
      %v1508 = vadd.f32 %v599, %v1507
      %v1509 = vpop.f32.mrf.mxu0
      %v1510 = vadd.f32 %v599, %v1509
      %1511 = vmatmul.bf16.gmra.mxu0 %v740
      %v1512 = vpop.f32.mrf.mxu0
      %v1513 = vadd.f32 %v599, %v1512
      %v1514 = vpop.f32.mrf.mxu0
      %v1515 = vadd.f32 %v599, %v1514
      %1516 = vmatmul.bf16.gmra.mxu0 %v741
      %v1517 = vpop.f32.mrf.mxu0
      %v1518 = vadd.f32 %v599, %v1517
      %v1519 = vpop.f32.mrf.mxu0
      %v1520 = vadd.f32 %v599, %v1519
      %1521 = vmatmul.bf16.gmra.mxu0 %v742
      %v1522 = vpop.f32.mrf.mxu0
      %v1523 = vadd.f32 %v599, %v1522
      %v1524 = vpop.f32.mrf.mxu0
      %v1525 = vadd.f32 %v599, %v1524
      %1526 = vmatmul.bf16.gmra.mxu0 %v743
      %v1527 = vpop.f32.mrf.mxu0
      %v1528 = vadd.f32 %v599, %v1527
      %v1529 = vpop.f32.mrf.mxu0
      %v1530 = vadd.f32 %v599, %v1529
      %1531 = vmatmul.bf16.gmra.mxu0 %v744
      %v1532 = vpop.f32.mrf.mxu0
      %v1533 = vadd.f32 %v599, %v1532
      %v1534 = vpop.f32.mrf.mxu0
      %v1535 = vadd.f32 %v599, %v1534
      %1536 = vmatmul.bf16.gmra.mxu0 %v745
      %v1537 = vpop.f32.mrf.mxu0
      %v1538 = vadd.f32 %v599, %v1537
      %v1539 = vpop.f32.mrf.mxu0
      %v1540 = vadd.f32 %v599, %v1539
      %1541 = vmatmul.bf16.gmra.mxu0 %v746
      %v1542 = vpop.f32.mrf.mxu0
      %v1543 = vadd.f32 %v599, %v1542
      %v1544 = vpop.f32.mrf.mxu0
      %v1545 = vadd.f32 %v599, %v1544
      %1546 = vmatmul.bf16.gmra.mxu0 %v747
      %v1547 = vpop.f32.mrf.mxu0
      %v1548 = vadd.f32 %v599, %v1547
      %v1549 = vpop.f32.mrf.mxu0
      %v1550 = vadd.f32 %v599, %v1549
      %1551 = vmatmul.bf16.gmra.mxu0 %v748
      %v1552 = vpop.f32.mrf.mxu0
      %v1553 = vadd.f32 %v599, %v1552
      %v1554 = vpop.f32.mrf.mxu0
      %v1555 = vadd.f32 %v599, %v1554
      %1556 = vmatmul.bf16.gmra.mxu0 %v749
      %v1557 = vpop.f32.mrf.mxu0
      %v1558 = vadd.f32 %v599, %v1557
      %v1559 = vpop.f32.mrf.mxu0
      %v1560 = vadd.f32 %v599, %v1559
      %1561 = vmatmul.bf16.gmra.mxu0 %v750
      %v1562 = vpop.f32.mrf.mxu0
      %v1563 = vadd.f32 %v599, %v1562
      %v1564 = vpop.f32.mrf.mxu0
      %v1565 = vadd.f32 %v599, %v1564
      %1566 = vmatmul.bf16.gmra.mxu0 %v751
      %v1567 = vpop.f32.mrf.mxu0
      %v1568 = vadd.f32 %v599, %v1567
      %v1569 = vpop.f32.mrf.mxu0
      %v1570 = vadd.f32 %v599, %v1569
      %1571 = vmatmul.bf16.gmra.mxu0 %v752
      %v1572 = vpop.f32.mrf.mxu0
      %v1573 = vadd.f32 %v599, %v1572
      %v1574 = vpop.f32.mrf.mxu0
      %v1575 = vadd.f32 %v599, %v1574
      %1576 = vmatmul.bf16.gmra.mxu0 %v753
      %v1577 = vpop.f32.mrf.mxu0
      %v1578 = vadd.f32 %v599, %v1577
      %v1579 = vpop.f32.mrf.mxu0
      %v1580 = vadd.f32 %v599, %v1579
      %1581 = vmatmul.bf16.gmra.mxu0 %v754
      %v1582 = vpop.f32.mrf.mxu0
      %v1583 = vadd.f32 %v599, %v1582
      %v1584 = vpop.f32.mrf.mxu0
      %v1585 = vadd.f32 %v599, %v1584
      %1586 = vmatmul.bf16.gmra.mxu0 %v755
      %v1587 = vpop.f32.mrf.mxu0
      %v1588 = vadd.f32 %v599, %v1587
      %v1589 = vpop.f32.mrf.mxu0
      %v1590 = vadd.f32 %v599, %v1589
      %1591 = vmatmul.bf16.gmra.mxu0 %v756
      %v1592 = vpop.f32.mrf.mxu0
      %v1593 = vadd.f32 %v599, %v1592
      %v1594 = vpop.f32.mrf.mxu0
      %v1595 = vadd.f32 %v599, %v1594
      %1596 = vmatmul.bf16.gmra.mxu0 %v757
      %v1597 = vpop.f32.mrf.mxu0
      %v1598 = vadd.f32 %v599, %v1597
      %v1599 = vpop.f32.mrf.mxu0
      %v1600 = vadd.f32 %v599, %v1599
      %1601 = vmatmul.bf16.gmra.mxu0 %v758
      %v1602 = vpop.f32.mrf.mxu0
      %v1603 = vadd.f32 %v599, %v1602
      %v1604 = vpop.f32.mrf.mxu0
      %v1605 = vadd.f32 %v599, %v1604
      %1606 = vmatmul.bf16.gmra.mxu0 %v759
      %v1607 = vpop.f32.mrf.mxu0
      %v1608 = vadd.f32 %v599, %v1607
      %v1609 = vpop.f32.mrf.mxu0
      %v1610 = vadd.f32 %v599, %v1609
      %1611 = vmatmul.bf16.gmra.mxu0 %v760
      %v1612 = vpop.f32.mrf.mxu0
      %v1613 = vadd.f32 %v599, %v1612
      %v1614 = vpop.f32.mrf.mxu0
      %v1615 = vadd.f32 %v599, %v1614
      %1616 = vmatmul.bf16.gmra.mxu0 %v761
      %v1617 = vpop.f32.mrf.mxu0
      %v1618 = vadd.f32 %v599, %v1617
      %v1619 = vpop.f32.mrf.mxu0
      %v1620 = vadd.f32 %v599, %v1619
      %1621 = vmatmul.bf16.gmra.mxu0 %v762
      %v1622 = vpop.f32.mrf.mxu0
      %v1623 = vadd.f32 %v599, %v1622
      %v1624 = vpop.f32.mrf.mxu0
      %v1625 = vadd.f32 %v599, %v1624
      %1626 = vmatmul.bf16.gmra.mxu0 %v763
      %v1627 = vpop.f32.mrf.mxu0
      %v1628 = vadd.f32 %v599, %v1627
      %v1629 = vpop.f32.mrf.mxu0
      %v1630 = vadd.f32 %v599, %v1629
      %1631 = vdwg.mxu0
      %v1632 = vmax.f32 %v966, 0.0
      %v1633 = vmax.f32 %v1135, 0.0
      %v1634 = vmax.f32 %v1304, 0.0
      %v1635 = vmax.f32 %v1473, 0.0
      %v1636 = vmax.f32 %v968, 0.0
      %v1637 = vmax.f32 %v1137, 0.0
      %v1638 = vmax.f32 %v1306, 0.0
      %v1639 = vmax.f32 %v1475, 0.0
      %v1640 = vmax.f32 %v971, 0.0
      %v1641 = vmax.f32 %v1140, 0.0
      %v1642 = vmax.f32 %v1309, 0.0
      %v1643 = vmax.f32 %v1478, 0.0
      %v1644 = vmax.f32 %v973, 0.0
      %v1645 = vmax.f32 %v1142, 0.0
      %v1646 = vmax.f32 %v1311, 0.0
      %v1647 = vmax.f32 %v1480, 0.0
      %v1648 = vmax.f32 %v976, 0.0
      %v1649 = vmax.f32 %v1145, 0.0
      %v1650 = vmax.f32 %v1314, 0.0
      %v1651 = vmax.f32 %v1483, 0.0
      %v1652 = vmax.f32 %v978, 0.0
      %v1653 = vmax.f32 %v1147, 0.0
      %v1654 = vmax.f32 %v1316, 0.0
      %v1655 = vmax.f32 %v1485, 0.0
      %v1656 = vmax.f32 %v981, 0.0
      %v1657 = vmax.f32 %v1150, 0.0
      %v1658 = vmax.f32 %v1319, 0.0
      %v1659 = vmax.f32 %v1488, 0.0
      %v1660 = vmax.f32 %v983, 0.0
      %v1661 = vmax.f32 %v1152, 0.0
      %v1662 = vmax.f32 %v1321, 0.0
      %v1663 = vmax.f32 %v1490, 0.0
      %v1664 = vmax.f32 %v986, 0.0
      %v1665 = vmax.f32 %v1155, 0.0
      %v1666 = vmax.f32 %v1324, 0.0
      %v1667 = vmax.f32 %v1493, 0.0
      %v1668 = vmax.f32 %v988, 0.0
      %v1669 = vmax.f32 %v1157, 0.0
      %v1670 = vmax.f32 %v1326, 0.0
      %v1671 = vmax.f32 %v1495, 0.0
      %v1672 = vmax.f32 %v991, 0.0
      %v1673 = vmax.f32 %v1160, 0.0
      %v1674 = vmax.f32 %v1329, 0.0
      %v1675 = vmax.f32 %v1498, 0.0
      %v1676 = vmax.f32 %v993, 0.0
      %v1677 = vmax.f32 %v1162, 0.0
      %v1678 = vmax.f32 %v1331, 0.0
      %v1679 = vmax.f32 %v1500, 0.0
      %v1680 = vmax.f32 %v996, 0.0
      %v1681 = vmax.f32 %v1165, 0.0
      %v1682 = vmax.f32 %v1334, 0.0
      %v1683 = vmax.f32 %v1503, 0.0
      %v1684 = vmax.f32 %v998, 0.0
      %v1685 = vmax.f32 %v1167, 0.0
      %v1686 = vmax.f32 %v1336, 0.0
      %v1687 = vmax.f32 %v1505, 0.0
      %v1688 = vmax.f32 %v1001, 0.0
      %v1689 = vmax.f32 %v1170, 0.0
      %v1690 = vmax.f32 %v1339, 0.0
      %v1691 = vmax.f32 %v1508, 0.0
      %v1692 = vmax.f32 %v1003, 0.0
      %v1693 = vmax.f32 %v1172, 0.0
      %v1694 = vmax.f32 %v1341, 0.0
      %v1695 = vmax.f32 %v1510, 0.0
      %v1696 = vmax.f32 %v1006, 0.0
      %v1697 = vmax.f32 %v1175, 0.0
      %v1698 = vmax.f32 %v1344, 0.0
      %v1699 = vmax.f32 %v1513, 0.0
      %v1700 = vmax.f32 %v1008, 0.0
      %v1701 = vmax.f32 %v1177, 0.0
      %v1702 = vmax.f32 %v1346, 0.0
      %v1703 = vmax.f32 %v1515, 0.0
      %v1704 = vmax.f32 %v1011, 0.0
      %v1705 = vmax.f32 %v1180, 0.0
      %v1706 = vmax.f32 %v1349, 0.0
      %v1707 = vmax.f32 %v1518, 0.0
      %v1708 = vmax.f32 %v1013, 0.0
      %v1709 = vmax.f32 %v1182, 0.0
      %v1710 = vmax.f32 %v1351, 0.0
      %v1711 = vmax.f32 %v1520, 0.0
      %v1712 = vmax.f32 %v1016, 0.0
      %v1713 = vmax.f32 %v1185, 0.0
      %v1714 = vmax.f32 %v1354, 0.0
      %v1715 = vmax.f32 %v1523, 0.0
      %v1716 = vmax.f32 %v1018, 0.0
      %v1717 = vmax.f32 %v1187, 0.0
      %v1718 = vmax.f32 %v1356, 0.0
      %v1719 = vmax.f32 %v1525, 0.0
      %v1720 = vmax.f32 %v1021, 0.0
      %v1721 = vmax.f32 %v1190, 0.0
      %v1722 = vmax.f32 %v1359, 0.0
      %v1723 = vmax.f32 %v1528, 0.0
      %v1724 = vmax.f32 %v1023, 0.0
      %v1725 = vmax.f32 %v1192, 0.0
      %v1726 = vmax.f32 %v1361, 0.0
      %v1727 = vmax.f32 %v1530, 0.0
      %v1728 = vmax.f32 %v1026, 0.0
      %v1729 = vmax.f32 %v1195, 0.0
      %v1730 = vmax.f32 %v1364, 0.0
      %v1731 = vmax.f32 %v1533, 0.0
      %v1732 = vmax.f32 %v1028, 0.0
      %v1733 = vmax.f32 %v1197, 0.0
      %v1734 = vmax.f32 %v1366, 0.0
      %v1735 = vmax.f32 %v1535, 0.0
      %v1736 = vmax.f32 %v1031, 0.0
      %v1737 = vmax.f32 %v1200, 0.0
      %v1738 = vmax.f32 %v1369, 0.0
      %v1739 = vmax.f32 %v1538, 0.0
      %v1740 = vmax.f32 %v1033, 0.0
      %v1741 = vmax.f32 %v1202, 0.0
      %v1742 = vmax.f32 %v1371, 0.0
      %v1743 = vmax.f32 %v1540, 0.0
      %v1744 = vmax.f32 %v1036, 0.0
      %v1745 = vmax.f32 %v1205, 0.0
      %v1746 = vmax.f32 %v1374, 0.0
      %v1747 = vmax.f32 %v1543, 0.0
      %v1748 = vmax.f32 %v1038, 0.0
      %v1749 = vmax.f32 %v1207, 0.0
      %v1750 = vmax.f32 %v1376, 0.0
      %v1751 = vmax.f32 %v1545, 0.0
      %v1752 = vmax.f32 %v1041, 0.0
      %v1753 = vmax.f32 %v1210, 0.0
      %v1754 = vmax.f32 %v1379, 0.0
      %v1755 = vmax.f32 %v1548, 0.0
      %v1756 = vmax.f32 %v1043, 0.0
      %v1757 = vmax.f32 %v1212, 0.0
      %v1758 = vmax.f32 %v1381, 0.0
      %v1759 = vmax.f32 %v1550, 0.0
      %v1760 = vmax.f32 %v1046, 0.0
      %v1761 = vmax.f32 %v1215, 0.0
      %v1762 = vmax.f32 %v1384, 0.0
      %v1763 = vmax.f32 %v1553, 0.0
      %v1764 = vmax.f32 %v1048, 0.0
      %v1765 = vmax.f32 %v1217, 0.0
      %v1766 = vmax.f32 %v1386, 0.0
      %v1767 = vmax.f32 %v1555, 0.0
      %v1768 = vmax.f32 %v1051, 0.0
      %v1769 = vmax.f32 %v1220, 0.0
      %v1770 = vmax.f32 %v1389, 0.0
      %v1771 = vmax.f32 %v1558, 0.0
      %v1772 = vmax.f32 %v1053, 0.0
      %v1773 = vmax.f32 %v1222, 0.0
      %v1774 = vmax.f32 %v1391, 0.0
      %v1775 = vmax.f32 %v1560, 0.0
      %v1776 = vmax.f32 %v1056, 0.0
      %v1777 = vmax.f32 %v1225, 0.0
      %v1778 = vmax.f32 %v1394, 0.0
      %v1779 = vmax.f32 %v1563, 0.0
      %v1780 = vmax.f32 %v1058, 0.0
      %v1781 = vmax.f32 %v1227, 0.0
      %v1782 = vmax.f32 %v1396, 0.0
      %v1783 = vmax.f32 %v1565, 0.0
      %v1784 = vmax.f32 %v1061, 0.0
      %v1785 = vmax.f32 %v1230, 0.0
      %v1786 = vmax.f32 %v1399, 0.0
      %v1787 = vmax.f32 %v1568, 0.0
      %v1788 = vmax.f32 %v1063, 0.0
      %v1789 = vmax.f32 %v1232, 0.0
      %v1790 = vmax.f32 %v1401, 0.0
      %v1791 = vmax.f32 %v1570, 0.0
      %v1792 = vmax.f32 %v1066, 0.0
      %v1793 = vmax.f32 %v1235, 0.0
      %v1794 = vmax.f32 %v1404, 0.0
      %v1795 = vmax.f32 %v1573, 0.0
      %v1796 = vmax.f32 %v1068, 0.0
      %v1797 = vmax.f32 %v1237, 0.0
      %v1798 = vmax.f32 %v1406, 0.0
      %v1799 = vmax.f32 %v1575, 0.0
      %v1800 = vmax.f32 %v1071, 0.0
      %v1801 = vmax.f32 %v1240, 0.0
      %v1802 = vmax.f32 %v1409, 0.0
      %v1803 = vmax.f32 %v1578, 0.0
      %v1804 = vmax.f32 %v1073, 0.0
      %v1805 = vmax.f32 %v1242, 0.0
      %v1806 = vmax.f32 %v1411, 0.0
      %v1807 = vmax.f32 %v1580, 0.0
      %v1808 = vmax.f32 %v1076, 0.0
      %v1809 = vmax.f32 %v1245, 0.0
      %v1810 = vmax.f32 %v1414, 0.0
      %v1811 = vmax.f32 %v1583, 0.0
      %v1812 = vmax.f32 %v1078, 0.0
      %v1813 = vmax.f32 %v1247, 0.0
      %v1814 = vmax.f32 %v1416, 0.0
      %v1815 = vmax.f32 %v1585, 0.0
      %v1816 = vmax.f32 %v1081, 0.0
      %v1817 = vmax.f32 %v1250, 0.0
      %v1818 = vmax.f32 %v1419, 0.0
      %v1819 = vmax.f32 %v1588, 0.0
      %v1820 = vmax.f32 %v1083, 0.0
      %v1821 = vmax.f32 %v1252, 0.0
      %v1822 = vmax.f32 %v1421, 0.0
      %v1823 = vmax.f32 %v1590, 0.0
      %v1824 = vmax.f32 %v1086, 0.0
      %v1825 = vmax.f32 %v1255, 0.0
      %v1826 = vmax.f32 %v1424, 0.0
      %v1827 = vmax.f32 %v1593, 0.0
      %v1828 = vmax.f32 %v1088, 0.0
      %v1829 = vmax.f32 %v1257, 0.0
      %v1830 = vmax.f32 %v1426, 0.0
      %v1831 = vmax.f32 %v1595, 0.0
      %v1832 = vmax.f32 %v1091, 0.0
      %v1833 = vmax.f32 %v1260, 0.0
      %v1834 = vmax.f32 %v1429, 0.0
      %v1835 = vmax.f32 %v1598, 0.0
      %v1836 = vmax.f32 %v1093, 0.0
      %v1837 = vmax.f32 %v1262, 0.0
      %v1838 = vmax.f32 %v1431, 0.0
      %v1839 = vmax.f32 %v1600, 0.0
      %v1840 = vmax.f32 %v1096, 0.0
      %v1841 = vmax.f32 %v1265, 0.0
      %v1842 = vmax.f32 %v1434, 0.0
      %v1843 = vmax.f32 %v1603, 0.0
      %v1844 = vmax.f32 %v1098, 0.0
      %v1845 = vmax.f32 %v1267, 0.0
      %v1846 = vmax.f32 %v1436, 0.0
      %v1847 = vmax.f32 %v1605, 0.0
      %v1848 = vmax.f32 %v1101, 0.0
      %v1849 = vmax.f32 %v1270, 0.0
      %v1850 = vmax.f32 %v1439, 0.0
      %v1851 = vmax.f32 %v1608, 0.0
      %v1852 = vmax.f32 %v1103, 0.0
      %v1853 = vmax.f32 %v1272, 0.0
      %v1854 = vmax.f32 %v1441, 0.0
      %v1855 = vmax.f32 %v1610, 0.0
      %v1856 = vmax.f32 %v1106, 0.0
      %v1857 = vmax.f32 %v1275, 0.0
      %v1858 = vmax.f32 %v1444, 0.0
      %v1859 = vmax.f32 %v1613, 0.0
      %v1860 = vmax.f32 %v1108, 0.0
      %v1861 = vmax.f32 %v1277, 0.0
      %v1862 = vmax.f32 %v1446, 0.0
      %v1863 = vmax.f32 %v1615, 0.0
      %v1864 = vmax.f32 %v1111, 0.0
      %v1865 = vmax.f32 %v1280, 0.0
      %v1866 = vmax.f32 %v1449, 0.0
      %v1867 = vmax.f32 %v1618, 0.0
      %v1868 = vmax.f32 %v1113, 0.0
      %v1869 = vmax.f32 %v1282, 0.0
      %v1870 = vmax.f32 %v1451, 0.0
      %v1871 = vmax.f32 %v1620, 0.0
      %v1872 = vmax.f32 %v1116, 0.0
      %v1873 = vmax.f32 %v1285, 0.0
      %v1874 = vmax.f32 %v1454, 0.0
      %v1875 = vmax.f32 %v1623, 0.0
      %v1876 = vmax.f32 %v1118, 0.0
      %v1877 = vmax.f32 %v1287, 0.0
      %v1878 = vmax.f32 %v1456, 0.0
      %v1879 = vmax.f32 %v1625, 0.0
      %v1880 = vmax.f32 %v1121, 0.0
      %v1881 = vmax.f32 %v1290, 0.0
      %v1882 = vmax.f32 %v1459, 0.0
      %v1883 = vmax.f32 %v1628, 0.0
      %v1884 = vmax.f32 %v1123, 0.0
      %v1885 = vmax.f32 %v1292, 0.0
      %v1886 = vmax.f32 %v1461, 0.0
      %v1887 = vmax.f32 %v1630, 0.0
      %v1888 = vpack.c.bf16 %v1636, %v1632
      %v1889 = vpack.c.bf16 %v1637, %v1633
      %v1890 = vpack.c.bf16 %v1638, %v1634
      %v1891 = vpack.c.bf16 %v1639, %v1635
      %v1892 = vpack.c.bf16 %v1644, %v1640
      %v1893 = vpack.c.bf16 %v1645, %v1641
      %v1894 = vpack.c.bf16 %v1646, %v1642
      %v1895 = vpack.c.bf16 %v1647, %v1643
      %v1896 = vpack.c.bf16 %v1652, %v1648
      %v1897 = vpack.c.bf16 %v1653, %v1649
      %v1898 = vpack.c.bf16 %v1654, %v1650
      %v1899 = vpack.c.bf16 %v1655, %v1651
      %v1900 = vpack.c.bf16 %v1660, %v1656
      %v1901 = vpack.c.bf16 %v1661, %v1657
      %v1902 = vpack.c.bf16 %v1662, %v1658
      %v1903 = vpack.c.bf16 %v1663, %v1659
      %v1904 = vpack.c.bf16 %v1668, %v1664
      %v1905 = vpack.c.bf16 %v1669, %v1665
      %v1906 = vpack.c.bf16 %v1670, %v1666
      %v1907 = vpack.c.bf16 %v1671, %v1667
      %v1908 = vpack.c.bf16 %v1676, %v1672
      %v1909 = vpack.c.bf16 %v1677, %v1673
      %v1910 = vpack.c.bf16 %v1678, %v1674
      %v1911 = vpack.c.bf16 %v1679, %v1675
      %v1912 = vpack.c.bf16 %v1684, %v1680
      %v1913 = vpack.c.bf16 %v1685, %v1681
      %v1914 = vpack.c.bf16 %v1686, %v1682
      %v1915 = vpack.c.bf16 %v1687, %v1683
      %v1916 = vpack.c.bf16 %v1692, %v1688
      %v1917 = vpack.c.bf16 %v1693, %v1689
      %v1918 = vpack.c.bf16 %v1694, %v1690
      %v1919 = vpack.c.bf16 %v1695, %v1691
      %v1920 = vpack.c.bf16 %v1700, %v1696
      %v1921 = vpack.c.bf16 %v1701, %v1697
      %v1922 = vpack.c.bf16 %v1702, %v1698
      %v1923 = vpack.c.bf16 %v1703, %v1699
      %v1924 = vpack.c.bf16 %v1708, %v1704
      %v1925 = vpack.c.bf16 %v1709, %v1705
      %v1926 = vpack.c.bf16 %v1710, %v1706
      %v1927 = vpack.c.bf16 %v1711, %v1707
      %v1928 = vpack.c.bf16 %v1716, %v1712
      %v1929 = vpack.c.bf16 %v1717, %v1713
      %v1930 = vpack.c.bf16 %v1718, %v1714
      %v1931 = vpack.c.bf16 %v1719, %v1715
      %v1932 = vpack.c.bf16 %v1724, %v1720
      %v1933 = vpack.c.bf16 %v1725, %v1721
      %v1934 = vpack.c.bf16 %v1726, %v1722
      %v1935 = vpack.c.bf16 %v1727, %v1723
      %v1936 = vpack.c.bf16 %v1732, %v1728
      %v1937 = vpack.c.bf16 %v1733, %v1729
      %v1938 = vpack.c.bf16 %v1734, %v1730
      %v1939 = vpack.c.bf16 %v1735, %v1731
      %v1940 = vpack.c.bf16 %v1740, %v1736
      %v1941 = vpack.c.bf16 %v1741, %v1737
      %v1942 = vpack.c.bf16 %v1742, %v1738
      %v1943 = vpack.c.bf16 %v1743, %v1739
      %v1944 = vpack.c.bf16 %v1748, %v1744
      %v1945 = vpack.c.bf16 %v1749, %v1745
      %v1946 = vpack.c.bf16 %v1750, %v1746
      %v1947 = vpack.c.bf16 %v1751, %v1747
      %v1948 = vpack.c.bf16 %v1756, %v1752
      %v1949 = vpack.c.bf16 %v1757, %v1753
      %v1950 = vpack.c.bf16 %v1758, %v1754
      %v1951 = vpack.c.bf16 %v1759, %v1755
      %v1952 = vpack.c.bf16 %v1764, %v1760
      %v1953 = vpack.c.bf16 %v1765, %v1761
      %v1954 = vpack.c.bf16 %v1766, %v1762
      %v1955 = vpack.c.bf16 %v1767, %v1763
      %v1956 = vpack.c.bf16 %v1772, %v1768
      %v1957 = vpack.c.bf16 %v1773, %v1769
      %v1958 = vpack.c.bf16 %v1774, %v1770
      %v1959 = vpack.c.bf16 %v1775, %v1771
      %v1960 = vpack.c.bf16 %v1780, %v1776
      %v1961 = vpack.c.bf16 %v1781, %v1777
      %v1962 = vpack.c.bf16 %v1782, %v1778
      %v1963 = vpack.c.bf16 %v1783, %v1779
      %v1964 = vpack.c.bf16 %v1788, %v1784
      %v1965 = vpack.c.bf16 %v1789, %v1785
      %v1966 = vpack.c.bf16 %v1790, %v1786
      %v1967 = vpack.c.bf16 %v1791, %v1787
      %v1968 = vpack.c.bf16 %v1796, %v1792
      %v1969 = vpack.c.bf16 %v1797, %v1793
      %v1970 = vpack.c.bf16 %v1798, %v1794
      %v1971 = vpack.c.bf16 %v1799, %v1795
      %v1972 = vpack.c.bf16 %v1804, %v1800
      %v1973 = vpack.c.bf16 %v1805, %v1801
      %v1974 = vpack.c.bf16 %v1806, %v1802
      %v1975 = vpack.c.bf16 %v1807, %v1803
      %v1976 = vpack.c.bf16 %v1812, %v1808
      %v1977 = vpack.c.bf16 %v1813, %v1809
      %v1978 = vpack.c.bf16 %v1814, %v1810
      %v1979 = vpack.c.bf16 %v1815, %v1811
      %v1980 = vpack.c.bf16 %v1820, %v1816
      %v1981 = vpack.c.bf16 %v1821, %v1817
      %v1982 = vpack.c.bf16 %v1822, %v1818
      %v1983 = vpack.c.bf16 %v1823, %v1819
      %v1984 = vpack.c.bf16 %v1828, %v1824
      %v1985 = vpack.c.bf16 %v1829, %v1825
      %v1986 = vpack.c.bf16 %v1830, %v1826
      %v1987 = vpack.c.bf16 %v1831, %v1827
      %v1988 = vpack.c.bf16 %v1836, %v1832
      %v1989 = vpack.c.bf16 %v1837, %v1833
      %v1990 = vpack.c.bf16 %v1838, %v1834
      %v1991 = vpack.c.bf16 %v1839, %v1835
      %v1992 = vpack.c.bf16 %v1844, %v1840
      %v1993 = vpack.c.bf16 %v1845, %v1841
      %v1994 = vpack.c.bf16 %v1846, %v1842
      %v1995 = vpack.c.bf16 %v1847, %v1843
      %v1996 = vpack.c.bf16 %v1852, %v1848
      %v1997 = vpack.c.bf16 %v1853, %v1849
      %v1998 = vpack.c.bf16 %v1854, %v1850
      %v1999 = vpack.c.bf16 %v1855, %v1851
      %v2000 = vpack.c.bf16 %v1860, %v1856
      %v2001 = vpack.c.bf16 %v1861, %v1857
      %v2002 = vpack.c.bf16 %v1862, %v1858
      %v2003 = vpack.c.bf16 %v1863, %v1859
      %v2004 = vpack.c.bf16 %v1868, %v1864
      %v2005 = vpack.c.bf16 %v1869, %v1865
      %v2006 = vpack.c.bf16 %v1870, %v1866
      %v2007 = vpack.c.bf16 %v1871, %v1867
      %v2008 = vpack.c.bf16 %v1876, %v1872
      %v2009 = vpack.c.bf16 %v1877, %v1873
      %v2010 = vpack.c.bf16 %v1878, %v1874
      %v2011 = vpack.c.bf16 %v1879, %v1875
      %v2012 = vpack.c.bf16 %v1884, %v1880
      %v2013 = vpack.c.bf16 %v1885, %v1881
      %v2014 = vpack.c.bf16 %v1886, %v1882
      %v2015 = vpack.c.bf16 %v1887, %v1883
      %v2016 = vld [vmem:[%s3] sm:$0xff]
      %v2017 = vld [vmem:[%s3 + $0x8] sm:$0xff]
      %v2018 = vld [vmem:[%s3 + $0x10] sm:$0xff]
      %v2019 = vld [vmem:[%s3 + $0x18] sm:$0xff]
      %v2020 = vld [vmem:[%s3 + $0x20] sm:$0xff]
      %v2021 = vld [vmem:[%s3 + $0x28] sm:$0xff]
      %v2022 = vld [vmem:[%s3 + $0x30] sm:$0xff]
      %v2023 = vld [vmem:[%s3 + $0x38] sm:$0xff]
      %v2024 = vld [vmem:[%s3 + $0x40] sm:$0xff]
      %v2025 = vld [vmem:[%s3 + $0x48] sm:$0xff]
      %v2026 = vld [vmem:[%s3 + $0x50] sm:$0xff]
      %v2027 = vld [vmem:[%s3 + $0x58] sm:$0xff]
      %v2028 = vld [vmem:[%s3 + $0x60] sm:$0xff]
      %v2029 = vld [vmem:[%s3 + $0x68] sm:$0xff]
      %v2030 = vld [vmem:[%s3 + $0x70] sm:$0xff]
      %v2031 = vld [vmem:[%s3 + $0x78] sm:$0xff]
      %v2032 = vld [vmem:[%s3 + $0x80] sm:$0xff]
      %v2033 = vld [vmem:[%s3 + $0x88] sm:$0xff]
      %v2034 = vld [vmem:[%s3 + $0x90] sm:$0xff]
      %v2035 = vld [vmem:[%s3 + $0x98] sm:$0xff]
      %v2036 = vld [vmem:[%s3 + $0xa0] sm:$0xff]
      %v2037 = vld [vmem:[%s3 + $0xa8] sm:$0xff]
      %v2038 = vld [vmem:[%s3 + $0xb0] sm:$0xff]
      %v2039 = vld [vmem:[%s3 + $0xb8] sm:$0xff]
      %v2040 = vld [vmem:[%s3 + $0xc0] sm:$0xff]
      %v2041 = vld [vmem:[%s3 + $0xc8] sm:$0xff]
      %v2042 = vld [vmem:[%s3 + $0xd0] sm:$0xff]
      %v2043 = vld [vmem:[%s3 + $0xd8] sm:$0xff]
      %v2044 = vld [vmem:[%s3 + $0xe0] sm:$0xff]
      %v2045 = vld [vmem:[%s3 + $0xe8] sm:$0xff]
      %v2046 = vld [vmem:[%s3 + $0xf0] sm:$0xff]
      %v2047 = vld [vmem:[%s3 + $0xf8] sm:$0xff]
      %v2048 = vld [vmem:[%s3 + $0x100] sm:$0xff]
      %v2049 = vld [vmem:[%s3 + $0x108] sm:$0xff]
      %v2050 = vld [vmem:[%s3 + $0x110] sm:$0xff]
      %v2051 = vld [vmem:[%s3 + $0x118] sm:$0xff]
      %v2052 = vld [vmem:[%s3 + $0x120] sm:$0xff]
      %v2053 = vld [vmem:[%s3 + $0x128] sm:$0xff]
      %v2054 = vld [vmem:[%s3 + $0x130] sm:$0xff]
      %v2055 = vld [vmem:[%s3 + $0x138] sm:$0xff]
      %v2056 = vld [vmem:[%s3 + $0x140] sm:$0xff]
      %v2057 = vld [vmem:[%s3 + $0x148] sm:$0xff]
      %v2058 = vld [vmem:[%s3 + $0x150] sm:$0xff]
      %v2059 = vld [vmem:[%s3 + $0x158] sm:$0xff]
      %v2060 = vld [vmem:[%s3 + $0x160] sm:$0xff]
      %v2061 = vld [vmem:[%s3 + $0x168] sm:$0xff]
      %v2062 = vld [vmem:[%s3 + $0x170] sm:$0xff]
      %v2063 = vld [vmem:[%s3 + $0x178] sm:$0xff]
      %v2064 = vld [vmem:[%s3 + $0x180] sm:$0xff]
      %v2065 = vld [vmem:[%s3 + $0x188] sm:$0xff]
      %v2066 = vld [vmem:[%s3 + $0x190] sm:$0xff]
      %v2067 = vld [vmem:[%s3 + $0x198] sm:$0xff]
      %v2068 = vld [vmem:[%s3 + $0x1a0] sm:$0xff]
      %v2069 = vld [vmem:[%s3 + $0x1a8] sm:$0xff]
      %v2070 = vld [vmem:[%s3 + $0x1b0] sm:$0xff]
      %v2071 = vld [vmem:[%s3 + $0x1b8] sm:$0xff]
      %v2072 = vld [vmem:[%s3 + $0x1c0] sm:$0xff]
      %v2073 = vld [vmem:[%s3 + $0x1c8] sm:$0xff]
      %v2074 = vld [vmem:[%s3 + $0x1d0] sm:$0xff]
      %v2075 = vld [vmem:[%s3 + $0x1d8] sm:$0xff]
      %v2076 = vld [vmem:[%s3 + $0x1e0] sm:$0xff]
      %v2077 = vld [vmem:[%s3 + $0x1e8] sm:$0xff]
      %v2078 = vld [vmem:[%s3 + $0x1f0] sm:$0xff]
      %v2079 = vld [vmem:[%s3 + $0x1f8] sm:$0xff]
      %v2080 = vld [vmem:[%s3 + $0x200] sm:$0xff]
      %v2081 = vld [vmem:[%s3 + $0x208] sm:$0xff]
      %v2082 = vld [vmem:[%s3 + $0x210] sm:$0xff]
      %v2083 = vld [vmem:[%s3 + $0x218] sm:$0xff]
      %v2084 = vld [vmem:[%s3 + $0x220] sm:$0xff]
      %v2085 = vld [vmem:[%s3 + $0x228] sm:$0xff]
      %v2086 = vld [vmem:[%s3 + $0x230] sm:$0xff]
      %v2087 = vld [vmem:[%s3 + $0x238] sm:$0xff]
      %v2088 = vld [vmem:[%s3 + $0x240] sm:$0xff]
      %v2089 = vld [vmem:[%s3 + $0x248] sm:$0xff]
      %v2090 = vld [vmem:[%s3 + $0x250] sm:$0xff]
      %v2091 = vld [vmem:[%s3 + $0x258] sm:$0xff]
      %v2092 = vld [vmem:[%s3 + $0x260] sm:$0xff]
      %v2093 = vld [vmem:[%s3 + $0x268] sm:$0xff]
      %v2094 = vld [vmem:[%s3 + $0x270] sm:$0xff]
      %v2095 = vld [vmem:[%s3 + $0x278] sm:$0xff]
      %v2096 = vld [vmem:[%s3 + $0x280] sm:$0xff]
      %v2097 = vld [vmem:[%s3 + $0x288] sm:$0xff]
      %v2098 = vld [vmem:[%s3 + $0x290] sm:$0xff]
      %v2099 = vld [vmem:[%s3 + $0x298] sm:$0xff]
      %v2100 = vld [vmem:[%s3 + $0x2a0] sm:$0xff]
      %v2101 = vld [vmem:[%s3 + $0x2a8] sm:$0xff]
      %v2102 = vld [vmem:[%s3 + $0x2b0] sm:$0xff]
      %v2103 = vld [vmem:[%s3 + $0x2b8] sm:$0xff]
      %v2104 = vld [vmem:[%s3 + $0x2c0] sm:$0xff]
      %v2105 = vld [vmem:[%s3 + $0x2c8] sm:$0xff]
      %v2106 = vld [vmem:[%s3 + $0x2d0] sm:$0xff]
      %v2107 = vld [vmem:[%s3 + $0x2d8] sm:$0xff]
      %v2108 = vld [vmem:[%s3 + $0x2e0] sm:$0xff]
      %v2109 = vld [vmem:[%s3 + $0x2e8] sm:$0xff]
      %v2110 = vld [vmem:[%s3 + $0x2f0] sm:$0xff]
      %v2111 = vld [vmem:[%s3 + $0x2f8] sm:$0xff]
      %v2112 = vld [vmem:[%s3 + $0x300] sm:$0xff]
      %v2113 = vld [vmem:[%s3 + $0x308] sm:$0xff]
      %v2114 = vld [vmem:[%s3 + $0x310] sm:$0xff]
      %v2115 = vld [vmem:[%s3 + $0x318] sm:$0xff]
      %v2116 = vld [vmem:[%s3 + $0x320] sm:$0xff]
      %v2117 = vld [vmem:[%s3 + $0x328] sm:$0xff]
      %v2118 = vld [vmem:[%s3 + $0x330] sm:$0xff]
      %v2119 = vld [vmem:[%s3 + $0x338] sm:$0xff]
      %v2120 = vld [vmem:[%s3 + $0x340] sm:$0xff]
      %v2121 = vld [vmem:[%s3 + $0x348] sm:$0xff]
      %v2122 = vld [vmem:[%s3 + $0x350] sm:$0xff]
      %v2123 = vld [vmem:[%s3 + $0x358] sm:$0xff]
      %v2124 = vld [vmem:[%s3 + $0x360] sm:$0xff]
      %v2125 = vld [vmem:[%s3 + $0x368] sm:$0xff]
      %v2126 = vld [vmem:[%s3 + $0x370] sm:$0xff]
      %v2127 = vld [vmem:[%s3 + $0x378] sm:$0xff]
      %v2128 = vld [vmem:[%s3 + $0x380] sm:$0xff]
      %v2129 = vld [vmem:[%s3 + $0x388] sm:$0xff]
      %v2130 = vld [vmem:[%s3 + $0x390] sm:$0xff]
      %v2131 = vld [vmem:[%s3 + $0x398] sm:$0xff]
      %v2132 = vld [vmem:[%s3 + $0x3a0] sm:$0xff]
      %v2133 = vld [vmem:[%s3 + $0x3a8] sm:$0xff]
      %v2134 = vld [vmem:[%s3 + $0x3b0] sm:$0xff]
      %v2135 = vld [vmem:[%s3 + $0x3b8] sm:$0xff]
      %v2136 = vld [vmem:[%s3 + $0x3c0] sm:$0xff]
      %v2137 = vld [vmem:[%s3 + $0x3c8] sm:$0xff]
      %v2138 = vld [vmem:[%s3 + $0x3d0] sm:$0xff]
      %v2139 = vld [vmem:[%s3 + $0x3d8] sm:$0xff]
      %v2140 = vld [vmem:[%s3 + $0x3e0] sm:$0xff]
      %v2141 = vld [vmem:[%s3 + $0x3e8] sm:$0xff]
      %v2142 = vld [vmem:[%s3 + $0x3f0] sm:$0xff]
      %v2143 = vld [vmem:[%s3 + $0x3f8] sm:$0xff]
      %v2144 = vld [vmem:[%s4] sm:$0xf]
      %v2146 = vperm.slane %v2144, 0
      %v2147 = vperm.slane %v2144, 1
      %v2148 = vperm.slane %v2144, 2
      %v2149 = vperm.slane %v2144, 3
      %v2282 = vunpack.c.l.b16 %v2016
      %v2283 = vunpack.c.h.b16 %v2016
      %v2284 = vunpack.c.l.b16 %v2017
      %v2285 = vunpack.c.h.b16 %v2017
      %v2286 = vunpack.c.l.b16 %v2018
      %v2287 = vunpack.c.h.b16 %v2018
      %v2288 = vunpack.c.l.b16 %v2019
      %v2289 = vunpack.c.h.b16 %v2019
      %v2290 = vunpack.c.l.b16 %v2020
      %v2291 = vunpack.c.h.b16 %v2020
      %v2292 = vunpack.c.l.b16 %v2021
      %v2293 = vunpack.c.h.b16 %v2021
      %v2294 = vunpack.c.l.b16 %v2022
      %v2295 = vunpack.c.h.b16 %v2022
      %v2296 = vunpack.c.l.b16 %v2023
      %v2297 = vunpack.c.h.b16 %v2023
      %v2298 = vunpack.c.l.b16 %v2024
      %v2299 = vunpack.c.h.b16 %v2024
      %v2300 = vunpack.c.l.b16 %v2025
      %v2301 = vunpack.c.h.b16 %v2025
      %v2302 = vunpack.c.l.b16 %v2026
      %v2303 = vunpack.c.h.b16 %v2026
      %v2304 = vunpack.c.l.b16 %v2027
      %v2305 = vunpack.c.h.b16 %v2027
      %v2306 = vunpack.c.l.b16 %v2028
      %v2307 = vunpack.c.h.b16 %v2028
      %v2308 = vunpack.c.l.b16 %v2029
      %v2309 = vunpack.c.h.b16 %v2029
      %v2310 = vunpack.c.l.b16 %v2030
      %v2311 = vunpack.c.h.b16 %v2030
      %v2312 = vunpack.c.l.b16 %v2031
      %v2313 = vunpack.c.h.b16 %v2031
      %v2314 = vunpack.c.l.b16 %v2032
      %v2315 = vunpack.c.h.b16 %v2032
      %v2316 = vunpack.c.l.b16 %v2033
      %v2317 = vunpack.c.h.b16 %v2033
      %v2318 = vunpack.c.l.b16 %v2034
      %v2319 = vunpack.c.h.b16 %v2034
      %v2320 = vunpack.c.l.b16 %v2035
      %v2321 = vunpack.c.h.b16 %v2035
      %v2322 = vunpack.c.l.b16 %v2036
      %v2323 = vunpack.c.h.b16 %v2036
      %v2324 = vunpack.c.l.b16 %v2037
      %v2325 = vunpack.c.h.b16 %v2037
      %v2326 = vunpack.c.l.b16 %v2038
      %v2327 = vunpack.c.h.b16 %v2038
      %v2328 = vunpack.c.l.b16 %v2039
      %v2329 = vunpack.c.h.b16 %v2039
      %v2330 = vunpack.c.l.b16 %v2040
      %v2331 = vunpack.c.h.b16 %v2040
      %v2332 = vunpack.c.l.b16 %v2041
      %v2333 = vunpack.c.h.b16 %v2041
      %v2334 = vunpack.c.l.b16 %v2042
      %v2335 = vunpack.c.h.b16 %v2042
      %v2336 = vunpack.c.l.b16 %v2043
      %v2337 = vunpack.c.h.b16 %v2043
      %v2338 = vunpack.c.l.b16 %v2044
      %v2339 = vunpack.c.h.b16 %v2044
      %v2340 = vunpack.c.l.b16 %v2045
      %v2341 = vunpack.c.h.b16 %v2045
      %v2342 = vunpack.c.l.b16 %v2046
      %v2343 = vunpack.c.h.b16 %v2046
      %v2344 = vunpack.c.l.b16 %v2047
      %v2345 = vunpack.c.h.b16 %v2047
      %v2346 = vunpack.c.l.b16 %v2048
      %v2347 = vunpack.c.h.b16 %v2048
      %v2348 = vunpack.c.l.b16 %v2049
      %v2349 = vunpack.c.h.b16 %v2049
      %v2350 = vunpack.c.l.b16 %v2050
      %v2351 = vunpack.c.h.b16 %v2050
      %v2352 = vunpack.c.l.b16 %v2051
      %v2353 = vunpack.c.h.b16 %v2051
      %v2354 = vunpack.c.l.b16 %v2052
      %v2355 = vunpack.c.h.b16 %v2052
      %v2356 = vunpack.c.l.b16 %v2053
      %v2357 = vunpack.c.h.b16 %v2053
      %v2358 = vunpack.c.l.b16 %v2054
      %v2359 = vunpack.c.h.b16 %v2054
      %v2360 = vunpack.c.l.b16 %v2055
      %v2361 = vunpack.c.h.b16 %v2055
      %v2362 = vunpack.c.l.b16 %v2056
      %v2363 = vunpack.c.h.b16 %v2056
      %v2364 = vunpack.c.l.b16 %v2057
      %v2365 = vunpack.c.h.b16 %v2057
      %v2366 = vunpack.c.l.b16 %v2058
      %v2367 = vunpack.c.h.b16 %v2058
      %v2368 = vunpack.c.l.b16 %v2059
      %v2369 = vunpack.c.h.b16 %v2059
      %v2370 = vunpack.c.l.b16 %v2060
      %v2371 = vunpack.c.h.b16 %v2060
      %v2372 = vunpack.c.l.b16 %v2061
      %v2373 = vunpack.c.h.b16 %v2061
      %v2374 = vunpack.c.l.b16 %v2062
      %v2375 = vunpack.c.h.b16 %v2062
      %v2376 = vunpack.c.l.b16 %v2063
      %v2377 = vunpack.c.h.b16 %v2063
      %v2378 = vunpack.c.l.b16 %v2064
      %v2379 = vunpack.c.h.b16 %v2064
      %v2380 = vunpack.c.l.b16 %v2065
      %v2381 = vunpack.c.h.b16 %v2065
      %v2382 = vunpack.c.l.b16 %v2066
      %v2383 = vunpack.c.h.b16 %v2066
      %v2384 = vunpack.c.l.b16 %v2067
      %v2385 = vunpack.c.h.b16 %v2067
      %v2386 = vunpack.c.l.b16 %v2068
      %v2387 = vunpack.c.h.b16 %v2068
      %v2388 = vunpack.c.l.b16 %v2069
      %v2389 = vunpack.c.h.b16 %v2069
      %v2390 = vunpack.c.l.b16 %v2070
      %v2391 = vunpack.c.h.b16 %v2070
      %v2392 = vunpack.c.l.b16 %v2071
      %v2393 = vunpack.c.h.b16 %v2071
      %v2394 = vunpack.c.l.b16 %v2072
      %v2395 = vunpack.c.h.b16 %v2072
      %v2396 = vunpack.c.l.b16 %v2073
      %v2397 = vunpack.c.h.b16 %v2073
      %v2398 = vunpack.c.l.b16 %v2074
      %v2399 = vunpack.c.h.b16 %v2074
      %v2400 = vunpack.c.l.b16 %v2075
      %v2401 = vunpack.c.h.b16 %v2075
      %v2402 = vunpack.c.l.b16 %v2076
      %v2403 = vunpack.c.h.b16 %v2076
      %v2404 = vunpack.c.l.b16 %v2077
      %v2405 = vunpack.c.h.b16 %v2077
      %v2406 = vunpack.c.l.b16 %v2078
      %v2407 = vunpack.c.h.b16 %v2078
      %v2408 = vunpack.c.l.b16 %v2079
      %v2409 = vunpack.c.h.b16 %v2079
      %v2410 = vunpack.c.l.b16 %v2080
      %v2411 = vunpack.c.h.b16 %v2080
      %v2412 = vunpack.c.l.b16 %v2081
      %v2413 = vunpack.c.h.b16 %v2081
      %v2414 = vunpack.c.l.b16 %v2082
      %v2415 = vunpack.c.h.b16 %v2082
      %v2416 = vunpack.c.l.b16 %v2083
      %v2417 = vunpack.c.h.b16 %v2083
      %v2418 = vunpack.c.l.b16 %v2084
      %v2419 = vunpack.c.h.b16 %v2084
      %v2420 = vunpack.c.l.b16 %v2085
      %v2421 = vunpack.c.h.b16 %v2085
      %v2422 = vunpack.c.l.b16 %v2086
      %v2423 = vunpack.c.h.b16 %v2086
      %v2424 = vunpack.c.l.b16 %v2087
      %v2425 = vunpack.c.h.b16 %v2087
      %v2426 = vunpack.c.l.b16 %v2088
      %v2427 = vunpack.c.h.b16 %v2088
      %v2428 = vunpack.c.l.b16 %v2089
      %v2429 = vunpack.c.h.b16 %v2089
      %v2430 = vunpack.c.l.b16 %v2090
      %v2431 = vunpack.c.h.b16 %v2090
      %v2432 = vunpack.c.l.b16 %v2091
      %v2433 = vunpack.c.h.b16 %v2091
      %v2434 = vunpack.c.l.b16 %v2092
      %v2435 = vunpack.c.h.b16 %v2092
      %v2436 = vunpack.c.l.b16 %v2093
      %v2437 = vunpack.c.h.b16 %v2093
      %v2438 = vunpack.c.l.b16 %v2094
      %v2439 = vunpack.c.h.b16 %v2094
      %v2440 = vunpack.c.l.b16 %v2095
      %v2441 = vunpack.c.h.b16 %v2095
      %v2442 = vunpack.c.l.b16 %v2096
      %v2443 = vunpack.c.h.b16 %v2096
      %v2444 = vunpack.c.l.b16 %v2097
      %v2445 = vunpack.c.h.b16 %v2097
      %v2446 = vunpack.c.l.b16 %v2098
      %v2447 = vunpack.c.h.b16 %v2098
      %v2448 = vunpack.c.l.b16 %v2099
      %v2449 = vunpack.c.h.b16 %v2099
      %v2450 = vunpack.c.l.b16 %v2100
      %v2451 = vunpack.c.h.b16 %v2100
      %v2452 = vunpack.c.l.b16 %v2101
      %v2453 = vunpack.c.h.b16 %v2101
      %v2454 = vunpack.c.l.b16 %v2102
      %v2455 = vunpack.c.h.b16 %v2102
      %v2456 = vunpack.c.l.b16 %v2103
      %v2457 = vunpack.c.h.b16 %v2103
      %v2458 = vunpack.c.l.b16 %v2104
      %v2459 = vunpack.c.h.b16 %v2104
      %v2460 = vunpack.c.l.b16 %v2105
      %v2461 = vunpack.c.h.b16 %v2105
      %v2462 = vunpack.c.l.b16 %v2106
      %v2463 = vunpack.c.h.b16 %v2106
      %v2464 = vunpack.c.l.b16 %v2107
      %v2465 = vunpack.c.h.b16 %v2107
      %v2466 = vunpack.c.l.b16 %v2108
      %v2467 = vunpack.c.h.b16 %v2108
      %v2468 = vunpack.c.l.b16 %v2109
      %v2469 = vunpack.c.h.b16 %v2109
      %v2470 = vunpack.c.l.b16 %v2110
      %v2471 = vunpack.c.h.b16 %v2110
      %v2472 = vunpack.c.l.b16 %v2111
      %v2473 = vunpack.c.h.b16 %v2111
      %v2474 = vunpack.c.l.b16 %v2112
      %v2475 = vunpack.c.h.b16 %v2112
      %v2476 = vunpack.c.l.b16 %v2113
      %v2477 = vunpack.c.h.b16 %v2113
      %v2478 = vunpack.c.l.b16 %v2114
      %v2479 = vunpack.c.h.b16 %v2114
      %v2480 = vunpack.c.l.b16 %v2115
      %v2481 = vunpack.c.h.b16 %v2115
      %v2482 = vunpack.c.l.b16 %v2116
      %v2483 = vunpack.c.h.b16 %v2116
      %v2484 = vunpack.c.l.b16 %v2117
      %v2485 = vunpack.c.h.b16 %v2117
      %v2486 = vunpack.c.l.b16 %v2118
      %v2487 = vunpack.c.h.b16 %v2118
      %v2488 = vunpack.c.l.b16 %v2119
      %v2489 = vunpack.c.h.b16 %v2119
      %v2490 = vunpack.c.l.b16 %v2120
      %v2491 = vunpack.c.h.b16 %v2120
      %v2492 = vunpack.c.l.b16 %v2121
      %v2493 = vunpack.c.h.b16 %v2121
      %v2494 = vunpack.c.l.b16 %v2122
      %v2495 = vunpack.c.h.b16 %v2122
      %v2496 = vunpack.c.l.b16 %v2123
      %v2497 = vunpack.c.h.b16 %v2123
      %v2498 = vunpack.c.l.b16 %v2124
      %v2499 = vunpack.c.h.b16 %v2124
      %v2500 = vunpack.c.l.b16 %v2125
      %v2501 = vunpack.c.h.b16 %v2125
      %v2502 = vunpack.c.l.b16 %v2126
      %v2503 = vunpack.c.h.b16 %v2126
      %v2504 = vunpack.c.l.b16 %v2127
      %v2505 = vunpack.c.h.b16 %v2127
      %v2506 = vunpack.c.l.b16 %v2128
      %v2507 = vunpack.c.h.b16 %v2128
      %v2508 = vunpack.c.l.b16 %v2129
      %v2509 = vunpack.c.h.b16 %v2129
      %v2510 = vunpack.c.l.b16 %v2130
      %v2511 = vunpack.c.h.b16 %v2130
      %v2512 = vunpack.c.l.b16 %v2131
      %v2513 = vunpack.c.h.b16 %v2131
      %v2514 = vunpack.c.l.b16 %v2132
      %v2515 = vunpack.c.h.b16 %v2132
      %v2516 = vunpack.c.l.b16 %v2133
      %v2517 = vunpack.c.h.b16 %v2133
      %v2518 = vunpack.c.l.b16 %v2134
      %v2519 = vunpack.c.h.b16 %v2134
      %v2520 = vunpack.c.l.b16 %v2135
      %v2521 = vunpack.c.h.b16 %v2135
      %v2522 = vunpack.c.l.b16 %v2136
      %v2523 = vunpack.c.h.b16 %v2136
      %v2524 = vunpack.c.l.b16 %v2137
      %v2525 = vunpack.c.h.b16 %v2137
      %v2526 = vunpack.c.l.b16 %v2138
      %v2527 = vunpack.c.h.b16 %v2138
      %v2528 = vunpack.c.l.b16 %v2139
      %v2529 = vunpack.c.h.b16 %v2139
      %v2530 = vunpack.c.l.b16 %v2140
      %v2531 = vunpack.c.h.b16 %v2140
      %v2532 = vunpack.c.l.b16 %v2141
      %v2533 = vunpack.c.h.b16 %v2141
      %v2534 = vunpack.c.l.b16 %v2142
      %v2535 = vunpack.c.h.b16 %v2142
      %v2536 = vunpack.c.l.b16 %v2143
      %v2537 = vunpack.c.h.b16 %v2143
      %v2538 = vpack.c.b16 %v2286, %v2282
      %v2539 = vpack.c.b16 %v2287, %v2283
      %v2540 = vpack.c.b16 %v2288, %v2284
      %v2541 = vpack.c.b16 %v2289, %v2285
      %v2542 = vpack.c.b16 %v2294, %v2290
      %v2543 = vpack.c.b16 %v2295, %v2291
      %v2544 = vpack.c.b16 %v2296, %v2292
      %v2545 = vpack.c.b16 %v2297, %v2293
      %v2546 = vpack.c.b16 %v2302, %v2298
      %v2547 = vpack.c.b16 %v2303, %v2299
      %v2548 = vpack.c.b16 %v2304, %v2300
      %v2549 = vpack.c.b16 %v2305, %v2301
      %v2550 = vpack.c.b16 %v2310, %v2306
      %v2551 = vpack.c.b16 %v2311, %v2307
      %v2552 = vpack.c.b16 %v2312, %v2308
      %v2553 = vpack.c.b16 %v2313, %v2309
      %v2554 = vpack.c.b16 %v2318, %v2314
      %v2555 = vpack.c.b16 %v2319, %v2315
      %v2556 = vpack.c.b16 %v2320, %v2316
      %v2557 = vpack.c.b16 %v2321, %v2317
      %v2558 = vpack.c.b16 %v2326, %v2322
      %v2559 = vpack.c.b16 %v2327, %v2323
      %v2560 = vpack.c.b16 %v2328, %v2324
      %v2561 = vpack.c.b16 %v2329, %v2325
      %v2562 = vpack.c.b16 %v2334, %v2330
      %v2563 = vpack.c.b16 %v2335, %v2331
      %v2564 = vpack.c.b16 %v2336, %v2332
      %v2565 = vpack.c.b16 %v2337, %v2333
      %v2566 = vpack.c.b16 %v2342, %v2338
      %v2567 = vpack.c.b16 %v2343, %v2339
      %v2568 = vpack.c.b16 %v2344, %v2340
      %v2569 = vpack.c.b16 %v2345, %v2341
      %v2570 = vpack.c.b16 %v2350, %v2346
      %v2571 = vpack.c.b16 %v2351, %v2347
      %v2572 = vpack.c.b16 %v2352, %v2348
      %v2573 = vpack.c.b16 %v2353, %v2349
      %v2574 = vpack.c.b16 %v2358, %v2354
      %v2575 = vpack.c.b16 %v2359, %v2355
      %v2576 = vpack.c.b16 %v2360, %v2356
      %v2577 = vpack.c.b16 %v2361, %v2357
      %v2578 = vpack.c.b16 %v2366, %v2362
      %v2579 = vpack.c.b16 %v2367, %v2363
      %v2580 = vpack.c.b16 %v2368, %v2364
      %v2581 = vpack.c.b16 %v2369, %v2365
      %v2582 = vpack.c.b16 %v2374, %v2370
      %v2583 = vpack.c.b16 %v2375, %v2371
      %v2584 = vpack.c.b16 %v2376, %v2372
      %v2585 = vpack.c.b16 %v2377, %v2373
      %v2586 = vpack.c.b16 %v2382, %v2378
      %v2587 = vpack.c.b16 %v2383, %v2379
      %v2588 = vpack.c.b16 %v2384, %v2380
      %v2589 = vpack.c.b16 %v2385, %v2381
      %v2590 = vpack.c.b16 %v2390, %v2386
      %v2591 = vpack.c.b16 %v2391, %v2387
      %v2592 = vpack.c.b16 %v2392, %v2388
      %v2593 = vpack.c.b16 %v2393, %v2389
      %v2594 = vpack.c.b16 %v2398, %v2394
      %v2595 = vpack.c.b16 %v2399, %v2395
      %v2596 = vpack.c.b16 %v2400, %v2396
      %v2597 = vpack.c.b16 %v2401, %v2397
      %v2598 = vpack.c.b16 %v2406, %v2402
      %v2599 = vpack.c.b16 %v2407, %v2403
      %v2600 = vpack.c.b16 %v2408, %v2404
      %v2601 = vpack.c.b16 %v2409, %v2405
      %v2602 = vpack.c.b16 %v2414, %v2410
      %v2603 = vpack.c.b16 %v2415, %v2411
      %v2604 = vpack.c.b16 %v2416, %v2412
      %v2605 = vpack.c.b16 %v2417, %v2413
      %v2606 = vpack.c.b16 %v2422, %v2418
      %v2607 = vpack.c.b16 %v2423, %v2419
      %v2608 = vpack.c.b16 %v2424, %v2420
      %v2609 = vpack.c.b16 %v2425, %v2421
      %v2610 = vpack.c.b16 %v2430, %v2426
      %v2611 = vpack.c.b16 %v2431, %v2427
      %v2612 = vpack.c.b16 %v2432, %v2428
      %v2613 = vpack.c.b16 %v2433, %v2429
      %v2614 = vpack.c.b16 %v2438, %v2434
      %v2615 = vpack.c.b16 %v2439, %v2435
      %v2616 = vpack.c.b16 %v2440, %v2436
      %v2617 = vpack.c.b16 %v2441, %v2437
      %v2618 = vpack.c.b16 %v2446, %v2442
      %v2619 = vpack.c.b16 %v2447, %v2443
      %v2620 = vpack.c.b16 %v2448, %v2444
      %v2621 = vpack.c.b16 %v2449, %v2445
      %v2622 = vpack.c.b16 %v2454, %v2450
      %v2623 = vpack.c.b16 %v2455, %v2451
      %v2624 = vpack.c.b16 %v2456, %v2452
      %v2625 = vpack.c.b16 %v2457, %v2453
      %v2626 = vpack.c.b16 %v2462, %v2458
      %v2627 = vpack.c.b16 %v2463, %v2459
      %v2628 = vpack.c.b16 %v2464, %v2460
      %v2629 = vpack.c.b16 %v2465, %v2461
      %v2630 = vpack.c.b16 %v2470, %v2466
      %v2631 = vpack.c.b16 %v2471, %v2467
      %v2632 = vpack.c.b16 %v2472, %v2468
      %v2633 = vpack.c.b16 %v2473, %v2469
      %v2634 = vpack.c.b16 %v2478, %v2474
      %v2635 = vpack.c.b16 %v2479, %v2475
      %v2636 = vpack.c.b16 %v2480, %v2476
      %v2637 = vpack.c.b16 %v2481, %v2477
      %v2638 = vpack.c.b16 %v2486, %v2482
      %v2639 = vpack.c.b16 %v2487, %v2483
      %v2640 = vpack.c.b16 %v2488, %v2484
      %v2641 = vpack.c.b16 %v2489, %v2485
      %v2642 = vpack.c.b16 %v2494, %v2490
      %v2643 = vpack.c.b16 %v2495, %v2491
      %v2644 = vpack.c.b16 %v2496, %v2492
      %v2645 = vpack.c.b16 %v2497, %v2493
      %v2646 = vpack.c.b16 %v2502, %v2498
      %v2647 = vpack.c.b16 %v2503, %v2499
      %v2648 = vpack.c.b16 %v2504, %v2500
      %v2649 = vpack.c.b16 %v2505, %v2501
      %v2650 = vpack.c.b16 %v2510, %v2506
      %v2651 = vpack.c.b16 %v2511, %v2507
      %v2652 = vpack.c.b16 %v2512, %v2508
      %v2653 = vpack.c.b16 %v2513, %v2509
      %v2654 = vpack.c.b16 %v2518, %v2514
      %v2655 = vpack.c.b16 %v2519, %v2515
      %v2656 = vpack.c.b16 %v2520, %v2516
      %v2657 = vpack.c.b16 %v2521, %v2517
      %v2658 = vpack.c.b16 %v2526, %v2522
      %v2659 = vpack.c.b16 %v2527, %v2523
      %v2660 = vpack.c.b16 %v2528, %v2524
      %v2661 = vpack.c.b16 %v2529, %v2525
      %v2662 = vpack.c.b16 %v2534, %v2530
      %v2663 = vpack.c.b16 %v2535, %v2531
      %v2664 = vpack.c.b16 %v2536, %v2532
      %v2665 = vpack.c.b16 %v2537, %v2533
      %2794 = vmatpush.bf16.msra.mxu0 %v2566
      %2795 = vmatpush.bf16.msra.mxu0 %v2562
      %2796 = vmatpush.bf16.msra.mxu0 %v2558
      %2797 = vmatpush.bf16.msra.mxu0 %v2554
      %2798 = vmatpush.bf16.msra.mxu0 %v2550
      %2799 = vmatpush.bf16.msra.mxu0 %v2546
      %2800 = vmatpush.bf16.msra.mxu0 %v2542
      %2801 = vmatpush.bf16.msra.mxu0 %v2538
      %2802 = vmatmul.bf16.gmra.mxu0 %v1888
      %v2803 = vpop.f32.mrf.mxu0
      %v2804 = vadd.f32 %v2146, %v2803
      %v2805 = vpop.f32.mrf.mxu0
      %v2806 = vadd.f32 %v2146, %v2805
      %2807 = vmatmul.bf16.gmra.mxu0 %v1892
      %v2808 = vpop.f32.mrf.mxu0
      %v2809 = vadd.f32 %v2146, %v2808
      %v2810 = vpop.f32.mrf.mxu0
      %v2811 = vadd.f32 %v2146, %v2810
      %2812 = vmatmul.bf16.gmra.mxu0 %v1896
      %v2813 = vpop.f32.mrf.mxu0
      %v2814 = vadd.f32 %v2146, %v2813
      %v2815 = vpop.f32.mrf.mxu0
      %v2816 = vadd.f32 %v2146, %v2815
      %2817 = vmatmul.bf16.gmra.mxu0 %v1900
      %v2818 = vpop.f32.mrf.mxu0
      %v2819 = vadd.f32 %v2146, %v2818
      %v2820 = vpop.f32.mrf.mxu0
      %v2821 = vadd.f32 %v2146, %v2820
      %2822 = vmatmul.bf16.gmra.mxu0 %v1904
      %v2823 = vpop.f32.mrf.mxu0
      %v2824 = vadd.f32 %v2146, %v2823
      %v2825 = vpop.f32.mrf.mxu0
      %v2826 = vadd.f32 %v2146, %v2825
      %2827 = vmatmul.bf16.gmra.mxu0 %v1908
      %v2828 = vpop.f32.mrf.mxu0
      %v2829 = vadd.f32 %v2146, %v2828
      %v2830 = vpop.f32.mrf.mxu0
      %v2831 = vadd.f32 %v2146, %v2830
      %2832 = vmatmul.bf16.gmra.mxu0 %v1912
      %v2833 = vpop.f32.mrf.mxu0
      %v2834 = vadd.f32 %v2146, %v2833
      %v2835 = vpop.f32.mrf.mxu0
      %v2836 = vadd.f32 %v2146, %v2835
      %2837 = vmatmul.bf16.gmra.mxu0 %v1916
      %v2838 = vpop.f32.mrf.mxu0
      %v2839 = vadd.f32 %v2146, %v2838
      %v2840 = vpop.f32.mrf.mxu0
      %v2841 = vadd.f32 %v2146, %v2840
      %2842 = vmatmul.bf16.gmra.mxu0 %v1920
      %v2843 = vpop.f32.mrf.mxu0
      %v2844 = vadd.f32 %v2146, %v2843
      %v2845 = vpop.f32.mrf.mxu0
      %v2846 = vadd.f32 %v2146, %v2845
      %2847 = vmatmul.bf16.gmra.mxu0 %v1924
      %v2848 = vpop.f32.mrf.mxu0
      %v2849 = vadd.f32 %v2146, %v2848
      %v2850 = vpop.f32.mrf.mxu0
      %v2851 = vadd.f32 %v2146, %v2850
      %2852 = vmatmul.bf16.gmra.mxu0 %v1928
      %v2853 = vpop.f32.mrf.mxu0
      %v2854 = vadd.f32 %v2146, %v2853
      %v2855 = vpop.f32.mrf.mxu0
      %v2856 = vadd.f32 %v2146, %v2855
      %2857 = vmatmul.bf16.gmra.mxu0 %v1932
      %v2858 = vpop.f32.mrf.mxu0
      %v2859 = vadd.f32 %v2146, %v2858
      %v2860 = vpop.f32.mrf.mxu0
      %v2861 = vadd.f32 %v2146, %v2860
      %2862 = vmatmul.bf16.gmra.mxu0 %v1936
      %v2863 = vpop.f32.mrf.mxu0
      %v2864 = vadd.f32 %v2146, %v2863
      %v2865 = vpop.f32.mrf.mxu0
      %v2866 = vadd.f32 %v2146, %v2865
      %2867 = vmatmul.bf16.gmra.mxu0 %v1940
      %v2868 = vpop.f32.mrf.mxu0
      %v2869 = vadd.f32 %v2146, %v2868
      %v2870 = vpop.f32.mrf.mxu0
      %v2871 = vadd.f32 %v2146, %v2870
      %2872 = vmatmul.bf16.gmra.mxu0 %v1944
      %v2873 = vpop.f32.mrf.mxu0
      %v2874 = vadd.f32 %v2146, %v2873
      %v2875 = vpop.f32.mrf.mxu0
      %v2876 = vadd.f32 %v2146, %v2875
      %2877 = vmatmul.bf16.gmra.mxu0 %v1948
      %v2878 = vpop.f32.mrf.mxu0
      %v2879 = vadd.f32 %v2146, %v2878
      %v2880 = vpop.f32.mrf.mxu0
      %v2881 = vadd.f32 %v2146, %v2880
      %2882 = vmatmul.bf16.gmra.mxu0 %v1952
      %v2883 = vpop.f32.mrf.mxu0
      %v2884 = vadd.f32 %v2146, %v2883
      %v2885 = vpop.f32.mrf.mxu0
      %v2886 = vadd.f32 %v2146, %v2885
      %2887 = vmatmul.bf16.gmra.mxu0 %v1956
      %v2888 = vpop.f32.mrf.mxu0
      %v2889 = vadd.f32 %v2146, %v2888
      %v2890 = vpop.f32.mrf.mxu0
      %v2891 = vadd.f32 %v2146, %v2890
      %2892 = vmatmul.bf16.gmra.mxu0 %v1960
      %v2893 = vpop.f32.mrf.mxu0
      %v2894 = vadd.f32 %v2146, %v2893
      %v2895 = vpop.f32.mrf.mxu0
      %v2896 = vadd.f32 %v2146, %v2895
      %2897 = vmatmul.bf16.gmra.mxu0 %v1964
      %v2898 = vpop.f32.mrf.mxu0
      %v2899 = vadd.f32 %v2146, %v2898
      %v2900 = vpop.f32.mrf.mxu0
      %v2901 = vadd.f32 %v2146, %v2900
      %2902 = vmatmul.bf16.gmra.mxu0 %v1968
      %v2903 = vpop.f32.mrf.mxu0
      %v2904 = vadd.f32 %v2146, %v2903
      %v2905 = vpop.f32.mrf.mxu0
      %v2906 = vadd.f32 %v2146, %v2905
      %2907 = vmatmul.bf16.gmra.mxu0 %v1972
      %v2908 = vpop.f32.mrf.mxu0
      %v2909 = vadd.f32 %v2146, %v2908
      %v2910 = vpop.f32.mrf.mxu0
      %v2911 = vadd.f32 %v2146, %v2910
      %2912 = vmatmul.bf16.gmra.mxu0 %v1976
      %v2913 = vpop.f32.mrf.mxu0
      %v2914 = vadd.f32 %v2146, %v2913
      %v2915 = vpop.f32.mrf.mxu0
      %v2916 = vadd.f32 %v2146, %v2915
      %2917 = vmatmul.bf16.gmra.mxu0 %v1980
      %v2918 = vpop.f32.mrf.mxu0
      %v2919 = vadd.f32 %v2146, %v2918
      %v2920 = vpop.f32.mrf.mxu0
      %v2921 = vadd.f32 %v2146, %v2920
      %2922 = vmatmul.bf16.gmra.mxu0 %v1984
      %v2923 = vpop.f32.mrf.mxu0
      %v2924 = vadd.f32 %v2146, %v2923
      %v2925 = vpop.f32.mrf.mxu0
      %v2926 = vadd.f32 %v2146, %v2925
      %2927 = vmatmul.bf16.gmra.mxu0 %v1988
      %v2928 = vpop.f32.mrf.mxu0
      %v2929 = vadd.f32 %v2146, %v2928
      %v2930 = vpop.f32.mrf.mxu0
      %v2931 = vadd.f32 %v2146, %v2930
      %2932 = vmatmul.bf16.gmra.mxu0 %v1992
      %v2933 = vpop.f32.mrf.mxu0
      %v2934 = vadd.f32 %v2146, %v2933
      %v2935 = vpop.f32.mrf.mxu0
      %v2936 = vadd.f32 %v2146, %v2935
      %2937 = vmatmul.bf16.gmra.mxu0 %v1996
      %v2938 = vpop.f32.mrf.mxu0
      %v2939 = vadd.f32 %v2146, %v2938
      %v2940 = vpop.f32.mrf.mxu0
      %v2941 = vadd.f32 %v2146, %v2940
      %2942 = vmatmul.bf16.gmra.mxu0 %v2000
      %v2943 = vpop.f32.mrf.mxu0
      %v2944 = vadd.f32 %v2146, %v2943
      %v2945 = vpop.f32.mrf.mxu0
      %v2946 = vadd.f32 %v2146, %v2945
      %2947 = vmatmul.bf16.gmra.mxu0 %v2004
      %v2948 = vpop.f32.mrf.mxu0
      %v2949 = vadd.f32 %v2146, %v2948
      %v2950 = vpop.f32.mrf.mxu0
      %v2951 = vadd.f32 %v2146, %v2950
      %2952 = vmatmul.bf16.gmra.mxu0 %v2008
      %v2953 = vpop.f32.mrf.mxu0
      %v2954 = vadd.f32 %v2146, %v2953
      %v2955 = vpop.f32.mrf.mxu0
      %v2956 = vadd.f32 %v2146, %v2955
      %2957 = vmatmul.bf16.gmra.mxu0 %v2012
      %v2958 = vpop.f32.mrf.mxu0
      %v2959 = vadd.f32 %v2146, %v2958
      %v2960 = vpop.f32.mrf.mxu0
      %v2961 = vadd.f32 %v2146, %v2960
      %2962 = vdwg.mxu0
      %2963 = vmatpush.bf16.msra.mxu0 %v2598
      %2964 = vmatpush.bf16.msra.mxu0 %v2594
      %2965 = vmatpush.bf16.msra.mxu0 %v2590
      %2966 = vmatpush.bf16.msra.mxu0 %v2586
      %2967 = vmatpush.bf16.msra.mxu0 %v2582
      %2968 = vmatpush.bf16.msra.mxu0 %v2578
      %2969 = vmatpush.bf16.msra.mxu0 %v2574
      %2970 = vmatpush.bf16.msra.mxu0 %v2570
      %2971 = vmatmul.bf16.gmra.mxu0 %v1889
      %v2972 = vpop.f32.mrf.mxu0
      %v2973 = vadd.f32 %v2804, %v2972
      %v2974 = vpop.f32.mrf.mxu0
      %v2975 = vadd.f32 %v2806, %v2974
      %2976 = vmatmul.bf16.gmra.mxu0 %v1893
      %v2977 = vpop.f32.mrf.mxu0
      %v2978 = vadd.f32 %v2809, %v2977
      %v2979 = vpop.f32.mrf.mxu0
      %v2980 = vadd.f32 %v2811, %v2979
      %2981 = vmatmul.bf16.gmra.mxu0 %v1897
      %v2982 = vpop.f32.mrf.mxu0
      %v2983 = vadd.f32 %v2814, %v2982
      %v2984 = vpop.f32.mrf.mxu0
      %v2985 = vadd.f32 %v2816, %v2984
      %2986 = vmatmul.bf16.gmra.mxu0 %v1901
      %v2987 = vpop.f32.mrf.mxu0
      %v2988 = vadd.f32 %v2819, %v2987
      %v2989 = vpop.f32.mrf.mxu0
      %v2990 = vadd.f32 %v2821, %v2989
      %2991 = vmatmul.bf16.gmra.mxu0 %v1905
      %v2992 = vpop.f32.mrf.mxu0
      %v2993 = vadd.f32 %v2824, %v2992
      %v2994 = vpop.f32.mrf.mxu0
      %v2995 = vadd.f32 %v2826, %v2994
      %2996 = vmatmul.bf16.gmra.mxu0 %v1909
      %v2997 = vpop.f32.mrf.mxu0
      %v2998 = vadd.f32 %v2829, %v2997
      %v2999 = vpop.f32.mrf.mxu0
      %v3000 = vadd.f32 %v2831, %v2999
      %3001 = vmatmul.bf16.gmra.mxu0 %v1913
      %v3002 = vpop.f32.mrf.mxu0
      %v3003 = vadd.f32 %v2834, %v3002
      %v3004 = vpop.f32.mrf.mxu0
      %v3005 = vadd.f32 %v2836, %v3004
      %3006 = vmatmul.bf16.gmra.mxu0 %v1917
      %v3007 = vpop.f32.mrf.mxu0
      %v3008 = vadd.f32 %v2839, %v3007
      %v3009 = vpop.f32.mrf.mxu0
      %v3010 = vadd.f32 %v2841, %v3009
      %3011 = vmatmul.bf16.gmra.mxu0 %v1921
      %v3012 = vpop.f32.mrf.mxu0
      %v3013 = vadd.f32 %v2844, %v3012
      %v3014 = vpop.f32.mrf.mxu0
      %v3015 = vadd.f32 %v2846, %v3014
      %3016 = vmatmul.bf16.gmra.mxu0 %v1925
      %v3017 = vpop.f32.mrf.mxu0
      %v3018 = vadd.f32 %v2849, %v3017
      %v3019 = vpop.f32.mrf.mxu0
      %v3020 = vadd.f32 %v2851, %v3019
      %3021 = vmatmul.bf16.gmra.mxu0 %v1929
      %v3022 = vpop.f32.mrf.mxu0
      %v3023 = vadd.f32 %v2854, %v3022
      %v3024 = vpop.f32.mrf.mxu0
      %v3025 = vadd.f32 %v2856, %v3024
      %3026 = vmatmul.bf16.gmra.mxu0 %v1933
      %v3027 = vpop.f32.mrf.mxu0
      %v3028 = vadd.f32 %v2859, %v3027
      %v3029 = vpop.f32.mrf.mxu0
      %v3030 = vadd.f32 %v2861, %v3029
      %3031 = vmatmul.bf16.gmra.mxu0 %v1937
      %v3032 = vpop.f32.mrf.mxu0
      %v3033 = vadd.f32 %v2864, %v3032
      %v3034 = vpop.f32.mrf.mxu0
      %v3035 = vadd.f32 %v2866, %v3034
      %3036 = vmatmul.bf16.gmra.mxu0 %v1941
      %v3037 = vpop.f32.mrf.mxu0
      %v3038 = vadd.f32 %v2869, %v3037
      %v3039 = vpop.f32.mrf.mxu0
      %v3040 = vadd.f32 %v2871, %v3039
      %3041 = vmatmul.bf16.gmra.mxu0 %v1945
      %v3042 = vpop.f32.mrf.mxu0
      %v3043 = vadd.f32 %v2874, %v3042
      %v3044 = vpop.f32.mrf.mxu0
      %v3045 = vadd.f32 %v2876, %v3044
      %3046 = vmatmul.bf16.gmra.mxu0 %v1949
      %v3047 = vpop.f32.mrf.mxu0
      %v3048 = vadd.f32 %v2879, %v3047
      %v3049 = vpop.f32.mrf.mxu0
      %v3050 = vadd.f32 %v2881, %v3049
      %3051 = vmatmul.bf16.gmra.mxu0 %v1953
      %v3052 = vpop.f32.mrf.mxu0
      %v3053 = vadd.f32 %v2884, %v3052
      %v3054 = vpop.f32.mrf.mxu0
      %v3055 = vadd.f32 %v2886, %v3054
      %3056 = vmatmul.bf16.gmra.mxu0 %v1957
      %v3057 = vpop.f32.mrf.mxu0
      %v3058 = vadd.f32 %v2889, %v3057
      %v3059 = vpop.f32.mrf.mxu0
      %v3060 = vadd.f32 %v2891, %v3059
      %3061 = vmatmul.bf16.gmra.mxu0 %v1961
      %v3062 = vpop.f32.mrf.mxu0
      %v3063 = vadd.f32 %v2894, %v3062
      %v3064 = vpop.f32.mrf.mxu0
      %v3065 = vadd.f32 %v2896, %v3064
      %3066 = vmatmul.bf16.gmra.mxu0 %v1965
      %v3067 = vpop.f32.mrf.mxu0
      %v3068 = vadd.f32 %v2899, %v3067
      %v3069 = vpop.f32.mrf.mxu0
      %v3070 = vadd.f32 %v2901, %v3069
      %3071 = vmatmul.bf16.gmra.mxu0 %v1969
      %v3072 = vpop.f32.mrf.mxu0
      %v3073 = vadd.f32 %v2904, %v3072
      %v3074 = vpop.f32.mrf.mxu0
      %v3075 = vadd.f32 %v2906, %v3074
      %3076 = vmatmul.bf16.gmra.mxu0 %v1973
      %v3077 = vpop.f32.mrf.mxu0
      %v3078 = vadd.f32 %v2909, %v3077
      %v3079 = vpop.f32.mrf.mxu0
      %v3080 = vadd.f32 %v2911, %v3079
      %3081 = vmatmul.bf16.gmra.mxu0 %v1977
      %v3082 = vpop.f32.mrf.mxu0
      %v3083 = vadd.f32 %v2914, %v3082
      %v3084 = vpop.f32.mrf.mxu0
      %v3085 = vadd.f32 %v2916, %v3084
      %3086 = vmatmul.bf16.gmra.mxu0 %v1981
      %v3087 = vpop.f32.mrf.mxu0
      %v3088 = vadd.f32 %v2919, %v3087
      %v3089 = vpop.f32.mrf.mxu0
      %v3090 = vadd.f32 %v2921, %v3089
      %3091 = vmatmul.bf16.gmra.mxu0 %v1985
      %v3092 = vpop.f32.mrf.mxu0
      %v3093 = vadd.f32 %v2924, %v3092
      %v3094 = vpop.f32.mrf.mxu0
      %v3095 = vadd.f32 %v2926, %v3094
      %3096 = vmatmul.bf16.gmra.mxu0 %v1989
      %v3097 = vpop.f32.mrf.mxu0
      %v3098 = vadd.f32 %v2929, %v3097
      %v3099 = vpop.f32.mrf.mxu0
      %v3100 = vadd.f32 %v2931, %v3099
      %3101 = vmatmul.bf16.gmra.mxu0 %v1993
      %v3102 = vpop.f32.mrf.mxu0
      %v3103 = vadd.f32 %v2934, %v3102
      %v3104 = vpop.f32.mrf.mxu0
      %v3105 = vadd.f32 %v2936, %v3104
      %3106 = vmatmul.bf16.gmra.mxu0 %v1997
      %v3107 = vpop.f32.mrf.mxu0
      %v3108 = vadd.f32 %v2939, %v3107
      %v3109 = vpop.f32.mrf.mxu0
      %v3110 = vadd.f32 %v2941, %v3109
      %3111 = vmatmul.bf16.gmra.mxu0 %v2001
      %v3112 = vpop.f32.mrf.mxu0
      %v3113 = vadd.f32 %v2944, %v3112
      %v3114 = vpop.f32.mrf.mxu0
      %v3115 = vadd.f32 %v2946, %v3114
      %3116 = vmatmul.bf16.gmra.mxu0 %v2005
      %v3117 = vpop.f32.mrf.mxu0
      %v3118 = vadd.f32 %v2949, %v3117
      %v3119 = vpop.f32.mrf.mxu0
      %v3120 = vadd.f32 %v2951, %v3119
      %3121 = vmatmul.bf16.gmra.mxu0 %v2009
      %v3122 = vpop.f32.mrf.mxu0
      %v3123 = vadd.f32 %v2954, %v3122
      %v3124 = vpop.f32.mrf.mxu0
      %v3125 = vadd.f32 %v2956, %v3124
      %3126 = vmatmul.bf16.gmra.mxu0 %v2013
      %v3127 = vpop.f32.mrf.mxu0
      %v3128 = vadd.f32 %v2959, %v3127
      %v3129 = vpop.f32.mrf.mxu0
      %v3130 = vadd.f32 %v2961, %v3129
      %3131 = vdwg.mxu0
      %3132 = vmatpush.bf16.msra.mxu0 %v2630
      %3133 = vmatpush.bf16.msra.mxu0 %v2626
      %3134 = vmatpush.bf16.msra.mxu0 %v2622
      %3135 = vmatpush.bf16.msra.mxu0 %v2618
      %3136 = vmatpush.bf16.msra.mxu0 %v2614
      %3137 = vmatpush.bf16.msra.mxu0 %v2610
      %3138 = vmatpush.bf16.msra.mxu0 %v2606
      %3139 = vmatpush.bf16.msra.mxu0 %v2602
      %3140 = vmatmul.bf16.gmra.mxu0 %v1890
      %v3141 = vpop.f32.mrf.mxu0
      %v3142 = vadd.f32 %v2973, %v3141
      %v3143 = vpop.f32.mrf.mxu0
      %v3144 = vadd.f32 %v2975, %v3143
      %3145 = vmatmul.bf16.gmra.mxu0 %v1894
      %v3146 = vpop.f32.mrf.mxu0
      %v3147 = vadd.f32 %v2978, %v3146
      %v3148 = vpop.f32.mrf.mxu0
      %v3149 = vadd.f32 %v2980, %v3148
      %3150 = vmatmul.bf16.gmra.mxu0 %v1898
      %v3151 = vpop.f32.mrf.mxu0
      %v3152 = vadd.f32 %v2983, %v3151
      %v3153 = vpop.f32.mrf.mxu0
      %v3154 = vadd.f32 %v2985, %v3153
      %3155 = vmatmul.bf16.gmra.mxu0 %v1902
      %v3156 = vpop.f32.mrf.mxu0
      %v3157 = vadd.f32 %v2988, %v3156
      %v3158 = vpop.f32.mrf.mxu0
      %v3159 = vadd.f32 %v2990, %v3158
      %3160 = vmatmul.bf16.gmra.mxu0 %v1906
      %v3161 = vpop.f32.mrf.mxu0
      %v3162 = vadd.f32 %v2993, %v3161
      %v3163 = vpop.f32.mrf.mxu0
      %v3164 = vadd.f32 %v2995, %v3163
      %3165 = vmatmul.bf16.gmra.mxu0 %v1910
      %v3166 = vpop.f32.mrf.mxu0
      %v3167 = vadd.f32 %v2998, %v3166
      %v3168 = vpop.f32.mrf.mxu0
      %v3169 = vadd.f32 %v3000, %v3168
      %3170 = vmatmul.bf16.gmra.mxu0 %v1914
      %v3171 = vpop.f32.mrf.mxu0
      %v3172 = vadd.f32 %v3003, %v3171
      %v3173 = vpop.f32.mrf.mxu0
      %v3174 = vadd.f32 %v3005, %v3173
      %3175 = vmatmul.bf16.gmra.mxu0 %v1918
      %v3176 = vpop.f32.mrf.mxu0
      %v3177 = vadd.f32 %v3008, %v3176
      %v3178 = vpop.f32.mrf.mxu0
      %v3179 = vadd.f32 %v3010, %v3178
      %3180 = vmatmul.bf16.gmra.mxu0 %v1922
      %v3181 = vpop.f32.mrf.mxu0
      %v3182 = vadd.f32 %v3013, %v3181
      %v3183 = vpop.f32.mrf.mxu0
      %v3184 = vadd.f32 %v3015, %v3183
      %3185 = vmatmul.bf16.gmra.mxu0 %v1926
      %v3186 = vpop.f32.mrf.mxu0
      %v3187 = vadd.f32 %v3018, %v3186
      %v3188 = vpop.f32.mrf.mxu0
      %v3189 = vadd.f32 %v3020, %v3188
      %3190 = vmatmul.bf16.gmra.mxu0 %v1930
      %v3191 = vpop.f32.mrf.mxu0
      %v3192 = vadd.f32 %v3023, %v3191
      %v3193 = vpop.f32.mrf.mxu0
      %v3194 = vadd.f32 %v3025, %v3193
      %3195 = vmatmul.bf16.gmra.mxu0 %v1934
      %v3196 = vpop.f32.mrf.mxu0
      %v3197 = vadd.f32 %v3028, %v3196
      %v3198 = vpop.f32.mrf.mxu0
      %v3199 = vadd.f32 %v3030, %v3198
      %3200 = vmatmul.bf16.gmra.mxu0 %v1938
      %v3201 = vpop.f32.mrf.mxu0
      %v3202 = vadd.f32 %v3033, %v3201
      %v3203 = vpop.f32.mrf.mxu0
      %v3204 = vadd.f32 %v3035, %v3203
      %3205 = vmatmul.bf16.gmra.mxu0 %v1942
      %v3206 = vpop.f32.mrf.mxu0
      %v3207 = vadd.f32 %v3038, %v3206
      %v3208 = vpop.f32.mrf.mxu0
      %v3209 = vadd.f32 %v3040, %v3208
      %3210 = vmatmul.bf16.gmra.mxu0 %v1946
      %v3211 = vpop.f32.mrf.mxu0
      %v3212 = vadd.f32 %v3043, %v3211
      %v3213 = vpop.f32.mrf.mxu0
      %v3214 = vadd.f32 %v3045, %v3213
      %3215 = vmatmul.bf16.gmra.mxu0 %v1950
      %v3216 = vpop.f32.mrf.mxu0
      %v3217 = vadd.f32 %v3048, %v3216
      %v3218 = vpop.f32.mrf.mxu0
      %v3219 = vadd.f32 %v3050, %v3218
      %3220 = vmatmul.bf16.gmra.mxu0 %v1954
      %v3221 = vpop.f32.mrf.mxu0
      %v3222 = vadd.f32 %v3053, %v3221
      %v3223 = vpop.f32.mrf.mxu0
      %v3224 = vadd.f32 %v3055, %v3223
      %3225 = vmatmul.bf16.gmra.mxu0 %v1958
      %v3226 = vpop.f32.mrf.mxu0
      %v3227 = vadd.f32 %v3058, %v3226
      %v3228 = vpop.f32.mrf.mxu0
      %v3229 = vadd.f32 %v3060, %v3228
      %3230 = vmatmul.bf16.gmra.mxu0 %v1962
      %v3231 = vpop.f32.mrf.mxu0
      %v3232 = vadd.f32 %v3063, %v3231
      %v3233 = vpop.f32.mrf.mxu0
      %v3234 = vadd.f32 %v3065, %v3233
      %3235 = vmatmul.bf16.gmra.mxu0 %v1966
      %v3236 = vpop.f32.mrf.mxu0
      %v3237 = vadd.f32 %v3068, %v3236
      %v3238 = vpop.f32.mrf.mxu0
      %v3239 = vadd.f32 %v3070, %v3238
      %3240 = vmatmul.bf16.gmra.mxu0 %v1970
      %v3241 = vpop.f32.mrf.mxu0
      %v3242 = vadd.f32 %v3073, %v3241
      %v3243 = vpop.f32.mrf.mxu0
      %v3244 = vadd.f32 %v3075, %v3243
      %3245 = vmatmul.bf16.gmra.mxu0 %v1974
      %v3246 = vpop.f32.mrf.mxu0
      %v3247 = vadd.f32 %v3078, %v3246
      %v3248 = vpop.f32.mrf.mxu0
      %v3249 = vadd.f32 %v3080, %v3248
      %3250 = vmatmul.bf16.gmra.mxu0 %v1978
      %v3251 = vpop.f32.mrf.mxu0
      %v3252 = vadd.f32 %v3083, %v3251
      %v3253 = vpop.f32.mrf.mxu0
      %v3254 = vadd.f32 %v3085, %v3253
      %3255 = vmatmul.bf16.gmra.mxu0 %v1982
      %v3256 = vpop.f32.mrf.mxu0
      %v3257 = vadd.f32 %v3088, %v3256
      %v3258 = vpop.f32.mrf.mxu0
      %v3259 = vadd.f32 %v3090, %v3258
      %3260 = vmatmul.bf16.gmra.mxu0 %v1986
      %v3261 = vpop.f32.mrf.mxu0
      %v3262 = vadd.f32 %v3093, %v3261
      %v3263 = vpop.f32.mrf.mxu0
      %v3264 = vadd.f32 %v3095, %v3263
      %3265 = vmatmul.bf16.gmra.mxu0 %v1990
      %v3266 = vpop.f32.mrf.mxu0
      %v3267 = vadd.f32 %v3098, %v3266
      %v3268 = vpop.f32.mrf.mxu0
      %v3269 = vadd.f32 %v3100, %v3268
      %3270 = vmatmul.bf16.gmra.mxu0 %v1994
      %v3271 = vpop.f32.mrf.mxu0
      %v3272 = vadd.f32 %v3103, %v3271
      %v3273 = vpop.f32.mrf.mxu0
      %v3274 = vadd.f32 %v3105, %v3273
      %3275 = vmatmul.bf16.gmra.mxu0 %v1998
      %v3276 = vpop.f32.mrf.mxu0
      %v3277 = vadd.f32 %v3108, %v3276
      %v3278 = vpop.f32.mrf.mxu0
      %v3279 = vadd.f32 %v3110, %v3278
      %3280 = vmatmul.bf16.gmra.mxu0 %v2002
      %v3281 = vpop.f32.mrf.mxu0
      %v3282 = vadd.f32 %v3113, %v3281
      %v3283 = vpop.f32.mrf.mxu0
      %v3284 = vadd.f32 %v3115, %v3283
      %3285 = vmatmul.bf16.gmra.mxu0 %v2006
      %v3286 = vpop.f32.mrf.mxu0
      %v3287 = vadd.f32 %v3118, %v3286
      %v3288 = vpop.f32.mrf.mxu0
      %v3289 = vadd.f32 %v3120, %v3288
      %3290 = vmatmul.bf16.gmra.mxu0 %v2010
      %v3291 = vpop.f32.mrf.mxu0
      %v3292 = vadd.f32 %v3123, %v3291
      %v3293 = vpop.f32.mrf.mxu0
      %v3294 = vadd.f32 %v3125, %v3293
      %3295 = vmatmul.bf16.gmra.mxu0 %v2014
      %v3296 = vpop.f32.mrf.mxu0
      %v3297 = vadd.f32 %v3128, %v3296
      %v3298 = vpop.f32.mrf.mxu0
      %v3299 = vadd.f32 %v3130, %v3298
      %3300 = vdwg.mxu0
      %3301 = vmatpush.bf16.msra.mxu0 %v2662
      %3302 = vmatpush.bf16.msra.mxu0 %v2658
      %3303 = vmatpush.bf16.msra.mxu0 %v2654
      %3304 = vmatpush.bf16.msra.mxu0 %v2650
      %3305 = vmatpush.bf16.msra.mxu0 %v2646
      %3306 = vmatpush.bf16.msra.mxu0 %v2642
      %3307 = vmatpush.bf16.msra.mxu0 %v2638
      %3308 = vmatpush.bf16.msra.mxu0 %v2634
      %3309 = vmatmul.bf16.gmra.mxu0 %v1891
      %v3310 = vpop.f32.mrf.mxu0
      %v3311 = vadd.f32 %v3142, %v3310
      %v3312 = vpop.f32.mrf.mxu0
      %v3313 = vadd.f32 %v3144, %v3312
      %3314 = vmatmul.bf16.gmra.mxu0 %v1895
      %v3315 = vpop.f32.mrf.mxu0
      %v3316 = vadd.f32 %v3147, %v3315
      %v3317 = vpop.f32.mrf.mxu0
      %v3318 = vadd.f32 %v3149, %v3317
      %3319 = vmatmul.bf16.gmra.mxu0 %v1899
      %v3320 = vpop.f32.mrf.mxu0
      %v3321 = vadd.f32 %v3152, %v3320
      %v3322 = vpop.f32.mrf.mxu0
      %v3323 = vadd.f32 %v3154, %v3322
      %3324 = vmatmul.bf16.gmra.mxu0 %v1903
      %v3325 = vpop.f32.mrf.mxu0
      %v3326 = vadd.f32 %v3157, %v3325
      %v3327 = vpop.f32.mrf.mxu0
      %v3328 = vadd.f32 %v3159, %v3327
      %3329 = vmatmul.bf16.gmra.mxu0 %v1907
      %v3330 = vpop.f32.mrf.mxu0
      %v3331 = vadd.f32 %v3162, %v3330
      %v3332 = vpop.f32.mrf.mxu0
      %v3333 = vadd.f32 %v3164, %v3332
      %3334 = vmatmul.bf16.gmra.mxu0 %v1911
      %v3335 = vpop.f32.mrf.mxu0
      %v3336 = vadd.f32 %v3167, %v3335
      %v3337 = vpop.f32.mrf.mxu0
      %v3338 = vadd.f32 %v3169, %v3337
      %3339 = vmatmul.bf16.gmra.mxu0 %v1915
      %v3340 = vpop.f32.mrf.mxu0
      %v3341 = vadd.f32 %v3172, %v3340
      %v3342 = vpop.f32.mrf.mxu0
      %v3343 = vadd.f32 %v3174, %v3342
      %3344 = vmatmul.bf16.gmra.mxu0 %v1919
      %v3345 = vpop.f32.mrf.mxu0
      %v3346 = vadd.f32 %v3177, %v3345
      %v3347 = vpop.f32.mrf.mxu0
      %v3348 = vadd.f32 %v3179, %v3347
      %3349 = vmatmul.bf16.gmra.mxu0 %v1923
      %v3350 = vpop.f32.mrf.mxu0
      %v3351 = vadd.f32 %v3182, %v3350
      %v3352 = vpop.f32.mrf.mxu0
      %v3353 = vadd.f32 %v3184, %v3352
      %3354 = vmatmul.bf16.gmra.mxu0 %v1927
      %v3355 = vpop.f32.mrf.mxu0
      %v3356 = vadd.f32 %v3187, %v3355
      %v3357 = vpop.f32.mrf.mxu0
      %v3358 = vadd.f32 %v3189, %v3357
      %3359 = vmatmul.bf16.gmra.mxu0 %v1931
      %v3360 = vpop.f32.mrf.mxu0
      %v3361 = vadd.f32 %v3192, %v3360
      %v3362 = vpop.f32.mrf.mxu0
      %v3363 = vadd.f32 %v3194, %v3362
      %3364 = vmatmul.bf16.gmra.mxu0 %v1935
      %v3365 = vpop.f32.mrf.mxu0
      %v3366 = vadd.f32 %v3197, %v3365
      %v3367 = vpop.f32.mrf.mxu0
      %v3368 = vadd.f32 %v3199, %v3367
      %3369 = vmatmul.bf16.gmra.mxu0 %v1939
      %v3370 = vpop.f32.mrf.mxu0
      %v3371 = vadd.f32 %v3202, %v3370
      %v3372 = vpop.f32.mrf.mxu0
      %v3373 = vadd.f32 %v3204, %v3372
      %3374 = vmatmul.bf16.gmra.mxu0 %v1943
      %v3375 = vpop.f32.mrf.mxu0
      %v3376 = vadd.f32 %v3207, %v3375
      %v3377 = vpop.f32.mrf.mxu0
      %v3378 = vadd.f32 %v3209, %v3377
      %3379 = vmatmul.bf16.gmra.mxu0 %v1947
      %v3380 = vpop.f32.mrf.mxu0
      %v3381 = vadd.f32 %v3212, %v3380
      %v3382 = vpop.f32.mrf.mxu0
      %v3383 = vadd.f32 %v3214, %v3382
      %3384 = vmatmul.bf16.gmra.mxu0 %v1951
      %v3385 = vpop.f32.mrf.mxu0
      %v3386 = vadd.f32 %v3217, %v3385
      %v3387 = vpop.f32.mrf.mxu0
      %v3388 = vadd.f32 %v3219, %v3387
      %3389 = vmatmul.bf16.gmra.mxu0 %v1955
      %v3390 = vpop.f32.mrf.mxu0
      %v3391 = vadd.f32 %v3222, %v3390
      %v3392 = vpop.f32.mrf.mxu0
      %v3393 = vadd.f32 %v3224, %v3392
      %3394 = vmatmul.bf16.gmra.mxu0 %v1959
      %v3395 = vpop.f32.mrf.mxu0
      %v3396 = vadd.f32 %v3227, %v3395
      %v3397 = vpop.f32.mrf.mxu0
      %v3398 = vadd.f32 %v3229, %v3397
      %3399 = vmatmul.bf16.gmra.mxu0 %v1963
      %v3400 = vpop.f32.mrf.mxu0
      %v3401 = vadd.f32 %v3232, %v3400
      %v3402 = vpop.f32.mrf.mxu0
      %v3403 = vadd.f32 %v3234, %v3402
      %3404 = vmatmul.bf16.gmra.mxu0 %v1967
      %v3405 = vpop.f32.mrf.mxu0
      %v3406 = vadd.f32 %v3237, %v3405
      %v3407 = vpop.f32.mrf.mxu0
      %v3408 = vadd.f32 %v3239, %v3407
      %3409 = vmatmul.bf16.gmra.mxu0 %v1971
      %v3410 = vpop.f32.mrf.mxu0
      %v3411 = vadd.f32 %v3242, %v3410
      %v3412 = vpop.f32.mrf.mxu0
      %v3413 = vadd.f32 %v3244, %v3412
      %3414 = vmatmul.bf16.gmra.mxu0 %v1975
      %v3415 = vpop.f32.mrf.mxu0
      %v3416 = vadd.f32 %v3247, %v3415
      %v3417 = vpop.f32.mrf.mxu0
      %v3418 = vadd.f32 %v3249, %v3417
      %3419 = vmatmul.bf16.gmra.mxu0 %v1979
      %v3420 = vpop.f32.mrf.mxu0
      %v3421 = vadd.f32 %v3252, %v3420
      %v3422 = vpop.f32.mrf.mxu0
      %v3423 = vadd.f32 %v3254, %v3422
      %3424 = vmatmul.bf16.gmra.mxu0 %v1983
      %v3425 = vpop.f32.mrf.mxu0
      %v3426 = vadd.f32 %v3257, %v3425
      %v3427 = vpop.f32.mrf.mxu0
      %v3428 = vadd.f32 %v3259, %v3427
      %3429 = vmatmul.bf16.gmra.mxu0 %v1987
      %v3430 = vpop.f32.mrf.mxu0
      %v3431 = vadd.f32 %v3262, %v3430
      %v3432 = vpop.f32.mrf.mxu0
      %v3433 = vadd.f32 %v3264, %v3432
      %3434 = vmatmul.bf16.gmra.mxu0 %v1991
      %v3435 = vpop.f32.mrf.mxu0
      %v3436 = vadd.f32 %v3267, %v3435
      %v3437 = vpop.f32.mrf.mxu0
      %v3438 = vadd.f32 %v3269, %v3437
      %3439 = vmatmul.bf16.gmra.mxu0 %v1995
      %v3440 = vpop.f32.mrf.mxu0
      %v3441 = vadd.f32 %v3272, %v3440
      %v3442 = vpop.f32.mrf.mxu0
      %v3443 = vadd.f32 %v3274, %v3442
      %3444 = vmatmul.bf16.gmra.mxu0 %v1999
      %v3445 = vpop.f32.mrf.mxu0
      %v3446 = vadd.f32 %v3277, %v3445
      %v3447 = vpop.f32.mrf.mxu0
      %v3448 = vadd.f32 %v3279, %v3447
      %3449 = vmatmul.bf16.gmra.mxu0 %v2003
      %v3450 = vpop.f32.mrf.mxu0
      %v3451 = vadd.f32 %v3282, %v3450
      %v3452 = vpop.f32.mrf.mxu0
      %v3453 = vadd.f32 %v3284, %v3452
      %3454 = vmatmul.bf16.gmra.mxu0 %v2007
      %v3455 = vpop.f32.mrf.mxu0
      %v3456 = vadd.f32 %v3287, %v3455
      %v3457 = vpop.f32.mrf.mxu0
      %v3458 = vadd.f32 %v3289, %v3457
      %3459 = vmatmul.bf16.gmra.mxu0 %v2011
      %v3460 = vpop.f32.mrf.mxu0
      %v3461 = vadd.f32 %v3292, %v3460
      %v3462 = vpop.f32.mrf.mxu0
      %v3463 = vadd.f32 %v3294, %v3462
      %3464 = vmatmul.bf16.gmra.mxu0 %v2015
      %v3465 = vpop.f32.mrf.mxu0
      %v3466 = vadd.f32 %v3297, %v3465
      %v3467 = vpop.f32.mrf.mxu0
      %v3468 = vadd.f32 %v3299, %v3467
      %3469 = vdwg.mxu0
      %3470 = vmatpush.bf16.msra.mxu0 %v2567
      %3471 = vmatpush.bf16.msra.mxu0 %v2563
      %3472 = vmatpush.bf16.msra.mxu0 %v2559
      %3473 = vmatpush.bf16.msra.mxu0 %v2555
      %3474 = vmatpush.bf16.msra.mxu0 %v2551
      %3475 = vmatpush.bf16.msra.mxu0 %v2547
      %3476 = vmatpush.bf16.msra.mxu0 %v2543
      %3477 = vmatpush.bf16.msra.mxu0 %v2539
      %3478 = vmatmul.bf16.gmra.mxu0 %v1888
      %v3479 = vpop.f32.mrf.mxu0
      %v3480 = vadd.f32 %v2147, %v3479
      %v3481 = vpop.f32.mrf.mxu0
      %v3482 = vadd.f32 %v2147, %v3481
      %3483 = vmatmul.bf16.gmra.mxu0 %v1892
      %v3484 = vpop.f32.mrf.mxu0
      %v3485 = vadd.f32 %v2147, %v3484
      %v3486 = vpop.f32.mrf.mxu0
      %v3487 = vadd.f32 %v2147, %v3486
      %3488 = vmatmul.bf16.gmra.mxu0 %v1896
      %v3489 = vpop.f32.mrf.mxu0
      %v3490 = vadd.f32 %v2147, %v3489
      %v3491 = vpop.f32.mrf.mxu0
      %v3492 = vadd.f32 %v2147, %v3491
      %3493 = vmatmul.bf16.gmra.mxu0 %v1900
      %v3494 = vpop.f32.mrf.mxu0
      %v3495 = vadd.f32 %v2147, %v3494
      %v3496 = vpop.f32.mrf.mxu0
      %v3497 = vadd.f32 %v2147, %v3496
      %3498 = vmatmul.bf16.gmra.mxu0 %v1904
      %v3499 = vpop.f32.mrf.mxu0
      %v3500 = vadd.f32 %v2147, %v3499
      %v3501 = vpop.f32.mrf.mxu0
      %v3502 = vadd.f32 %v2147, %v3501
      %3503 = vmatmul.bf16.gmra.mxu0 %v1908
      %v3504 = vpop.f32.mrf.mxu0
      %v3505 = vadd.f32 %v2147, %v3504
      %v3506 = vpop.f32.mrf.mxu0
      %v3507 = vadd.f32 %v2147, %v3506
      %3508 = vmatmul.bf16.gmra.mxu0 %v1912
      %v3509 = vpop.f32.mrf.mxu0
      %v3510 = vadd.f32 %v2147, %v3509
      %v3511 = vpop.f32.mrf.mxu0
      %v3512 = vadd.f32 %v2147, %v3511
      %3513 = vmatmul.bf16.gmra.mxu0 %v1916
      %v3514 = vpop.f32.mrf.mxu0
      %v3515 = vadd.f32 %v2147, %v3514
      %v3516 = vpop.f32.mrf.mxu0
      %v3517 = vadd.f32 %v2147, %v3516
      %3518 = vmatmul.bf16.gmra.mxu0 %v1920
      %v3519 = vpop.f32.mrf.mxu0
      %v3520 = vadd.f32 %v2147, %v3519
      %v3521 = vpop.f32.mrf.mxu0
      %v3522 = vadd.f32 %v2147, %v3521
      %3523 = vmatmul.bf16.gmra.mxu0 %v1924
      %v3524 = vpop.f32.mrf.mxu0
      %v3525 = vadd.f32 %v2147, %v3524
      %v3526 = vpop.f32.mrf.mxu0
      %v3527 = vadd.f32 %v2147, %v3526
      %3528 = vmatmul.bf16.gmra.mxu0 %v1928
      %v3529 = vpop.f32.mrf.mxu0
      %v3530 = vadd.f32 %v2147, %v3529
      %v3531 = vpop.f32.mrf.mxu0
      %v3532 = vadd.f32 %v2147, %v3531
      %3533 = vmatmul.bf16.gmra.mxu0 %v1932
      %v3534 = vpop.f32.mrf.mxu0
      %v3535 = vadd.f32 %v2147, %v3534
      %v3536 = vpop.f32.mrf.mxu0
      %v3537 = vadd.f32 %v2147, %v3536
      %3538 = vmatmul.bf16.gmra.mxu0 %v1936
      %v3539 = vpop.f32.mrf.mxu0
      %v3540 = vadd.f32 %v2147, %v3539
      %v3541 = vpop.f32.mrf.mxu0
      %v3542 = vadd.f32 %v2147, %v3541
      %3543 = vmatmul.bf16.gmra.mxu0 %v1940
      %v3544 = vpop.f32.mrf.mxu0
      %v3545 = vadd.f32 %v2147, %v3544
      %v3546 = vpop.f32.mrf.mxu0
      %v3547 = vadd.f32 %v2147, %v3546
      %3548 = vmatmul.bf16.gmra.mxu0 %v1944
      %v3549 = vpop.f32.mrf.mxu0
      %v3550 = vadd.f32 %v2147, %v3549
      %v3551 = vpop.f32.mrf.mxu0
      %v3552 = vadd.f32 %v2147, %v3551
      %3553 = vmatmul.bf16.gmra.mxu0 %v1948
      %v3554 = vpop.f32.mrf.mxu0
      %v3555 = vadd.f32 %v2147, %v3554
      %v3556 = vpop.f32.mrf.mxu0
      %v3557 = vadd.f32 %v2147, %v3556
      %3558 = vmatmul.bf16.gmra.mxu0 %v1952
      %v3559 = vpop.f32.mrf.mxu0
      %v3560 = vadd.f32 %v2147, %v3559
      %v3561 = vpop.f32.mrf.mxu0
      %v3562 = vadd.f32 %v2147, %v3561
      %3563 = vmatmul.bf16.gmra.mxu0 %v1956
      %v3564 = vpop.f32.mrf.mxu0
      %v3565 = vadd.f32 %v2147, %v3564
      %v3566 = vpop.f32.mrf.mxu0
      %v3567 = vadd.f32 %v2147, %v3566
      %3568 = vmatmul.bf16.gmra.mxu0 %v1960
      %v3569 = vpop.f32.mrf.mxu0
      %v3570 = vadd.f32 %v2147, %v3569
      %v3571 = vpop.f32.mrf.mxu0
      %v3572 = vadd.f32 %v2147, %v3571
      %3573 = vmatmul.bf16.gmra.mxu0 %v1964
      %v3574 = vpop.f32.mrf.mxu0
      %v3575 = vadd.f32 %v2147, %v3574
      %v3576 = vpop.f32.mrf.mxu0
      %v3577 = vadd.f32 %v2147, %v3576
      %3578 = vmatmul.bf16.gmra.mxu0 %v1968
      %v3579 = vpop.f32.mrf.mxu0
      %v3580 = vadd.f32 %v2147, %v3579
      %v3581 = vpop.f32.mrf.mxu0
      %v3582 = vadd.f32 %v2147, %v3581
      %3583 = vmatmul.bf16.gmra.mxu0 %v1972
      %v3584 = vpop.f32.mrf.mxu0
      %v3585 = vadd.f32 %v2147, %v3584
      %v3586 = vpop.f32.mrf.mxu0
      %v3587 = vadd.f32 %v2147, %v3586
      %3588 = vmatmul.bf16.gmra.mxu0 %v1976
      %v3589 = vpop.f32.mrf.mxu0
      %v3590 = vadd.f32 %v2147, %v3589
      %v3591 = vpop.f32.mrf.mxu0
      %v3592 = vadd.f32 %v2147, %v3591
      %3593 = vmatmul.bf16.gmra.mxu0 %v1980
      %v3594 = vpop.f32.mrf.mxu0
      %v3595 = vadd.f32 %v2147, %v3594
      %v3596 = vpop.f32.mrf.mxu0
      %v3597 = vadd.f32 %v2147, %v3596
      %3598 = vmatmul.bf16.gmra.mxu0 %v1984
      %v3599 = vpop.f32.mrf.mxu0
      %v3600 = vadd.f32 %v2147, %v3599
      %v3601 = vpop.f32.mrf.mxu0
      %v3602 = vadd.f32 %v2147, %v3601
      %3603 = vmatmul.bf16.gmra.mxu0 %v1988
      %v3604 = vpop.f32.mrf.mxu0
      %v3605 = vadd.f32 %v2147, %v3604
      %v3606 = vpop.f32.mrf.mxu0
      %v3607 = vadd.f32 %v2147, %v3606
      %3608 = vmatmul.bf16.gmra.mxu0 %v1992
      %v3609 = vpop.f32.mrf.mxu0
      %v3610 = vadd.f32 %v2147, %v3609
      %v3611 = vpop.f32.mrf.mxu0
      %v3612 = vadd.f32 %v2147, %v3611
      %3613 = vmatmul.bf16.gmra.mxu0 %v1996
      %v3614 = vpop.f32.mrf.mxu0
      %v3615 = vadd.f32 %v2147, %v3614
      %v3616 = vpop.f32.mrf.mxu0
      %v3617 = vadd.f32 %v2147, %v3616
      %3618 = vmatmul.bf16.gmra.mxu0 %v2000
      %v3619 = vpop.f32.mrf.mxu0
      %v3620 = vadd.f32 %v2147, %v3619
      %v3621 = vpop.f32.mrf.mxu0
      %v3622 = vadd.f32 %v2147, %v3621
      %3623 = vmatmul.bf16.gmra.mxu0 %v2004
      %v3624 = vpop.f32.mrf.mxu0
      %v3625 = vadd.f32 %v2147, %v3624
      %v3626 = vpop.f32.mrf.mxu0
      %v3627 = vadd.f32 %v2147, %v3626
      %3628 = vmatmul.bf16.gmra.mxu0 %v2008
      %v3629 = vpop.f32.mrf.mxu0
      %v3630 = vadd.f32 %v2147, %v3629
      %v3631 = vpop.f32.mrf.mxu0
      %v3632 = vadd.f32 %v2147, %v3631
      %3633 = vmatmul.bf16.gmra.mxu0 %v2012
      %v3634 = vpop.f32.mrf.mxu0
      %v3635 = vadd.f32 %v2147, %v3634
      %v3636 = vpop.f32.mrf.mxu0
      %v3637 = vadd.f32 %v2147, %v3636
      %3638 = vdwg.mxu0
      %3639 = vmatpush.bf16.msra.mxu0 %v2599
      %3640 = vmatpush.bf16.msra.mxu0 %v2595
      %3641 = vmatpush.bf16.msra.mxu0 %v2591
      %3642 = vmatpush.bf16.msra.mxu0 %v2587
      %3643 = vmatpush.bf16.msra.mxu0 %v2583
      %3644 = vmatpush.bf16.msra.mxu0 %v2579
      %3645 = vmatpush.bf16.msra.mxu0 %v2575
      %3646 = vmatpush.bf16.msra.mxu0 %v2571
      %3647 = vmatmul.bf16.gmra.mxu0 %v1889
      %v3648 = vpop.f32.mrf.mxu0
      %v3649 = vadd.f32 %v3480, %v3648
      %v3650 = vpop.f32.mrf.mxu0
      %v3651 = vadd.f32 %v3482, %v3650
      %3652 = vmatmul.bf16.gmra.mxu0 %v1893
      %v3653 = vpop.f32.mrf.mxu0
      %v3654 = vadd.f32 %v3485, %v3653
      %v3655 = vpop.f32.mrf.mxu0
      %v3656 = vadd.f32 %v3487, %v3655
      %3657 = vmatmul.bf16.gmra.mxu0 %v1897
      %v3658 = vpop.f32.mrf.mxu0
      %v3659 = vadd.f32 %v3490, %v3658
      %v3660 = vpop.f32.mrf.mxu0
      %v3661 = vadd.f32 %v3492, %v3660
      %3662 = vmatmul.bf16.gmra.mxu0 %v1901
      %v3663 = vpop.f32.mrf.mxu0
      %v3664 = vadd.f32 %v3495, %v3663
      %v3665 = vpop.f32.mrf.mxu0
      %v3666 = vadd.f32 %v3497, %v3665
      %3667 = vmatmul.bf16.gmra.mxu0 %v1905
      %v3668 = vpop.f32.mrf.mxu0
      %v3669 = vadd.f32 %v3500, %v3668
      %v3670 = vpop.f32.mrf.mxu0
      %v3671 = vadd.f32 %v3502, %v3670
      %3672 = vmatmul.bf16.gmra.mxu0 %v1909
      %v3673 = vpop.f32.mrf.mxu0
      %v3674 = vadd.f32 %v3505, %v3673
      %v3675 = vpop.f32.mrf.mxu0
      %v3676 = vadd.f32 %v3507, %v3675
      %3677 = vmatmul.bf16.gmra.mxu0 %v1913
      %v3678 = vpop.f32.mrf.mxu0
      %v3679 = vadd.f32 %v3510, %v3678
      %v3680 = vpop.f32.mrf.mxu0
      %v3681 = vadd.f32 %v3512, %v3680
      %3682 = vmatmul.bf16.gmra.mxu0 %v1917
      %v3683 = vpop.f32.mrf.mxu0
      %v3684 = vadd.f32 %v3515, %v3683
      %v3685 = vpop.f32.mrf.mxu0
      %v3686 = vadd.f32 %v3517, %v3685
      %3687 = vmatmul.bf16.gmra.mxu0 %v1921
      %v3688 = vpop.f32.mrf.mxu0
      %v3689 = vadd.f32 %v3520, %v3688
      %v3690 = vpop.f32.mrf.mxu0
      %v3691 = vadd.f32 %v3522, %v3690
      %3692 = vmatmul.bf16.gmra.mxu0 %v1925
      %v3693 = vpop.f32.mrf.mxu0
      %v3694 = vadd.f32 %v3525, %v3693
      %v3695 = vpop.f32.mrf.mxu0
      %v3696 = vadd.f32 %v3527, %v3695
      %3697 = vmatmul.bf16.gmra.mxu0 %v1929
      %v3698 = vpop.f32.mrf.mxu0
      %v3699 = vadd.f32 %v3530, %v3698
      %v3700 = vpop.f32.mrf.mxu0
      %v3701 = vadd.f32 %v3532, %v3700
      %3702 = vmatmul.bf16.gmra.mxu0 %v1933
      %v3703 = vpop.f32.mrf.mxu0
      %v3704 = vadd.f32 %v3535, %v3703
      %v3705 = vpop.f32.mrf.mxu0
      %v3706 = vadd.f32 %v3537, %v3705
      %3707 = vmatmul.bf16.gmra.mxu0 %v1937
      %v3708 = vpop.f32.mrf.mxu0
      %v3709 = vadd.f32 %v3540, %v3708
      %v3710 = vpop.f32.mrf.mxu0
      %v3711 = vadd.f32 %v3542, %v3710
      %3712 = vmatmul.bf16.gmra.mxu0 %v1941
      %v3713 = vpop.f32.mrf.mxu0
      %v3714 = vadd.f32 %v3545, %v3713
      %v3715 = vpop.f32.mrf.mxu0
      %v3716 = vadd.f32 %v3547, %v3715
      %3717 = vmatmul.bf16.gmra.mxu0 %v1945
      %v3718 = vpop.f32.mrf.mxu0
      %v3719 = vadd.f32 %v3550, %v3718
      %v3720 = vpop.f32.mrf.mxu0
      %v3721 = vadd.f32 %v3552, %v3720
      %3722 = vmatmul.bf16.gmra.mxu0 %v1949
      %v3723 = vpop.f32.mrf.mxu0
      %v3724 = vadd.f32 %v3555, %v3723
      %v3725 = vpop.f32.mrf.mxu0
      %v3726 = vadd.f32 %v3557, %v3725
      %3727 = vmatmul.bf16.gmra.mxu0 %v1953
      %v3728 = vpop.f32.mrf.mxu0
      %v3729 = vadd.f32 %v3560, %v3728
      %v3730 = vpop.f32.mrf.mxu0
      %v3731 = vadd.f32 %v3562, %v3730
      %3732 = vmatmul.bf16.gmra.mxu0 %v1957
      %v3733 = vpop.f32.mrf.mxu0
      %v3734 = vadd.f32 %v3565, %v3733
      %v3735 = vpop.f32.mrf.mxu0
      %v3736 = vadd.f32 %v3567, %v3735
      %3737 = vmatmul.bf16.gmra.mxu0 %v1961
      %v3738 = vpop.f32.mrf.mxu0
      %v3739 = vadd.f32 %v3570, %v3738
      %v3740 = vpop.f32.mrf.mxu0
      %v3741 = vadd.f32 %v3572, %v3740
      %3742 = vmatmul.bf16.gmra.mxu0 %v1965
      %v3743 = vpop.f32.mrf.mxu0
      %v3744 = vadd.f32 %v3575, %v3743
      %v3745 = vpop.f32.mrf.mxu0
      %v3746 = vadd.f32 %v3577, %v3745
      %3747 = vmatmul.bf16.gmra.mxu0 %v1969
      %v3748 = vpop.f32.mrf.mxu0
      %v3749 = vadd.f32 %v3580, %v3748
      %v3750 = vpop.f32.mrf.mxu0
      %v3751 = vadd.f32 %v3582, %v3750
      %3752 = vmatmul.bf16.gmra.mxu0 %v1973
      %v3753 = vpop.f32.mrf.mxu0
      %v3754 = vadd.f32 %v3585, %v3753
      %v3755 = vpop.f32.mrf.mxu0
      %v3756 = vadd.f32 %v3587, %v3755
      %3757 = vmatmul.bf16.gmra.mxu0 %v1977
      %v3758 = vpop.f32.mrf.mxu0
      %v3759 = vadd.f32 %v3590, %v3758
      %v3760 = vpop.f32.mrf.mxu0
      %v3761 = vadd.f32 %v3592, %v3760
      %3762 = vmatmul.bf16.gmra.mxu0 %v1981
      %v3763 = vpop.f32.mrf.mxu0
      %v3764 = vadd.f32 %v3595, %v3763
      %v3765 = vpop.f32.mrf.mxu0
      %v3766 = vadd.f32 %v3597, %v3765
      %3767 = vmatmul.bf16.gmra.mxu0 %v1985
      %v3768 = vpop.f32.mrf.mxu0
      %v3769 = vadd.f32 %v3600, %v3768
      %v3770 = vpop.f32.mrf.mxu0
      %v3771 = vadd.f32 %v3602, %v3770
      %3772 = vmatmul.bf16.gmra.mxu0 %v1989
      %v3773 = vpop.f32.mrf.mxu0
      %v3774 = vadd.f32 %v3605, %v3773
      %v3775 = vpop.f32.mrf.mxu0
      %v3776 = vadd.f32 %v3607, %v3775
      %3777 = vmatmul.bf16.gmra.mxu0 %v1993
      %v3778 = vpop.f32.mrf.mxu0
      %v3779 = vadd.f32 %v3610, %v3778
      %v3780 = vpop.f32.mrf.mxu0
      %v3781 = vadd.f32 %v3612, %v3780
      %3782 = vmatmul.bf16.gmra.mxu0 %v1997
      %v3783 = vpop.f32.mrf.mxu0
      %v3784 = vadd.f32 %v3615, %v3783
      %v3785 = vpop.f32.mrf.mxu0
      %v3786 = vadd.f32 %v3617, %v3785
      %3787 = vmatmul.bf16.gmra.mxu0 %v2001
      %v3788 = vpop.f32.mrf.mxu0
      %v3789 = vadd.f32 %v3620, %v3788
      %v3790 = vpop.f32.mrf.mxu0
      %v3791 = vadd.f32 %v3622, %v3790
      %3792 = vmatmul.bf16.gmra.mxu0 %v2005
      %v3793 = vpop.f32.mrf.mxu0
      %v3794 = vadd.f32 %v3625, %v3793
      %v3795 = vpop.f32.mrf.mxu0
      %v3796 = vadd.f32 %v3627, %v3795
      %3797 = vmatmul.bf16.gmra.mxu0 %v2009
      %v3798 = vpop.f32.mrf.mxu0
      %v3799 = vadd.f32 %v3630, %v3798
      %v3800 = vpop.f32.mrf.mxu0
      %v3801 = vadd.f32 %v3632, %v3800
      %3802 = vmatmul.bf16.gmra.mxu0 %v2013
      %v3803 = vpop.f32.mrf.mxu0
      %v3804 = vadd.f32 %v3635, %v3803
      %v3805 = vpop.f32.mrf.mxu0
      %v3806 = vadd.f32 %v3637, %v3805
      %3807 = vdwg.mxu0
      %3808 = vmatpush.bf16.msra.mxu0 %v2631
      %3809 = vmatpush.bf16.msra.mxu0 %v2627
      %3810 = vmatpush.bf16.msra.mxu0 %v2623
      %3811 = vmatpush.bf16.msra.mxu0 %v2619
      %3812 = vmatpush.bf16.msra.mxu0 %v2615
      %3813 = vmatpush.bf16.msra.mxu0 %v2611
      %3814 = vmatpush.bf16.msra.mxu0 %v2607
      %3815 = vmatpush.bf16.msra.mxu0 %v2603
      %3816 = vmatmul.bf16.gmra.mxu0 %v1890
      %v3817 = vpop.f32.mrf.mxu0
      %v3818 = vadd.f32 %v3649, %v3817
      %v3819 = vpop.f32.mrf.mxu0
      %v3820 = vadd.f32 %v3651, %v3819
      %3821 = vmatmul.bf16.gmra.mxu0 %v1894
      %v3822 = vpop.f32.mrf.mxu0
      %v3823 = vadd.f32 %v3654, %v3822
      %v3824 = vpop.f32.mrf.mxu0
      %v3825 = vadd.f32 %v3656, %v3824
      %3826 = vmatmul.bf16.gmra.mxu0 %v1898
      %v3827 = vpop.f32.mrf.mxu0
      %v3828 = vadd.f32 %v3659, %v3827
      %v3829 = vpop.f32.mrf.mxu0
      %v3830 = vadd.f32 %v3661, %v3829
      %3831 = vmatmul.bf16.gmra.mxu0 %v1902
      %v3832 = vpop.f32.mrf.mxu0
      %v3833 = vadd.f32 %v3664, %v3832
      %v3834 = vpop.f32.mrf.mxu0
      %v3835 = vadd.f32 %v3666, %v3834
      %3836 = vmatmul.bf16.gmra.mxu0 %v1906
      %v3837 = vpop.f32.mrf.mxu0
      %v3838 = vadd.f32 %v3669, %v3837
      %v3839 = vpop.f32.mrf.mxu0
      %v3840 = vadd.f32 %v3671, %v3839
      %3841 = vmatmul.bf16.gmra.mxu0 %v1910
      %v3842 = vpop.f32.mrf.mxu0
      %v3843 = vadd.f32 %v3674, %v3842
      %v3844 = vpop.f32.mrf.mxu0
      %v3845 = vadd.f32 %v3676, %v3844
      %3846 = vmatmul.bf16.gmra.mxu0 %v1914
      %v3847 = vpop.f32.mrf.mxu0
      %v3848 = vadd.f32 %v3679, %v3847
      %v3849 = vpop.f32.mrf.mxu0
      %v3850 = vadd.f32 %v3681, %v3849
      %3851 = vmatmul.bf16.gmra.mxu0 %v1918
      %v3852 = vpop.f32.mrf.mxu0
      %v3853 = vadd.f32 %v3684, %v3852
      %v3854 = vpop.f32.mrf.mxu0
      %v3855 = vadd.f32 %v3686, %v3854
      %3856 = vmatmul.bf16.gmra.mxu0 %v1922
      %v3857 = vpop.f32.mrf.mxu0
      %v3858 = vadd.f32 %v3689, %v3857
      %v3859 = vpop.f32.mrf.mxu0
      %v3860 = vadd.f32 %v3691, %v3859
      %3861 = vmatmul.bf16.gmra.mxu0 %v1926
      %v3862 = vpop.f32.mrf.mxu0
      %v3863 = vadd.f32 %v3694, %v3862
      %v3864 = vpop.f32.mrf.mxu0
      %v3865 = vadd.f32 %v3696, %v3864
      %3866 = vmatmul.bf16.gmra.mxu0 %v1930
      %v3867 = vpop.f32.mrf.mxu0
      %v3868 = vadd.f32 %v3699, %v3867
      %v3869 = vpop.f32.mrf.mxu0
      %v3870 = vadd.f32 %v3701, %v3869
      %3871 = vmatmul.bf16.gmra.mxu0 %v1934
      %v3872 = vpop.f32.mrf.mxu0
      %v3873 = vadd.f32 %v3704, %v3872
      %v3874 = vpop.f32.mrf.mxu0
      %v3875 = vadd.f32 %v3706, %v3874
      %3876 = vmatmul.bf16.gmra.mxu0 %v1938
      %v3877 = vpop.f32.mrf.mxu0
      %v3878 = vadd.f32 %v3709, %v3877
      %v3879 = vpop.f32.mrf.mxu0
      %v3880 = vadd.f32 %v3711, %v3879
      %3881 = vmatmul.bf16.gmra.mxu0 %v1942
      %v3882 = vpop.f32.mrf.mxu0
      %v3883 = vadd.f32 %v3714, %v3882
      %v3884 = vpop.f32.mrf.mxu0
      %v3885 = vadd.f32 %v3716, %v3884
      %3886 = vmatmul.bf16.gmra.mxu0 %v1946
      %v3887 = vpop.f32.mrf.mxu0
      %v3888 = vadd.f32 %v3719, %v3887
      %v3889 = vpop.f32.mrf.mxu0
      %v3890 = vadd.f32 %v3721, %v3889
      %3891 = vmatmul.bf16.gmra.mxu0 %v1950
      %v3892 = vpop.f32.mrf.mxu0
      %v3893 = vadd.f32 %v3724, %v3892
      %v3894 = vpop.f32.mrf.mxu0
      %v3895 = vadd.f32 %v3726, %v3894
      %3896 = vmatmul.bf16.gmra.mxu0 %v1954
      %v3897 = vpop.f32.mrf.mxu0
      %v3898 = vadd.f32 %v3729, %v3897
      %v3899 = vpop.f32.mrf.mxu0
      %v3900 = vadd.f32 %v3731, %v3899
      %3901 = vmatmul.bf16.gmra.mxu0 %v1958
      %v3902 = vpop.f32.mrf.mxu0
      %v3903 = vadd.f32 %v3734, %v3902
      %v3904 = vpop.f32.mrf.mxu0
      %v3905 = vadd.f32 %v3736, %v3904
      %3906 = vmatmul.bf16.gmra.mxu0 %v1962
      %v3907 = vpop.f32.mrf.mxu0
      %v3908 = vadd.f32 %v3739, %v3907
      %v3909 = vpop.f32.mrf.mxu0
      %v3910 = vadd.f32 %v3741, %v3909
      %3911 = vmatmul.bf16.gmra.mxu0 %v1966
      %v3912 = vpop.f32.mrf.mxu0
      %v3913 = vadd.f32 %v3744, %v3912
      %v3914 = vpop.f32.mrf.mxu0
      %v3915 = vadd.f32 %v3746, %v3914
      %3916 = vmatmul.bf16.gmra.mxu0 %v1970
      %v3917 = vpop.f32.mrf.mxu0
      %v3918 = vadd.f32 %v3749, %v3917
      %v3919 = vpop.f32.mrf.mxu0
      %v3920 = vadd.f32 %v3751, %v3919
      %3921 = vmatmul.bf16.gmra.mxu0 %v1974
      %v3922 = vpop.f32.mrf.mxu0
      %v3923 = vadd.f32 %v3754, %v3922
      %v3924 = vpop.f32.mrf.mxu0
      %v3925 = vadd.f32 %v3756, %v3924
      %3926 = vmatmul.bf16.gmra.mxu0 %v1978
      %v3927 = vpop.f32.mrf.mxu0
      %v3928 = vadd.f32 %v3759, %v3927
      %v3929 = vpop.f32.mrf.mxu0
      %v3930 = vadd.f32 %v3761, %v3929
      %3931 = vmatmul.bf16.gmra.mxu0 %v1982
      %v3932 = vpop.f32.mrf.mxu0
      %v3933 = vadd.f32 %v3764, %v3932
      %v3934 = vpop.f32.mrf.mxu0
      %v3935 = vadd.f32 %v3766, %v3934
      %3936 = vmatmul.bf16.gmra.mxu0 %v1986
      %v3937 = vpop.f32.mrf.mxu0
      %v3938 = vadd.f32 %v3769, %v3937
      %v3939 = vpop.f32.mrf.mxu0
      %v3940 = vadd.f32 %v3771, %v3939
      %3941 = vmatmul.bf16.gmra.mxu0 %v1990
      %v3942 = vpop.f32.mrf.mxu0
      %v3943 = vadd.f32 %v3774, %v3942
      %v3944 = vpop.f32.mrf.mxu0
      %v3945 = vadd.f32 %v3776, %v3944
      %3946 = vmatmul.bf16.gmra.mxu0 %v1994
      %v3947 = vpop.f32.mrf.mxu0
      %v3948 = vadd.f32 %v3779, %v3947
      %v3949 = vpop.f32.mrf.mxu0
      %v3950 = vadd.f32 %v3781, %v3949
      %3951 = vmatmul.bf16.gmra.mxu0 %v1998
      %v3952 = vpop.f32.mrf.mxu0
      %v3953 = vadd.f32 %v3784, %v3952
      %v3954 = vpop.f32.mrf.mxu0
      %v3955 = vadd.f32 %v3786, %v3954
      %3956 = vmatmul.bf16.gmra.mxu0 %v2002
      %v3957 = vpop.f32.mrf.mxu0
      %v3958 = vadd.f32 %v3789, %v3957
      %v3959 = vpop.f32.mrf.mxu0
      %v3960 = vadd.f32 %v3791, %v3959
      %3961 = vmatmul.bf16.gmra.mxu0 %v2006
      %v3962 = vpop.f32.mrf.mxu0
      %v3963 = vadd.f32 %v3794, %v3962
      %v3964 = vpop.f32.mrf.mxu0
      %v3965 = vadd.f32 %v3796, %v3964
      %3966 = vmatmul.bf16.gmra.mxu0 %v2010
      %v3967 = vpop.f32.mrf.mxu0
      %v3968 = vadd.f32 %v3799, %v3967
      %v3969 = vpop.f32.mrf.mxu0
      %v3970 = vadd.f32 %v3801, %v3969
      %3971 = vmatmul.bf16.gmra.mxu0 %v2014
      %v3972 = vpop.f32.mrf.mxu0
      %v3973 = vadd.f32 %v3804, %v3972
      %v3974 = vpop.f32.mrf.mxu0
      %v3975 = vadd.f32 %v3806, %v3974
      %3976 = vdwg.mxu0
      %3977 = vmatpush.bf16.msra.mxu0 %v2663
      %3978 = vmatpush.bf16.msra.mxu0 %v2659
      %3979 = vmatpush.bf16.msra.mxu0 %v2655
      %3980 = vmatpush.bf16.msra.mxu0 %v2651
      %3981 = vmatpush.bf16.msra.mxu0 %v2647
      %3982 = vmatpush.bf16.msra.mxu0 %v2643
      %3983 = vmatpush.bf16.msra.mxu0 %v2639
      %3984 = vmatpush.bf16.msra.mxu0 %v2635
      %3985 = vmatmul.bf16.gmra.mxu0 %v1891
      %v3986 = vpop.f32.mrf.mxu0
      %v3987 = vadd.f32 %v3818, %v3986
      %v3988 = vpop.f32.mrf.mxu0
      %v3989 = vadd.f32 %v3820, %v3988
      %3990 = vmatmul.bf16.gmra.mxu0 %v1895
      %v3991 = vpop.f32.mrf.mxu0
      %v3992 = vadd.f32 %v3823, %v3991
      %v3993 = vpop.f32.mrf.mxu0
      %v3994 = vadd.f32 %v3825, %v3993
      %3995 = vmatmul.bf16.gmra.mxu0 %v1899
      %v3996 = vpop.f32.mrf.mxu0
      %v3997 = vadd.f32 %v3828, %v3996
      %v3998 = vpop.f32.mrf.mxu0
      %v3999 = vadd.f32 %v3830, %v3998
      %4000 = vmatmul.bf16.gmra.mxu0 %v1903
      %v4001 = vpop.f32.mrf.mxu0
      %v4002 = vadd.f32 %v3833, %v4001
      %v4003 = vpop.f32.mrf.mxu0
      %v4004 = vadd.f32 %v3835, %v4003
      %4005 = vmatmul.bf16.gmra.mxu0 %v1907
      %v4006 = vpop.f32.mrf.mxu0
      %v4007 = vadd.f32 %v3838, %v4006
      %v4008 = vpop.f32.mrf.mxu0
      %v4009 = vadd.f32 %v3840, %v4008
      %4010 = vmatmul.bf16.gmra.mxu0 %v1911
      %v4011 = vpop.f32.mrf.mxu0
      %v4012 = vadd.f32 %v3843, %v4011
      %v4013 = vpop.f32.mrf.mxu0
      %v4014 = vadd.f32 %v3845, %v4013
      %4015 = vmatmul.bf16.gmra.mxu0 %v1915
      %v4016 = vpop.f32.mrf.mxu0
      %v4017 = vadd.f32 %v3848, %v4016
      %v4018 = vpop.f32.mrf.mxu0
      %v4019 = vadd.f32 %v3850, %v4018
      %4020 = vmatmul.bf16.gmra.mxu0 %v1919
      %v4021 = vpop.f32.mrf.mxu0
      %v4022 = vadd.f32 %v3853, %v4021
      %v4023 = vpop.f32.mrf.mxu0
      %v4024 = vadd.f32 %v3855, %v4023
      %4025 = vmatmul.bf16.gmra.mxu0 %v1923
      %v4026 = vpop.f32.mrf.mxu0
      %v4027 = vadd.f32 %v3858, %v4026
      %v4028 = vpop.f32.mrf.mxu0
      %v4029 = vadd.f32 %v3860, %v4028
      %4030 = vmatmul.bf16.gmra.mxu0 %v1927
      %v4031 = vpop.f32.mrf.mxu0
      %v4032 = vadd.f32 %v3863, %v4031
      %v4033 = vpop.f32.mrf.mxu0
      %v4034 = vadd.f32 %v3865, %v4033
      %4035 = vmatmul.bf16.gmra.mxu0 %v1931
      %v4036 = vpop.f32.mrf.mxu0
      %v4037 = vadd.f32 %v3868, %v4036
      %v4038 = vpop.f32.mrf.mxu0
      %v4039 = vadd.f32 %v3870, %v4038
      %4040 = vmatmul.bf16.gmra.mxu0 %v1935
      %v4041 = vpop.f32.mrf.mxu0
      %v4042 = vadd.f32 %v3873, %v4041
      %v4043 = vpop.f32.mrf.mxu0
      %v4044 = vadd.f32 %v3875, %v4043
      %4045 = vmatmul.bf16.gmra.mxu0 %v1939
      %v4046 = vpop.f32.mrf.mxu0
      %v4047 = vadd.f32 %v3878, %v4046
      %v4048 = vpop.f32.mrf.mxu0
      %v4049 = vadd.f32 %v3880, %v4048
      %4050 = vmatmul.bf16.gmra.mxu0 %v1943
      %v4051 = vpop.f32.mrf.mxu0
      %v4052 = vadd.f32 %v3883, %v4051
      %v4053 = vpop.f32.mrf.mxu0
      %v4054 = vadd.f32 %v3885, %v4053
      %4055 = vmatmul.bf16.gmra.mxu0 %v1947
      %v4056 = vpop.f32.mrf.mxu0
      %v4057 = vadd.f32 %v3888, %v4056
      %v4058 = vpop.f32.mrf.mxu0
      %v4059 = vadd.f32 %v3890, %v4058
      %4060 = vmatmul.bf16.gmra.mxu0 %v1951
      %v4061 = vpop.f32.mrf.mxu0
      %v4062 = vadd.f32 %v3893, %v4061
      %v4063 = vpop.f32.mrf.mxu0
      %v4064 = vadd.f32 %v3895, %v4063
      %4065 = vmatmul.bf16.gmra.mxu0 %v1955
      %v4066 = vpop.f32.mrf.mxu0
      %v4067 = vadd.f32 %v3898, %v4066
      %v4068 = vpop.f32.mrf.mxu0
      %v4069 = vadd.f32 %v3900, %v4068
      %4070 = vmatmul.bf16.gmra.mxu0 %v1959
      %v4071 = vpop.f32.mrf.mxu0
      %v4072 = vadd.f32 %v3903, %v4071
      %v4073 = vpop.f32.mrf.mxu0
      %v4074 = vadd.f32 %v3905, %v4073
      %4075 = vmatmul.bf16.gmra.mxu0 %v1963
      %v4076 = vpop.f32.mrf.mxu0
      %v4077 = vadd.f32 %v3908, %v4076
      %v4078 = vpop.f32.mrf.mxu0
      %v4079 = vadd.f32 %v3910, %v4078
      %4080 = vmatmul.bf16.gmra.mxu0 %v1967
      %v4081 = vpop.f32.mrf.mxu0
      %v4082 = vadd.f32 %v3913, %v4081
      %v4083 = vpop.f32.mrf.mxu0
      %v4084 = vadd.f32 %v3915, %v4083
      %4085 = vmatmul.bf16.gmra.mxu0 %v1971
      %v4086 = vpop.f32.mrf.mxu0
      %v4087 = vadd.f32 %v3918, %v4086
      %v4088 = vpop.f32.mrf.mxu0
      %v4089 = vadd.f32 %v3920, %v4088
      %4090 = vmatmul.bf16.gmra.mxu0 %v1975
      %v4091 = vpop.f32.mrf.mxu0
      %v4092 = vadd.f32 %v3923, %v4091
      %v4093 = vpop.f32.mrf.mxu0
      %v4094 = vadd.f32 %v3925, %v4093
      %4095 = vmatmul.bf16.gmra.mxu0 %v1979
      %v4096 = vpop.f32.mrf.mxu0
      %v4097 = vadd.f32 %v3928, %v4096
      %v4098 = vpop.f32.mrf.mxu0
      %v4099 = vadd.f32 %v3930, %v4098
      %4100 = vmatmul.bf16.gmra.mxu0 %v1983
      %v4101 = vpop.f32.mrf.mxu0
      %v4102 = vadd.f32 %v3933, %v4101
      %v4103 = vpop.f32.mrf.mxu0
      %v4104 = vadd.f32 %v3935, %v4103
      %4105 = vmatmul.bf16.gmra.mxu0 %v1987
      %v4106 = vpop.f32.mrf.mxu0
      %v4107 = vadd.f32 %v3938, %v4106
      %v4108 = vpop.f32.mrf.mxu0
      %v4109 = vadd.f32 %v3940, %v4108
      %4110 = vmatmul.bf16.gmra.mxu0 %v1991
      %v4111 = vpop.f32.mrf.mxu0
      %v4112 = vadd.f32 %v3943, %v4111
      %v4113 = vpop.f32.mrf.mxu0
      %v4114 = vadd.f32 %v3945, %v4113
      %4115 = vmatmul.bf16.gmra.mxu0 %v1995
      %v4116 = vpop.f32.mrf.mxu0
      %v4117 = vadd.f32 %v3948, %v4116
      %v4118 = vpop.f32.mrf.mxu0
      %v4119 = vadd.f32 %v3950, %v4118
      %4120 = vmatmul.bf16.gmra.mxu0 %v1999
      %v4121 = vpop.f32.mrf.mxu0
      %v4122 = vadd.f32 %v3953, %v4121
      %v4123 = vpop.f32.mrf.mxu0
      %v4124 = vadd.f32 %v3955, %v4123
      %4125 = vmatmul.bf16.gmra.mxu0 %v2003
      %v4126 = vpop.f32.mrf.mxu0
      %v4127 = vadd.f32 %v3958, %v4126
      %v4128 = vpop.f32.mrf.mxu0
      %v4129 = vadd.f32 %v3960, %v4128
      %4130 = vmatmul.bf16.gmra.mxu0 %v2007
      %v4131 = vpop.f32.mrf.mxu0
      %v4132 = vadd.f32 %v3963, %v4131
      %v4133 = vpop.f32.mrf.mxu0
      %v4134 = vadd.f32 %v3965, %v4133
      %4135 = vmatmul.bf16.gmra.mxu0 %v2011
      %v4136 = vpop.f32.mrf.mxu0
      %v4137 = vadd.f32 %v3968, %v4136
      %v4138 = vpop.f32.mrf.mxu0
      %v4139 = vadd.f32 %v3970, %v4138
      %4140 = vmatmul.bf16.gmra.mxu0 %v2015
      %v4141 = vpop.f32.mrf.mxu0
      %v4142 = vadd.f32 %v3973, %v4141
      %v4143 = vpop.f32.mrf.mxu0
      %v4144 = vadd.f32 %v3975, %v4143
      %4145 = vdwg.mxu0
      %4146 = vmatpush.bf16.msra.mxu0 %v2568
      %4147 = vmatpush.bf16.msra.mxu0 %v2564
      %4148 = vmatpush.bf16.msra.mxu0 %v2560
      %4149 = vmatpush.bf16.msra.mxu0 %v2556
      %4150 = vmatpush.bf16.msra.mxu0 %v2552
      %4151 = vmatpush.bf16.msra.mxu0 %v2548
      %4152 = vmatpush.bf16.msra.mxu0 %v2544
      %4153 = vmatpush.bf16.msra.mxu0 %v2540
      %4154 = vmatmul.bf16.gmra.mxu0 %v1888
      %v4155 = vpop.f32.mrf.mxu0
      %v4156 = vadd.f32 %v2148, %v4155
      %v4157 = vpop.f32.mrf.mxu0
      %v4158 = vadd.f32 %v2148, %v4157
      %4159 = vmatmul.bf16.gmra.mxu0 %v1892
      %v4160 = vpop.f32.mrf.mxu0
      %v4161 = vadd.f32 %v2148, %v4160
      %v4162 = vpop.f32.mrf.mxu0
      %v4163 = vadd.f32 %v2148, %v4162
      %4164 = vmatmul.bf16.gmra.mxu0 %v1896
      %v4165 = vpop.f32.mrf.mxu0
      %v4166 = vadd.f32 %v2148, %v4165
      %v4167 = vpop.f32.mrf.mxu0
      %v4168 = vadd.f32 %v2148, %v4167
      %4169 = vmatmul.bf16.gmra.mxu0 %v1900
      %v4170 = vpop.f32.mrf.mxu0
      %v4171 = vadd.f32 %v2148, %v4170
      %v4172 = vpop.f32.mrf.mxu0
      %v4173 = vadd.f32 %v2148, %v4172
      %4174 = vmatmul.bf16.gmra.mxu0 %v1904
      %v4175 = vpop.f32.mrf.mxu0
      %v4176 = vadd.f32 %v2148, %v4175
      %v4177 = vpop.f32.mrf.mxu0
      %v4178 = vadd.f32 %v2148, %v4177
      %4179 = vmatmul.bf16.gmra.mxu0 %v1908
      %v4180 = vpop.f32.mrf.mxu0
      %v4181 = vadd.f32 %v2148, %v4180
      %v4182 = vpop.f32.mrf.mxu0
      %v4183 = vadd.f32 %v2148, %v4182
      %4184 = vmatmul.bf16.gmra.mxu0 %v1912
      %v4185 = vpop.f32.mrf.mxu0
      %v4186 = vadd.f32 %v2148, %v4185
      %v4187 = vpop.f32.mrf.mxu0
      %v4188 = vadd.f32 %v2148, %v4187
      %4189 = vmatmul.bf16.gmra.mxu0 %v1916
      %v4190 = vpop.f32.mrf.mxu0
      %v4191 = vadd.f32 %v2148, %v4190
      %v4192 = vpop.f32.mrf.mxu0
      %v4193 = vadd.f32 %v2148, %v4192
      %4194 = vmatmul.bf16.gmra.mxu0 %v1920
      %v4195 = vpop.f32.mrf.mxu0
      %v4196 = vadd.f32 %v2148, %v4195
      %v4197 = vpop.f32.mrf.mxu0
      %v4198 = vadd.f32 %v2148, %v4197
      %4199 = vmatmul.bf16.gmra.mxu0 %v1924
      %v4200 = vpop.f32.mrf.mxu0
      %v4201 = vadd.f32 %v2148, %v4200
      %v4202 = vpop.f32.mrf.mxu0
      %v4203 = vadd.f32 %v2148, %v4202
      %4204 = vmatmul.bf16.gmra.mxu0 %v1928
      %v4205 = vpop.f32.mrf.mxu0
      %v4206 = vadd.f32 %v2148, %v4205
      %v4207 = vpop.f32.mrf.mxu0
      %v4208 = vadd.f32 %v2148, %v4207
      %4209 = vmatmul.bf16.gmra.mxu0 %v1932
      %v4210 = vpop.f32.mrf.mxu0
      %v4211 = vadd.f32 %v2148, %v4210
      %v4212 = vpop.f32.mrf.mxu0
      %v4213 = vadd.f32 %v2148, %v4212
      %4214 = vmatmul.bf16.gmra.mxu0 %v1936
      %v4215 = vpop.f32.mrf.mxu0
      %v4216 = vadd.f32 %v2148, %v4215
      %v4217 = vpop.f32.mrf.mxu0
      %v4218 = vadd.f32 %v2148, %v4217
      %4219 = vmatmul.bf16.gmra.mxu0 %v1940
      %v4220 = vpop.f32.mrf.mxu0
      %v4221 = vadd.f32 %v2148, %v4220
      %v4222 = vpop.f32.mrf.mxu0
      %v4223 = vadd.f32 %v2148, %v4222
      %4224 = vmatmul.bf16.gmra.mxu0 %v1944
      %v4225 = vpop.f32.mrf.mxu0
      %v4226 = vadd.f32 %v2148, %v4225
      %v4227 = vpop.f32.mrf.mxu0
      %v4228 = vadd.f32 %v2148, %v4227
      %4229 = vmatmul.bf16.gmra.mxu0 %v1948
      %v4230 = vpop.f32.mrf.mxu0
      %v4231 = vadd.f32 %v2148, %v4230
      %v4232 = vpop.f32.mrf.mxu0
      %v4233 = vadd.f32 %v2148, %v4232
      %4234 = vmatmul.bf16.gmra.mxu0 %v1952
      %v4235 = vpop.f32.mrf.mxu0
      %v4236 = vadd.f32 %v2148, %v4235
      %v4237 = vpop.f32.mrf.mxu0
      %v4238 = vadd.f32 %v2148, %v4237
      %4239 = vmatmul.bf16.gmra.mxu0 %v1956
      %v4240 = vpop.f32.mrf.mxu0
      %v4241 = vadd.f32 %v2148, %v4240
      %v4242 = vpop.f32.mrf.mxu0
      %v4243 = vadd.f32 %v2148, %v4242
      %4244 = vmatmul.bf16.gmra.mxu0 %v1960
      %v4245 = vpop.f32.mrf.mxu0
      %v4246 = vadd.f32 %v2148, %v4245
      %v4247 = vpop.f32.mrf.mxu0
      %v4248 = vadd.f32 %v2148, %v4247
      %4249 = vmatmul.bf16.gmra.mxu0 %v1964
      %v4250 = vpop.f32.mrf.mxu0
      %v4251 = vadd.f32 %v2148, %v4250
      %v4252 = vpop.f32.mrf.mxu0
      %v4253 = vadd.f32 %v2148, %v4252
      %4254 = vmatmul.bf16.gmra.mxu0 %v1968
      %v4255 = vpop.f32.mrf.mxu0
      %v4256 = vadd.f32 %v2148, %v4255
      %v4257 = vpop.f32.mrf.mxu0
      %v4258 = vadd.f32 %v2148, %v4257
      %4259 = vmatmul.bf16.gmra.mxu0 %v1972
      %v4260 = vpop.f32.mrf.mxu0
      %v4261 = vadd.f32 %v2148, %v4260
      %v4262 = vpop.f32.mrf.mxu0
      %v4263 = vadd.f32 %v2148, %v4262
      %4264 = vmatmul.bf16.gmra.mxu0 %v1976
      %v4265 = vpop.f32.mrf.mxu0
      %v4266 = vadd.f32 %v2148, %v4265
      %v4267 = vpop.f32.mrf.mxu0
      %v4268 = vadd.f32 %v2148, %v4267
      %4269 = vmatmul.bf16.gmra.mxu0 %v1980
      %v4270 = vpop.f32.mrf.mxu0
      %v4271 = vadd.f32 %v2148, %v4270
      %v4272 = vpop.f32.mrf.mxu0
      %v4273 = vadd.f32 %v2148, %v4272
      %4274 = vmatmul.bf16.gmra.mxu0 %v1984
      %v4275 = vpop.f32.mrf.mxu0
      %v4276 = vadd.f32 %v2148, %v4275
      %v4277 = vpop.f32.mrf.mxu0
      %v4278 = vadd.f32 %v2148, %v4277
      %4279 = vmatmul.bf16.gmra.mxu0 %v1988
      %v4280 = vpop.f32.mrf.mxu0
      %v4281 = vadd.f32 %v2148, %v4280
      %v4282 = vpop.f32.mrf.mxu0
      %v4283 = vadd.f32 %v2148, %v4282
      %4284 = vmatmul.bf16.gmra.mxu0 %v1992
      %v4285 = vpop.f32.mrf.mxu0
      %v4286 = vadd.f32 %v2148, %v4285
      %v4287 = vpop.f32.mrf.mxu0
      %v4288 = vadd.f32 %v2148, %v4287
      %4289 = vmatmul.bf16.gmra.mxu0 %v1996
      %v4290 = vpop.f32.mrf.mxu0
      %v4291 = vadd.f32 %v2148, %v4290
      %v4292 = vpop.f32.mrf.mxu0
      %v4293 = vadd.f32 %v2148, %v4292
      %4294 = vmatmul.bf16.gmra.mxu0 %v2000
      %v4295 = vpop.f32.mrf.mxu0
      %v4296 = vadd.f32 %v2148, %v4295
      %v4297 = vpop.f32.mrf.mxu0
      %v4298 = vadd.f32 %v2148, %v4297
      %4299 = vmatmul.bf16.gmra.mxu0 %v2004
      %v4300 = vpop.f32.mrf.mxu0
      %v4301 = vadd.f32 %v2148, %v4300
      %v4302 = vpop.f32.mrf.mxu0
      %v4303 = vadd.f32 %v2148, %v4302
      %4304 = vmatmul.bf16.gmra.mxu0 %v2008
      %v4305 = vpop.f32.mrf.mxu0
      %v4306 = vadd.f32 %v2148, %v4305
      %v4307 = vpop.f32.mrf.mxu0
      %v4308 = vadd.f32 %v2148, %v4307
      %4309 = vmatmul.bf16.gmra.mxu0 %v2012
      %v4310 = vpop.f32.mrf.mxu0
      %v4311 = vadd.f32 %v2148, %v4310
      %v4312 = vpop.f32.mrf.mxu0
      %v4313 = vadd.f32 %v2148, %v4312
      %4314 = vdwg.mxu0
      %4315 = vmatpush.bf16.msra.mxu0 %v2600
      %4316 = vmatpush.bf16.msra.mxu0 %v2596
      %4317 = vmatpush.bf16.msra.mxu0 %v2592
      %4318 = vmatpush.bf16.msra.mxu0 %v2588
      %4319 = vmatpush.bf16.msra.mxu0 %v2584
      %4320 = vmatpush.bf16.msra.mxu0 %v2580
      %4321 = vmatpush.bf16.msra.mxu0 %v2576
      %4322 = vmatpush.bf16.msra.mxu0 %v2572
      %4323 = vmatmul.bf16.gmra.mxu0 %v1889
      %v4324 = vpop.f32.mrf.mxu0
      %v4325 = vadd.f32 %v4156, %v4324
      %v4326 = vpop.f32.mrf.mxu0
      %v4327 = vadd.f32 %v4158, %v4326
      %4328 = vmatmul.bf16.gmra.mxu0 %v1893
      %v4329 = vpop.f32.mrf.mxu0
      %v4330 = vadd.f32 %v4161, %v4329
      %v4331 = vpop.f32.mrf.mxu0
      %v4332 = vadd.f32 %v4163, %v4331
      %4333 = vmatmul.bf16.gmra.mxu0 %v1897
      %v4334 = vpop.f32.mrf.mxu0
      %v4335 = vadd.f32 %v4166, %v4334
      %v4336 = vpop.f32.mrf.mxu0
      %v4337 = vadd.f32 %v4168, %v4336
      %4338 = vmatmul.bf16.gmra.mxu0 %v1901
      %v4339 = vpop.f32.mrf.mxu0
      %v4340 = vadd.f32 %v4171, %v4339
      %v4341 = vpop.f32.mrf.mxu0
      %v4342 = vadd.f32 %v4173, %v4341
      %4343 = vmatmul.bf16.gmra.mxu0 %v1905
      %v4344 = vpop.f32.mrf.mxu0
      %v4345 = vadd.f32 %v4176, %v4344
      %v4346 = vpop.f32.mrf.mxu0
      %v4347 = vadd.f32 %v4178, %v4346
      %4348 = vmatmul.bf16.gmra.mxu0 %v1909
      %v4349 = vpop.f32.mrf.mxu0
      %v4350 = vadd.f32 %v4181, %v4349
      %v4351 = vpop.f32.mrf.mxu0
      %v4352 = vadd.f32 %v4183, %v4351
      %4353 = vmatmul.bf16.gmra.mxu0 %v1913
      %v4354 = vpop.f32.mrf.mxu0
      %v4355 = vadd.f32 %v4186, %v4354
      %v4356 = vpop.f32.mrf.mxu0
      %v4357 = vadd.f32 %v4188, %v4356
      %4358 = vmatmul.bf16.gmra.mxu0 %v1917
      %v4359 = vpop.f32.mrf.mxu0
      %v4360 = vadd.f32 %v4191, %v4359
      %v4361 = vpop.f32.mrf.mxu0
      %v4362 = vadd.f32 %v4193, %v4361
      %4363 = vmatmul.bf16.gmra.mxu0 %v1921
      %v4364 = vpop.f32.mrf.mxu0
      %v4365 = vadd.f32 %v4196, %v4364
      %v4366 = vpop.f32.mrf.mxu0
      %v4367 = vadd.f32 %v4198, %v4366
      %4368 = vmatmul.bf16.gmra.mxu0 %v1925
      %v4369 = vpop.f32.mrf.mxu0
      %v4370 = vadd.f32 %v4201, %v4369
      %v4371 = vpop.f32.mrf.mxu0
      %v4372 = vadd.f32 %v4203, %v4371
      %4373 = vmatmul.bf16.gmra.mxu0 %v1929
      %v4374 = vpop.f32.mrf.mxu0
      %v4375 = vadd.f32 %v4206, %v4374
      %v4376 = vpop.f32.mrf.mxu0
      %v4377 = vadd.f32 %v4208, %v4376
      %4378 = vmatmul.bf16.gmra.mxu0 %v1933
      %v4379 = vpop.f32.mrf.mxu0
      %v4380 = vadd.f32 %v4211, %v4379
      %v4381 = vpop.f32.mrf.mxu0
      %v4382 = vadd.f32 %v4213, %v4381
      %4383 = vmatmul.bf16.gmra.mxu0 %v1937
      %v4384 = vpop.f32.mrf.mxu0
      %v4385 = vadd.f32 %v4216, %v4384
      %v4386 = vpop.f32.mrf.mxu0
      %v4387 = vadd.f32 %v4218, %v4386
      %4388 = vmatmul.bf16.gmra.mxu0 %v1941
      %v4389 = vpop.f32.mrf.mxu0
      %v4390 = vadd.f32 %v4221, %v4389
      %v4391 = vpop.f32.mrf.mxu0
      %v4392 = vadd.f32 %v4223, %v4391
      %4393 = vmatmul.bf16.gmra.mxu0 %v1945
      %v4394 = vpop.f32.mrf.mxu0
      %v4395 = vadd.f32 %v4226, %v4394
      %v4396 = vpop.f32.mrf.mxu0
      %v4397 = vadd.f32 %v4228, %v4396
      %4398 = vmatmul.bf16.gmra.mxu0 %v1949
      %v4399 = vpop.f32.mrf.mxu0
      %v4400 = vadd.f32 %v4231, %v4399
      %v4401 = vpop.f32.mrf.mxu0
      %v4402 = vadd.f32 %v4233, %v4401
      %4403 = vmatmul.bf16.gmra.mxu0 %v1953
      %v4404 = vpop.f32.mrf.mxu0
      %v4405 = vadd.f32 %v4236, %v4404
      %v4406 = vpop.f32.mrf.mxu0
      %v4407 = vadd.f32 %v4238, %v4406
      %4408 = vmatmul.bf16.gmra.mxu0 %v1957
      %v4409 = vpop.f32.mrf.mxu0
      %v4410 = vadd.f32 %v4241, %v4409
      %v4411 = vpop.f32.mrf.mxu0
      %v4412 = vadd.f32 %v4243, %v4411
      %4413 = vmatmul.bf16.gmra.mxu0 %v1961
      %v4414 = vpop.f32.mrf.mxu0
      %v4415 = vadd.f32 %v4246, %v4414
      %v4416 = vpop.f32.mrf.mxu0
      %v4417 = vadd.f32 %v4248, %v4416
      %4418 = vmatmul.bf16.gmra.mxu0 %v1965
      %v4419 = vpop.f32.mrf.mxu0
      %v4420 = vadd.f32 %v4251, %v4419
      %v4421 = vpop.f32.mrf.mxu0
      %v4422 = vadd.f32 %v4253, %v4421
      %4423 = vmatmul.bf16.gmra.mxu0 %v1969
      %v4424 = vpop.f32.mrf.mxu0
      %v4425 = vadd.f32 %v4256, %v4424
      %v4426 = vpop.f32.mrf.mxu0
      %v4427 = vadd.f32 %v4258, %v4426
      %4428 = vmatmul.bf16.gmra.mxu0 %v1973
      %v4429 = vpop.f32.mrf.mxu0
      %v4430 = vadd.f32 %v4261, %v4429
      %v4431 = vpop.f32.mrf.mxu0
      %v4432 = vadd.f32 %v4263, %v4431
      %4433 = vmatmul.bf16.gmra.mxu0 %v1977
      %v4434 = vpop.f32.mrf.mxu0
      %v4435 = vadd.f32 %v4266, %v4434
      %v4436 = vpop.f32.mrf.mxu0
      %v4437 = vadd.f32 %v4268, %v4436
      %4438 = vmatmul.bf16.gmra.mxu0 %v1981
      %v4439 = vpop.f32.mrf.mxu0
      %v4440 = vadd.f32 %v4271, %v4439
      %v4441 = vpop.f32.mrf.mxu0
      %v4442 = vadd.f32 %v4273, %v4441
      %4443 = vmatmul.bf16.gmra.mxu0 %v1985
      %v4444 = vpop.f32.mrf.mxu0
      %v4445 = vadd.f32 %v4276, %v4444
      %v4446 = vpop.f32.mrf.mxu0
      %v4447 = vadd.f32 %v4278, %v4446
      %4448 = vmatmul.bf16.gmra.mxu0 %v1989
      %v4449 = vpop.f32.mrf.mxu0
      %v4450 = vadd.f32 %v4281, %v4449
      %v4451 = vpop.f32.mrf.mxu0
      %v4452 = vadd.f32 %v4283, %v4451
      %4453 = vmatmul.bf16.gmra.mxu0 %v1993
      %v4454 = vpop.f32.mrf.mxu0
      %v4455 = vadd.f32 %v4286, %v4454
      %v4456 = vpop.f32.mrf.mxu0
      %v4457 = vadd.f32 %v4288, %v4456
      %4458 = vmatmul.bf16.gmra.mxu0 %v1997
      %v4459 = vpop.f32.mrf.mxu0
      %v4460 = vadd.f32 %v4291, %v4459
      %v4461 = vpop.f32.mrf.mxu0
      %v4462 = vadd.f32 %v4293, %v4461
      %4463 = vmatmul.bf16.gmra.mxu0 %v2001
      %v4464 = vpop.f32.mrf.mxu0
      %v4465 = vadd.f32 %v4296, %v4464
      %v4466 = vpop.f32.mrf.mxu0
      %v4467 = vadd.f32 %v4298, %v4466
      %4468 = vmatmul.bf16.gmra.mxu0 %v2005
      %v4469 = vpop.f32.mrf.mxu0
      %v4470 = vadd.f32 %v4301, %v4469
      %v4471 = vpop.f32.mrf.mxu0
      %v4472 = vadd.f32 %v4303, %v4471
      %4473 = vmatmul.bf16.gmra.mxu0 %v2009
      %v4474 = vpop.f32.mrf.mxu0
      %v4475 = vadd.f32 %v4306, %v4474
      %v4476 = vpop.f32.mrf.mxu0
      %v4477 = vadd.f32 %v4308, %v4476
      %4478 = vmatmul.bf16.gmra.mxu0 %v2013
      %v4479 = vpop.f32.mrf.mxu0
      %v4480 = vadd.f32 %v4311, %v4479
      %v4481 = vpop.f32.mrf.mxu0
      %v4482 = vadd.f32 %v4313, %v4481
      %4483 = vdwg.mxu0
      %4484 = vmatpush.bf16.msra.mxu0 %v2632
      %4485 = vmatpush.bf16.msra.mxu0 %v2628
      %4486 = vmatpush.bf16.msra.mxu0 %v2624
      %4487 = vmatpush.bf16.msra.mxu0 %v2620
      %4488 = vmatpush.bf16.msra.mxu0 %v2616
      %4489 = vmatpush.bf16.msra.mxu0 %v2612
      %4490 = vmatpush.bf16.msra.mxu0 %v2608
      %4491 = vmatpush.bf16.msra.mxu0 %v2604
      %4492 = vmatmul.bf16.gmra.mxu0 %v1890
      %v4493 = vpop.f32.mrf.mxu0
      %v4494 = vadd.f32 %v4325, %v4493
      %v4495 = vpop.f32.mrf.mxu0
      %v4496 = vadd.f32 %v4327, %v4495
      %4497 = vmatmul.bf16.gmra.mxu0 %v1894
      %v4498 = vpop.f32.mrf.mxu0
      %v4499 = vadd.f32 %v4330, %v4498
      %v4500 = vpop.f32.mrf.mxu0
      %v4501 = vadd.f32 %v4332, %v4500
      %4502 = vmatmul.bf16.gmra.mxu0 %v1898
      %v4503 = vpop.f32.mrf.mxu0
      %v4504 = vadd.f32 %v4335, %v4503
      %v4505 = vpop.f32.mrf.mxu0
      %v4506 = vadd.f32 %v4337, %v4505
      %4507 = vmatmul.bf16.gmra.mxu0 %v1902
      %v4508 = vpop.f32.mrf.mxu0
      %v4509 = vadd.f32 %v4340, %v4508
      %v4510 = vpop.f32.mrf.mxu0
      %v4511 = vadd.f32 %v4342, %v4510
      %4512 = vmatmul.bf16.gmra.mxu0 %v1906
      %v4513 = vpop.f32.mrf.mxu0
      %v4514 = vadd.f32 %v4345, %v4513
      %v4515 = vpop.f32.mrf.mxu0
      %v4516 = vadd.f32 %v4347, %v4515
      %4517 = vmatmul.bf16.gmra.mxu0 %v1910
      %v4518 = vpop.f32.mrf.mxu0
      %v4519 = vadd.f32 %v4350, %v4518
      %v4520 = vpop.f32.mrf.mxu0
      %v4521 = vadd.f32 %v4352, %v4520
      %4522 = vmatmul.bf16.gmra.mxu0 %v1914
      %v4523 = vpop.f32.mrf.mxu0
      %v4524 = vadd.f32 %v4355, %v4523
      %v4525 = vpop.f32.mrf.mxu0
      %v4526 = vadd.f32 %v4357, %v4525
      %4527 = vmatmul.bf16.gmra.mxu0 %v1918
      %v4528 = vpop.f32.mrf.mxu0
      %v4529 = vadd.f32 %v4360, %v4528
      %v4530 = vpop.f32.mrf.mxu0
      %v4531 = vadd.f32 %v4362, %v4530
      %4532 = vmatmul.bf16.gmra.mxu0 %v1922
      %v4533 = vpop.f32.mrf.mxu0
      %v4534 = vadd.f32 %v4365, %v4533
      %v4535 = vpop.f32.mrf.mxu0
      %v4536 = vadd.f32 %v4367, %v4535
      %4537 = vmatmul.bf16.gmra.mxu0 %v1926
      %v4538 = vpop.f32.mrf.mxu0
      %v4539 = vadd.f32 %v4370, %v4538
      %v4540 = vpop.f32.mrf.mxu0
      %v4541 = vadd.f32 %v4372, %v4540
      %4542 = vmatmul.bf16.gmra.mxu0 %v1930
      %v4543 = vpop.f32.mrf.mxu0
      %v4544 = vadd.f32 %v4375, %v4543
      %v4545 = vpop.f32.mrf.mxu0
      %v4546 = vadd.f32 %v4377, %v4545
      %4547 = vmatmul.bf16.gmra.mxu0 %v1934
      %v4548 = vpop.f32.mrf.mxu0
      %v4549 = vadd.f32 %v4380, %v4548
      %v4550 = vpop.f32.mrf.mxu0
      %v4551 = vadd.f32 %v4382, %v4550
      %4552 = vmatmul.bf16.gmra.mxu0 %v1938
      %v4553 = vpop.f32.mrf.mxu0
      %v4554 = vadd.f32 %v4385, %v4553
      %v4555 = vpop.f32.mrf.mxu0
      %v4556 = vadd.f32 %v4387, %v4555
      %4557 = vmatmul.bf16.gmra.mxu0 %v1942
      %v4558 = vpop.f32.mrf.mxu0
      %v4559 = vadd.f32 %v4390, %v4558
      %v4560 = vpop.f32.mrf.mxu0
      %v4561 = vadd.f32 %v4392, %v4560
      %4562 = vmatmul.bf16.gmra.mxu0 %v1946
      %v4563 = vpop.f32.mrf.mxu0
      %v4564 = vadd.f32 %v4395, %v4563
      %v4565 = vpop.f32.mrf.mxu0
      %v4566 = vadd.f32 %v4397, %v4565
      %4567 = vmatmul.bf16.gmra.mxu0 %v1950
      %v4568 = vpop.f32.mrf.mxu0
      %v4569 = vadd.f32 %v4400, %v4568
      %v4570 = vpop.f32.mrf.mxu0
      %v4571 = vadd.f32 %v4402, %v4570
      %4572 = vmatmul.bf16.gmra.mxu0 %v1954
      %v4573 = vpop.f32.mrf.mxu0
      %v4574 = vadd.f32 %v4405, %v4573
      %v4575 = vpop.f32.mrf.mxu0
      %v4576 = vadd.f32 %v4407, %v4575
      %4577 = vmatmul.bf16.gmra.mxu0 %v1958
      %v4578 = vpop.f32.mrf.mxu0
      %v4579 = vadd.f32 %v4410, %v4578
      %v4580 = vpop.f32.mrf.mxu0
      %v4581 = vadd.f32 %v4412, %v4580
      %4582 = vmatmul.bf16.gmra.mxu0 %v1962
      %v4583 = vpop.f32.mrf.mxu0
      %v4584 = vadd.f32 %v4415, %v4583
      %v4585 = vpop.f32.mrf.mxu0
      %v4586 = vadd.f32 %v4417, %v4585
      %4587 = vmatmul.bf16.gmra.mxu0 %v1966
      %v4588 = vpop.f32.mrf.mxu0
      %v4589 = vadd.f32 %v4420, %v4588
      %v4590 = vpop.f32.mrf.mxu0
      %v4591 = vadd.f32 %v4422, %v4590
      %4592 = vmatmul.bf16.gmra.mxu0 %v1970
      %v4593 = vpop.f32.mrf.mxu0
      %v4594 = vadd.f32 %v4425, %v4593
      %v4595 = vpop.f32.mrf.mxu0
      %v4596 = vadd.f32 %v4427, %v4595
      %4597 = vmatmul.bf16.gmra.mxu0 %v1974
      %v4598 = vpop.f32.mrf.mxu0
      %v4599 = vadd.f32 %v4430, %v4598
      %v4600 = vpop.f32.mrf.mxu0
      %v4601 = vadd.f32 %v4432, %v4600
      %4602 = vmatmul.bf16.gmra.mxu0 %v1978
      %v4603 = vpop.f32.mrf.mxu0
      %v4604 = vadd.f32 %v4435, %v4603
      %v4605 = vpop.f32.mrf.mxu0
      %v4606 = vadd.f32 %v4437, %v4605
      %4607 = vmatmul.bf16.gmra.mxu0 %v1982
      %v4608 = vpop.f32.mrf.mxu0
      %v4609 = vadd.f32 %v4440, %v4608
      %v4610 = vpop.f32.mrf.mxu0
      %v4611 = vadd.f32 %v4442, %v4610
      %4612 = vmatmul.bf16.gmra.mxu0 %v1986
      %v4613 = vpop.f32.mrf.mxu0
      %v4614 = vadd.f32 %v4445, %v4613
      %v4615 = vpop.f32.mrf.mxu0
      %v4616 = vadd.f32 %v4447, %v4615
      %4617 = vmatmul.bf16.gmra.mxu0 %v1990
      %v4618 = vpop.f32.mrf.mxu0
      %v4619 = vadd.f32 %v4450, %v4618
      %v4620 = vpop.f32.mrf.mxu0
      %v4621 = vadd.f32 %v4452, %v4620
      %4622 = vmatmul.bf16.gmra.mxu0 %v1994
      %v4623 = vpop.f32.mrf.mxu0
      %v4624 = vadd.f32 %v4455, %v4623
      %v4625 = vpop.f32.mrf.mxu0
      %v4626 = vadd.f32 %v4457, %v4625
      %4627 = vmatmul.bf16.gmra.mxu0 %v1998
      %v4628 = vpop.f32.mrf.mxu0
      %v4629 = vadd.f32 %v4460, %v4628
      %v4630 = vpop.f32.mrf.mxu0
      %v4631 = vadd.f32 %v4462, %v4630
      %4632 = vmatmul.bf16.gmra.mxu0 %v2002
      %v4633 = vpop.f32.mrf.mxu0
      %v4634 = vadd.f32 %v4465, %v4633
      %v4635 = vpop.f32.mrf.mxu0
      %v4636 = vadd.f32 %v4467, %v4635
      %4637 = vmatmul.bf16.gmra.mxu0 %v2006
      %v4638 = vpop.f32.mrf.mxu0
      %v4639 = vadd.f32 %v4470, %v4638
      %v4640 = vpop.f32.mrf.mxu0
      %v4641 = vadd.f32 %v4472, %v4640
      %4642 = vmatmul.bf16.gmra.mxu0 %v2010
      %v4643 = vpop.f32.mrf.mxu0
      %v4644 = vadd.f32 %v4475, %v4643
      %v4645 = vpop.f32.mrf.mxu0
      %v4646 = vadd.f32 %v4477, %v4645
      %4647 = vmatmul.bf16.gmra.mxu0 %v2014
      %v4648 = vpop.f32.mrf.mxu0
      %v4649 = vadd.f32 %v4480, %v4648
      %v4650 = vpop.f32.mrf.mxu0
      %v4651 = vadd.f32 %v4482, %v4650
      %4652 = vdwg.mxu0
      %4653 = vmatpush.bf16.msra.mxu0 %v2664
      %4654 = vmatpush.bf16.msra.mxu0 %v2660
      %4655 = vmatpush.bf16.msra.mxu0 %v2656
      %4656 = vmatpush.bf16.msra.mxu0 %v2652
      %4657 = vmatpush.bf16.msra.mxu0 %v2648
      %4658 = vmatpush.bf16.msra.mxu0 %v2644
      %4659 = vmatpush.bf16.msra.mxu0 %v2640
      %4660 = vmatpush.bf16.msra.mxu0 %v2636
      %4661 = vmatmul.bf16.gmra.mxu0 %v1891
      %v4662 = vpop.f32.mrf.mxu0
      %v4663 = vadd.f32 %v4494, %v4662
      %v4664 = vpop.f32.mrf.mxu0
      %v4665 = vadd.f32 %v4496, %v4664
      %4666 = vmatmul.bf16.gmra.mxu0 %v1895
      %v4667 = vpop.f32.mrf.mxu0
      %v4668 = vadd.f32 %v4499, %v4667
      %v4669 = vpop.f32.mrf.mxu0
      %v4670 = vadd.f32 %v4501, %v4669
      %4671 = vmatmul.bf16.gmra.mxu0 %v1899
      %v4672 = vpop.f32.mrf.mxu0
      %v4673 = vadd.f32 %v4504, %v4672
      %v4674 = vpop.f32.mrf.mxu0
      %v4675 = vadd.f32 %v4506, %v4674
      %4676 = vmatmul.bf16.gmra.mxu0 %v1903
      %v4677 = vpop.f32.mrf.mxu0
      %v4678 = vadd.f32 %v4509, %v4677
      %v4679 = vpop.f32.mrf.mxu0
      %v4680 = vadd.f32 %v4511, %v4679
      %4681 = vmatmul.bf16.gmra.mxu0 %v1907
      %v4682 = vpop.f32.mrf.mxu0
      %v4683 = vadd.f32 %v4514, %v4682
      %v4684 = vpop.f32.mrf.mxu0
      %v4685 = vadd.f32 %v4516, %v4684
      %4686 = vmatmul.bf16.gmra.mxu0 %v1911
      %v4687 = vpop.f32.mrf.mxu0
      %v4688 = vadd.f32 %v4519, %v4687
      %v4689 = vpop.f32.mrf.mxu0
      %v4690 = vadd.f32 %v4521, %v4689
      %4691 = vmatmul.bf16.gmra.mxu0 %v1915
      %v4692 = vpop.f32.mrf.mxu0
      %v4693 = vadd.f32 %v4524, %v4692
      %v4694 = vpop.f32.mrf.mxu0
      %v4695 = vadd.f32 %v4526, %v4694
      %4696 = vmatmul.bf16.gmra.mxu0 %v1919
      %v4697 = vpop.f32.mrf.mxu0
      %v4698 = vadd.f32 %v4529, %v4697
      %v4699 = vpop.f32.mrf.mxu0
      %v4700 = vadd.f32 %v4531, %v4699
      %4701 = vmatmul.bf16.gmra.mxu0 %v1923
      %v4702 = vpop.f32.mrf.mxu0
      %v4703 = vadd.f32 %v4534, %v4702
      %v4704 = vpop.f32.mrf.mxu0
      %v4705 = vadd.f32 %v4536, %v4704
      %4706 = vmatmul.bf16.gmra.mxu0 %v1927
      %v4707 = vpop.f32.mrf.mxu0
      %v4708 = vadd.f32 %v4539, %v4707
      %v4709 = vpop.f32.mrf.mxu0
      %v4710 = vadd.f32 %v4541, %v4709
      %4711 = vmatmul.bf16.gmra.mxu0 %v1931
      %v4712 = vpop.f32.mrf.mxu0
      %v4713 = vadd.f32 %v4544, %v4712
      %v4714 = vpop.f32.mrf.mxu0
      %v4715 = vadd.f32 %v4546, %v4714
      %4716 = vmatmul.bf16.gmra.mxu0 %v1935
      %v4717 = vpop.f32.mrf.mxu0
      %v4718 = vadd.f32 %v4549, %v4717
      %v4719 = vpop.f32.mrf.mxu0
      %v4720 = vadd.f32 %v4551, %v4719
      %4721 = vmatmul.bf16.gmra.mxu0 %v1939
      %v4722 = vpop.f32.mrf.mxu0
      %v4723 = vadd.f32 %v4554, %v4722
      %v4724 = vpop.f32.mrf.mxu0
      %v4725 = vadd.f32 %v4556, %v4724
      %4726 = vmatmul.bf16.gmra.mxu0 %v1943
      %v4727 = vpop.f32.mrf.mxu0
      %v4728 = vadd.f32 %v4559, %v4727
      %v4729 = vpop.f32.mrf.mxu0
      %v4730 = vadd.f32 %v4561, %v4729
      %4731 = vmatmul.bf16.gmra.mxu0 %v1947
      %v4732 = vpop.f32.mrf.mxu0
      %v4733 = vadd.f32 %v4564, %v4732
      %v4734 = vpop.f32.mrf.mxu0
      %v4735 = vadd.f32 %v4566, %v4734
      %4736 = vmatmul.bf16.gmra.mxu0 %v1951
      %v4737 = vpop.f32.mrf.mxu0
      %v4738 = vadd.f32 %v4569, %v4737
      %v4739 = vpop.f32.mrf.mxu0
      %v4740 = vadd.f32 %v4571, %v4739
      %4741 = vmatmul.bf16.gmra.mxu0 %v1955
      %v4742 = vpop.f32.mrf.mxu0
      %v4743 = vadd.f32 %v4574, %v4742
      %v4744 = vpop.f32.mrf.mxu0
      %v4745 = vadd.f32 %v4576, %v4744
      %4746 = vmatmul.bf16.gmra.mxu0 %v1959
      %v4747 = vpop.f32.mrf.mxu0
      %v4748 = vadd.f32 %v4579, %v4747
      %v4749 = vpop.f32.mrf.mxu0
      %v4750 = vadd.f32 %v4581, %v4749
      %4751 = vmatmul.bf16.gmra.mxu0 %v1963
      %v4752 = vpop.f32.mrf.mxu0
      %v4753 = vadd.f32 %v4584, %v4752
      %v4754 = vpop.f32.mrf.mxu0
      %v4755 = vadd.f32 %v4586, %v4754
      %4756 = vmatmul.bf16.gmra.mxu0 %v1967
      %v4757 = vpop.f32.mrf.mxu0
      %v4758 = vadd.f32 %v4589, %v4757
      %v4759 = vpop.f32.mrf.mxu0
      %v4760 = vadd.f32 %v4591, %v4759
      %4761 = vmatmul.bf16.gmra.mxu0 %v1971
      %v4762 = vpop.f32.mrf.mxu0
      %v4763 = vadd.f32 %v4594, %v4762
      %v4764 = vpop.f32.mrf.mxu0
      %v4765 = vadd.f32 %v4596, %v4764
      %4766 = vmatmul.bf16.gmra.mxu0 %v1975
      %v4767 = vpop.f32.mrf.mxu0
      %v4768 = vadd.f32 %v4599, %v4767
      %v4769 = vpop.f32.mrf.mxu0
      %v4770 = vadd.f32 %v4601, %v4769
      %4771 = vmatmul.bf16.gmra.mxu0 %v1979
      %v4772 = vpop.f32.mrf.mxu0
      %v4773 = vadd.f32 %v4604, %v4772
      %v4774 = vpop.f32.mrf.mxu0
      %v4775 = vadd.f32 %v4606, %v4774
      %4776 = vmatmul.bf16.gmra.mxu0 %v1983
      %v4777 = vpop.f32.mrf.mxu0
      %v4778 = vadd.f32 %v4609, %v4777
      %v4779 = vpop.f32.mrf.mxu0
      %v4780 = vadd.f32 %v4611, %v4779
      %4781 = vmatmul.bf16.gmra.mxu0 %v1987
      %v4782 = vpop.f32.mrf.mxu0
      %v4783 = vadd.f32 %v4614, %v4782
      %v4784 = vpop.f32.mrf.mxu0
      %v4785 = vadd.f32 %v4616, %v4784
      %4786 = vmatmul.bf16.gmra.mxu0 %v1991
      %v4787 = vpop.f32.mrf.mxu0
      %v4788 = vadd.f32 %v4619, %v4787
      %v4789 = vpop.f32.mrf.mxu0
      %v4790 = vadd.f32 %v4621, %v4789
      %4791 = vmatmul.bf16.gmra.mxu0 %v1995
      %v4792 = vpop.f32.mrf.mxu0
      %v4793 = vadd.f32 %v4624, %v4792
      %v4794 = vpop.f32.mrf.mxu0
      %v4795 = vadd.f32 %v4626, %v4794
      %4796 = vmatmul.bf16.gmra.mxu0 %v1999
      %v4797 = vpop.f32.mrf.mxu0
      %v4798 = vadd.f32 %v4629, %v4797
      %v4799 = vpop.f32.mrf.mxu0
      %v4800 = vadd.f32 %v4631, %v4799
      %4801 = vmatmul.bf16.gmra.mxu0 %v2003
      %v4802 = vpop.f32.mrf.mxu0
      %v4803 = vadd.f32 %v4634, %v4802
      %v4804 = vpop.f32.mrf.mxu0
      %v4805 = vadd.f32 %v4636, %v4804
      %4806 = vmatmul.bf16.gmra.mxu0 %v2007
      %v4807 = vpop.f32.mrf.mxu0
      %v4808 = vadd.f32 %v4639, %v4807
      %v4809 = vpop.f32.mrf.mxu0
      %v4810 = vadd.f32 %v4641, %v4809
      %4811 = vmatmul.bf16.gmra.mxu0 %v2011
      %v4812 = vpop.f32.mrf.mxu0
      %v4813 = vadd.f32 %v4644, %v4812
      %v4814 = vpop.f32.mrf.mxu0
      %v4815 = vadd.f32 %v4646, %v4814
      %4816 = vmatmul.bf16.gmra.mxu0 %v2015
      %v4817 = vpop.f32.mrf.mxu0
      %v4818 = vadd.f32 %v4649, %v4817
      %v4819 = vpop.f32.mrf.mxu0
      %v4820 = vadd.f32 %v4651, %v4819
      %4821 = vdwg.mxu0
      %4822 = vmatpush.bf16.msra.mxu0 %v2569
      %4823 = vmatpush.bf16.msra.mxu0 %v2565
      %4824 = vmatpush.bf16.msra.mxu0 %v2561
      %4825 = vmatpush.bf16.msra.mxu0 %v2557
      %4826 = vmatpush.bf16.msra.mxu0 %v2553
      %4827 = vmatpush.bf16.msra.mxu0 %v2549
      %4828 = vmatpush.bf16.msra.mxu0 %v2545
      %4829 = vmatpush.bf16.msra.mxu0 %v2541
      %4830 = vmatmul.bf16.gmra.mxu0 %v1888
      %v4831 = vpop.f32.mrf.mxu0
      %v4832 = vadd.f32 %v2149, %v4831
      %v4833 = vpop.f32.mrf.mxu0
      %v4834 = vadd.f32 %v2149, %v4833
      %4835 = vmatmul.bf16.gmra.mxu0 %v1892
      %v4836 = vpop.f32.mrf.mxu0
      %v4837 = vadd.f32 %v2149, %v4836
      %v4838 = vpop.f32.mrf.mxu0
      %v4839 = vadd.f32 %v2149, %v4838
      %4840 = vmatmul.bf16.gmra.mxu0 %v1896
      %v4841 = vpop.f32.mrf.mxu0
      %v4842 = vadd.f32 %v2149, %v4841
      %v4843 = vpop.f32.mrf.mxu0
      %v4844 = vadd.f32 %v2149, %v4843
      %4845 = vmatmul.bf16.gmra.mxu0 %v1900
      %v4846 = vpop.f32.mrf.mxu0
      %v4847 = vadd.f32 %v2149, %v4846
      %v4848 = vpop.f32.mrf.mxu0
      %v4849 = vadd.f32 %v2149, %v4848
      %4850 = vmatmul.bf16.gmra.mxu0 %v1904
      %v4851 = vpop.f32.mrf.mxu0
      %v4852 = vadd.f32 %v2149, %v4851
      %v4853 = vpop.f32.mrf.mxu0
      %v4854 = vadd.f32 %v2149, %v4853
      %4855 = vmatmul.bf16.gmra.mxu0 %v1908
      %v4856 = vpop.f32.mrf.mxu0
      %v4857 = vadd.f32 %v2149, %v4856
      %v4858 = vpop.f32.mrf.mxu0
      %v4859 = vadd.f32 %v2149, %v4858
      %4860 = vmatmul.bf16.gmra.mxu0 %v1912
      %v4861 = vpop.f32.mrf.mxu0
      %v4862 = vadd.f32 %v2149, %v4861
      %v4863 = vpop.f32.mrf.mxu0
      %v4864 = vadd.f32 %v2149, %v4863
      %4865 = vmatmul.bf16.gmra.mxu0 %v1916
      %v4866 = vpop.f32.mrf.mxu0
      %v4867 = vadd.f32 %v2149, %v4866
      %v4868 = vpop.f32.mrf.mxu0
      %v4869 = vadd.f32 %v2149, %v4868
      %4870 = vmatmul.bf16.gmra.mxu0 %v1920
      %v4871 = vpop.f32.mrf.mxu0
      %v4872 = vadd.f32 %v2149, %v4871
      %v4873 = vpop.f32.mrf.mxu0
      %v4874 = vadd.f32 %v2149, %v4873
      %4875 = vmatmul.bf16.gmra.mxu0 %v1924
      %v4876 = vpop.f32.mrf.mxu0
      %v4877 = vadd.f32 %v2149, %v4876
      %v4878 = vpop.f32.mrf.mxu0
      %v4879 = vadd.f32 %v2149, %v4878
      %4880 = vmatmul.bf16.gmra.mxu0 %v1928
      %v4881 = vpop.f32.mrf.mxu0
      %v4882 = vadd.f32 %v2149, %v4881
      %v4883 = vpop.f32.mrf.mxu0
      %v4884 = vadd.f32 %v2149, %v4883
      %4885 = vmatmul.bf16.gmra.mxu0 %v1932
      %v4886 = vpop.f32.mrf.mxu0
      %v4887 = vadd.f32 %v2149, %v4886
      %v4888 = vpop.f32.mrf.mxu0
      %v4889 = vadd.f32 %v2149, %v4888
      %4890 = vmatmul.bf16.gmra.mxu0 %v1936
      %v4891 = vpop.f32.mrf.mxu0
      %v4892 = vadd.f32 %v2149, %v4891
      %v4893 = vpop.f32.mrf.mxu0
      %v4894 = vadd.f32 %v2149, %v4893
      %4895 = vmatmul.bf16.gmra.mxu0 %v1940
      %v4896 = vpop.f32.mrf.mxu0
      %v4897 = vadd.f32 %v2149, %v4896
      %v4898 = vpop.f32.mrf.mxu0
      %v4899 = vadd.f32 %v2149, %v4898
      %4900 = vmatmul.bf16.gmra.mxu0 %v1944
      %v4901 = vpop.f32.mrf.mxu0
      %v4902 = vadd.f32 %v2149, %v4901
      %v4903 = vpop.f32.mrf.mxu0
      %v4904 = vadd.f32 %v2149, %v4903
      %4905 = vmatmul.bf16.gmra.mxu0 %v1948
      %v4906 = vpop.f32.mrf.mxu0
      %v4907 = vadd.f32 %v2149, %v4906
      %v4908 = vpop.f32.mrf.mxu0
      %v4909 = vadd.f32 %v2149, %v4908
      %4910 = vmatmul.bf16.gmra.mxu0 %v1952
      %v4911 = vpop.f32.mrf.mxu0
      %v4912 = vadd.f32 %v2149, %v4911
      %v4913 = vpop.f32.mrf.mxu0
      %v4914 = vadd.f32 %v2149, %v4913
      %4915 = vmatmul.bf16.gmra.mxu0 %v1956
      %v4916 = vpop.f32.mrf.mxu0
      %v4917 = vadd.f32 %v2149, %v4916
      %v4918 = vpop.f32.mrf.mxu0
      %v4919 = vadd.f32 %v2149, %v4918
      %4920 = vmatmul.bf16.gmra.mxu0 %v1960
      %v4921 = vpop.f32.mrf.mxu0
      %v4922 = vadd.f32 %v2149, %v4921
      %v4923 = vpop.f32.mrf.mxu0
      %v4924 = vadd.f32 %v2149, %v4923
      %4925 = vmatmul.bf16.gmra.mxu0 %v1964
      %v4926 = vpop.f32.mrf.mxu0
      %v4927 = vadd.f32 %v2149, %v4926
      %v4928 = vpop.f32.mrf.mxu0
      %v4929 = vadd.f32 %v2149, %v4928
      %4930 = vmatmul.bf16.gmra.mxu0 %v1968
      %v4931 = vpop.f32.mrf.mxu0
      %v4932 = vadd.f32 %v2149, %v4931
      %v4933 = vpop.f32.mrf.mxu0
      %v4934 = vadd.f32 %v2149, %v4933
      %4935 = vmatmul.bf16.gmra.mxu0 %v1972
      %v4936 = vpop.f32.mrf.mxu0
      %v4937 = vadd.f32 %v2149, %v4936
      %v4938 = vpop.f32.mrf.mxu0
      %v4939 = vadd.f32 %v2149, %v4938
      %4940 = vmatmul.bf16.gmra.mxu0 %v1976
      %v4941 = vpop.f32.mrf.mxu0
      %v4942 = vadd.f32 %v2149, %v4941
      %v4943 = vpop.f32.mrf.mxu0
      %v4944 = vadd.f32 %v2149, %v4943
      %4945 = vmatmul.bf16.gmra.mxu0 %v1980
      %v4946 = vpop.f32.mrf.mxu0
      %v4947 = vadd.f32 %v2149, %v4946
      %v4948 = vpop.f32.mrf.mxu0
      %v4949 = vadd.f32 %v2149, %v4948
      %4950 = vmatmul.bf16.gmra.mxu0 %v1984
      %v4951 = vpop.f32.mrf.mxu0
      %v4952 = vadd.f32 %v2149, %v4951
      %v4953 = vpop.f32.mrf.mxu0
      %v4954 = vadd.f32 %v2149, %v4953
      %4955 = vmatmul.bf16.gmra.mxu0 %v1988
      %v4956 = vpop.f32.mrf.mxu0
      %v4957 = vadd.f32 %v2149, %v4956
      %v4958 = vpop.f32.mrf.mxu0
      %v4959 = vadd.f32 %v2149, %v4958
      %4960 = vmatmul.bf16.gmra.mxu0 %v1992
      %v4961 = vpop.f32.mrf.mxu0
      %v4962 = vadd.f32 %v2149, %v4961
      %v4963 = vpop.f32.mrf.mxu0
      %v4964 = vadd.f32 %v2149, %v4963
      %4965 = vmatmul.bf16.gmra.mxu0 %v1996
      %v4966 = vpop.f32.mrf.mxu0
      %v4967 = vadd.f32 %v2149, %v4966
      %v4968 = vpop.f32.mrf.mxu0
      %v4969 = vadd.f32 %v2149, %v4968
      %4970 = vmatmul.bf16.gmra.mxu0 %v2000
      %v4971 = vpop.f32.mrf.mxu0
      %v4972 = vadd.f32 %v2149, %v4971
      %v4973 = vpop.f32.mrf.mxu0
      %v4974 = vadd.f32 %v2149, %v4973
      %4975 = vmatmul.bf16.gmra.mxu0 %v2004
      %v4976 = vpop.f32.mrf.mxu0
      %v4977 = vadd.f32 %v2149, %v4976
      %v4978 = vpop.f32.mrf.mxu0
      %v4979 = vadd.f32 %v2149, %v4978
      %4980 = vmatmul.bf16.gmra.mxu0 %v2008
      %v4981 = vpop.f32.mrf.mxu0
      %v4982 = vadd.f32 %v2149, %v4981
      %v4983 = vpop.f32.mrf.mxu0
      %v4984 = vadd.f32 %v2149, %v4983
      %4985 = vmatmul.bf16.gmra.mxu0 %v2012
      %v4986 = vpop.f32.mrf.mxu0
      %v4987 = vadd.f32 %v2149, %v4986
      %v4988 = vpop.f32.mrf.mxu0
      %v4989 = vadd.f32 %v2149, %v4988
      %4990 = vdwg.mxu0
      %4991 = vmatpush.bf16.msra.mxu0 %v2601
      %4992 = vmatpush.bf16.msra.mxu0 %v2597
      %4993 = vmatpush.bf16.msra.mxu0 %v2593
      %4994 = vmatpush.bf16.msra.mxu0 %v2589
      %4995 = vmatpush.bf16.msra.mxu0 %v2585
      %4996 = vmatpush.bf16.msra.mxu0 %v2581
      %4997 = vmatpush.bf16.msra.mxu0 %v2577
      %4998 = vmatpush.bf16.msra.mxu0 %v2573
      %4999 = vmatmul.bf16.gmra.mxu0 %v1889
      %v5000 = vpop.f32.mrf.mxu0
      %v5001 = vadd.f32 %v4832, %v5000
      %v5002 = vpop.f32.mrf.mxu0
      %v5003 = vadd.f32 %v4834, %v5002
      %5004 = vmatmul.bf16.gmra.mxu0 %v1893
      %v5005 = vpop.f32.mrf.mxu0
      %v5006 = vadd.f32 %v4837, %v5005
      %v5007 = vpop.f32.mrf.mxu0
      %v5008 = vadd.f32 %v4839, %v5007
      %5009 = vmatmul.bf16.gmra.mxu0 %v1897
      %v5010 = vpop.f32.mrf.mxu0
      %v5011 = vadd.f32 %v4842, %v5010
      %v5012 = vpop.f32.mrf.mxu0
      %v5013 = vadd.f32 %v4844, %v5012
      %5014 = vmatmul.bf16.gmra.mxu0 %v1901
      %v5015 = vpop.f32.mrf.mxu0
      %v5016 = vadd.f32 %v4847, %v5015
      %v5017 = vpop.f32.mrf.mxu0
      %v5018 = vadd.f32 %v4849, %v5017
      %5019 = vmatmul.bf16.gmra.mxu0 %v1905
      %v5020 = vpop.f32.mrf.mxu0
      %v5021 = vadd.f32 %v4852, %v5020
      %v5022 = vpop.f32.mrf.mxu0
      %v5023 = vadd.f32 %v4854, %v5022
      %5024 = vmatmul.bf16.gmra.mxu0 %v1909
      %v5025 = vpop.f32.mrf.mxu0
      %v5026 = vadd.f32 %v4857, %v5025
      %v5027 = vpop.f32.mrf.mxu0
      %v5028 = vadd.f32 %v4859, %v5027
      %5029 = vmatmul.bf16.gmra.mxu0 %v1913
      %v5030 = vpop.f32.mrf.mxu0
      %v5031 = vadd.f32 %v4862, %v5030
      %v5032 = vpop.f32.mrf.mxu0
      %v5033 = vadd.f32 %v4864, %v5032
      %5034 = vmatmul.bf16.gmra.mxu0 %v1917
      %v5035 = vpop.f32.mrf.mxu0
      %v5036 = vadd.f32 %v4867, %v5035
      %v5037 = vpop.f32.mrf.mxu0
      %v5038 = vadd.f32 %v4869, %v5037
      %5039 = vmatmul.bf16.gmra.mxu0 %v1921
      %v5040 = vpop.f32.mrf.mxu0
      %v5041 = vadd.f32 %v4872, %v5040
      %v5042 = vpop.f32.mrf.mxu0
      %v5043 = vadd.f32 %v4874, %v5042
      %5044 = vmatmul.bf16.gmra.mxu0 %v1925
      %v5045 = vpop.f32.mrf.mxu0
      %v5046 = vadd.f32 %v4877, %v5045
      %v5047 = vpop.f32.mrf.mxu0
      %v5048 = vadd.f32 %v4879, %v5047
      %5049 = vmatmul.bf16.gmra.mxu0 %v1929
      %v5050 = vpop.f32.mrf.mxu0
      %v5051 = vadd.f32 %v4882, %v5050
      %v5052 = vpop.f32.mrf.mxu0
      %v5053 = vadd.f32 %v4884, %v5052
      %5054 = vmatmul.bf16.gmra.mxu0 %v1933
      %v5055 = vpop.f32.mrf.mxu0
      %v5056 = vadd.f32 %v4887, %v5055
      %v5057 = vpop.f32.mrf.mxu0
      %v5058 = vadd.f32 %v4889, %v5057
      %5059 = vmatmul.bf16.gmra.mxu0 %v1937
      %v5060 = vpop.f32.mrf.mxu0
      %v5061 = vadd.f32 %v4892, %v5060
      %v5062 = vpop.f32.mrf.mxu0
      %v5063 = vadd.f32 %v4894, %v5062
      %5064 = vmatmul.bf16.gmra.mxu0 %v1941
      %v5065 = vpop.f32.mrf.mxu0
      %v5066 = vadd.f32 %v4897, %v5065
      %v5067 = vpop.f32.mrf.mxu0
      %v5068 = vadd.f32 %v4899, %v5067
      %5069 = vmatmul.bf16.gmra.mxu0 %v1945
      %v5070 = vpop.f32.mrf.mxu0
      %v5071 = vadd.f32 %v4902, %v5070
      %v5072 = vpop.f32.mrf.mxu0
      %v5073 = vadd.f32 %v4904, %v5072
      %5074 = vmatmul.bf16.gmra.mxu0 %v1949
      %v5075 = vpop.f32.mrf.mxu0
      %v5076 = vadd.f32 %v4907, %v5075
      %v5077 = vpop.f32.mrf.mxu0
      %v5078 = vadd.f32 %v4909, %v5077
      %5079 = vmatmul.bf16.gmra.mxu0 %v1953
      %v5080 = vpop.f32.mrf.mxu0
      %v5081 = vadd.f32 %v4912, %v5080
      %v5082 = vpop.f32.mrf.mxu0
      %v5083 = vadd.f32 %v4914, %v5082
      %5084 = vmatmul.bf16.gmra.mxu0 %v1957
      %v5085 = vpop.f32.mrf.mxu0
      %v5086 = vadd.f32 %v4917, %v5085
      %v5087 = vpop.f32.mrf.mxu0
      %v5088 = vadd.f32 %v4919, %v5087
      %5089 = vmatmul.bf16.gmra.mxu0 %v1961
      %v5090 = vpop.f32.mrf.mxu0
      %v5091 = vadd.f32 %v4922, %v5090
      %v5092 = vpop.f32.mrf.mxu0
      %v5093 = vadd.f32 %v4924, %v5092
      %5094 = vmatmul.bf16.gmra.mxu0 %v1965
      %v5095 = vpop.f32.mrf.mxu0
      %v5096 = vadd.f32 %v4927, %v5095
      %v5097 = vpop.f32.mrf.mxu0
      %v5098 = vadd.f32 %v4929, %v5097
      %5099 = vmatmul.bf16.gmra.mxu0 %v1969
      %v5100 = vpop.f32.mrf.mxu0
      %v5101 = vadd.f32 %v4932, %v5100
      %v5102 = vpop.f32.mrf.mxu0
      %v5103 = vadd.f32 %v4934, %v5102
      %5104 = vmatmul.bf16.gmra.mxu0 %v1973
      %v5105 = vpop.f32.mrf.mxu0
      %v5106 = vadd.f32 %v4937, %v5105
      %v5107 = vpop.f32.mrf.mxu0
      %v5108 = vadd.f32 %v4939, %v5107
      %5109 = vmatmul.bf16.gmra.mxu0 %v1977
      %v5110 = vpop.f32.mrf.mxu0
      %v5111 = vadd.f32 %v4942, %v5110
      %v5112 = vpop.f32.mrf.mxu0
      %v5113 = vadd.f32 %v4944, %v5112
      %5114 = vmatmul.bf16.gmra.mxu0 %v1981
      %v5115 = vpop.f32.mrf.mxu0
      %v5116 = vadd.f32 %v4947, %v5115
      %v5117 = vpop.f32.mrf.mxu0
      %v5118 = vadd.f32 %v4949, %v5117
      %5119 = vmatmul.bf16.gmra.mxu0 %v1985
      %v5120 = vpop.f32.mrf.mxu0
      %v5121 = vadd.f32 %v4952, %v5120
      %v5122 = vpop.f32.mrf.mxu0
      %v5123 = vadd.f32 %v4954, %v5122
      %5124 = vmatmul.bf16.gmra.mxu0 %v1989
      %v5125 = vpop.f32.mrf.mxu0
      %v5126 = vadd.f32 %v4957, %v5125
      %v5127 = vpop.f32.mrf.mxu0
      %v5128 = vadd.f32 %v4959, %v5127
      %5129 = vmatmul.bf16.gmra.mxu0 %v1993
      %v5130 = vpop.f32.mrf.mxu0
      %v5131 = vadd.f32 %v4962, %v5130
      %v5132 = vpop.f32.mrf.mxu0
      %v5133 = vadd.f32 %v4964, %v5132
      %5134 = vmatmul.bf16.gmra.mxu0 %v1997
      %v5135 = vpop.f32.mrf.mxu0
      %v5136 = vadd.f32 %v4967, %v5135
      %v5137 = vpop.f32.mrf.mxu0
      %v5138 = vadd.f32 %v4969, %v5137
      %5139 = vmatmul.bf16.gmra.mxu0 %v2001
      %v5140 = vpop.f32.mrf.mxu0
      %v5141 = vadd.f32 %v4972, %v5140
      %v5142 = vpop.f32.mrf.mxu0
      %v5143 = vadd.f32 %v4974, %v5142
      %5144 = vmatmul.bf16.gmra.mxu0 %v2005
      %v5145 = vpop.f32.mrf.mxu0
      %v5146 = vadd.f32 %v4977, %v5145
      %v5147 = vpop.f32.mrf.mxu0
      %v5148 = vadd.f32 %v4979, %v5147
      %5149 = vmatmul.bf16.gmra.mxu0 %v2009
      %v5150 = vpop.f32.mrf.mxu0
      %v5151 = vadd.f32 %v4982, %v5150
      %v5152 = vpop.f32.mrf.mxu0
      %v5153 = vadd.f32 %v4984, %v5152
      %5154 = vmatmul.bf16.gmra.mxu0 %v2013
      %v5155 = vpop.f32.mrf.mxu0
      %v5156 = vadd.f32 %v4987, %v5155
      %v5157 = vpop.f32.mrf.mxu0
      %v5158 = vadd.f32 %v4989, %v5157
      %5159 = vdwg.mxu0
      %5160 = vmatpush.bf16.msra.mxu0 %v2633
      %5161 = vmatpush.bf16.msra.mxu0 %v2629
      %5162 = vmatpush.bf16.msra.mxu0 %v2625
      %5163 = vmatpush.bf16.msra.mxu0 %v2621
      %5164 = vmatpush.bf16.msra.mxu0 %v2617
      %5165 = vmatpush.bf16.msra.mxu0 %v2613
      %5166 = vmatpush.bf16.msra.mxu0 %v2609
      %5167 = vmatpush.bf16.msra.mxu0 %v2605
      %5168 = vmatmul.bf16.gmra.mxu0 %v1890
      %v5169 = vpop.f32.mrf.mxu0
      %v5170 = vadd.f32 %v5001, %v5169
      %v5171 = vpop.f32.mrf.mxu0
      %v5172 = vadd.f32 %v5003, %v5171
      %5173 = vmatmul.bf16.gmra.mxu0 %v1894
      %v5174 = vpop.f32.mrf.mxu0
      %v5175 = vadd.f32 %v5006, %v5174
      %v5176 = vpop.f32.mrf.mxu0
      %v5177 = vadd.f32 %v5008, %v5176
      %5178 = vmatmul.bf16.gmra.mxu0 %v1898
      %v5179 = vpop.f32.mrf.mxu0
      %v5180 = vadd.f32 %v5011, %v5179
      %v5181 = vpop.f32.mrf.mxu0
      %v5182 = vadd.f32 %v5013, %v5181
      %5183 = vmatmul.bf16.gmra.mxu0 %v1902
      %v5184 = vpop.f32.mrf.mxu0
      %v5185 = vadd.f32 %v5016, %v5184
      %v5186 = vpop.f32.mrf.mxu0
      %v5187 = vadd.f32 %v5018, %v5186
      %5188 = vmatmul.bf16.gmra.mxu0 %v1906
      %v5189 = vpop.f32.mrf.mxu0
      %v5190 = vadd.f32 %v5021, %v5189
      %v5191 = vpop.f32.mrf.mxu0
      %v5192 = vadd.f32 %v5023, %v5191
      %5193 = vmatmul.bf16.gmra.mxu0 %v1910
      %v5194 = vpop.f32.mrf.mxu0
      %v5195 = vadd.f32 %v5026, %v5194
      %v5196 = vpop.f32.mrf.mxu0
      %v5197 = vadd.f32 %v5028, %v5196
      %5198 = vmatmul.bf16.gmra.mxu0 %v1914
      %v5199 = vpop.f32.mrf.mxu0
      %v5200 = vadd.f32 %v5031, %v5199
      %v5201 = vpop.f32.mrf.mxu0
      %v5202 = vadd.f32 %v5033, %v5201
      %5203 = vmatmul.bf16.gmra.mxu0 %v1918
      %v5204 = vpop.f32.mrf.mxu0
      %v5205 = vadd.f32 %v5036, %v5204
      %v5206 = vpop.f32.mrf.mxu0
      %v5207 = vadd.f32 %v5038, %v5206
      %5208 = vmatmul.bf16.gmra.mxu0 %v1922
      %v5209 = vpop.f32.mrf.mxu0
      %v5210 = vadd.f32 %v5041, %v5209
      %v5211 = vpop.f32.mrf.mxu0
      %v5212 = vadd.f32 %v5043, %v5211
      %5213 = vmatmul.bf16.gmra.mxu0 %v1926
      %v5214 = vpop.f32.mrf.mxu0
      %v5215 = vadd.f32 %v5046, %v5214
      %v5216 = vpop.f32.mrf.mxu0
      %v5217 = vadd.f32 %v5048, %v5216
      %5218 = vmatmul.bf16.gmra.mxu0 %v1930
      %v5219 = vpop.f32.mrf.mxu0
      %v5220 = vadd.f32 %v5051, %v5219
      %v5221 = vpop.f32.mrf.mxu0
      %v5222 = vadd.f32 %v5053, %v5221
      %5223 = vmatmul.bf16.gmra.mxu0 %v1934
      %v5224 = vpop.f32.mrf.mxu0
      %v5225 = vadd.f32 %v5056, %v5224
      %v5226 = vpop.f32.mrf.mxu0
      %v5227 = vadd.f32 %v5058, %v5226
      %5228 = vmatmul.bf16.gmra.mxu0 %v1938
      %v5229 = vpop.f32.mrf.mxu0
      %v5230 = vadd.f32 %v5061, %v5229
      %v5231 = vpop.f32.mrf.mxu0
      %v5232 = vadd.f32 %v5063, %v5231
      %5233 = vmatmul.bf16.gmra.mxu0 %v1942
      %v5234 = vpop.f32.mrf.mxu0
      %v5235 = vadd.f32 %v5066, %v5234
      %v5236 = vpop.f32.mrf.mxu0
      %v5237 = vadd.f32 %v5068, %v5236
      %5238 = vmatmul.bf16.gmra.mxu0 %v1946
      %v5239 = vpop.f32.mrf.mxu0
      %v5240 = vadd.f32 %v5071, %v5239
      %v5241 = vpop.f32.mrf.mxu0
      %v5242 = vadd.f32 %v5073, %v5241
      %5243 = vmatmul.bf16.gmra.mxu0 %v1950
      %v5244 = vpop.f32.mrf.mxu0
      %v5245 = vadd.f32 %v5076, %v5244
      %v5246 = vpop.f32.mrf.mxu0
      %v5247 = vadd.f32 %v5078, %v5246
      %5248 = vmatmul.bf16.gmra.mxu0 %v1954
      %v5249 = vpop.f32.mrf.mxu0
      %v5250 = vadd.f32 %v5081, %v5249
      %v5251 = vpop.f32.mrf.mxu0
      %v5252 = vadd.f32 %v5083, %v5251
      %5253 = vmatmul.bf16.gmra.mxu0 %v1958
      %v5254 = vpop.f32.mrf.mxu0
      %v5255 = vadd.f32 %v5086, %v5254
      %v5256 = vpop.f32.mrf.mxu0
      %v5257 = vadd.f32 %v5088, %v5256
      %5258 = vmatmul.bf16.gmra.mxu0 %v1962
      %v5259 = vpop.f32.mrf.mxu0
      %v5260 = vadd.f32 %v5091, %v5259
      %v5261 = vpop.f32.mrf.mxu0
      %v5262 = vadd.f32 %v5093, %v5261
      %5263 = vmatmul.bf16.gmra.mxu0 %v1966
      %v5264 = vpop.f32.mrf.mxu0
      %v5265 = vadd.f32 %v5096, %v5264
      %v5266 = vpop.f32.mrf.mxu0
      %v5267 = vadd.f32 %v5098, %v5266
      %5268 = vmatmul.bf16.gmra.mxu0 %v1970
      %v5269 = vpop.f32.mrf.mxu0
      %v5270 = vadd.f32 %v5101, %v5269
      %v5271 = vpop.f32.mrf.mxu0
      %v5272 = vadd.f32 %v5103, %v5271
      %5273 = vmatmul.bf16.gmra.mxu0 %v1974
      %v5274 = vpop.f32.mrf.mxu0
      %v5275 = vadd.f32 %v5106, %v5274
      %v5276 = vpop.f32.mrf.mxu0
      %v5277 = vadd.f32 %v5108, %v5276
      %5278 = vmatmul.bf16.gmra.mxu0 %v1978
      %v5279 = vpop.f32.mrf.mxu0
      %v5280 = vadd.f32 %v5111, %v5279
      %v5281 = vpop.f32.mrf.mxu0
      %v5282 = vadd.f32 %v5113, %v5281
      %5283 = vmatmul.bf16.gmra.mxu0 %v1982
      %v5284 = vpop.f32.mrf.mxu0
      %v5285 = vadd.f32 %v5116, %v5284
      %v5286 = vpop.f32.mrf.mxu0
      %v5287 = vadd.f32 %v5118, %v5286
      %5288 = vmatmul.bf16.gmra.mxu0 %v1986
      %v5289 = vpop.f32.mrf.mxu0
      %v5290 = vadd.f32 %v5121, %v5289
      %v5291 = vpop.f32.mrf.mxu0
      %v5292 = vadd.f32 %v5123, %v5291
      %5293 = vmatmul.bf16.gmra.mxu0 %v1990
      %v5294 = vpop.f32.mrf.mxu0
      %v5295 = vadd.f32 %v5126, %v5294
      %v5296 = vpop.f32.mrf.mxu0
      %v5297 = vadd.f32 %v5128, %v5296
      %5298 = vmatmul.bf16.gmra.mxu0 %v1994
      %v5299 = vpop.f32.mrf.mxu0
      %v5300 = vadd.f32 %v5131, %v5299
      %v5301 = vpop.f32.mrf.mxu0
      %v5302 = vadd.f32 %v5133, %v5301
      %5303 = vmatmul.bf16.gmra.mxu0 %v1998
      %v5304 = vpop.f32.mrf.mxu0
      %v5305 = vadd.f32 %v5136, %v5304
      %v5306 = vpop.f32.mrf.mxu0
      %v5307 = vadd.f32 %v5138, %v5306
      %5308 = vmatmul.bf16.gmra.mxu0 %v2002
      %v5309 = vpop.f32.mrf.mxu0
      %v5310 = vadd.f32 %v5141, %v5309
      %v5311 = vpop.f32.mrf.mxu0
      %v5312 = vadd.f32 %v5143, %v5311
      %5313 = vmatmul.bf16.gmra.mxu0 %v2006
      %v5314 = vpop.f32.mrf.mxu0
      %v5315 = vadd.f32 %v5146, %v5314
      %v5316 = vpop.f32.mrf.mxu0
      %v5317 = vadd.f32 %v5148, %v5316
      %5318 = vmatmul.bf16.gmra.mxu0 %v2010
      %v5319 = vpop.f32.mrf.mxu0
      %v5320 = vadd.f32 %v5151, %v5319
      %v5321 = vpop.f32.mrf.mxu0
      %v5322 = vadd.f32 %v5153, %v5321
      %5323 = vmatmul.bf16.gmra.mxu0 %v2014
      %v5324 = vpop.f32.mrf.mxu0
      %v5325 = vadd.f32 %v5156, %v5324
      %v5326 = vpop.f32.mrf.mxu0
      %v5327 = vadd.f32 %v5158, %v5326
      %5328 = vdwg.mxu0
      %5329 = vmatpush.bf16.msra.mxu0 %v2665
      %5330 = vmatpush.bf16.msra.mxu0 %v2661
      %5331 = vmatpush.bf16.msra.mxu0 %v2657
      %5332 = vmatpush.bf16.msra.mxu0 %v2653
      %5333 = vmatpush.bf16.msra.mxu0 %v2649
      %5334 = vmatpush.bf16.msra.mxu0 %v2645
      %5335 = vmatpush.bf16.msra.mxu0 %v2641
      %5336 = vmatpush.bf16.msra.mxu0 %v2637
      %5337 = vmatmul.bf16.gmra.mxu0 %v1891
      %v5338 = vpop.f32.mrf.mxu0
      %v5339 = vadd.f32 %v5170, %v5338
      %v5340 = vpop.f32.mrf.mxu0
      %v5341 = vadd.f32 %v5172, %v5340
      %5342 = vmatmul.bf16.gmra.mxu0 %v1895
      %v5343 = vpop.f32.mrf.mxu0
      %v5344 = vadd.f32 %v5175, %v5343
      %v5345 = vpop.f32.mrf.mxu0
      %v5346 = vadd.f32 %v5177, %v5345
      %5347 = vmatmul.bf16.gmra.mxu0 %v1899
      %v5348 = vpop.f32.mrf.mxu0
      %v5349 = vadd.f32 %v5180, %v5348
      %v5350 = vpop.f32.mrf.mxu0
      %v5351 = vadd.f32 %v5182, %v5350
      %5352 = vmatmul.bf16.gmra.mxu0 %v1903
      %v5353 = vpop.f32.mrf.mxu0
      %v5354 = vadd.f32 %v5185, %v5353
      %v5355 = vpop.f32.mrf.mxu0
      %v5356 = vadd.f32 %v5187, %v5355
      %5357 = vmatmul.bf16.gmra.mxu0 %v1907
      %v5358 = vpop.f32.mrf.mxu0
      %v5359 = vadd.f32 %v5190, %v5358
      %v5360 = vpop.f32.mrf.mxu0
      %v5361 = vadd.f32 %v5192, %v5360
      %5362 = vmatmul.bf16.gmra.mxu0 %v1911
      %v5363 = vpop.f32.mrf.mxu0
      %v5364 = vadd.f32 %v5195, %v5363
      %v5365 = vpop.f32.mrf.mxu0
      %v5366 = vadd.f32 %v5197, %v5365
      %5367 = vmatmul.bf16.gmra.mxu0 %v1915
      %v5368 = vpop.f32.mrf.mxu0
      %v5369 = vadd.f32 %v5200, %v5368
      %v5370 = vpop.f32.mrf.mxu0
      %v5371 = vadd.f32 %v5202, %v5370
      %5372 = vmatmul.bf16.gmra.mxu0 %v1919
      %v5373 = vpop.f32.mrf.mxu0
      %v5374 = vadd.f32 %v5205, %v5373
      %v5375 = vpop.f32.mrf.mxu0
      %v5376 = vadd.f32 %v5207, %v5375
      %5377 = vmatmul.bf16.gmra.mxu0 %v1923
      %v5378 = vpop.f32.mrf.mxu0
      %v5379 = vadd.f32 %v5210, %v5378
      %v5380 = vpop.f32.mrf.mxu0
      %v5381 = vadd.f32 %v5212, %v5380
      %5382 = vmatmul.bf16.gmra.mxu0 %v1927
      %v5383 = vpop.f32.mrf.mxu0
      %v5384 = vadd.f32 %v5215, %v5383
      %v5385 = vpop.f32.mrf.mxu0
      %v5386 = vadd.f32 %v5217, %v5385
      %5387 = vmatmul.bf16.gmra.mxu0 %v1931
      %v5388 = vpop.f32.mrf.mxu0
      %v5389 = vadd.f32 %v5220, %v5388
      %v5390 = vpop.f32.mrf.mxu0
      %v5391 = vadd.f32 %v5222, %v5390
      %5392 = vmatmul.bf16.gmra.mxu0 %v1935
      %v5393 = vpop.f32.mrf.mxu0
      %v5394 = vadd.f32 %v5225, %v5393
      %v5395 = vpop.f32.mrf.mxu0
      %v5396 = vadd.f32 %v5227, %v5395
      %5397 = vmatmul.bf16.gmra.mxu0 %v1939
      %v5398 = vpop.f32.mrf.mxu0
      %v5399 = vadd.f32 %v5230, %v5398
      %v5400 = vpop.f32.mrf.mxu0
      %v5401 = vadd.f32 %v5232, %v5400
      %5402 = vmatmul.bf16.gmra.mxu0 %v1943
      %v5403 = vpop.f32.mrf.mxu0
      %v5404 = vadd.f32 %v5235, %v5403
      %v5405 = vpop.f32.mrf.mxu0
      %v5406 = vadd.f32 %v5237, %v5405
      %5407 = vmatmul.bf16.gmra.mxu0 %v1947
      %v5408 = vpop.f32.mrf.mxu0
      %v5409 = vadd.f32 %v5240, %v5408
      %v5410 = vpop.f32.mrf.mxu0
      %v5411 = vadd.f32 %v5242, %v5410
      %5412 = vmatmul.bf16.gmra.mxu0 %v1951
      %v5413 = vpop.f32.mrf.mxu0
      %v5414 = vadd.f32 %v5245, %v5413
      %v5415 = vpop.f32.mrf.mxu0
      %v5416 = vadd.f32 %v5247, %v5415
      %5417 = vmatmul.bf16.gmra.mxu0 %v1955
      %v5418 = vpop.f32.mrf.mxu0
      %v5419 = vadd.f32 %v5250, %v5418
      %v5420 = vpop.f32.mrf.mxu0
      %v5421 = vadd.f32 %v5252, %v5420
      %5422 = vmatmul.bf16.gmra.mxu0 %v1959
      %v5423 = vpop.f32.mrf.mxu0
      %v5424 = vadd.f32 %v5255, %v5423
      %v5425 = vpop.f32.mrf.mxu0
      %v5426 = vadd.f32 %v5257, %v5425
      %5427 = vmatmul.bf16.gmra.mxu0 %v1963
      %v5428 = vpop.f32.mrf.mxu0
      %v5429 = vadd.f32 %v5260, %v5428
      %v5430 = vpop.f32.mrf.mxu0
      %v5431 = vadd.f32 %v5262, %v5430
      %5432 = vmatmul.bf16.gmra.mxu0 %v1967
      %v5433 = vpop.f32.mrf.mxu0
      %v5434 = vadd.f32 %v5265, %v5433
      %v5435 = vpop.f32.mrf.mxu0
      %v5436 = vadd.f32 %v5267, %v5435
      %5437 = vmatmul.bf16.gmra.mxu0 %v1971
      %v5438 = vpop.f32.mrf.mxu0
      %v5439 = vadd.f32 %v5270, %v5438
      %v5440 = vpop.f32.mrf.mxu0
      %v5441 = vadd.f32 %v5272, %v5440
      %5442 = vmatmul.bf16.gmra.mxu0 %v1975
      %v5443 = vpop.f32.mrf.mxu0
      %v5444 = vadd.f32 %v5275, %v5443
      %v5445 = vpop.f32.mrf.mxu0
      %v5446 = vadd.f32 %v5277, %v5445
      %5447 = vmatmul.bf16.gmra.mxu0 %v1979
      %v5448 = vpop.f32.mrf.mxu0
      %v5449 = vadd.f32 %v5280, %v5448
      %v5450 = vpop.f32.mrf.mxu0
      %v5451 = vadd.f32 %v5282, %v5450
      %5452 = vmatmul.bf16.gmra.mxu0 %v1983
      %v5453 = vpop.f32.mrf.mxu0
      %v5454 = vadd.f32 %v5285, %v5453
      %v5455 = vpop.f32.mrf.mxu0
      %v5456 = vadd.f32 %v5287, %v5455
      %5457 = vmatmul.bf16.gmra.mxu0 %v1987
      %v5458 = vpop.f32.mrf.mxu0
      %v5459 = vadd.f32 %v5290, %v5458
      %v5460 = vpop.f32.mrf.mxu0
      %v5461 = vadd.f32 %v5292, %v5460
      %5462 = vmatmul.bf16.gmra.mxu0 %v1991
      %v5463 = vpop.f32.mrf.mxu0
      %v5464 = vadd.f32 %v5295, %v5463
      %v5465 = vpop.f32.mrf.mxu0
      %v5466 = vadd.f32 %v5297, %v5465
      %5467 = vmatmul.bf16.gmra.mxu0 %v1995
      %v5468 = vpop.f32.mrf.mxu0
      %v5469 = vadd.f32 %v5300, %v5468
      %v5470 = vpop.f32.mrf.mxu0
      %v5471 = vadd.f32 %v5302, %v5470
      %5472 = vmatmul.bf16.gmra.mxu0 %v1999
      %v5473 = vpop.f32.mrf.mxu0
      %v5474 = vadd.f32 %v5305, %v5473
      %v5475 = vpop.f32.mrf.mxu0
      %v5476 = vadd.f32 %v5307, %v5475
      %5477 = vmatmul.bf16.gmra.mxu0 %v2003
      %v5478 = vpop.f32.mrf.mxu0
      %v5479 = vadd.f32 %v5310, %v5478
      %v5480 = vpop.f32.mrf.mxu0
      %v5481 = vadd.f32 %v5312, %v5480
      %5482 = vmatmul.bf16.gmra.mxu0 %v2007
      %v5483 = vpop.f32.mrf.mxu0
      %v5484 = vadd.f32 %v5315, %v5483
      %v5485 = vpop.f32.mrf.mxu0
      %v5486 = vadd.f32 %v5317, %v5485
      %5487 = vmatmul.bf16.gmra.mxu0 %v2011
      %v5488 = vpop.f32.mrf.mxu0
      %v5489 = vadd.f32 %v5320, %v5488
      %v5490 = vpop.f32.mrf.mxu0
      %v5491 = vadd.f32 %v5322, %v5490
      %5492 = vmatmul.bf16.gmra.mxu0 %v2015
      %v5493 = vpop.f32.mrf.mxu0
      %v5494 = vadd.f32 %v5325, %v5493
      %v5495 = vpop.f32.mrf.mxu0
      %v5496 = vadd.f32 %v5327, %v5495
      %5497 = vdwg.mxu0
      %v5498 = vmax.f32 %v3311, 0.0
      %v5499 = vmax.f32 %v3987, 0.0
      %v5500 = vmax.f32 %v4663, 0.0
      %v5501 = vmax.f32 %v5339, 0.0
      %v5502 = vmax.f32 %v3313, 0.0
      %v5503 = vmax.f32 %v3989, 0.0
      %v5504 = vmax.f32 %v4665, 0.0
      %v5505 = vmax.f32 %v5341, 0.0
      %v5506 = vmax.f32 %v3316, 0.0
      %v5507 = vmax.f32 %v3992, 0.0
      %v5508 = vmax.f32 %v4668, 0.0
      %v5509 = vmax.f32 %v5344, 0.0
      %v5510 = vmax.f32 %v3318, 0.0
      %v5511 = vmax.f32 %v3994, 0.0
      %v5512 = vmax.f32 %v4670, 0.0
      %v5513 = vmax.f32 %v5346, 0.0
      %v5514 = vmax.f32 %v3321, 0.0
      %v5515 = vmax.f32 %v3997, 0.0
      %v5516 = vmax.f32 %v4673, 0.0
      %v5517 = vmax.f32 %v5349, 0.0
      %v5518 = vmax.f32 %v3323, 0.0
      %v5519 = vmax.f32 %v3999, 0.0
      %v5520 = vmax.f32 %v4675, 0.0
      %v5521 = vmax.f32 %v5351, 0.0
      %v5522 = vmax.f32 %v3326, 0.0
      %v5523 = vmax.f32 %v4002, 0.0
      %v5524 = vmax.f32 %v4678, 0.0
      %v5525 = vmax.f32 %v5354, 0.0
      %v5526 = vmax.f32 %v3328, 0.0
      %v5527 = vmax.f32 %v4004, 0.0
      %v5528 = vmax.f32 %v4680, 0.0
      %v5529 = vmax.f32 %v5356, 0.0
      %v5530 = vmax.f32 %v3331, 0.0
      %v5531 = vmax.f32 %v4007, 0.0
      %v5532 = vmax.f32 %v4683, 0.0
      %v5533 = vmax.f32 %v5359, 0.0
      %v5534 = vmax.f32 %v3333, 0.0
      %v5535 = vmax.f32 %v4009, 0.0
      %v5536 = vmax.f32 %v4685, 0.0
      %v5537 = vmax.f32 %v5361, 0.0
      %v5538 = vmax.f32 %v3336, 0.0
      %v5539 = vmax.f32 %v4012, 0.0
      %v5540 = vmax.f32 %v4688, 0.0
      %v5541 = vmax.f32 %v5364, 0.0
      %v5542 = vmax.f32 %v3338, 0.0
      %v5543 = vmax.f32 %v4014, 0.0
      %v5544 = vmax.f32 %v4690, 0.0
      %v5545 = vmax.f32 %v5366, 0.0
      %v5546 = vmax.f32 %v3341, 0.0
      %v5547 = vmax.f32 %v4017, 0.0
      %v5548 = vmax.f32 %v4693, 0.0
      %v5549 = vmax.f32 %v5369, 0.0
      %v5550 = vmax.f32 %v3343, 0.0
      %v5551 = vmax.f32 %v4019, 0.0
      %v5552 = vmax.f32 %v4695, 0.0
      %v5553 = vmax.f32 %v5371, 0.0
      %v5554 = vmax.f32 %v3346, 0.0
      %v5555 = vmax.f32 %v4022, 0.0
      %v5556 = vmax.f32 %v4698, 0.0
      %v5557 = vmax.f32 %v5374, 0.0
      %v5558 = vmax.f32 %v3348, 0.0
      %v5559 = vmax.f32 %v4024, 0.0
      %v5560 = vmax.f32 %v4700, 0.0
      %v5561 = vmax.f32 %v5376, 0.0
      %v5562 = vmax.f32 %v3351, 0.0
      %v5563 = vmax.f32 %v4027, 0.0
      %v5564 = vmax.f32 %v4703, 0.0
      %v5565 = vmax.f32 %v5379, 0.0
      %v5566 = vmax.f32 %v3353, 0.0
      %v5567 = vmax.f32 %v4029, 0.0
      %v5568 = vmax.f32 %v4705, 0.0
      %v5569 = vmax.f32 %v5381, 0.0
      %v5570 = vmax.f32 %v3356, 0.0
      %v5571 = vmax.f32 %v4032, 0.0
      %v5572 = vmax.f32 %v4708, 0.0
      %v5573 = vmax.f32 %v5384, 0.0
      %v5574 = vmax.f32 %v3358, 0.0
      %v5575 = vmax.f32 %v4034, 0.0
      %v5576 = vmax.f32 %v4710, 0.0
      %v5577 = vmax.f32 %v5386, 0.0
      %v5578 = vmax.f32 %v3361, 0.0
      %v5579 = vmax.f32 %v4037, 0.0
      %v5580 = vmax.f32 %v4713, 0.0
      %v5581 = vmax.f32 %v5389, 0.0
      %v5582 = vmax.f32 %v3363, 0.0
      %v5583 = vmax.f32 %v4039, 0.0
      %v5584 = vmax.f32 %v4715, 0.0
      %v5585 = vmax.f32 %v5391, 0.0
      %v5586 = vmax.f32 %v3366, 0.0
      %v5587 = vmax.f32 %v4042, 0.0
      %v5588 = vmax.f32 %v4718, 0.0
      %v5589 = vmax.f32 %v5394, 0.0
      %v5590 = vmax.f32 %v3368, 0.0
      %v5591 = vmax.f32 %v4044, 0.0
      %v5592 = vmax.f32 %v4720, 0.0
      %v5593 = vmax.f32 %v5396, 0.0
      %v5594 = vmax.f32 %v3371, 0.0
      %v5595 = vmax.f32 %v4047, 0.0
      %v5596 = vmax.f32 %v4723, 0.0
      %v5597 = vmax.f32 %v5399, 0.0
      %v5598 = vmax.f32 %v3373, 0.0
      %v5599 = vmax.f32 %v4049, 0.0
      %v5600 = vmax.f32 %v4725, 0.0
      %v5601 = vmax.f32 %v5401, 0.0
      %v5602 = vmax.f32 %v3376, 0.0
      %v5603 = vmax.f32 %v4052, 0.0
      %v5604 = vmax.f32 %v4728, 0.0
      %v5605 = vmax.f32 %v5404, 0.0
      %v5606 = vmax.f32 %v3378, 0.0
      %v5607 = vmax.f32 %v4054, 0.0
      %v5608 = vmax.f32 %v4730, 0.0
      %v5609 = vmax.f32 %v5406, 0.0
      %v5610 = vmax.f32 %v3381, 0.0
      %v5611 = vmax.f32 %v4057, 0.0
      %v5612 = vmax.f32 %v4733, 0.0
      %v5613 = vmax.f32 %v5409, 0.0
      %v5614 = vmax.f32 %v3383, 0.0
      %v5615 = vmax.f32 %v4059, 0.0
      %v5616 = vmax.f32 %v4735, 0.0
      %v5617 = vmax.f32 %v5411, 0.0
      %v5618 = vmax.f32 %v3386, 0.0
      %v5619 = vmax.f32 %v4062, 0.0
      %v5620 = vmax.f32 %v4738, 0.0
      %v5621 = vmax.f32 %v5414, 0.0
      %v5622 = vmax.f32 %v3388, 0.0
      %v5623 = vmax.f32 %v4064, 0.0
      %v5624 = vmax.f32 %v4740, 0.0
      %v5625 = vmax.f32 %v5416, 0.0
      %v5626 = vmax.f32 %v3391, 0.0
      %v5627 = vmax.f32 %v4067, 0.0
      %v5628 = vmax.f32 %v4743, 0.0
      %v5629 = vmax.f32 %v5419, 0.0
      %v5630 = vmax.f32 %v3393, 0.0
      %v5631 = vmax.f32 %v4069, 0.0
      %v5632 = vmax.f32 %v4745, 0.0
      %v5633 = vmax.f32 %v5421, 0.0
      %v5634 = vmax.f32 %v3396, 0.0
      %v5635 = vmax.f32 %v4072, 0.0
      %v5636 = vmax.f32 %v4748, 0.0
      %v5637 = vmax.f32 %v5424, 0.0
      %v5638 = vmax.f32 %v3398, 0.0
      %v5639 = vmax.f32 %v4074, 0.0
      %v5640 = vmax.f32 %v4750, 0.0
      %v5641 = vmax.f32 %v5426, 0.0
      %v5642 = vmax.f32 %v3401, 0.0
      %v5643 = vmax.f32 %v4077, 0.0
      %v5644 = vmax.f32 %v4753, 0.0
      %v5645 = vmax.f32 %v5429, 0.0
      %v5646 = vmax.f32 %v3403, 0.0
      %v5647 = vmax.f32 %v4079, 0.0
      %v5648 = vmax.f32 %v4755, 0.0
      %v5649 = vmax.f32 %v5431, 0.0
      %v5650 = vmax.f32 %v3406, 0.0
      %v5651 = vmax.f32 %v4082, 0.0
      %v5652 = vmax.f32 %v4758, 0.0
      %v5653 = vmax.f32 %v5434, 0.0
      %v5654 = vmax.f32 %v3408, 0.0
      %v5655 = vmax.f32 %v4084, 0.0
      %v5656 = vmax.f32 %v4760, 0.0
      %v5657 = vmax.f32 %v5436, 0.0
      %v5658 = vmax.f32 %v3411, 0.0
      %v5659 = vmax.f32 %v4087, 0.0
      %v5660 = vmax.f32 %v4763, 0.0
      %v5661 = vmax.f32 %v5439, 0.0
      %v5662 = vmax.f32 %v3413, 0.0
      %v5663 = vmax.f32 %v4089, 0.0
      %v5664 = vmax.f32 %v4765, 0.0
      %v5665 = vmax.f32 %v5441, 0.0
      %v5666 = vmax.f32 %v3416, 0.0
      %v5667 = vmax.f32 %v4092, 0.0
      %v5668 = vmax.f32 %v4768, 0.0
      %v5669 = vmax.f32 %v5444, 0.0
      %v5670 = vmax.f32 %v3418, 0.0
      %v5671 = vmax.f32 %v4094, 0.0
      %v5672 = vmax.f32 %v4770, 0.0
      %v5673 = vmax.f32 %v5446, 0.0
      %v5674 = vmax.f32 %v3421, 0.0
      %v5675 = vmax.f32 %v4097, 0.0
      %v5676 = vmax.f32 %v4773, 0.0
      %v5677 = vmax.f32 %v5449, 0.0
      %v5678 = vmax.f32 %v3423, 0.0
      %v5679 = vmax.f32 %v4099, 0.0
      %v5680 = vmax.f32 %v4775, 0.0
      %v5681 = vmax.f32 %v5451, 0.0
      %v5682 = vmax.f32 %v3426, 0.0
      %v5683 = vmax.f32 %v4102, 0.0
      %v5684 = vmax.f32 %v4778, 0.0
      %v5685 = vmax.f32 %v5454, 0.0
      %v5686 = vmax.f32 %v3428, 0.0
      %v5687 = vmax.f32 %v4104, 0.0
      %v5688 = vmax.f32 %v4780, 0.0
      %v5689 = vmax.f32 %v5456, 0.0
      %v5690 = vmax.f32 %v3431, 0.0
      %v5691 = vmax.f32 %v4107, 0.0
      %v5692 = vmax.f32 %v4783, 0.0
      %v5693 = vmax.f32 %v5459, 0.0
      %v5694 = vmax.f32 %v3433, 0.0
      %v5695 = vmax.f32 %v4109, 0.0
      %v5696 = vmax.f32 %v4785, 0.0
      %v5697 = vmax.f32 %v5461, 0.0
      %v5698 = vmax.f32 %v3436, 0.0
      %v5699 = vmax.f32 %v4112, 0.0
      %v5700 = vmax.f32 %v4788, 0.0
      %v5701 = vmax.f32 %v5464, 0.0
      %v5702 = vmax.f32 %v3438, 0.0
      %v5703 = vmax.f32 %v4114, 0.0
      %v5704 = vmax.f32 %v4790, 0.0
      %v5705 = vmax.f32 %v5466, 0.0
      %v5706 = vmax.f32 %v3441, 0.0
      %v5707 = vmax.f32 %v4117, 0.0
      %v5708 = vmax.f32 %v4793, 0.0
      %v5709 = vmax.f32 %v5469, 0.0
      %v5710 = vmax.f32 %v3443, 0.0
      %v5711 = vmax.f32 %v4119, 0.0
      %v5712 = vmax.f32 %v4795, 0.0
      %v5713 = vmax.f32 %v5471, 0.0
      %v5714 = vmax.f32 %v3446, 0.0
      %v5715 = vmax.f32 %v4122, 0.0
      %v5716 = vmax.f32 %v4798, 0.0
      %v5717 = vmax.f32 %v5474, 0.0
      %v5718 = vmax.f32 %v3448, 0.0
      %v5719 = vmax.f32 %v4124, 0.0
      %v5720 = vmax.f32 %v4800, 0.0
      %v5721 = vmax.f32 %v5476, 0.0
      %v5722 = vmax.f32 %v3451, 0.0
      %v5723 = vmax.f32 %v4127, 0.0
      %v5724 = vmax.f32 %v4803, 0.0
      %v5725 = vmax.f32 %v5479, 0.0
      %v5726 = vmax.f32 %v3453, 0.0
      %v5727 = vmax.f32 %v4129, 0.0
      %v5728 = vmax.f32 %v4805, 0.0
      %v5729 = vmax.f32 %v5481, 0.0
      %v5730 = vmax.f32 %v3456, 0.0
      %v5731 = vmax.f32 %v4132, 0.0
      %v5732 = vmax.f32 %v4808, 0.0
      %v5733 = vmax.f32 %v5484, 0.0
      %v5734 = vmax.f32 %v3458, 0.0
      %v5735 = vmax.f32 %v4134, 0.0
      %v5736 = vmax.f32 %v4810, 0.0
      %v5737 = vmax.f32 %v5486, 0.0
      %v5738 = vmax.f32 %v3461, 0.0
      %v5739 = vmax.f32 %v4137, 0.0
      %v5740 = vmax.f32 %v4813, 0.0
      %v5741 = vmax.f32 %v5489, 0.0
      %v5742 = vmax.f32 %v3463, 0.0
      %v5743 = vmax.f32 %v4139, 0.0
      %v5744 = vmax.f32 %v4815, 0.0
      %v5745 = vmax.f32 %v5491, 0.0
      %v5746 = vmax.f32 %v3466, 0.0
      %v5747 = vmax.f32 %v4142, 0.0
      %v5748 = vmax.f32 %v4818, 0.0
      %v5749 = vmax.f32 %v5494, 0.0
      %v5750 = vmax.f32 %v3468, 0.0
      %v5751 = vmax.f32 %v4144, 0.0
      %v5752 = vmax.f32 %v4820, 0.0
      %v5753 = vmax.f32 %v5496, 0.0
      %v5754 = vpack.c.bf16 %v5502, %v5498
      %v5755 = vpack.c.bf16 %v5503, %v5499
      %v5756 = vpack.c.bf16 %v5504, %v5500
      %v5757 = vpack.c.bf16 %v5505, %v5501
      %v5758 = vpack.c.bf16 %v5510, %v5506
      %v5759 = vpack.c.bf16 %v5511, %v5507
      %v5760 = vpack.c.bf16 %v5512, %v5508
      %v5761 = vpack.c.bf16 %v5513, %v5509
      %v5762 = vpack.c.bf16 %v5518, %v5514
      %v5763 = vpack.c.bf16 %v5519, %v5515
      %v5764 = vpack.c.bf16 %v5520, %v5516
      %v5765 = vpack.c.bf16 %v5521, %v5517
      %v5766 = vpack.c.bf16 %v5526, %v5522
      %v5767 = vpack.c.bf16 %v5527, %v5523
      %v5768 = vpack.c.bf16 %v5528, %v5524
      %v5769 = vpack.c.bf16 %v5529, %v5525
      %v5770 = vpack.c.bf16 %v5534, %v5530
      %v5771 = vpack.c.bf16 %v5535, %v5531
      %v5772 = vpack.c.bf16 %v5536, %v5532
      %v5773 = vpack.c.bf16 %v5537, %v5533
      %v5774 = vpack.c.bf16 %v5542, %v5538
      %v5775 = vpack.c.bf16 %v5543, %v5539
      %v5776 = vpack.c.bf16 %v5544, %v5540
      %v5777 = vpack.c.bf16 %v5545, %v5541
      %v5778 = vpack.c.bf16 %v5550, %v5546
      %v5779 = vpack.c.bf16 %v5551, %v5547
      %v5780 = vpack.c.bf16 %v5552, %v5548
      %v5781 = vpack.c.bf16 %v5553, %v5549
      %v5782 = vpack.c.bf16 %v5558, %v5554
      %v5783 = vpack.c.bf16 %v5559, %v5555
      %v5784 = vpack.c.bf16 %v5560, %v5556
      %v5785 = vpack.c.bf16 %v5561, %v5557
      %v5786 = vpack.c.bf16 %v5566, %v5562
      %v5787 = vpack.c.bf16 %v5567, %v5563
      %v5788 = vpack.c.bf16 %v5568, %v5564
      %v5789 = vpack.c.bf16 %v5569, %v5565
      %v5790 = vpack.c.bf16 %v5574, %v5570
      %v5791 = vpack.c.bf16 %v5575, %v5571
      %v5792 = vpack.c.bf16 %v5576, %v5572
      %v5793 = vpack.c.bf16 %v5577, %v5573
      %v5794 = vpack.c.bf16 %v5582, %v5578
      %v5795 = vpack.c.bf16 %v5583, %v5579
      %v5796 = vpack.c.bf16 %v5584, %v5580
      %v5797 = vpack.c.bf16 %v5585, %v5581
      %v5798 = vpack.c.bf16 %v5590, %v5586
      %v5799 = vpack.c.bf16 %v5591, %v5587
      %v5800 = vpack.c.bf16 %v5592, %v5588
      %v5801 = vpack.c.bf16 %v5593, %v5589
      %v5802 = vpack.c.bf16 %v5598, %v5594
      %v5803 = vpack.c.bf16 %v5599, %v5595
      %v5804 = vpack.c.bf16 %v5600, %v5596
      %v5805 = vpack.c.bf16 %v5601, %v5597
      %v5806 = vpack.c.bf16 %v5606, %v5602
      %v5807 = vpack.c.bf16 %v5607, %v5603
      %v5808 = vpack.c.bf16 %v5608, %v5604
      %v5809 = vpack.c.bf16 %v5609, %v5605
      %v5810 = vpack.c.bf16 %v5614, %v5610
      %v5811 = vpack.c.bf16 %v5615, %v5611
      %v5812 = vpack.c.bf16 %v5616, %v5612
      %v5813 = vpack.c.bf16 %v5617, %v5613
      %v5814 = vpack.c.bf16 %v5622, %v5618
      %v5815 = vpack.c.bf16 %v5623, %v5619
      %v5816 = vpack.c.bf16 %v5624, %v5620
      %v5817 = vpack.c.bf16 %v5625, %v5621
      %v5818 = vpack.c.bf16 %v5630, %v5626
      %v5819 = vpack.c.bf16 %v5631, %v5627
      %v5820 = vpack.c.bf16 %v5632, %v5628
      %v5821 = vpack.c.bf16 %v5633, %v5629
      %v5822 = vpack.c.bf16 %v5638, %v5634
      %v5823 = vpack.c.bf16 %v5639, %v5635
      %v5824 = vpack.c.bf16 %v5640, %v5636
      %v5825 = vpack.c.bf16 %v5641, %v5637
      %v5826 = vpack.c.bf16 %v5646, %v5642
      %v5827 = vpack.c.bf16 %v5647, %v5643
      %v5828 = vpack.c.bf16 %v5648, %v5644
      %v5829 = vpack.c.bf16 %v5649, %v5645
      %v5830 = vpack.c.bf16 %v5654, %v5650
      %v5831 = vpack.c.bf16 %v5655, %v5651
      %v5832 = vpack.c.bf16 %v5656, %v5652
      %v5833 = vpack.c.bf16 %v5657, %v5653
      %v5834 = vpack.c.bf16 %v5662, %v5658
      %v5835 = vpack.c.bf16 %v5663, %v5659
      %v5836 = vpack.c.bf16 %v5664, %v5660
      %v5837 = vpack.c.bf16 %v5665, %v5661
      %v5838 = vpack.c.bf16 %v5670, %v5666
      %v5839 = vpack.c.bf16 %v5671, %v5667
      %v5840 = vpack.c.bf16 %v5672, %v5668
      %v5841 = vpack.c.bf16 %v5673, %v5669
      %v5842 = vpack.c.bf16 %v5678, %v5674
      %v5843 = vpack.c.bf16 %v5679, %v5675
      %v5844 = vpack.c.bf16 %v5680, %v5676
      %v5845 = vpack.c.bf16 %v5681, %v5677
      %v5846 = vpack.c.bf16 %v5686, %v5682
      %v5847 = vpack.c.bf16 %v5687, %v5683
      %v5848 = vpack.c.bf16 %v5688, %v5684
      %v5849 = vpack.c.bf16 %v5689, %v5685
      %v5850 = vpack.c.bf16 %v5694, %v5690
      %v5851 = vpack.c.bf16 %v5695, %v5691
      %v5852 = vpack.c.bf16 %v5696, %v5692
      %v5853 = vpack.c.bf16 %v5697, %v5693
      %v5854 = vpack.c.bf16 %v5702, %v5698
      %v5855 = vpack.c.bf16 %v5703, %v5699
      %v5856 = vpack.c.bf16 %v5704, %v5700
      %v5857 = vpack.c.bf16 %v5705, %v5701
      %v5858 = vpack.c.bf16 %v5710, %v5706
      %v5859 = vpack.c.bf16 %v5711, %v5707
      %v5860 = vpack.c.bf16 %v5712, %v5708
      %v5861 = vpack.c.bf16 %v5713, %v5709
      %v5862 = vpack.c.bf16 %v5718, %v5714
      %v5863 = vpack.c.bf16 %v5719, %v5715
      %v5864 = vpack.c.bf16 %v5720, %v5716
      %v5865 = vpack.c.bf16 %v5721, %v5717
      %v5866 = vpack.c.bf16 %v5726, %v5722
      %v5867 = vpack.c.bf16 %v5727, %v5723
      %v5868 = vpack.c.bf16 %v5728, %v5724
      %v5869 = vpack.c.bf16 %v5729, %v5725
      %v5870 = vpack.c.bf16 %v5734, %v5730
      %v5871 = vpack.c.bf16 %v5735, %v5731
      %v5872 = vpack.c.bf16 %v5736, %v5732
      %v5873 = vpack.c.bf16 %v5737, %v5733
      %v5874 = vpack.c.bf16 %v5742, %v5738
      %v5875 = vpack.c.bf16 %v5743, %v5739
      %v5876 = vpack.c.bf16 %v5744, %v5740
      %v5877 = vpack.c.bf16 %v5745, %v5741
      %v5878 = vpack.c.bf16 %v5750, %v5746
      %v5879 = vpack.c.bf16 %v5751, %v5747
      %v5880 = vpack.c.bf16 %v5752, %v5748
      %v5881 = vpack.c.bf16 %v5753, %v5749
      %v5882 = vld [vmem:[%s5] sm:$0xff]
      %v5883 = vld [vmem:[%s5 + $0x8] sm:$0xf]
      %v5884 = vld [vmem:[%s5 + $0xc] sm:$0xff]
      %v5885 = vld [vmem:[%s5 + $0x14] sm:$0xf]
      %v5886 = vld [vmem:[%s5 + $0x18] sm:$0xff]
      %v5887 = vld [vmem:[%s5 + $0x20] sm:$0xf]
      %v5888 = vld [vmem:[%s5 + $0x24] sm:$0xff]
      %v5889 = vld [vmem:[%s5 + $0x2c] sm:$0xf]
      %v5890 = vld [vmem:[%s5 + $0x30] sm:$0xff]
      %v5891 = vld [vmem:[%s5 + $0x38] sm:$0xf]
      %v5892 = vld [vmem:[%s5 + $0x3c] sm:$0xff]
      %v5893 = vld [vmem:[%s5 + $0x44] sm:$0xf]
      %v5894 = vld [vmem:[%s5 + $0x48] sm:$0xff]
      %v5895 = vld [vmem:[%s5 + $0x50] sm:$0xf]
      %v5896 = vld [vmem:[%s5 + $0x54] sm:$0xff]
      %v5897 = vld [vmem:[%s5 + $0x5c] sm:$0xf]
      %v5898 = vld [vmem:[%s5 + $0x60] sm:$0xff]
      %v5899 = vld [vmem:[%s5 + $0x68] sm:$0xf]
      %v5900 = vld [vmem:[%s5 + $0x6c] sm:$0xff]
      %v5901 = vld [vmem:[%s5 + $0x74] sm:$0xf]
      %v5902 = vld [vmem:[%s5 + $0x78] sm:$0xff]
      %v5903 = vld [vmem:[%s5 + $0x80] sm:$0xf]
      %v5904 = vld [vmem:[%s5 + $0x84] sm:$0xff]
      %v5905 = vld [vmem:[%s5 + $0x8c] sm:$0xf]
      %v5906 = vld [vmem:[%s5 + $0x90] sm:$0xff]
      %v5907 = vld [vmem:[%s5 + $0x98] sm:$0xf]
      %v5908 = vld [vmem:[%s5 + $0x9c] sm:$0xff]
      %v5909 = vld [vmem:[%s5 + $0xa4] sm:$0xf]
      %v5910 = vld [vmem:[%s5 + $0xa8] sm:$0xff]
      %v5911 = vld [vmem:[%s5 + $0xb0] sm:$0xf]
      %v5912 = vld [vmem:[%s5 + $0xb4] sm:$0xff]
      %v5913 = vld [vmem:[%s5 + $0xbc] sm:$0xf]
      %v5914 = vld [vmem:[%s5 + $0xc0] sm:$0xff]
      %v5915 = vld [vmem:[%s5 + $0xc8] sm:$0xf]
      %v5916 = vld [vmem:[%s5 + $0xcc] sm:$0xff]
      %v5917 = vld [vmem:[%s5 + $0xd4] sm:$0xf]
      %v5918 = vld [vmem:[%s5 + $0xd8] sm:$0xff]
      %v5919 = vld [vmem:[%s5 + $0xe0] sm:$0xf]
      %v5920 = vld [vmem:[%s5 + $0xe4] sm:$0xff]
      %v5921 = vld [vmem:[%s5 + $0xec] sm:$0xf]
      %v5922 = vld [vmem:[%s5 + $0xf0] sm:$0xff]
      %v5923 = vld [vmem:[%s5 + $0xf8] sm:$0xf]
      %v5924 = vld [vmem:[%s5 + $0xfc] sm:$0xff]
      %v5925 = vld [vmem:[%s5 + $0x104] sm:$0xf]
      %v5926 = vld [vmem:[%s5 + $0x108] sm:$0xff]
      %v5927 = vld [vmem:[%s5 + $0x110] sm:$0xf]
      %v5928 = vld [vmem:[%s5 + $0x114] sm:$0xff]
      %v5929 = vld [vmem:[%s5 + $0x11c] sm:$0xf]
      %v5930 = vld [vmem:[%s5 + $0x120] sm:$0xff]
      %v5931 = vld [vmem:[%s5 + $0x128] sm:$0xf]
      %v5932 = vld [vmem:[%s5 + $0x12c] sm:$0xff]
      %v5933 = vld [vmem:[%s5 + $0x134] sm:$0xf]
      %v5934 = vld [vmem:[%s5 + $0x138] sm:$0xff]
      %v5935 = vld [vmem:[%s5 + $0x140] sm:$0xf]
      %v5936 = vld [vmem:[%s5 + $0x144] sm:$0xff]
      %v5937 = vld [vmem:[%s5 + $0x14c] sm:$0xf]
      %v5938 = vld [vmem:[%s5 + $0x150] sm:$0xff]
      %v5939 = vld [vmem:[%s5 + $0x158] sm:$0xf]
      %v5940 = vld [vmem:[%s5 + $0x15c] sm:$0xff]
      %v5941 = vld [vmem:[%s5 + $0x164] sm:$0xf]
      %v5942 = vld [vmem:[%s5 + $0x168] sm:$0xff]
      %v5943 = vld [vmem:[%s5 + $0x170] sm:$0xf]
      %v5944 = vld [vmem:[%s5 + $0x174] sm:$0xff]
      %v5945 = vld [vmem:[%s5 + $0x17c] sm:$0xf]
      %v5946 = vld [vmem:[%s5 + $0x180] sm:$0xff]
      %v5947 = vld [vmem:[%s5 + $0x188] sm:$0xf]
      %v5948 = vld [vmem:[%s5 + $0x18c] sm:$0xff]
      %v5949 = vld [vmem:[%s5 + $0x194] sm:$0xf]
      %v5950 = vld [vmem:[%s5 + $0x198] sm:$0xff]
      %v5951 = vld [vmem:[%s5 + $0x1a0] sm:$0xf]
      %v5952 = vld [vmem:[%s5 + $0x1a4] sm:$0xff]
      %v5953 = vld [vmem:[%s5 + $0x1ac] sm:$0xf]
      %v5954 = vld [vmem:[%s5 + $0x1b0] sm:$0xff]
      %v5955 = vld [vmem:[%s5 + $0x1b8] sm:$0xf]
      %v5956 = vld [vmem:[%s5 + $0x1bc] sm:$0xff]
      %v5957 = vld [vmem:[%s5 + $0x1c4] sm:$0xf]
      %v5958 = vld [vmem:[%s5 + $0x1c8] sm:$0xff]
      %v5959 = vld [vmem:[%s5 + $0x1d0] sm:$0xf]
      %v5960 = vld [vmem:[%s5 + $0x1d4] sm:$0xff]
      %v5961 = vld [vmem:[%s5 + $0x1dc] sm:$0xf]
      %v5962 = vld [vmem:[%s5 + $0x1e0] sm:$0xff]
      %v5963 = vld [vmem:[%s5 + $0x1e8] sm:$0xf]
      %v5964 = vld [vmem:[%s5 + $0x1ec] sm:$0xff]
      %v5965 = vld [vmem:[%s5 + $0x1f4] sm:$0xf]
      %v5966 = vld [vmem:[%s5 + $0x1f8] sm:$0xff]
      %v5967 = vld [vmem:[%s5 + $0x200] sm:$0xf]
      %v5968 = vld [vmem:[%s5 + $0x204] sm:$0xff]
      %v5969 = vld [vmem:[%s5 + $0x20c] sm:$0xf]
      %v5970 = vld [vmem:[%s5 + $0x210] sm:$0xff]
      %v5971 = vld [vmem:[%s5 + $0x218] sm:$0xf]
      %v5972 = vld [vmem:[%s5 + $0x21c] sm:$0xff]
      %v5973 = vld [vmem:[%s5 + $0x224] sm:$0xf]
      %v5974 = vld [vmem:[%s5 + $0x228] sm:$0xff]
      %v5975 = vld [vmem:[%s5 + $0x230] sm:$0xf]
      %v5976 = vld [vmem:[%s5 + $0x234] sm:$0xff]
      %v5977 = vld [vmem:[%s5 + $0x23c] sm:$0xf]
      %v5978 = vld [vmem:[%s5 + $0x240] sm:$0xff]
      %v5979 = vld [vmem:[%s5 + $0x248] sm:$0xf]
      %v5980 = vld [vmem:[%s5 + $0x24c] sm:$0xff]
      %v5981 = vld [vmem:[%s5 + $0x254] sm:$0xf]
      %v5982 = vld [vmem:[%s5 + $0x258] sm:$0xff]
      %v5983 = vld [vmem:[%s5 + $0x260] sm:$0xf]
      %v5984 = vld [vmem:[%s5 + $0x264] sm:$0xff]
      %v5985 = vld [vmem:[%s5 + $0x26c] sm:$0xf]
      %v5986 = vld [vmem:[%s5 + $0x270] sm:$0xff]
      %v5987 = vld [vmem:[%s5 + $0x278] sm:$0xf]
      %v5988 = vld [vmem:[%s5 + $0x27c] sm:$0xff]
      %v5989 = vld [vmem:[%s5 + $0x284] sm:$0xf]
      %v5990 = vld [vmem:[%s5 + $0x288] sm:$0xff]
      %v5991 = vld [vmem:[%s5 + $0x290] sm:$0xf]
      %v5992 = vld [vmem:[%s5 + $0x294] sm:$0xff]
      %v5993 = vld [vmem:[%s5 + $0x29c] sm:$0xf]
      %v5994 = vld [vmem:[%s5 + $0x2a0] sm:$0xff]
      %v5995 = vld [vmem:[%s5 + $0x2a8] sm:$0xf]
      %v5996 = vld [vmem:[%s5 + $0x2ac] sm:$0xff]
      %v5997 = vld [vmem:[%s5 + $0x2b4] sm:$0xf]
      %v5998 = vld [vmem:[%s5 + $0x2b8] sm:$0xff]
      %v5999 = vld [vmem:[%s5 + $0x2c0] sm:$0xf]
      %v6000 = vld [vmem:[%s5 + $0x2c4] sm:$0xff]
      %v6001 = vld [vmem:[%s5 + $0x2cc] sm:$0xf]
      %v6002 = vld [vmem:[%s5 + $0x2d0] sm:$0xff]
      %v6003 = vld [vmem:[%s5 + $0x2d8] sm:$0xf]
      %v6004 = vld [vmem:[%s5 + $0x2dc] sm:$0xff]
      %v6005 = vld [vmem:[%s5 + $0x2e4] sm:$0xf]
      %v6006 = vld [vmem:[%s5 + $0x2e8] sm:$0xff]
      %v6007 = vld [vmem:[%s5 + $0x2f0] sm:$0xf]
      %v6008 = vld [vmem:[%s5 + $0x2f4] sm:$0xff]
      %v6009 = vld [vmem:[%s5 + $0x2fc] sm:$0xf]
      %v6010 = vld [vmem:[%s6] sm:$0x7]
      %v6012 = vperm.slane %v6010, 0
      %v6013 = vperm.slane %v6010, 1
      %v6014 = vperm.slane %v6010, 2
      %v6146 = vunpack.c.l.b16 %v5882
      %v6147 = vunpack.c.h.b16 %v5882
      %v6148 = vunpack.c.l.b16 %v5883
      %v6149 = vunpack.c.l.b16 %v5884
      %v6150 = vunpack.c.h.b16 %v5884
      %v6151 = vunpack.c.l.b16 %v5885
      %v6152 = vunpack.c.l.b16 %v5886
      %v6153 = vunpack.c.h.b16 %v5886
      %v6154 = vunpack.c.l.b16 %v5887
      %v6155 = vunpack.c.l.b16 %v5888
      %v6156 = vunpack.c.h.b16 %v5888
      %v6157 = vunpack.c.l.b16 %v5889
      %v6158 = vunpack.c.l.b16 %v5890
      %v6159 = vunpack.c.h.b16 %v5890
      %v6160 = vunpack.c.l.b16 %v5891
      %v6161 = vunpack.c.l.b16 %v5892
      %v6162 = vunpack.c.h.b16 %v5892
      %v6163 = vunpack.c.l.b16 %v5893
      %v6164 = vunpack.c.l.b16 %v5894
      %v6165 = vunpack.c.h.b16 %v5894
      %v6166 = vunpack.c.l.b16 %v5895
      %v6167 = vunpack.c.l.b16 %v5896
      %v6168 = vunpack.c.h.b16 %v5896
      %v6169 = vunpack.c.l.b16 %v5897
      %v6170 = vunpack.c.l.b16 %v5898
      %v6171 = vunpack.c.h.b16 %v5898
      %v6172 = vunpack.c.l.b16 %v5899
      %v6173 = vunpack.c.l.b16 %v5900
      %v6174 = vunpack.c.h.b16 %v5900
      %v6175 = vunpack.c.l.b16 %v5901
      %v6176 = vunpack.c.l.b16 %v5902
      %v6177 = vunpack.c.h.b16 %v5902
      %v6178 = vunpack.c.l.b16 %v5903
      %v6179 = vunpack.c.l.b16 %v5904
      %v6180 = vunpack.c.h.b16 %v5904
      %v6181 = vunpack.c.l.b16 %v5905
      %v6182 = vunpack.c.l.b16 %v5906
      %v6183 = vunpack.c.h.b16 %v5906
      %v6184 = vunpack.c.l.b16 %v5907
      %v6185 = vunpack.c.l.b16 %v5908
      %v6186 = vunpack.c.h.b16 %v5908
      %v6187 = vunpack.c.l.b16 %v5909
      %v6188 = vunpack.c.l.b16 %v5910
      %v6189 = vunpack.c.h.b16 %v5910
      %v6190 = vunpack.c.l.b16 %v5911
      %v6191 = vunpack.c.l.b16 %v5912
      %v6192 = vunpack.c.h.b16 %v5912
      %v6193 = vunpack.c.l.b16 %v5913
      %v6194 = vunpack.c.l.b16 %v5914
      %v6195 = vunpack.c.h.b16 %v5914
      %v6196 = vunpack.c.l.b16 %v5915
      %v6197 = vunpack.c.l.b16 %v5916
      %v6198 = vunpack.c.h.b16 %v5916
      %v6199 = vunpack.c.l.b16 %v5917
      %v6200 = vunpack.c.l.b16 %v5918
      %v6201 = vunpack.c.h.b16 %v5918
      %v6202 = vunpack.c.l.b16 %v5919
      %v6203 = vunpack.c.l.b16 %v5920
      %v6204 = vunpack.c.h.b16 %v5920
      %v6205 = vunpack.c.l.b16 %v5921
      %v6206 = vunpack.c.l.b16 %v5922
      %v6207 = vunpack.c.h.b16 %v5922
      %v6208 = vunpack.c.l.b16 %v5923
      %v6209 = vunpack.c.l.b16 %v5924
      %v6210 = vunpack.c.h.b16 %v5924
      %v6211 = vunpack.c.l.b16 %v5925
      %v6212 = vunpack.c.l.b16 %v5926
      %v6213 = vunpack.c.h.b16 %v5926
      %v6214 = vunpack.c.l.b16 %v5927
      %v6215 = vunpack.c.l.b16 %v5928
      %v6216 = vunpack.c.h.b16 %v5928
      %v6217 = vunpack.c.l.b16 %v5929
      %v6218 = vunpack.c.l.b16 %v5930
      %v6219 = vunpack.c.h.b16 %v5930
      %v6220 = vunpack.c.l.b16 %v5931
      %v6221 = vunpack.c.l.b16 %v5932
      %v6222 = vunpack.c.h.b16 %v5932
      %v6223 = vunpack.c.l.b16 %v5933
      %v6224 = vunpack.c.l.b16 %v5934
      %v6225 = vunpack.c.h.b16 %v5934
      %v6226 = vunpack.c.l.b16 %v5935
      %v6227 = vunpack.c.l.b16 %v5936
      %v6228 = vunpack.c.h.b16 %v5936
      %v6229 = vunpack.c.l.b16 %v5937
      %v6230 = vunpack.c.l.b16 %v5938
      %v6231 = vunpack.c.h.b16 %v5938
      %v6232 = vunpack.c.l.b16 %v5939
      %v6233 = vunpack.c.l.b16 %v5940
      %v6234 = vunpack.c.h.b16 %v5940
      %v6235 = vunpack.c.l.b16 %v5941
      %v6236 = vunpack.c.l.b16 %v5942
      %v6237 = vunpack.c.h.b16 %v5942
      %v6238 = vunpack.c.l.b16 %v5943
      %v6239 = vunpack.c.l.b16 %v5944
      %v6240 = vunpack.c.h.b16 %v5944
      %v6241 = vunpack.c.l.b16 %v5945
      %v6242 = vunpack.c.l.b16 %v5946
      %v6243 = vunpack.c.h.b16 %v5946
      %v6244 = vunpack.c.l.b16 %v5947
      %v6245 = vunpack.c.l.b16 %v5948
      %v6246 = vunpack.c.h.b16 %v5948
      %v6247 = vunpack.c.l.b16 %v5949
      %v6248 = vunpack.c.l.b16 %v5950
      %v6249 = vunpack.c.h.b16 %v5950
      %v6250 = vunpack.c.l.b16 %v5951
      %v6251 = vunpack.c.l.b16 %v5952
      %v6252 = vunpack.c.h.b16 %v5952
      %v6253 = vunpack.c.l.b16 %v5953
      %v6254 = vunpack.c.l.b16 %v5954
      %v6255 = vunpack.c.h.b16 %v5954
      %v6256 = vunpack.c.l.b16 %v5955
      %v6257 = vunpack.c.l.b16 %v5956
      %v6258 = vunpack.c.h.b16 %v5956
      %v6259 = vunpack.c.l.b16 %v5957
      %v6260 = vunpack.c.l.b16 %v5958
      %v6261 = vunpack.c.h.b16 %v5958
      %v6262 = vunpack.c.l.b16 %v5959
      %v6263 = vunpack.c.l.b16 %v5960
      %v6264 = vunpack.c.h.b16 %v5960
      %v6265 = vunpack.c.l.b16 %v5961
      %v6266 = vunpack.c.l.b16 %v5962
      %v6267 = vunpack.c.h.b16 %v5962
      %v6268 = vunpack.c.l.b16 %v5963
      %v6269 = vunpack.c.l.b16 %v5964
      %v6270 = vunpack.c.h.b16 %v5964
      %v6271 = vunpack.c.l.b16 %v5965
      %v6272 = vunpack.c.l.b16 %v5966
      %v6273 = vunpack.c.h.b16 %v5966
      %v6274 = vunpack.c.l.b16 %v5967
      %v6275 = vunpack.c.l.b16 %v5968
      %v6276 = vunpack.c.h.b16 %v5968
      %v6277 = vunpack.c.l.b16 %v5969
      %v6278 = vunpack.c.l.b16 %v5970
      %v6279 = vunpack.c.h.b16 %v5970
      %v6280 = vunpack.c.l.b16 %v5971
      %v6281 = vunpack.c.l.b16 %v5972
      %v6282 = vunpack.c.h.b16 %v5972
      %v6283 = vunpack.c.l.b16 %v5973
      %v6284 = vunpack.c.l.b16 %v5974
      %v6285 = vunpack.c.h.b16 %v5974
      %v6286 = vunpack.c.l.b16 %v5975
      %v6287 = vunpack.c.l.b16 %v5976
      %v6288 = vunpack.c.h.b16 %v5976
      %v6289 = vunpack.c.l.b16 %v5977
      %v6290 = vunpack.c.l.b16 %v5978
      %v6291 = vunpack.c.h.b16 %v5978
      %v6292 = vunpack.c.l.b16 %v5979
      %v6293 = vunpack.c.l.b16 %v5980
      %v6294 = vunpack.c.h.b16 %v5980
      %v6295 = vunpack.c.l.b16 %v5981
      %v6296 = vunpack.c.l.b16 %v5982
      %v6297 = vunpack.c.h.b16 %v5982
      %v6298 = vunpack.c.l.b16 %v5983
      %v6299 = vunpack.c.l.b16 %v5984
      %v6300 = vunpack.c.h.b16 %v5984
      %v6301 = vunpack.c.l.b16 %v5985
      %v6302 = vunpack.c.l.b16 %v5986
      %v6303 = vunpack.c.h.b16 %v5986
      %v6304 = vunpack.c.l.b16 %v5987
      %v6305 = vunpack.c.l.b16 %v5988
      %v6306 = vunpack.c.h.b16 %v5988
      %v6307 = vunpack.c.l.b16 %v5989
      %v6308 = vunpack.c.l.b16 %v5990
      %v6309 = vunpack.c.h.b16 %v5990
      %v6310 = vunpack.c.l.b16 %v5991
      %v6311 = vunpack.c.l.b16 %v5992
      %v6312 = vunpack.c.h.b16 %v5992
      %v6313 = vunpack.c.l.b16 %v5993
      %v6314 = vunpack.c.l.b16 %v5994
      %v6315 = vunpack.c.h.b16 %v5994
      %v6316 = vunpack.c.l.b16 %v5995
      %v6317 = vunpack.c.l.b16 %v5996
      %v6318 = vunpack.c.h.b16 %v5996
      %v6319 = vunpack.c.l.b16 %v5997
      %v6320 = vunpack.c.l.b16 %v5998
      %v6321 = vunpack.c.h.b16 %v5998
      %v6322 = vunpack.c.l.b16 %v5999
      %v6323 = vunpack.c.l.b16 %v6000
      %v6324 = vunpack.c.h.b16 %v6000
      %v6325 = vunpack.c.l.b16 %v6001
      %v6326 = vunpack.c.l.b16 %v6002
      %v6327 = vunpack.c.h.b16 %v6002
      %v6328 = vunpack.c.l.b16 %v6003
      %v6329 = vunpack.c.l.b16 %v6004
      %v6330 = vunpack.c.h.b16 %v6004
      %v6331 = vunpack.c.l.b16 %v6005
      %v6332 = vunpack.c.l.b16 %v6006
      %v6333 = vunpack.c.h.b16 %v6006
      %v6334 = vunpack.c.l.b16 %v6007
      %v6335 = vunpack.c.l.b16 %v6008
      %v6336 = vunpack.c.h.b16 %v6008
      %v6337 = vunpack.c.l.b16 %v6009
      %v6338 = vpack.c.b16 %v6149, %v6146
      %v6339 = vpack.c.b16 %v6150, %v6147
      %v6340 = vpack.c.b16 %v6151, %v6148
      %v6341 = vpack.c.b16 %v6155, %v6152
      %v6342 = vpack.c.b16 %v6156, %v6153
      %v6343 = vpack.c.b16 %v6157, %v6154
      %v6344 = vpack.c.b16 %v6161, %v6158
      %v6345 = vpack.c.b16 %v6162, %v6159
      %v6346 = vpack.c.b16 %v6163, %v6160
      %v6347 = vpack.c.b16 %v6167, %v6164
      %v6348 = vpack.c.b16 %v6168, %v6165
      %v6349 = vpack.c.b16 %v6169, %v6166
      %v6350 = vpack.c.b16 %v6173, %v6170
      %v6351 = vpack.c.b16 %v6174, %v6171
      %v6352 = vpack.c.b16 %v6175, %v6172
      %v6353 = vpack.c.b16 %v6179, %v6176
      %v6354 = vpack.c.b16 %v6180, %v6177
      %v6355 = vpack.c.b16 %v6181, %v6178
      %v6356 = vpack.c.b16 %v6185, %v6182
      %v6357 = vpack.c.b16 %v6186, %v6183
      %v6358 = vpack.c.b16 %v6187, %v6184
      %v6359 = vpack.c.b16 %v6191, %v6188
      %v6360 = vpack.c.b16 %v6192, %v6189
      %v6361 = vpack.c.b16 %v6193, %v6190
      %v6362 = vpack.c.b16 %v6197, %v6194
      %v6363 = vpack.c.b16 %v6198, %v6195
      %v6364 = vpack.c.b16 %v6199, %v6196
      %v6365 = vpack.c.b16 %v6203, %v6200
      %v6366 = vpack.c.b16 %v6204, %v6201
      %v6367 = vpack.c.b16 %v6205, %v6202
      %v6368 = vpack.c.b16 %v6209, %v6206
      %v6369 = vpack.c.b16 %v6210, %v6207
      %v6370 = vpack.c.b16 %v6211, %v6208
      %v6371 = vpack.c.b16 %v6215, %v6212
      %v6372 = vpack.c.b16 %v6216, %v6213
      %v6373 = vpack.c.b16 %v6217, %v6214
      %v6374 = vpack.c.b16 %v6221, %v6218
      %v6375 = vpack.c.b16 %v6222, %v6219
      %v6376 = vpack.c.b16 %v6223, %v6220
      %v6377 = vpack.c.b16 %v6227, %v6224
      %v6378 = vpack.c.b16 %v6228, %v6225
      %v6379 = vpack.c.b16 %v6229, %v6226
      %v6380 = vpack.c.b16 %v6233, %v6230
      %v6381 = vpack.c.b16 %v6234, %v6231
      %v6382 = vpack.c.b16 %v6235, %v6232
      %v6383 = vpack.c.b16 %v6239, %v6236
      %v6384 = vpack.c.b16 %v6240, %v6237
      %v6385 = vpack.c.b16 %v6241, %v6238
      %v6386 = vpack.c.b16 %v6245, %v6242
      %v6387 = vpack.c.b16 %v6246, %v6243
      %v6388 = vpack.c.b16 %v6247, %v6244
      %v6389 = vpack.c.b16 %v6251, %v6248
      %v6390 = vpack.c.b16 %v6252, %v6249
      %v6391 = vpack.c.b16 %v6253, %v6250
      %v6392 = vpack.c.b16 %v6257, %v6254
      %v6393 = vpack.c.b16 %v6258, %v6255
      %v6394 = vpack.c.b16 %v6259, %v6256
      %v6395 = vpack.c.b16 %v6263, %v6260
      %v6396 = vpack.c.b16 %v6264, %v6261
      %v6397 = vpack.c.b16 %v6265, %v6262
      %v6398 = vpack.c.b16 %v6269, %v6266
      %v6399 = vpack.c.b16 %v6270, %v6267
      %v6400 = vpack.c.b16 %v6271, %v6268
      %v6401 = vpack.c.b16 %v6275, %v6272
      %v6402 = vpack.c.b16 %v6276, %v6273
      %v6403 = vpack.c.b16 %v6277, %v6274
      %v6404 = vpack.c.b16 %v6281, %v6278
      %v6405 = vpack.c.b16 %v6282, %v6279
      %v6406 = vpack.c.b16 %v6283, %v6280
      %v6407 = vpack.c.b16 %v6287, %v6284
      %v6408 = vpack.c.b16 %v6288, %v6285
      %v6409 = vpack.c.b16 %v6289, %v6286
      %v6410 = vpack.c.b16 %v6293, %v6290
      %v6411 = vpack.c.b16 %v6294, %v6291
      %v6412 = vpack.c.b16 %v6295, %v6292
      %v6413 = vpack.c.b16 %v6299, %v6296
      %v6414 = vpack.c.b16 %v6300, %v6297
      %v6415 = vpack.c.b16 %v6301, %v6298
      %v6416 = vpack.c.b16 %v6305, %v6302
      %v6417 = vpack.c.b16 %v6306, %v6303
      %v6418 = vpack.c.b16 %v6307, %v6304
      %v6419 = vpack.c.b16 %v6311, %v6308
      %v6420 = vpack.c.b16 %v6312, %v6309
      %v6421 = vpack.c.b16 %v6313, %v6310
      %v6422 = vpack.c.b16 %v6317, %v6314
      %v6423 = vpack.c.b16 %v6318, %v6315
      %v6424 = vpack.c.b16 %v6319, %v6316
      %v6425 = vpack.c.b16 %v6323, %v6320
      %v6426 = vpack.c.b16 %v6324, %v6321
      %v6427 = vpack.c.b16 %v6325, %v6322
      %v6428 = vpack.c.b16 %v6329, %v6326
      %v6429 = vpack.c.b16 %v6330, %v6327
      %v6430 = vpack.c.b16 %v6331, %v6328
      %v6431 = vpack.c.b16 %v6335, %v6332
      %v6432 = vpack.c.b16 %v6336, %v6333
      %v6433 = vpack.c.b16 %v6337, %v6334
      %6530 = vmatpush.bf16.msra.mxu0 %v6359
      %6531 = vmatpush.bf16.msra.mxu0 %v6356
      %6532 = vmatpush.bf16.msra.mxu0 %v6353
      %6533 = vmatpush.bf16.msra.mxu0 %v6350
      %6534 = vmatpush.bf16.msra.mxu0 %v6347
      %6535 = vmatpush.bf16.msra.mxu0 %v6344
      %6536 = vmatpush.bf16.msra.mxu0 %v6341
      %6537 = vmatpush.bf16.msra.mxu0 %v6338
      %6538 = vmatmul.bf16.gmra.mxu0 %v5754
      %v6539 = vpop.f32.mrf.mxu0
      %v6540 = vadd.f32 %v6012, %v6539
      %v6541 = vpop.f32.mrf.mxu0
      %v6542 = vadd.f32 %v6012, %v6541
      %6543 = vmatmul.bf16.gmra.mxu0 %v5758
      %v6544 = vpop.f32.mrf.mxu0
      %v6545 = vadd.f32 %v6012, %v6544
      %v6546 = vpop.f32.mrf.mxu0
      %v6547 = vadd.f32 %v6012, %v6546
      %6548 = vmatmul.bf16.gmra.mxu0 %v5762
      %v6549 = vpop.f32.mrf.mxu0
      %v6550 = vadd.f32 %v6012, %v6549
      %v6551 = vpop.f32.mrf.mxu0
      %v6552 = vadd.f32 %v6012, %v6551
      %6553 = vmatmul.bf16.gmra.mxu0 %v5766
      %v6554 = vpop.f32.mrf.mxu0
      %v6555 = vadd.f32 %v6012, %v6554
      %v6556 = vpop.f32.mrf.mxu0
      %v6557 = vadd.f32 %v6012, %v6556
      %6558 = vmatmul.bf16.gmra.mxu0 %v5770
      %v6559 = vpop.f32.mrf.mxu0
      %v6560 = vadd.f32 %v6012, %v6559
      %v6561 = vpop.f32.mrf.mxu0
      %v6562 = vadd.f32 %v6012, %v6561
      %6563 = vmatmul.bf16.gmra.mxu0 %v5774
      %v6564 = vpop.f32.mrf.mxu0
      %v6565 = vadd.f32 %v6012, %v6564
      %v6566 = vpop.f32.mrf.mxu0
      %v6567 = vadd.f32 %v6012, %v6566
      %6568 = vmatmul.bf16.gmra.mxu0 %v5778
      %v6569 = vpop.f32.mrf.mxu0
      %v6570 = vadd.f32 %v6012, %v6569
      %v6571 = vpop.f32.mrf.mxu0
      %v6572 = vadd.f32 %v6012, %v6571
      %6573 = vmatmul.bf16.gmra.mxu0 %v5782
      %v6574 = vpop.f32.mrf.mxu0
      %v6575 = vadd.f32 %v6012, %v6574
      %v6576 = vpop.f32.mrf.mxu0
      %v6577 = vadd.f32 %v6012, %v6576
      %6578 = vmatmul.bf16.gmra.mxu0 %v5786
      %v6579 = vpop.f32.mrf.mxu0
      %v6580 = vadd.f32 %v6012, %v6579
      %v6581 = vpop.f32.mrf.mxu0
      %v6582 = vadd.f32 %v6012, %v6581
      %6583 = vmatmul.bf16.gmra.mxu0 %v5790
      %v6584 = vpop.f32.mrf.mxu0
      %v6585 = vadd.f32 %v6012, %v6584
      %v6586 = vpop.f32.mrf.mxu0
      %v6587 = vadd.f32 %v6012, %v6586
      %6588 = vmatmul.bf16.gmra.mxu0 %v5794
      %v6589 = vpop.f32.mrf.mxu0
      %v6590 = vadd.f32 %v6012, %v6589
      %v6591 = vpop.f32.mrf.mxu0
      %v6592 = vadd.f32 %v6012, %v6591
      %6593 = vmatmul.bf16.gmra.mxu0 %v5798
      %v6594 = vpop.f32.mrf.mxu0
      %v6595 = vadd.f32 %v6012, %v6594
      %v6596 = vpop.f32.mrf.mxu0
      %v6597 = vadd.f32 %v6012, %v6596
      %6598 = vmatmul.bf16.gmra.mxu0 %v5802
      %v6599 = vpop.f32.mrf.mxu0
      %v6600 = vadd.f32 %v6012, %v6599
      %v6601 = vpop.f32.mrf.mxu0
      %v6602 = vadd.f32 %v6012, %v6601
      %6603 = vmatmul.bf16.gmra.mxu0 %v5806
      %v6604 = vpop.f32.mrf.mxu0
      %v6605 = vadd.f32 %v6012, %v6604
      %v6606 = vpop.f32.mrf.mxu0
      %v6607 = vadd.f32 %v6012, %v6606
      %6608 = vmatmul.bf16.gmra.mxu0 %v5810
      %v6609 = vpop.f32.mrf.mxu0
      %v6610 = vadd.f32 %v6012, %v6609
      %v6611 = vpop.f32.mrf.mxu0
      %v6612 = vadd.f32 %v6012, %v6611
      %6613 = vmatmul.bf16.gmra.mxu0 %v5814
      %v6614 = vpop.f32.mrf.mxu0
      %v6615 = vadd.f32 %v6012, %v6614
      %v6616 = vpop.f32.mrf.mxu0
      %v6617 = vadd.f32 %v6012, %v6616
      %6618 = vmatmul.bf16.gmra.mxu0 %v5818
      %v6619 = vpop.f32.mrf.mxu0
      %v6620 = vadd.f32 %v6012, %v6619
      %v6621 = vpop.f32.mrf.mxu0
      %v6622 = vadd.f32 %v6012, %v6621
      %6623 = vmatmul.bf16.gmra.mxu0 %v5822
      %v6624 = vpop.f32.mrf.mxu0
      %v6625 = vadd.f32 %v6012, %v6624
      %v6626 = vpop.f32.mrf.mxu0
      %v6627 = vadd.f32 %v6012, %v6626
      %6628 = vmatmul.bf16.gmra.mxu0 %v5826
      %v6629 = vpop.f32.mrf.mxu0
      %v6630 = vadd.f32 %v6012, %v6629
      %v6631 = vpop.f32.mrf.mxu0
      %v6632 = vadd.f32 %v6012, %v6631
      %6633 = vmatmul.bf16.gmra.mxu0 %v5830
      %v6634 = vpop.f32.mrf.mxu0
      %v6635 = vadd.f32 %v6012, %v6634
      %v6636 = vpop.f32.mrf.mxu0
      %v6637 = vadd.f32 %v6012, %v6636
      %6638 = vmatmul.bf16.gmra.mxu0 %v5834
      %v6639 = vpop.f32.mrf.mxu0
      %v6640 = vadd.f32 %v6012, %v6639
      %v6641 = vpop.f32.mrf.mxu0
      %v6642 = vadd.f32 %v6012, %v6641
      %6643 = vmatmul.bf16.gmra.mxu0 %v5838
      %v6644 = vpop.f32.mrf.mxu0
      %v6645 = vadd.f32 %v6012, %v6644
      %v6646 = vpop.f32.mrf.mxu0
      %v6647 = vadd.f32 %v6012, %v6646
      %6648 = vmatmul.bf16.gmra.mxu0 %v5842
      %v6649 = vpop.f32.mrf.mxu0
      %v6650 = vadd.f32 %v6012, %v6649
      %v6651 = vpop.f32.mrf.mxu0
      %v6652 = vadd.f32 %v6012, %v6651
      %6653 = vmatmul.bf16.gmra.mxu0 %v5846
      %v6654 = vpop.f32.mrf.mxu0
      %v6655 = vadd.f32 %v6012, %v6654
      %v6656 = vpop.f32.mrf.mxu0
      %v6657 = vadd.f32 %v6012, %v6656
      %6658 = vmatmul.bf16.gmra.mxu0 %v5850
      %v6659 = vpop.f32.mrf.mxu0
      %v6660 = vadd.f32 %v6012, %v6659
      %v6661 = vpop.f32.mrf.mxu0
      %v6662 = vadd.f32 %v6012, %v6661
      %6663 = vmatmul.bf16.gmra.mxu0 %v5854
      %v6664 = vpop.f32.mrf.mxu0
      %v6665 = vadd.f32 %v6012, %v6664
      %v6666 = vpop.f32.mrf.mxu0
      %v6667 = vadd.f32 %v6012, %v6666
      %6668 = vmatmul.bf16.gmra.mxu0 %v5858
      %v6669 = vpop.f32.mrf.mxu0
      %v6670 = vadd.f32 %v6012, %v6669
      %v6671 = vpop.f32.mrf.mxu0
      %v6672 = vadd.f32 %v6012, %v6671
      %6673 = vmatmul.bf16.gmra.mxu0 %v5862
      %v6674 = vpop.f32.mrf.mxu0
      %v6675 = vadd.f32 %v6012, %v6674
      %v6676 = vpop.f32.mrf.mxu0
      %v6677 = vadd.f32 %v6012, %v6676
      %6678 = vmatmul.bf16.gmra.mxu0 %v5866
      %v6679 = vpop.f32.mrf.mxu0
      %v6680 = vadd.f32 %v6012, %v6679
      %v6681 = vpop.f32.mrf.mxu0
      %v6682 = vadd.f32 %v6012, %v6681
      %6683 = vmatmul.bf16.gmra.mxu0 %v5870
      %v6684 = vpop.f32.mrf.mxu0
      %v6685 = vadd.f32 %v6012, %v6684
      %v6686 = vpop.f32.mrf.mxu0
      %v6687 = vadd.f32 %v6012, %v6686
      %6688 = vmatmul.bf16.gmra.mxu0 %v5874
      %v6689 = vpop.f32.mrf.mxu0
      %v6690 = vadd.f32 %v6012, %v6689
      %v6691 = vpop.f32.mrf.mxu0
      %v6692 = vadd.f32 %v6012, %v6691
      %6693 = vmatmul.bf16.gmra.mxu0 %v5878
      %v6694 = vpop.f32.mrf.mxu0
      %v6695 = vadd.f32 %v6012, %v6694
      %v6696 = vpop.f32.mrf.mxu0
      %v6697 = vadd.f32 %v6012, %v6696
      %6698 = vdwg.mxu0
      %6699 = vmatpush.bf16.msra.mxu0 %v6383
      %6700 = vmatpush.bf16.msra.mxu0 %v6380
      %6701 = vmatpush.bf16.msra.mxu0 %v6377
      %6702 = vmatpush.bf16.msra.mxu0 %v6374
      %6703 = vmatpush.bf16.msra.mxu0 %v6371
      %6704 = vmatpush.bf16.msra.mxu0 %v6368
      %6705 = vmatpush.bf16.msra.mxu0 %v6365
      %6706 = vmatpush.bf16.msra.mxu0 %v6362
      %6707 = vmatmul.bf16.gmra.mxu0 %v5755
      %v6708 = vpop.f32.mrf.mxu0
      %v6709 = vadd.f32 %v6540, %v6708
      %v6710 = vpop.f32.mrf.mxu0
      %v6711 = vadd.f32 %v6542, %v6710
      %6712 = vmatmul.bf16.gmra.mxu0 %v5759
      %v6713 = vpop.f32.mrf.mxu0
      %v6714 = vadd.f32 %v6545, %v6713
      %v6715 = vpop.f32.mrf.mxu0
      %v6716 = vadd.f32 %v6547, %v6715
      %6717 = vmatmul.bf16.gmra.mxu0 %v5763
      %v6718 = vpop.f32.mrf.mxu0
      %v6719 = vadd.f32 %v6550, %v6718
      %v6720 = vpop.f32.mrf.mxu0
      %v6721 = vadd.f32 %v6552, %v6720
      %6722 = vmatmul.bf16.gmra.mxu0 %v5767
      %v6723 = vpop.f32.mrf.mxu0
      %v6724 = vadd.f32 %v6555, %v6723
      %v6725 = vpop.f32.mrf.mxu0
      %v6726 = vadd.f32 %v6557, %v6725
      %6727 = vmatmul.bf16.gmra.mxu0 %v5771
      %v6728 = vpop.f32.mrf.mxu0
      %v6729 = vadd.f32 %v6560, %v6728
      %v6730 = vpop.f32.mrf.mxu0
      %v6731 = vadd.f32 %v6562, %v6730
      %6732 = vmatmul.bf16.gmra.mxu0 %v5775
      %v6733 = vpop.f32.mrf.mxu0
      %v6734 = vadd.f32 %v6565, %v6733
      %v6735 = vpop.f32.mrf.mxu0
      %v6736 = vadd.f32 %v6567, %v6735
      %6737 = vmatmul.bf16.gmra.mxu0 %v5779
      %v6738 = vpop.f32.mrf.mxu0
      %v6739 = vadd.f32 %v6570, %v6738
      %v6740 = vpop.f32.mrf.mxu0
      %v6741 = vadd.f32 %v6572, %v6740
      %6742 = vmatmul.bf16.gmra.mxu0 %v5783
      %v6743 = vpop.f32.mrf.mxu0
      %v6744 = vadd.f32 %v6575, %v6743
      %v6745 = vpop.f32.mrf.mxu0
      %v6746 = vadd.f32 %v6577, %v6745
      %6747 = vmatmul.bf16.gmra.mxu0 %v5787
      %v6748 = vpop.f32.mrf.mxu0
      %v6749 = vadd.f32 %v6580, %v6748
      %v6750 = vpop.f32.mrf.mxu0
      %v6751 = vadd.f32 %v6582, %v6750
      %6752 = vmatmul.bf16.gmra.mxu0 %v5791
      %v6753 = vpop.f32.mrf.mxu0
      %v6754 = vadd.f32 %v6585, %v6753
      %v6755 = vpop.f32.mrf.mxu0
      %v6756 = vadd.f32 %v6587, %v6755
      %6757 = vmatmul.bf16.gmra.mxu0 %v5795
      %v6758 = vpop.f32.mrf.mxu0
      %v6759 = vadd.f32 %v6590, %v6758
      %v6760 = vpop.f32.mrf.mxu0
      %v6761 = vadd.f32 %v6592, %v6760
      %6762 = vmatmul.bf16.gmra.mxu0 %v5799
      %v6763 = vpop.f32.mrf.mxu0
      %v6764 = vadd.f32 %v6595, %v6763
      %v6765 = vpop.f32.mrf.mxu0
      %v6766 = vadd.f32 %v6597, %v6765
      %6767 = vmatmul.bf16.gmra.mxu0 %v5803
      %v6768 = vpop.f32.mrf.mxu0
      %v6769 = vadd.f32 %v6600, %v6768
      %v6770 = vpop.f32.mrf.mxu0
      %v6771 = vadd.f32 %v6602, %v6770
      %6772 = vmatmul.bf16.gmra.mxu0 %v5807
      %v6773 = vpop.f32.mrf.mxu0
      %v6774 = vadd.f32 %v6605, %v6773
      %v6775 = vpop.f32.mrf.mxu0
      %v6776 = vadd.f32 %v6607, %v6775
      %6777 = vmatmul.bf16.gmra.mxu0 %v5811
      %v6778 = vpop.f32.mrf.mxu0
      %v6779 = vadd.f32 %v6610, %v6778
      %v6780 = vpop.f32.mrf.mxu0
      %v6781 = vadd.f32 %v6612, %v6780
      %6782 = vmatmul.bf16.gmra.mxu0 %v5815
      %v6783 = vpop.f32.mrf.mxu0
      %v6784 = vadd.f32 %v6615, %v6783
      %v6785 = vpop.f32.mrf.mxu0
      %v6786 = vadd.f32 %v6617, %v6785
      %6787 = vmatmul.bf16.gmra.mxu0 %v5819
      %v6788 = vpop.f32.mrf.mxu0
      %v6789 = vadd.f32 %v6620, %v6788
      %v6790 = vpop.f32.mrf.mxu0
      %v6791 = vadd.f32 %v6622, %v6790
      %6792 = vmatmul.bf16.gmra.mxu0 %v5823
      %v6793 = vpop.f32.mrf.mxu0
      %v6794 = vadd.f32 %v6625, %v6793
      %v6795 = vpop.f32.mrf.mxu0
      %v6796 = vadd.f32 %v6627, %v6795
      %6797 = vmatmul.bf16.gmra.mxu0 %v5827
      %v6798 = vpop.f32.mrf.mxu0
      %v6799 = vadd.f32 %v6630, %v6798
      %v6800 = vpop.f32.mrf.mxu0
      %v6801 = vadd.f32 %v6632, %v6800
      %6802 = vmatmul.bf16.gmra.mxu0 %v5831
      %v6803 = vpop.f32.mrf.mxu0
      %v6804 = vadd.f32 %v6635, %v6803
      %v6805 = vpop.f32.mrf.mxu0
      %v6806 = vadd.f32 %v6637, %v6805
      %6807 = vmatmul.bf16.gmra.mxu0 %v5835
      %v6808 = vpop.f32.mrf.mxu0
      %v6809 = vadd.f32 %v6640, %v6808
      %v6810 = vpop.f32.mrf.mxu0
      %v6811 = vadd.f32 %v6642, %v6810
      %6812 = vmatmul.bf16.gmra.mxu0 %v5839
      %v6813 = vpop.f32.mrf.mxu0
      %v6814 = vadd.f32 %v6645, %v6813
      %v6815 = vpop.f32.mrf.mxu0
      %v6816 = vadd.f32 %v6647, %v6815
      %6817 = vmatmul.bf16.gmra.mxu0 %v5843
      %v6818 = vpop.f32.mrf.mxu0
      %v6819 = vadd.f32 %v6650, %v6818
      %v6820 = vpop.f32.mrf.mxu0
      %v6821 = vadd.f32 %v6652, %v6820
      %6822 = vmatmul.bf16.gmra.mxu0 %v5847
      %v6823 = vpop.f32.mrf.mxu0
      %v6824 = vadd.f32 %v6655, %v6823
      %v6825 = vpop.f32.mrf.mxu0
      %v6826 = vadd.f32 %v6657, %v6825
      %6827 = vmatmul.bf16.gmra.mxu0 %v5851
      %v6828 = vpop.f32.mrf.mxu0
      %v6829 = vadd.f32 %v6660, %v6828
      %v6830 = vpop.f32.mrf.mxu0
      %v6831 = vadd.f32 %v6662, %v6830
      %6832 = vmatmul.bf16.gmra.mxu0 %v5855
      %v6833 = vpop.f32.mrf.mxu0
      %v6834 = vadd.f32 %v6665, %v6833
      %v6835 = vpop.f32.mrf.mxu0
      %v6836 = vadd.f32 %v6667, %v6835
      %6837 = vmatmul.bf16.gmra.mxu0 %v5859
      %v6838 = vpop.f32.mrf.mxu0
      %v6839 = vadd.f32 %v6670, %v6838
      %v6840 = vpop.f32.mrf.mxu0
      %v6841 = vadd.f32 %v6672, %v6840
      %6842 = vmatmul.bf16.gmra.mxu0 %v5863
      %v6843 = vpop.f32.mrf.mxu0
      %v6844 = vadd.f32 %v6675, %v6843
      %v6845 = vpop.f32.mrf.mxu0
      %v6846 = vadd.f32 %v6677, %v6845
      %6847 = vmatmul.bf16.gmra.mxu0 %v5867
      %v6848 = vpop.f32.mrf.mxu0
      %v6849 = vadd.f32 %v6680, %v6848
      %v6850 = vpop.f32.mrf.mxu0
      %v6851 = vadd.f32 %v6682, %v6850
      %6852 = vmatmul.bf16.gmra.mxu0 %v5871
      %v6853 = vpop.f32.mrf.mxu0
      %v6854 = vadd.f32 %v6685, %v6853
      %v6855 = vpop.f32.mrf.mxu0
      %v6856 = vadd.f32 %v6687, %v6855
      %6857 = vmatmul.bf16.gmra.mxu0 %v5875
      %v6858 = vpop.f32.mrf.mxu0
      %v6859 = vadd.f32 %v6690, %v6858
      %v6860 = vpop.f32.mrf.mxu0
      %v6861 = vadd.f32 %v6692, %v6860
      %6862 = vmatmul.bf16.gmra.mxu0 %v5879
      %v6863 = vpop.f32.mrf.mxu0
      %v6864 = vadd.f32 %v6695, %v6863
      %v6865 = vpop.f32.mrf.mxu0
      %v6866 = vadd.f32 %v6697, %v6865
      %6867 = vdwg.mxu0
      %6868 = vmatpush.bf16.msra.mxu0 %v6407
      %6869 = vmatpush.bf16.msra.mxu0 %v6404
      %6870 = vmatpush.bf16.msra.mxu0 %v6401
      %6871 = vmatpush.bf16.msra.mxu0 %v6398
      %6872 = vmatpush.bf16.msra.mxu0 %v6395
      %6873 = vmatpush.bf16.msra.mxu0 %v6392
      %6874 = vmatpush.bf16.msra.mxu0 %v6389
      %6875 = vmatpush.bf16.msra.mxu0 %v6386
      %6876 = vmatmul.bf16.gmra.mxu0 %v5756
      %v6877 = vpop.f32.mrf.mxu0
      %v6878 = vadd.f32 %v6709, %v6877
      %v6879 = vpop.f32.mrf.mxu0
      %v6880 = vadd.f32 %v6711, %v6879
      %6881 = vmatmul.bf16.gmra.mxu0 %v5760
      %v6882 = vpop.f32.mrf.mxu0
      %v6883 = vadd.f32 %v6714, %v6882
      %v6884 = vpop.f32.mrf.mxu0
      %v6885 = vadd.f32 %v6716, %v6884
      %6886 = vmatmul.bf16.gmra.mxu0 %v5764
      %v6887 = vpop.f32.mrf.mxu0
      %v6888 = vadd.f32 %v6719, %v6887
      %v6889 = vpop.f32.mrf.mxu0
      %v6890 = vadd.f32 %v6721, %v6889
      %6891 = vmatmul.bf16.gmra.mxu0 %v5768
      %v6892 = vpop.f32.mrf.mxu0
      %v6893 = vadd.f32 %v6724, %v6892
      %v6894 = vpop.f32.mrf.mxu0
      %v6895 = vadd.f32 %v6726, %v6894
      %6896 = vmatmul.bf16.gmra.mxu0 %v5772
      %v6897 = vpop.f32.mrf.mxu0
      %v6898 = vadd.f32 %v6729, %v6897
      %v6899 = vpop.f32.mrf.mxu0
      %v6900 = vadd.f32 %v6731, %v6899
      %6901 = vmatmul.bf16.gmra.mxu0 %v5776
      %v6902 = vpop.f32.mrf.mxu0
      %v6903 = vadd.f32 %v6734, %v6902
      %v6904 = vpop.f32.mrf.mxu0
      %v6905 = vadd.f32 %v6736, %v6904
      %6906 = vmatmul.bf16.gmra.mxu0 %v5780
      %v6907 = vpop.f32.mrf.mxu0
      %v6908 = vadd.f32 %v6739, %v6907
      %v6909 = vpop.f32.mrf.mxu0
      %v6910 = vadd.f32 %v6741, %v6909
      %6911 = vmatmul.bf16.gmra.mxu0 %v5784
      %v6912 = vpop.f32.mrf.mxu0
      %v6913 = vadd.f32 %v6744, %v6912
      %v6914 = vpop.f32.mrf.mxu0
      %v6915 = vadd.f32 %v6746, %v6914
      %6916 = vmatmul.bf16.gmra.mxu0 %v5788
      %v6917 = vpop.f32.mrf.mxu0
      %v6918 = vadd.f32 %v6749, %v6917
      %v6919 = vpop.f32.mrf.mxu0
      %v6920 = vadd.f32 %v6751, %v6919
      %6921 = vmatmul.bf16.gmra.mxu0 %v5792
      %v6922 = vpop.f32.mrf.mxu0
      %v6923 = vadd.f32 %v6754, %v6922
      %v6924 = vpop.f32.mrf.mxu0
      %v6925 = vadd.f32 %v6756, %v6924
      %6926 = vmatmul.bf16.gmra.mxu0 %v5796
      %v6927 = vpop.f32.mrf.mxu0
      %v6928 = vadd.f32 %v6759, %v6927
      %v6929 = vpop.f32.mrf.mxu0
      %v6930 = vadd.f32 %v6761, %v6929
      %6931 = vmatmul.bf16.gmra.mxu0 %v5800
      %v6932 = vpop.f32.mrf.mxu0
      %v6933 = vadd.f32 %v6764, %v6932
      %v6934 = vpop.f32.mrf.mxu0
      %v6935 = vadd.f32 %v6766, %v6934
      %6936 = vmatmul.bf16.gmra.mxu0 %v5804
      %v6937 = vpop.f32.mrf.mxu0
      %v6938 = vadd.f32 %v6769, %v6937
      %v6939 = vpop.f32.mrf.mxu0
      %v6940 = vadd.f32 %v6771, %v6939
      %6941 = vmatmul.bf16.gmra.mxu0 %v5808
      %v6942 = vpop.f32.mrf.mxu0
      %v6943 = vadd.f32 %v6774, %v6942
      %v6944 = vpop.f32.mrf.mxu0
      %v6945 = vadd.f32 %v6776, %v6944
      %6946 = vmatmul.bf16.gmra.mxu0 %v5812
      %v6947 = vpop.f32.mrf.mxu0
      %v6948 = vadd.f32 %v6779, %v6947
      %v6949 = vpop.f32.mrf.mxu0
      %v6950 = vadd.f32 %v6781, %v6949
      %6951 = vmatmul.bf16.gmra.mxu0 %v5816
      %v6952 = vpop.f32.mrf.mxu0
      %v6953 = vadd.f32 %v6784, %v6952
      %v6954 = vpop.f32.mrf.mxu0
      %v6955 = vadd.f32 %v6786, %v6954
      %6956 = vmatmul.bf16.gmra.mxu0 %v5820
      %v6957 = vpop.f32.mrf.mxu0
      %v6958 = vadd.f32 %v6789, %v6957
      %v6959 = vpop.f32.mrf.mxu0
      %v6960 = vadd.f32 %v6791, %v6959
      %6961 = vmatmul.bf16.gmra.mxu0 %v5824
      %v6962 = vpop.f32.mrf.mxu0
      %v6963 = vadd.f32 %v6794, %v6962
      %v6964 = vpop.f32.mrf.mxu0
      %v6965 = vadd.f32 %v6796, %v6964
      %6966 = vmatmul.bf16.gmra.mxu0 %v5828
      %v6967 = vpop.f32.mrf.mxu0
      %v6968 = vadd.f32 %v6799, %v6967
      %v6969 = vpop.f32.mrf.mxu0
      %v6970 = vadd.f32 %v6801, %v6969
      %6971 = vmatmul.bf16.gmra.mxu0 %v5832
      %v6972 = vpop.f32.mrf.mxu0
      %v6973 = vadd.f32 %v6804, %v6972
      %v6974 = vpop.f32.mrf.mxu0
      %v6975 = vadd.f32 %v6806, %v6974
      %6976 = vmatmul.bf16.gmra.mxu0 %v5836
      %v6977 = vpop.f32.mrf.mxu0
      %v6978 = vadd.f32 %v6809, %v6977
      %v6979 = vpop.f32.mrf.mxu0
      %v6980 = vadd.f32 %v6811, %v6979
      %6981 = vmatmul.bf16.gmra.mxu0 %v5840
      %v6982 = vpop.f32.mrf.mxu0
      %v6983 = vadd.f32 %v6814, %v6982
      %v6984 = vpop.f32.mrf.mxu0
      %v6985 = vadd.f32 %v6816, %v6984
      %6986 = vmatmul.bf16.gmra.mxu0 %v5844
      %v6987 = vpop.f32.mrf.mxu0
      %v6988 = vadd.f32 %v6819, %v6987
      %v6989 = vpop.f32.mrf.mxu0
      %v6990 = vadd.f32 %v6821, %v6989
      %6991 = vmatmul.bf16.gmra.mxu0 %v5848
      %v6992 = vpop.f32.mrf.mxu0
      %v6993 = vadd.f32 %v6824, %v6992
      %v6994 = vpop.f32.mrf.mxu0
      %v6995 = vadd.f32 %v6826, %v6994
      %6996 = vmatmul.bf16.gmra.mxu0 %v5852
      %v6997 = vpop.f32.mrf.mxu0
      %v6998 = vadd.f32 %v6829, %v6997
      %v6999 = vpop.f32.mrf.mxu0
      %v7000 = vadd.f32 %v6831, %v6999
      %7001 = vmatmul.bf16.gmra.mxu0 %v5856
      %v7002 = vpop.f32.mrf.mxu0
      %v7003 = vadd.f32 %v6834, %v7002
      %v7004 = vpop.f32.mrf.mxu0
      %v7005 = vadd.f32 %v6836, %v7004
      %7006 = vmatmul.bf16.gmra.mxu0 %v5860
      %v7007 = vpop.f32.mrf.mxu0
      %v7008 = vadd.f32 %v6839, %v7007
      %v7009 = vpop.f32.mrf.mxu0
      %v7010 = vadd.f32 %v6841, %v7009
      %7011 = vmatmul.bf16.gmra.mxu0 %v5864
      %v7012 = vpop.f32.mrf.mxu0
      %v7013 = vadd.f32 %v6844, %v7012
      %v7014 = vpop.f32.mrf.mxu0
      %v7015 = vadd.f32 %v6846, %v7014
      %7016 = vmatmul.bf16.gmra.mxu0 %v5868
      %v7017 = vpop.f32.mrf.mxu0
      %v7018 = vadd.f32 %v6849, %v7017
      %v7019 = vpop.f32.mrf.mxu0
      %v7020 = vadd.f32 %v6851, %v7019
      %7021 = vmatmul.bf16.gmra.mxu0 %v5872
      %v7022 = vpop.f32.mrf.mxu0
      %v7023 = vadd.f32 %v6854, %v7022
      %v7024 = vpop.f32.mrf.mxu0
      %v7025 = vadd.f32 %v6856, %v7024
      %7026 = vmatmul.bf16.gmra.mxu0 %v5876
      %v7027 = vpop.f32.mrf.mxu0
      %v7028 = vadd.f32 %v6859, %v7027
      %v7029 = vpop.f32.mrf.mxu0
      %v7030 = vadd.f32 %v6861, %v7029
      %7031 = vmatmul.bf16.gmra.mxu0 %v5880
      %v7032 = vpop.f32.mrf.mxu0
      %v7033 = vadd.f32 %v6864, %v7032
      %v7034 = vpop.f32.mrf.mxu0
      %v7035 = vadd.f32 %v6866, %v7034
      %7036 = vdwg.mxu0
      %7037 = vmatpush.bf16.msra.mxu0 %v6431
      %7038 = vmatpush.bf16.msra.mxu0 %v6428
      %7039 = vmatpush.bf16.msra.mxu0 %v6425
      %7040 = vmatpush.bf16.msra.mxu0 %v6422
      %7041 = vmatpush.bf16.msra.mxu0 %v6419
      %7042 = vmatpush.bf16.msra.mxu0 %v6416
      %7043 = vmatpush.bf16.msra.mxu0 %v6413
      %7044 = vmatpush.bf16.msra.mxu0 %v6410
      %7045 = vmatmul.bf16.gmra.mxu0 %v5757
      %v7046 = vpop.f32.mrf.mxu0
      %v7047 = vadd.f32 %v6878, %v7046
      %v7048 = vpop.f32.mrf.mxu0
      %v7049 = vadd.f32 %v6880, %v7048
      %7050 = vmatmul.bf16.gmra.mxu0 %v5761
      %v7051 = vpop.f32.mrf.mxu0
      %v7052 = vadd.f32 %v6883, %v7051
      %v7053 = vpop.f32.mrf.mxu0
      %v7054 = vadd.f32 %v6885, %v7053
      %7055 = vmatmul.bf16.gmra.mxu0 %v5765
      %v7056 = vpop.f32.mrf.mxu0
      %v7057 = vadd.f32 %v6888, %v7056
      %v7058 = vpop.f32.mrf.mxu0
      %v7059 = vadd.f32 %v6890, %v7058
      %7060 = vmatmul.bf16.gmra.mxu0 %v5769
      %v7061 = vpop.f32.mrf.mxu0
      %v7062 = vadd.f32 %v6893, %v7061
      %v7063 = vpop.f32.mrf.mxu0
      %v7064 = vadd.f32 %v6895, %v7063
      %7065 = vmatmul.bf16.gmra.mxu0 %v5773
      %v7066 = vpop.f32.mrf.mxu0
      %v7067 = vadd.f32 %v6898, %v7066
      %v7068 = vpop.f32.mrf.mxu0
      %v7069 = vadd.f32 %v6900, %v7068
      %7070 = vmatmul.bf16.gmra.mxu0 %v5777
      %v7071 = vpop.f32.mrf.mxu0
      %v7072 = vadd.f32 %v6903, %v7071
      %v7073 = vpop.f32.mrf.mxu0
      %v7074 = vadd.f32 %v6905, %v7073
      %7075 = vmatmul.bf16.gmra.mxu0 %v5781
      %v7076 = vpop.f32.mrf.mxu0
      %v7077 = vadd.f32 %v6908, %v7076
      %v7078 = vpop.f32.mrf.mxu0
      %v7079 = vadd.f32 %v6910, %v7078
      %7080 = vmatmul.bf16.gmra.mxu0 %v5785
      %v7081 = vpop.f32.mrf.mxu0
      %v7082 = vadd.f32 %v6913, %v7081
      %v7083 = vpop.f32.mrf.mxu0
      %v7084 = vadd.f32 %v6915, %v7083
      %7085 = vmatmul.bf16.gmra.mxu0 %v5789
      %v7086 = vpop.f32.mrf.mxu0
      %v7087 = vadd.f32 %v6918, %v7086
      %v7088 = vpop.f32.mrf.mxu0
      %v7089 = vadd.f32 %v6920, %v7088
      %7090 = vmatmul.bf16.gmra.mxu0 %v5793
      %v7091 = vpop.f32.mrf.mxu0
      %v7092 = vadd.f32 %v6923, %v7091
      %v7093 = vpop.f32.mrf.mxu0
      %v7094 = vadd.f32 %v6925, %v7093
      %7095 = vmatmul.bf16.gmra.mxu0 %v5797
      %v7096 = vpop.f32.mrf.mxu0
      %v7097 = vadd.f32 %v6928, %v7096
      %v7098 = vpop.f32.mrf.mxu0
      %v7099 = vadd.f32 %v6930, %v7098
      %7100 = vmatmul.bf16.gmra.mxu0 %v5801
      %v7101 = vpop.f32.mrf.mxu0
      %v7102 = vadd.f32 %v6933, %v7101
      %v7103 = vpop.f32.mrf.mxu0
      %v7104 = vadd.f32 %v6935, %v7103
      %7105 = vmatmul.bf16.gmra.mxu0 %v5805
      %v7106 = vpop.f32.mrf.mxu0
      %v7107 = vadd.f32 %v6938, %v7106
      %v7108 = vpop.f32.mrf.mxu0
      %v7109 = vadd.f32 %v6940, %v7108
      %7110 = vmatmul.bf16.gmra.mxu0 %v5809
      %v7111 = vpop.f32.mrf.mxu0
      %v7112 = vadd.f32 %v6943, %v7111
      %v7113 = vpop.f32.mrf.mxu0
      %v7114 = vadd.f32 %v6945, %v7113
      %7115 = vmatmul.bf16.gmra.mxu0 %v5813
      %v7116 = vpop.f32.mrf.mxu0
      %v7117 = vadd.f32 %v6948, %v7116
      %v7118 = vpop.f32.mrf.mxu0
      %v7119 = vadd.f32 %v6950, %v7118
      %7120 = vmatmul.bf16.gmra.mxu0 %v5817
      %v7121 = vpop.f32.mrf.mxu0
      %v7122 = vadd.f32 %v6953, %v7121
      %v7123 = vpop.f32.mrf.mxu0
      %v7124 = vadd.f32 %v6955, %v7123
      %7125 = vmatmul.bf16.gmra.mxu0 %v5821
      %v7126 = vpop.f32.mrf.mxu0
      %v7127 = vadd.f32 %v6958, %v7126
      %v7128 = vpop.f32.mrf.mxu0
      %v7129 = vadd.f32 %v6960, %v7128
      %7130 = vmatmul.bf16.gmra.mxu0 %v5825
      %v7131 = vpop.f32.mrf.mxu0
      %v7132 = vadd.f32 %v6963, %v7131
      %v7133 = vpop.f32.mrf.mxu0
      %v7134 = vadd.f32 %v6965, %v7133
      %7135 = vmatmul.bf16.gmra.mxu0 %v5829
      %v7136 = vpop.f32.mrf.mxu0
      %v7137 = vadd.f32 %v6968, %v7136
      %v7138 = vpop.f32.mrf.mxu0
      %v7139 = vadd.f32 %v6970, %v7138
      %7140 = vmatmul.bf16.gmra.mxu0 %v5833
      %v7141 = vpop.f32.mrf.mxu0
      %v7142 = vadd.f32 %v6973, %v7141
      %v7143 = vpop.f32.mrf.mxu0
      %v7144 = vadd.f32 %v6975, %v7143
      %7145 = vmatmul.bf16.gmra.mxu0 %v5837
      %v7146 = vpop.f32.mrf.mxu0
      %v7147 = vadd.f32 %v6978, %v7146
      %v7148 = vpop.f32.mrf.mxu0
      %v7149 = vadd.f32 %v6980, %v7148
      %7150 = vmatmul.bf16.gmra.mxu0 %v5841
      %v7151 = vpop.f32.mrf.mxu0
      %v7152 = vadd.f32 %v6983, %v7151
      %v7153 = vpop.f32.mrf.mxu0
      %v7154 = vadd.f32 %v6985, %v7153
      %7155 = vmatmul.bf16.gmra.mxu0 %v5845
      %v7156 = vpop.f32.mrf.mxu0
      %v7157 = vadd.f32 %v6988, %v7156
      %v7158 = vpop.f32.mrf.mxu0
      %v7159 = vadd.f32 %v6990, %v7158
      %7160 = vmatmul.bf16.gmra.mxu0 %v5849
      %v7161 = vpop.f32.mrf.mxu0
      %v7162 = vadd.f32 %v6993, %v7161
      %v7163 = vpop.f32.mrf.mxu0
      %v7164 = vadd.f32 %v6995, %v7163
      %7165 = vmatmul.bf16.gmra.mxu0 %v5853
      %v7166 = vpop.f32.mrf.mxu0
      %v7167 = vadd.f32 %v6998, %v7166
      %v7168 = vpop.f32.mrf.mxu0
      %v7169 = vadd.f32 %v7000, %v7168
      %7170 = vmatmul.bf16.gmra.mxu0 %v5857
      %v7171 = vpop.f32.mrf.mxu0
      %v7172 = vadd.f32 %v7003, %v7171
      %v7173 = vpop.f32.mrf.mxu0
      %v7174 = vadd.f32 %v7005, %v7173
      %7175 = vmatmul.bf16.gmra.mxu0 %v5861
      %v7176 = vpop.f32.mrf.mxu0
      %v7177 = vadd.f32 %v7008, %v7176
      %v7178 = vpop.f32.mrf.mxu0
      %v7179 = vadd.f32 %v7010, %v7178
      %7180 = vmatmul.bf16.gmra.mxu0 %v5865
      %v7181 = vpop.f32.mrf.mxu0
      %v7182 = vadd.f32 %v7013, %v7181
      %v7183 = vpop.f32.mrf.mxu0
      %v7184 = vadd.f32 %v7015, %v7183
      %7185 = vmatmul.bf16.gmra.mxu0 %v5869
      %v7186 = vpop.f32.mrf.mxu0
      %v7187 = vadd.f32 %v7018, %v7186
      %v7188 = vpop.f32.mrf.mxu0
      %v7189 = vadd.f32 %v7020, %v7188
      %7190 = vmatmul.bf16.gmra.mxu0 %v5873
      %v7191 = vpop.f32.mrf.mxu0
      %v7192 = vadd.f32 %v7023, %v7191
      %v7193 = vpop.f32.mrf.mxu0
      %v7194 = vadd.f32 %v7025, %v7193
      %7195 = vmatmul.bf16.gmra.mxu0 %v5877
      %v7196 = vpop.f32.mrf.mxu0
      %v7197 = vadd.f32 %v7028, %v7196
      %v7198 = vpop.f32.mrf.mxu0
      %v7199 = vadd.f32 %v7030, %v7198
      %7200 = vmatmul.bf16.gmra.mxu0 %v5881
      %v7201 = vpop.f32.mrf.mxu0
      %v7202 = vadd.f32 %v7033, %v7201
      %v7203 = vpop.f32.mrf.mxu0
      %v7204 = vadd.f32 %v7035, %v7203
      %7205 = vdwg.mxu0
      %7206 = vmatpush.bf16.msra.mxu0 %v6360
      %7207 = vmatpush.bf16.msra.mxu0 %v6357
      %7208 = vmatpush.bf16.msra.mxu0 %v6354
      %7209 = vmatpush.bf16.msra.mxu0 %v6351
      %7210 = vmatpush.bf16.msra.mxu0 %v6348
      %7211 = vmatpush.bf16.msra.mxu0 %v6345
      %7212 = vmatpush.bf16.msra.mxu0 %v6342
      %7213 = vmatpush.bf16.msra.mxu0 %v6339
      %7214 = vmatmul.bf16.gmra.mxu0 %v5754
      %v7215 = vpop.f32.mrf.mxu0
      %v7216 = vadd.f32 %v6013, %v7215
      %v7217 = vpop.f32.mrf.mxu0
      %v7218 = vadd.f32 %v6013, %v7217
      %7219 = vmatmul.bf16.gmra.mxu0 %v5758
      %v7220 = vpop.f32.mrf.mxu0
      %v7221 = vadd.f32 %v6013, %v7220
      %v7222 = vpop.f32.mrf.mxu0
      %v7223 = vadd.f32 %v6013, %v7222
      %7224 = vmatmul.bf16.gmra.mxu0 %v5762
      %v7225 = vpop.f32.mrf.mxu0
      %v7226 = vadd.f32 %v6013, %v7225
      %v7227 = vpop.f32.mrf.mxu0
      %v7228 = vadd.f32 %v6013, %v7227
      %7229 = vmatmul.bf16.gmra.mxu0 %v5766
      %v7230 = vpop.f32.mrf.mxu0
      %v7231 = vadd.f32 %v6013, %v7230
      %v7232 = vpop.f32.mrf.mxu0
      %v7233 = vadd.f32 %v6013, %v7232
      %7234 = vmatmul.bf16.gmra.mxu0 %v5770
      %v7235 = vpop.f32.mrf.mxu0
      %v7236 = vadd.f32 %v6013, %v7235
      %v7237 = vpop.f32.mrf.mxu0
      %v7238 = vadd.f32 %v6013, %v7237
      %7239 = vmatmul.bf16.gmra.mxu0 %v5774
      %v7240 = vpop.f32.mrf.mxu0
      %v7241 = vadd.f32 %v6013, %v7240
      %v7242 = vpop.f32.mrf.mxu0
      %v7243 = vadd.f32 %v6013, %v7242
      %7244 = vmatmul.bf16.gmra.mxu0 %v5778
      %v7245 = vpop.f32.mrf.mxu0
      %v7246 = vadd.f32 %v6013, %v7245
      %v7247 = vpop.f32.mrf.mxu0
      %v7248 = vadd.f32 %v6013, %v7247
      %7249 = vmatmul.bf16.gmra.mxu0 %v5782
      %v7250 = vpop.f32.mrf.mxu0
      %v7251 = vadd.f32 %v6013, %v7250
      %v7252 = vpop.f32.mrf.mxu0
      %v7253 = vadd.f32 %v6013, %v7252
      %7254 = vmatmul.bf16.gmra.mxu0 %v5786
      %v7255 = vpop.f32.mrf.mxu0
      %v7256 = vadd.f32 %v6013, %v7255
      %v7257 = vpop.f32.mrf.mxu0
      %v7258 = vadd.f32 %v6013, %v7257
      %7259 = vmatmul.bf16.gmra.mxu0 %v5790
      %v7260 = vpop.f32.mrf.mxu0
      %v7261 = vadd.f32 %v6013, %v7260
      %v7262 = vpop.f32.mrf.mxu0
      %v7263 = vadd.f32 %v6013, %v7262
      %7264 = vmatmul.bf16.gmra.mxu0 %v5794
      %v7265 = vpop.f32.mrf.mxu0
      %v7266 = vadd.f32 %v6013, %v7265
      %v7267 = vpop.f32.mrf.mxu0
      %v7268 = vadd.f32 %v6013, %v7267
      %7269 = vmatmul.bf16.gmra.mxu0 %v5798
      %v7270 = vpop.f32.mrf.mxu0
      %v7271 = vadd.f32 %v6013, %v7270
      %v7272 = vpop.f32.mrf.mxu0
      %v7273 = vadd.f32 %v6013, %v7272
      %7274 = vmatmul.bf16.gmra.mxu0 %v5802
      %v7275 = vpop.f32.mrf.mxu0
      %v7276 = vadd.f32 %v6013, %v7275
      %v7277 = vpop.f32.mrf.mxu0
      %v7278 = vadd.f32 %v6013, %v7277
      %7279 = vmatmul.bf16.gmra.mxu0 %v5806
      %v7280 = vpop.f32.mrf.mxu0
      %v7281 = vadd.f32 %v6013, %v7280
      %v7282 = vpop.f32.mrf.mxu0
      %v7283 = vadd.f32 %v6013, %v7282
      %7284 = vmatmul.bf16.gmra.mxu0 %v5810
      %v7285 = vpop.f32.mrf.mxu0
      %v7286 = vadd.f32 %v6013, %v7285
      %v7287 = vpop.f32.mrf.mxu0
      %v7288 = vadd.f32 %v6013, %v7287
      %7289 = vmatmul.bf16.gmra.mxu0 %v5814
      %v7290 = vpop.f32.mrf.mxu0
      %v7291 = vadd.f32 %v6013, %v7290
      %v7292 = vpop.f32.mrf.mxu0
      %v7293 = vadd.f32 %v6013, %v7292
      %7294 = vmatmul.bf16.gmra.mxu0 %v5818
      %v7295 = vpop.f32.mrf.mxu0
      %v7296 = vadd.f32 %v6013, %v7295
      %v7297 = vpop.f32.mrf.mxu0
      %v7298 = vadd.f32 %v6013, %v7297
      %7299 = vmatmul.bf16.gmra.mxu0 %v5822
      %v7300 = vpop.f32.mrf.mxu0
      %v7301 = vadd.f32 %v6013, %v7300
      %v7302 = vpop.f32.mrf.mxu0
      %v7303 = vadd.f32 %v6013, %v7302
      %7304 = vmatmul.bf16.gmra.mxu0 %v5826
      %v7305 = vpop.f32.mrf.mxu0
      %v7306 = vadd.f32 %v6013, %v7305
      %v7307 = vpop.f32.mrf.mxu0
      %v7308 = vadd.f32 %v6013, %v7307
      %7309 = vmatmul.bf16.gmra.mxu0 %v5830
      %v7310 = vpop.f32.mrf.mxu0
      %v7311 = vadd.f32 %v6013, %v7310
      %v7312 = vpop.f32.mrf.mxu0
      %v7313 = vadd.f32 %v6013, %v7312
      %7314 = vmatmul.bf16.gmra.mxu0 %v5834
      %v7315 = vpop.f32.mrf.mxu0
      %v7316 = vadd.f32 %v6013, %v7315
      %v7317 = vpop.f32.mrf.mxu0
      %v7318 = vadd.f32 %v6013, %v7317
      %7319 = vmatmul.bf16.gmra.mxu0 %v5838
      %v7320 = vpop.f32.mrf.mxu0
      %v7321 = vadd.f32 %v6013, %v7320
      %v7322 = vpop.f32.mrf.mxu0
      %v7323 = vadd.f32 %v6013, %v7322
      %7324 = vmatmul.bf16.gmra.mxu0 %v5842
      %v7325 = vpop.f32.mrf.mxu0
      %v7326 = vadd.f32 %v6013, %v7325
      %v7327 = vpop.f32.mrf.mxu0
      %v7328 = vadd.f32 %v6013, %v7327
      %7329 = vmatmul.bf16.gmra.mxu0 %v5846
      %v7330 = vpop.f32.mrf.mxu0
      %v7331 = vadd.f32 %v6013, %v7330
      %v7332 = vpop.f32.mrf.mxu0
      %v7333 = vadd.f32 %v6013, %v7332
      %7334 = vmatmul.bf16.gmra.mxu0 %v5850
      %v7335 = vpop.f32.mrf.mxu0
      %v7336 = vadd.f32 %v6013, %v7335
      %v7337 = vpop.f32.mrf.mxu0
      %v7338 = vadd.f32 %v6013, %v7337
      %7339 = vmatmul.bf16.gmra.mxu0 %v5854
      %v7340 = vpop.f32.mrf.mxu0
      %v7341 = vadd.f32 %v6013, %v7340
      %v7342 = vpop.f32.mrf.mxu0
      %v7343 = vadd.f32 %v6013, %v7342
      %7344 = vmatmul.bf16.gmra.mxu0 %v5858
      %v7345 = vpop.f32.mrf.mxu0
      %v7346 = vadd.f32 %v6013, %v7345
      %v7347 = vpop.f32.mrf.mxu0
      %v7348 = vadd.f32 %v6013, %v7347
      %7349 = vmatmul.bf16.gmra.mxu0 %v5862
      %v7350 = vpop.f32.mrf.mxu0
      %v7351 = vadd.f32 %v6013, %v7350
      %v7352 = vpop.f32.mrf.mxu0
      %v7353 = vadd.f32 %v6013, %v7352
      %7354 = vmatmul.bf16.gmra.mxu0 %v5866
      %v7355 = vpop.f32.mrf.mxu0
      %v7356 = vadd.f32 %v6013, %v7355
      %v7357 = vpop.f32.mrf.mxu0
      %v7358 = vadd.f32 %v6013, %v7357
      %7359 = vmatmul.bf16.gmra.mxu0 %v5870
      %v7360 = vpop.f32.mrf.mxu0
      %v7361 = vadd.f32 %v6013, %v7360
      %v7362 = vpop.f32.mrf.mxu0
      %v7363 = vadd.f32 %v6013, %v7362
      %7364 = vmatmul.bf16.gmra.mxu0 %v5874
      %v7365 = vpop.f32.mrf.mxu0
      %v7366 = vadd.f32 %v6013, %v7365
      %v7367 = vpop.f32.mrf.mxu0
      %v7368 = vadd.f32 %v6013, %v7367
      %7369 = vmatmul.bf16.gmra.mxu0 %v5878
      %v7370 = vpop.f32.mrf.mxu0
      %v7371 = vadd.f32 %v6013, %v7370
      %v7372 = vpop.f32.mrf.mxu0
      %v7373 = vadd.f32 %v6013, %v7372
      %7374 = vdwg.mxu0
      %7375 = vmatpush.bf16.msra.mxu0 %v6384
      %7376 = vmatpush.bf16.msra.mxu0 %v6381
      %7377 = vmatpush.bf16.msra.mxu0 %v6378
      %7378 = vmatpush.bf16.msra.mxu0 %v6375
      %7379 = vmatpush.bf16.msra.mxu0 %v6372
      %7380 = vmatpush.bf16.msra.mxu0 %v6369
      %7381 = vmatpush.bf16.msra.mxu0 %v6366
      %7382 = vmatpush.bf16.msra.mxu0 %v6363
      %7383 = vmatmul.bf16.gmra.mxu0 %v5755
      %v7384 = vpop.f32.mrf.mxu0
      %v7385 = vadd.f32 %v7216, %v7384
      %v7386 = vpop.f32.mrf.mxu0
      %v7387 = vadd.f32 %v7218, %v7386
      %7388 = vmatmul.bf16.gmra.mxu0 %v5759
      %v7389 = vpop.f32.mrf.mxu0
      %v7390 = vadd.f32 %v7221, %v7389
      %v7391 = vpop.f32.mrf.mxu0
      %v7392 = vadd.f32 %v7223, %v7391
      %7393 = vmatmul.bf16.gmra.mxu0 %v5763
      %v7394 = vpop.f32.mrf.mxu0
      %v7395 = vadd.f32 %v7226, %v7394
      %v7396 = vpop.f32.mrf.mxu0
      %v7397 = vadd.f32 %v7228, %v7396
      %7398 = vmatmul.bf16.gmra.mxu0 %v5767
      %v7399 = vpop.f32.mrf.mxu0
      %v7400 = vadd.f32 %v7231, %v7399
      %v7401 = vpop.f32.mrf.mxu0
      %v7402 = vadd.f32 %v7233, %v7401
      %7403 = vmatmul.bf16.gmra.mxu0 %v5771
      %v7404 = vpop.f32.mrf.mxu0
      %v7405 = vadd.f32 %v7236, %v7404
      %v7406 = vpop.f32.mrf.mxu0
      %v7407 = vadd.f32 %v7238, %v7406
      %7408 = vmatmul.bf16.gmra.mxu0 %v5775
      %v7409 = vpop.f32.mrf.mxu0
      %v7410 = vadd.f32 %v7241, %v7409
      %v7411 = vpop.f32.mrf.mxu0
      %v7412 = vadd.f32 %v7243, %v7411
      %7413 = vmatmul.bf16.gmra.mxu0 %v5779
      %v7414 = vpop.f32.mrf.mxu0
      %v7415 = vadd.f32 %v7246, %v7414
      %v7416 = vpop.f32.mrf.mxu0
      %v7417 = vadd.f32 %v7248, %v7416
      %7418 = vmatmul.bf16.gmra.mxu0 %v5783
      %v7419 = vpop.f32.mrf.mxu0
      %v7420 = vadd.f32 %v7251, %v7419
      %v7421 = vpop.f32.mrf.mxu0
      %v7422 = vadd.f32 %v7253, %v7421
      %7423 = vmatmul.bf16.gmra.mxu0 %v5787
      %v7424 = vpop.f32.mrf.mxu0
      %v7425 = vadd.f32 %v7256, %v7424
      %v7426 = vpop.f32.mrf.mxu0
      %v7427 = vadd.f32 %v7258, %v7426
      %7428 = vmatmul.bf16.gmra.mxu0 %v5791
      %v7429 = vpop.f32.mrf.mxu0
      %v7430 = vadd.f32 %v7261, %v7429
      %v7431 = vpop.f32.mrf.mxu0
      %v7432 = vadd.f32 %v7263, %v7431
      %7433 = vmatmul.bf16.gmra.mxu0 %v5795
      %v7434 = vpop.f32.mrf.mxu0
      %v7435 = vadd.f32 %v7266, %v7434
      %v7436 = vpop.f32.mrf.mxu0
      %v7437 = vadd.f32 %v7268, %v7436
      %7438 = vmatmul.bf16.gmra.mxu0 %v5799
      %v7439 = vpop.f32.mrf.mxu0
      %v7440 = vadd.f32 %v7271, %v7439
      %v7441 = vpop.f32.mrf.mxu0
      %v7442 = vadd.f32 %v7273, %v7441
      %7443 = vmatmul.bf16.gmra.mxu0 %v5803
      %v7444 = vpop.f32.mrf.mxu0
      %v7445 = vadd.f32 %v7276, %v7444
      %v7446 = vpop.f32.mrf.mxu0
      %v7447 = vadd.f32 %v7278, %v7446
      %7448 = vmatmul.bf16.gmra.mxu0 %v5807
      %v7449 = vpop.f32.mrf.mxu0
      %v7450 = vadd.f32 %v7281, %v7449
      %v7451 = vpop.f32.mrf.mxu0
      %v7452 = vadd.f32 %v7283, %v7451
      %7453 = vmatmul.bf16.gmra.mxu0 %v5811
      %v7454 = vpop.f32.mrf.mxu0
      %v7455 = vadd.f32 %v7286, %v7454
      %v7456 = vpop.f32.mrf.mxu0
      %v7457 = vadd.f32 %v7288, %v7456
      %7458 = vmatmul.bf16.gmra.mxu0 %v5815
      %v7459 = vpop.f32.mrf.mxu0
      %v7460 = vadd.f32 %v7291, %v7459
      %v7461 = vpop.f32.mrf.mxu0
      %v7462 = vadd.f32 %v7293, %v7461
      %7463 = vmatmul.bf16.gmra.mxu0 %v5819
      %v7464 = vpop.f32.mrf.mxu0
      %v7465 = vadd.f32 %v7296, %v7464
      %v7466 = vpop.f32.mrf.mxu0
      %v7467 = vadd.f32 %v7298, %v7466
      %7468 = vmatmul.bf16.gmra.mxu0 %v5823
      %v7469 = vpop.f32.mrf.mxu0
      %v7470 = vadd.f32 %v7301, %v7469
      %v7471 = vpop.f32.mrf.mxu0
      %v7472 = vadd.f32 %v7303, %v7471
      %7473 = vmatmul.bf16.gmra.mxu0 %v5827
      %v7474 = vpop.f32.mrf.mxu0
      %v7475 = vadd.f32 %v7306, %v7474
      %v7476 = vpop.f32.mrf.mxu0
      %v7477 = vadd.f32 %v7308, %v7476
      %7478 = vmatmul.bf16.gmra.mxu0 %v5831
      %v7479 = vpop.f32.mrf.mxu0
      %v7480 = vadd.f32 %v7311, %v7479
      %v7481 = vpop.f32.mrf.mxu0
      %v7482 = vadd.f32 %v7313, %v7481
      %7483 = vmatmul.bf16.gmra.mxu0 %v5835
      %v7484 = vpop.f32.mrf.mxu0
      %v7485 = vadd.f32 %v7316, %v7484
      %v7486 = vpop.f32.mrf.mxu0
      %v7487 = vadd.f32 %v7318, %v7486
      %7488 = vmatmul.bf16.gmra.mxu0 %v5839
      %v7489 = vpop.f32.mrf.mxu0
      %v7490 = vadd.f32 %v7321, %v7489
      %v7491 = vpop.f32.mrf.mxu0
      %v7492 = vadd.f32 %v7323, %v7491
      %7493 = vmatmul.bf16.gmra.mxu0 %v5843
      %v7494 = vpop.f32.mrf.mxu0
      %v7495 = vadd.f32 %v7326, %v7494
      %v7496 = vpop.f32.mrf.mxu0
      %v7497 = vadd.f32 %v7328, %v7496
      %7498 = vmatmul.bf16.gmra.mxu0 %v5847
      %v7499 = vpop.f32.mrf.mxu0
      %v7500 = vadd.f32 %v7331, %v7499
      %v7501 = vpop.f32.mrf.mxu0
      %v7502 = vadd.f32 %v7333, %v7501
      %7503 = vmatmul.bf16.gmra.mxu0 %v5851
      %v7504 = vpop.f32.mrf.mxu0
      %v7505 = vadd.f32 %v7336, %v7504
      %v7506 = vpop.f32.mrf.mxu0
      %v7507 = vadd.f32 %v7338, %v7506
      %7508 = vmatmul.bf16.gmra.mxu0 %v5855
      %v7509 = vpop.f32.mrf.mxu0
      %v7510 = vadd.f32 %v7341, %v7509
      %v7511 = vpop.f32.mrf.mxu0
      %v7512 = vadd.f32 %v7343, %v7511
      %7513 = vmatmul.bf16.gmra.mxu0 %v5859
      %v7514 = vpop.f32.mrf.mxu0
      %v7515 = vadd.f32 %v7346, %v7514
      %v7516 = vpop.f32.mrf.mxu0
      %v7517 = vadd.f32 %v7348, %v7516
      %7518 = vmatmul.bf16.gmra.mxu0 %v5863
      %v7519 = vpop.f32.mrf.mxu0
      %v7520 = vadd.f32 %v7351, %v7519
      %v7521 = vpop.f32.mrf.mxu0
      %v7522 = vadd.f32 %v7353, %v7521
      %7523 = vmatmul.bf16.gmra.mxu0 %v5867
      %v7524 = vpop.f32.mrf.mxu0
      %v7525 = vadd.f32 %v7356, %v7524
      %v7526 = vpop.f32.mrf.mxu0
      %v7527 = vadd.f32 %v7358, %v7526
      %7528 = vmatmul.bf16.gmra.mxu0 %v5871
      %v7529 = vpop.f32.mrf.mxu0
      %v7530 = vadd.f32 %v7361, %v7529
      %v7531 = vpop.f32.mrf.mxu0
      %v7532 = vadd.f32 %v7363, %v7531
      %7533 = vmatmul.bf16.gmra.mxu0 %v5875
      %v7534 = vpop.f32.mrf.mxu0
      %v7535 = vadd.f32 %v7366, %v7534
      %v7536 = vpop.f32.mrf.mxu0
      %v7537 = vadd.f32 %v7368, %v7536
      %7538 = vmatmul.bf16.gmra.mxu0 %v5879
      %v7539 = vpop.f32.mrf.mxu0
      %v7540 = vadd.f32 %v7371, %v7539
      %v7541 = vpop.f32.mrf.mxu0
      %v7542 = vadd.f32 %v7373, %v7541
      %7543 = vdwg.mxu0
      %7544 = vmatpush.bf16.msra.mxu0 %v6408
      %7545 = vmatpush.bf16.msra.mxu0 %v6405
      %7546 = vmatpush.bf16.msra.mxu0 %v6402
      %7547 = vmatpush.bf16.msra.mxu0 %v6399
      %7548 = vmatpush.bf16.msra.mxu0 %v6396
      %7549 = vmatpush.bf16.msra.mxu0 %v6393
      %7550 = vmatpush.bf16.msra.mxu0 %v6390
      %7551 = vmatpush.bf16.msra.mxu0 %v6387
      %7552 = vmatmul.bf16.gmra.mxu0 %v5756
      %v7553 = vpop.f32.mrf.mxu0
      %v7554 = vadd.f32 %v7385, %v7553
      %v7555 = vpop.f32.mrf.mxu0
      %v7556 = vadd.f32 %v7387, %v7555
      %7557 = vmatmul.bf16.gmra.mxu0 %v5760
      %v7558 = vpop.f32.mrf.mxu0
      %v7559 = vadd.f32 %v7390, %v7558
      %v7560 = vpop.f32.mrf.mxu0
      %v7561 = vadd.f32 %v7392, %v7560
      %7562 = vmatmul.bf16.gmra.mxu0 %v5764
      %v7563 = vpop.f32.mrf.mxu0
      %v7564 = vadd.f32 %v7395, %v7563
      %v7565 = vpop.f32.mrf.mxu0
      %v7566 = vadd.f32 %v7397, %v7565
      %7567 = vmatmul.bf16.gmra.mxu0 %v5768
      %v7568 = vpop.f32.mrf.mxu0
      %v7569 = vadd.f32 %v7400, %v7568
      %v7570 = vpop.f32.mrf.mxu0
      %v7571 = vadd.f32 %v7402, %v7570
      %7572 = vmatmul.bf16.gmra.mxu0 %v5772
      %v7573 = vpop.f32.mrf.mxu0
      %v7574 = vadd.f32 %v7405, %v7573
      %v7575 = vpop.f32.mrf.mxu0
      %v7576 = vadd.f32 %v7407, %v7575
      %7577 = vmatmul.bf16.gmra.mxu0 %v5776
      %v7578 = vpop.f32.mrf.mxu0
      %v7579 = vadd.f32 %v7410, %v7578
      %v7580 = vpop.f32.mrf.mxu0
      %v7581 = vadd.f32 %v7412, %v7580
      %7582 = vmatmul.bf16.gmra.mxu0 %v5780
      %v7583 = vpop.f32.mrf.mxu0
      %v7584 = vadd.f32 %v7415, %v7583
      %v7585 = vpop.f32.mrf.mxu0
      %v7586 = vadd.f32 %v7417, %v7585
      %7587 = vmatmul.bf16.gmra.mxu0 %v5784
      %v7588 = vpop.f32.mrf.mxu0
      %v7589 = vadd.f32 %v7420, %v7588
      %v7590 = vpop.f32.mrf.mxu0
      %v7591 = vadd.f32 %v7422, %v7590
      %7592 = vmatmul.bf16.gmra.mxu0 %v5788
      %v7593 = vpop.f32.mrf.mxu0
      %v7594 = vadd.f32 %v7425, %v7593
      %v7595 = vpop.f32.mrf.mxu0
      %v7596 = vadd.f32 %v7427, %v7595
      %7597 = vmatmul.bf16.gmra.mxu0 %v5792
      %v7598 = vpop.f32.mrf.mxu0
      %v7599 = vadd.f32 %v7430, %v7598
      %v7600 = vpop.f32.mrf.mxu0
      %v7601 = vadd.f32 %v7432, %v7600
      %7602 = vmatmul.bf16.gmra.mxu0 %v5796
      %v7603 = vpop.f32.mrf.mxu0
      %v7604 = vadd.f32 %v7435, %v7603
      %v7605 = vpop.f32.mrf.mxu0
      %v7606 = vadd.f32 %v7437, %v7605
      %7607 = vmatmul.bf16.gmra.mxu0 %v5800
      %v7608 = vpop.f32.mrf.mxu0
      %v7609 = vadd.f32 %v7440, %v7608
      %v7610 = vpop.f32.mrf.mxu0
      %v7611 = vadd.f32 %v7442, %v7610
      %7612 = vmatmul.bf16.gmra.mxu0 %v5804
      %v7613 = vpop.f32.mrf.mxu0
      %v7614 = vadd.f32 %v7445, %v7613
      %v7615 = vpop.f32.mrf.mxu0
      %v7616 = vadd.f32 %v7447, %v7615
      %7617 = vmatmul.bf16.gmra.mxu0 %v5808
      %v7618 = vpop.f32.mrf.mxu0
      %v7619 = vadd.f32 %v7450, %v7618
      %v7620 = vpop.f32.mrf.mxu0
      %v7621 = vadd.f32 %v7452, %v7620
      %7622 = vmatmul.bf16.gmra.mxu0 %v5812
      %v7623 = vpop.f32.mrf.mxu0
      %v7624 = vadd.f32 %v7455, %v7623
      %v7625 = vpop.f32.mrf.mxu0
      %v7626 = vadd.f32 %v7457, %v7625
      %7627 = vmatmul.bf16.gmra.mxu0 %v5816
      %v7628 = vpop.f32.mrf.mxu0
      %v7629 = vadd.f32 %v7460, %v7628
      %v7630 = vpop.f32.mrf.mxu0
      %v7631 = vadd.f32 %v7462, %v7630
      %7632 = vmatmul.bf16.gmra.mxu0 %v5820
      %v7633 = vpop.f32.mrf.mxu0
      %v7634 = vadd.f32 %v7465, %v7633
      %v7635 = vpop.f32.mrf.mxu0
      %v7636 = vadd.f32 %v7467, %v7635
      %7637 = vmatmul.bf16.gmra.mxu0 %v5824
      %v7638 = vpop.f32.mrf.mxu0
      %v7639 = vadd.f32 %v7470, %v7638
      %v7640 = vpop.f32.mrf.mxu0
      %v7641 = vadd.f32 %v7472, %v7640
      %7642 = vmatmul.bf16.gmra.mxu0 %v5828
      %v7643 = vpop.f32.mrf.mxu0
      %v7644 = vadd.f32 %v7475, %v7643
      %v7645 = vpop.f32.mrf.mxu0
      %v7646 = vadd.f32 %v7477, %v7645
      %7647 = vmatmul.bf16.gmra.mxu0 %v5832
      %v7648 = vpop.f32.mrf.mxu0
      %v7649 = vadd.f32 %v7480, %v7648
      %v7650 = vpop.f32.mrf.mxu0
      %v7651 = vadd.f32 %v7482, %v7650
      %7652 = vmatmul.bf16.gmra.mxu0 %v5836
      %v7653 = vpop.f32.mrf.mxu0
      %v7654 = vadd.f32 %v7485, %v7653
      %v7655 = vpop.f32.mrf.mxu0
      %v7656 = vadd.f32 %v7487, %v7655
      %7657 = vmatmul.bf16.gmra.mxu0 %v5840
      %v7658 = vpop.f32.mrf.mxu0
      %v7659 = vadd.f32 %v7490, %v7658
      %v7660 = vpop.f32.mrf.mxu0
      %v7661 = vadd.f32 %v7492, %v7660
      %7662 = vmatmul.bf16.gmra.mxu0 %v5844
      %v7663 = vpop.f32.mrf.mxu0
      %v7664 = vadd.f32 %v7495, %v7663
      %v7665 = vpop.f32.mrf.mxu0
      %v7666 = vadd.f32 %v7497, %v7665
      %7667 = vmatmul.bf16.gmra.mxu0 %v5848
      %v7668 = vpop.f32.mrf.mxu0
      %v7669 = vadd.f32 %v7500, %v7668
      %v7670 = vpop.f32.mrf.mxu0
      %v7671 = vadd.f32 %v7502, %v7670
      %7672 = vmatmul.bf16.gmra.mxu0 %v5852
      %v7673 = vpop.f32.mrf.mxu0
      %v7674 = vadd.f32 %v7505, %v7673
      %v7675 = vpop.f32.mrf.mxu0
      %v7676 = vadd.f32 %v7507, %v7675
      %7677 = vmatmul.bf16.gmra.mxu0 %v5856
      %v7678 = vpop.f32.mrf.mxu0
      %v7679 = vadd.f32 %v7510, %v7678
      %v7680 = vpop.f32.mrf.mxu0
      %v7681 = vadd.f32 %v7512, %v7680
      %7682 = vmatmul.bf16.gmra.mxu0 %v5860
      %v7683 = vpop.f32.mrf.mxu0
      %v7684 = vadd.f32 %v7515, %v7683
      %v7685 = vpop.f32.mrf.mxu0
      %v7686 = vadd.f32 %v7517, %v7685
      %7687 = vmatmul.bf16.gmra.mxu0 %v5864
      %v7688 = vpop.f32.mrf.mxu0
      %v7689 = vadd.f32 %v7520, %v7688
      %v7690 = vpop.f32.mrf.mxu0
      %v7691 = vadd.f32 %v7522, %v7690
      %7692 = vmatmul.bf16.gmra.mxu0 %v5868
      %v7693 = vpop.f32.mrf.mxu0
      %v7694 = vadd.f32 %v7525, %v7693
      %v7695 = vpop.f32.mrf.mxu0
      %v7696 = vadd.f32 %v7527, %v7695
      %7697 = vmatmul.bf16.gmra.mxu0 %v5872
      %v7698 = vpop.f32.mrf.mxu0
      %v7699 = vadd.f32 %v7530, %v7698
      %v7700 = vpop.f32.mrf.mxu0
      %v7701 = vadd.f32 %v7532, %v7700
      %7702 = vmatmul.bf16.gmra.mxu0 %v5876
      %v7703 = vpop.f32.mrf.mxu0
      %v7704 = vadd.f32 %v7535, %v7703
      %v7705 = vpop.f32.mrf.mxu0
      %v7706 = vadd.f32 %v7537, %v7705
      %7707 = vmatmul.bf16.gmra.mxu0 %v5880
      %v7708 = vpop.f32.mrf.mxu0
      %v7709 = vadd.f32 %v7540, %v7708
      %v7710 = vpop.f32.mrf.mxu0
      %v7711 = vadd.f32 %v7542, %v7710
      %7712 = vdwg.mxu0
      %7713 = vmatpush.bf16.msra.mxu0 %v6432
      %7714 = vmatpush.bf16.msra.mxu0 %v6429
      %7715 = vmatpush.bf16.msra.mxu0 %v6426
      %7716 = vmatpush.bf16.msra.mxu0 %v6423
      %7717 = vmatpush.bf16.msra.mxu0 %v6420
      %7718 = vmatpush.bf16.msra.mxu0 %v6417
      %7719 = vmatpush.bf16.msra.mxu0 %v6414
      %7720 = vmatpush.bf16.msra.mxu0 %v6411
      %7721 = vmatmul.bf16.gmra.mxu0 %v5757
      %v7722 = vpop.f32.mrf.mxu0
      %v7723 = vadd.f32 %v7554, %v7722
      %v7724 = vpop.f32.mrf.mxu0
      %v7725 = vadd.f32 %v7556, %v7724
      %7726 = vmatmul.bf16.gmra.mxu0 %v5761
      %v7727 = vpop.f32.mrf.mxu0
      %v7728 = vadd.f32 %v7559, %v7727
      %v7729 = vpop.f32.mrf.mxu0
      %v7730 = vadd.f32 %v7561, %v7729
      %7731 = vmatmul.bf16.gmra.mxu0 %v5765
      %v7732 = vpop.f32.mrf.mxu0
      %v7733 = vadd.f32 %v7564, %v7732
      %v7734 = vpop.f32.mrf.mxu0
      %v7735 = vadd.f32 %v7566, %v7734
      %7736 = vmatmul.bf16.gmra.mxu0 %v5769
      %v7737 = vpop.f32.mrf.mxu0
      %v7738 = vadd.f32 %v7569, %v7737
      %v7739 = vpop.f32.mrf.mxu0
      %v7740 = vadd.f32 %v7571, %v7739
      %7741 = vmatmul.bf16.gmra.mxu0 %v5773
      %v7742 = vpop.f32.mrf.mxu0
      %v7743 = vadd.f32 %v7574, %v7742
      %v7744 = vpop.f32.mrf.mxu0
      %v7745 = vadd.f32 %v7576, %v7744
      %7746 = vmatmul.bf16.gmra.mxu0 %v5777
      %v7747 = vpop.f32.mrf.mxu0
      %v7748 = vadd.f32 %v7579, %v7747
      %v7749 = vpop.f32.mrf.mxu0
      %v7750 = vadd.f32 %v7581, %v7749
      %7751 = vmatmul.bf16.gmra.mxu0 %v5781
      %v7752 = vpop.f32.mrf.mxu0
      %v7753 = vadd.f32 %v7584, %v7752
      %v7754 = vpop.f32.mrf.mxu0
      %v7755 = vadd.f32 %v7586, %v7754
      %7756 = vmatmul.bf16.gmra.mxu0 %v5785
      %v7757 = vpop.f32.mrf.mxu0
      %v7758 = vadd.f32 %v7589, %v7757
      %v7759 = vpop.f32.mrf.mxu0
      %v7760 = vadd.f32 %v7591, %v7759
      %7761 = vmatmul.bf16.gmra.mxu0 %v5789
      %v7762 = vpop.f32.mrf.mxu0
      %v7763 = vadd.f32 %v7594, %v7762
      %v7764 = vpop.f32.mrf.mxu0
      %v7765 = vadd.f32 %v7596, %v7764
      %7766 = vmatmul.bf16.gmra.mxu0 %v5793
      %v7767 = vpop.f32.mrf.mxu0
      %v7768 = vadd.f32 %v7599, %v7767
      %v7769 = vpop.f32.mrf.mxu0
      %v7770 = vadd.f32 %v7601, %v7769
      %7771 = vmatmul.bf16.gmra.mxu0 %v5797
      %v7772 = vpop.f32.mrf.mxu0
      %v7773 = vadd.f32 %v7604, %v7772
      %v7774 = vpop.f32.mrf.mxu0
      %v7775 = vadd.f32 %v7606, %v7774
      %7776 = vmatmul.bf16.gmra.mxu0 %v5801
      %v7777 = vpop.f32.mrf.mxu0
      %v7778 = vadd.f32 %v7609, %v7777
      %v7779 = vpop.f32.mrf.mxu0
      %v7780 = vadd.f32 %v7611, %v7779
      %7781 = vmatmul.bf16.gmra.mxu0 %v5805
      %v7782 = vpop.f32.mrf.mxu0
      %v7783 = vadd.f32 %v7614, %v7782
      %v7784 = vpop.f32.mrf.mxu0
      %v7785 = vadd.f32 %v7616, %v7784
      %7786 = vmatmul.bf16.gmra.mxu0 %v5809
      %v7787 = vpop.f32.mrf.mxu0
      %v7788 = vadd.f32 %v7619, %v7787
      %v7789 = vpop.f32.mrf.mxu0
      %v7790 = vadd.f32 %v7621, %v7789
      %7791 = vmatmul.bf16.gmra.mxu0 %v5813
      %v7792 = vpop.f32.mrf.mxu0
      %v7793 = vadd.f32 %v7624, %v7792
      %v7794 = vpop.f32.mrf.mxu0
      %v7795 = vadd.f32 %v7626, %v7794
      %7796 = vmatmul.bf16.gmra.mxu0 %v5817
      %v7797 = vpop.f32.mrf.mxu0
      %v7798 = vadd.f32 %v7629, %v7797
      %v7799 = vpop.f32.mrf.mxu0
      %v7800 = vadd.f32 %v7631, %v7799
      %7801 = vmatmul.bf16.gmra.mxu0 %v5821
      %v7802 = vpop.f32.mrf.mxu0
      %v7803 = vadd.f32 %v7634, %v7802
      %v7804 = vpop.f32.mrf.mxu0
      %v7805 = vadd.f32 %v7636, %v7804
      %7806 = vmatmul.bf16.gmra.mxu0 %v5825
      %v7807 = vpop.f32.mrf.mxu0
      %v7808 = vadd.f32 %v7639, %v7807
      %v7809 = vpop.f32.mrf.mxu0
      %v7810 = vadd.f32 %v7641, %v7809
      %7811 = vmatmul.bf16.gmra.mxu0 %v5829
      %v7812 = vpop.f32.mrf.mxu0
      %v7813 = vadd.f32 %v7644, %v7812
      %v7814 = vpop.f32.mrf.mxu0
      %v7815 = vadd.f32 %v7646, %v7814
      %7816 = vmatmul.bf16.gmra.mxu0 %v5833
      %v7817 = vpop.f32.mrf.mxu0
      %v7818 = vadd.f32 %v7649, %v7817
      %v7819 = vpop.f32.mrf.mxu0
      %v7820 = vadd.f32 %v7651, %v7819
      %7821 = vmatmul.bf16.gmra.mxu0 %v5837
      %v7822 = vpop.f32.mrf.mxu0
      %v7823 = vadd.f32 %v7654, %v7822
      %v7824 = vpop.f32.mrf.mxu0
      %v7825 = vadd.f32 %v7656, %v7824
      %7826 = vmatmul.bf16.gmra.mxu0 %v5841
      %v7827 = vpop.f32.mrf.mxu0
      %v7828 = vadd.f32 %v7659, %v7827
      %v7829 = vpop.f32.mrf.mxu0
      %v7830 = vadd.f32 %v7661, %v7829
      %7831 = vmatmul.bf16.gmra.mxu0 %v5845
      %v7832 = vpop.f32.mrf.mxu0
      %v7833 = vadd.f32 %v7664, %v7832
      %v7834 = vpop.f32.mrf.mxu0
      %v7835 = vadd.f32 %v7666, %v7834
      %7836 = vmatmul.bf16.gmra.mxu0 %v5849
      %v7837 = vpop.f32.mrf.mxu0
      %v7838 = vadd.f32 %v7669, %v7837
      %v7839 = vpop.f32.mrf.mxu0
      %v7840 = vadd.f32 %v7671, %v7839
      %7841 = vmatmul.bf16.gmra.mxu0 %v5853
      %v7842 = vpop.f32.mrf.mxu0
      %v7843 = vadd.f32 %v7674, %v7842
      %v7844 = vpop.f32.mrf.mxu0
      %v7845 = vadd.f32 %v7676, %v7844
      %7846 = vmatmul.bf16.gmra.mxu0 %v5857
      %v7847 = vpop.f32.mrf.mxu0
      %v7848 = vadd.f32 %v7679, %v7847
      %v7849 = vpop.f32.mrf.mxu0
      %v7850 = vadd.f32 %v7681, %v7849
      %7851 = vmatmul.bf16.gmra.mxu0 %v5861
      %v7852 = vpop.f32.mrf.mxu0
      %v7853 = vadd.f32 %v7684, %v7852
      %v7854 = vpop.f32.mrf.mxu0
      %v7855 = vadd.f32 %v7686, %v7854
      %7856 = vmatmul.bf16.gmra.mxu0 %v5865
      %v7857 = vpop.f32.mrf.mxu0
      %v7858 = vadd.f32 %v7689, %v7857
      %v7859 = vpop.f32.mrf.mxu0
      %v7860 = vadd.f32 %v7691, %v7859
      %7861 = vmatmul.bf16.gmra.mxu0 %v5869
      %v7862 = vpop.f32.mrf.mxu0
      %v7863 = vadd.f32 %v7694, %v7862
      %v7864 = vpop.f32.mrf.mxu0
      %v7865 = vadd.f32 %v7696, %v7864
      %7866 = vmatmul.bf16.gmra.mxu0 %v5873
      %v7867 = vpop.f32.mrf.mxu0
      %v7868 = vadd.f32 %v7699, %v7867
      %v7869 = vpop.f32.mrf.mxu0
      %v7870 = vadd.f32 %v7701, %v7869
      %7871 = vmatmul.bf16.gmra.mxu0 %v5877
      %v7872 = vpop.f32.mrf.mxu0
      %v7873 = vadd.f32 %v7704, %v7872
      %v7874 = vpop.f32.mrf.mxu0
      %v7875 = vadd.f32 %v7706, %v7874
      %7876 = vmatmul.bf16.gmra.mxu0 %v5881
      %v7877 = vpop.f32.mrf.mxu0
      %v7878 = vadd.f32 %v7709, %v7877
      %v7879 = vpop.f32.mrf.mxu0
      %v7880 = vadd.f32 %v7711, %v7879
      %7881 = vdwg.mxu0
      %7882 = vmatpush.bf16.msra.mxu0 %v6361
      %7883 = vmatpush.bf16.msra.mxu0 %v6358
      %7884 = vmatpush.bf16.msra.mxu0 %v6355
      %7885 = vmatpush.bf16.msra.mxu0 %v6352
      %7886 = vmatpush.bf16.msra.mxu0 %v6349
      %7887 = vmatpush.bf16.msra.mxu0 %v6346
      %7888 = vmatpush.bf16.msra.mxu0 %v6343
      %7889 = vmatpush.bf16.msra.mxu0 %v6340
      %7890 = vmatmul.bf16.gmra.mxu0 %v5754
      %v7891 = vpop.f32.mrf.mxu0
      %v7892 = vadd.f32 %v6014, %v7891
      %v7893 = vpop.f32.mrf.mxu0
      %v7894 = vadd.f32 %v6014, %v7893
      %7895 = vmatmul.bf16.gmra.mxu0 %v5758
      %v7896 = vpop.f32.mrf.mxu0
      %v7897 = vadd.f32 %v6014, %v7896
      %v7898 = vpop.f32.mrf.mxu0
      %v7899 = vadd.f32 %v6014, %v7898
      %7900 = vmatmul.bf16.gmra.mxu0 %v5762
      %v7901 = vpop.f32.mrf.mxu0
      %v7902 = vadd.f32 %v6014, %v7901
      %v7903 = vpop.f32.mrf.mxu0
      %v7904 = vadd.f32 %v6014, %v7903
      %7905 = vmatmul.bf16.gmra.mxu0 %v5766
      %v7906 = vpop.f32.mrf.mxu0
      %v7907 = vadd.f32 %v6014, %v7906
      %v7908 = vpop.f32.mrf.mxu0
      %v7909 = vadd.f32 %v6014, %v7908
      %7910 = vmatmul.bf16.gmra.mxu0 %v5770
      %v7911 = vpop.f32.mrf.mxu0
      %v7912 = vadd.f32 %v6014, %v7911
      %v7913 = vpop.f32.mrf.mxu0
      %v7914 = vadd.f32 %v6014, %v7913
      %7915 = vmatmul.bf16.gmra.mxu0 %v5774
      %v7916 = vpop.f32.mrf.mxu0
      %v7917 = vadd.f32 %v6014, %v7916
      %v7918 = vpop.f32.mrf.mxu0
      %v7919 = vadd.f32 %v6014, %v7918
      %7920 = vmatmul.bf16.gmra.mxu0 %v5778
      %v7921 = vpop.f32.mrf.mxu0
      %v7922 = vadd.f32 %v6014, %v7921
      %v7923 = vpop.f32.mrf.mxu0
      %v7924 = vadd.f32 %v6014, %v7923
      %7925 = vmatmul.bf16.gmra.mxu0 %v5782
      %v7926 = vpop.f32.mrf.mxu0
      %v7927 = vadd.f32 %v6014, %v7926
      %v7928 = vpop.f32.mrf.mxu0
      %v7929 = vadd.f32 %v6014, %v7928
      %7930 = vmatmul.bf16.gmra.mxu0 %v5786
      %v7931 = vpop.f32.mrf.mxu0
      %v7932 = vadd.f32 %v6014, %v7931
      %v7933 = vpop.f32.mrf.mxu0
      %v7934 = vadd.f32 %v6014, %v7933
      %7935 = vmatmul.bf16.gmra.mxu0 %v5790
      %v7936 = vpop.f32.mrf.mxu0
      %v7937 = vadd.f32 %v6014, %v7936
      %v7938 = vpop.f32.mrf.mxu0
      %v7939 = vadd.f32 %v6014, %v7938
      %7940 = vmatmul.bf16.gmra.mxu0 %v5794
      %v7941 = vpop.f32.mrf.mxu0
      %v7942 = vadd.f32 %v6014, %v7941
      %v7943 = vpop.f32.mrf.mxu0
      %v7944 = vadd.f32 %v6014, %v7943
      %7945 = vmatmul.bf16.gmra.mxu0 %v5798
      %v7946 = vpop.f32.mrf.mxu0
      %v7947 = vadd.f32 %v6014, %v7946
      %v7948 = vpop.f32.mrf.mxu0
      %v7949 = vadd.f32 %v6014, %v7948
      %7950 = vmatmul.bf16.gmra.mxu0 %v5802
      %v7951 = vpop.f32.mrf.mxu0
      %v7952 = vadd.f32 %v6014, %v7951
      %v7953 = vpop.f32.mrf.mxu0
      %v7954 = vadd.f32 %v6014, %v7953
      %7955 = vmatmul.bf16.gmra.mxu0 %v5806
      %v7956 = vpop.f32.mrf.mxu0
      %v7957 = vadd.f32 %v6014, %v7956
      %v7958 = vpop.f32.mrf.mxu0
      %v7959 = vadd.f32 %v6014, %v7958
      %7960 = vmatmul.bf16.gmra.mxu0 %v5810
      %v7961 = vpop.f32.mrf.mxu0
      %v7962 = vadd.f32 %v6014, %v7961
      %v7963 = vpop.f32.mrf.mxu0
      %v7964 = vadd.f32 %v6014, %v7963
      %7965 = vmatmul.bf16.gmra.mxu0 %v5814
      %v7966 = vpop.f32.mrf.mxu0
      %v7967 = vadd.f32 %v6014, %v7966
      %v7968 = vpop.f32.mrf.mxu0
      %v7969 = vadd.f32 %v6014, %v7968
      %7970 = vmatmul.bf16.gmra.mxu0 %v5818
      %v7971 = vpop.f32.mrf.mxu0
      %v7972 = vadd.f32 %v6014, %v7971
      %v7973 = vpop.f32.mrf.mxu0
      %v7974 = vadd.f32 %v6014, %v7973
      %7975 = vmatmul.bf16.gmra.mxu0 %v5822
      %v7976 = vpop.f32.mrf.mxu0
      %v7977 = vadd.f32 %v6014, %v7976
      %v7978 = vpop.f32.mrf.mxu0
      %v7979 = vadd.f32 %v6014, %v7978
      %7980 = vmatmul.bf16.gmra.mxu0 %v5826
      %v7981 = vpop.f32.mrf.mxu0
      %v7982 = vadd.f32 %v6014, %v7981
      %v7983 = vpop.f32.mrf.mxu0
      %v7984 = vadd.f32 %v6014, %v7983
      %7985 = vmatmul.bf16.gmra.mxu0 %v5830
      %v7986 = vpop.f32.mrf.mxu0
      %v7987 = vadd.f32 %v6014, %v7986
      %v7988 = vpop.f32.mrf.mxu0
      %v7989 = vadd.f32 %v6014, %v7988
      %7990 = vmatmul.bf16.gmra.mxu0 %v5834
      %v7991 = vpop.f32.mrf.mxu0
      %v7992 = vadd.f32 %v6014, %v7991
      %v7993 = vpop.f32.mrf.mxu0
      %v7994 = vadd.f32 %v6014, %v7993
      %7995 = vmatmul.bf16.gmra.mxu0 %v5838
      %v7996 = vpop.f32.mrf.mxu0
      %v7997 = vadd.f32 %v6014, %v7996
      %v7998 = vpop.f32.mrf.mxu0
      %v7999 = vadd.f32 %v6014, %v7998
      %8000 = vmatmul.bf16.gmra.mxu0 %v5842
      %v8001 = vpop.f32.mrf.mxu0
      %v8002 = vadd.f32 %v6014, %v8001
      %v8003 = vpop.f32.mrf.mxu0
      %v8004 = vadd.f32 %v6014, %v8003
      %8005 = vmatmul.bf16.gmra.mxu0 %v5846
      %v8006 = vpop.f32.mrf.mxu0
      %v8007 = vadd.f32 %v6014, %v8006
      %v8008 = vpop.f32.mrf.mxu0
      %v8009 = vadd.f32 %v6014, %v8008
      %8010 = vmatmul.bf16.gmra.mxu0 %v5850
      %v8011 = vpop.f32.mrf.mxu0
      %v8012 = vadd.f32 %v6014, %v8011
      %v8013 = vpop.f32.mrf.mxu0
      %v8014 = vadd.f32 %v6014, %v8013
      %8015 = vmatmul.bf16.gmra.mxu0 %v5854
      %v8016 = vpop.f32.mrf.mxu0
      %v8017 = vadd.f32 %v6014, %v8016
      %v8018 = vpop.f32.mrf.mxu0
      %v8019 = vadd.f32 %v6014, %v8018
      %8020 = vmatmul.bf16.gmra.mxu0 %v5858
      %v8021 = vpop.f32.mrf.mxu0
      %v8022 = vadd.f32 %v6014, %v8021
      %v8023 = vpop.f32.mrf.mxu0
      %v8024 = vadd.f32 %v6014, %v8023
      %8025 = vmatmul.bf16.gmra.mxu0 %v5862
      %v8026 = vpop.f32.mrf.mxu0
      %v8027 = vadd.f32 %v6014, %v8026
      %v8028 = vpop.f32.mrf.mxu0
      %v8029 = vadd.f32 %v6014, %v8028
      %8030 = vmatmul.bf16.gmra.mxu0 %v5866
      %v8031 = vpop.f32.mrf.mxu0
      %v8032 = vadd.f32 %v6014, %v8031
      %v8033 = vpop.f32.mrf.mxu0
      %v8034 = vadd.f32 %v6014, %v8033
      %8035 = vmatmul.bf16.gmra.mxu0 %v5870
      %v8036 = vpop.f32.mrf.mxu0
      %v8037 = vadd.f32 %v6014, %v8036
      %v8038 = vpop.f32.mrf.mxu0
      %v8039 = vadd.f32 %v6014, %v8038
      %8040 = vmatmul.bf16.gmra.mxu0 %v5874
      %v8041 = vpop.f32.mrf.mxu0
      %v8042 = vadd.f32 %v6014, %v8041
      %v8043 = vpop.f32.mrf.mxu0
      %v8044 = vadd.f32 %v6014, %v8043
      %8045 = vmatmul.bf16.gmra.mxu0 %v5878
      %v8046 = vpop.f32.mrf.mxu0
      %v8047 = vadd.f32 %v6014, %v8046
      %v8048 = vpop.f32.mrf.mxu0
      %v8049 = vadd.f32 %v6014, %v8048
      %8050 = vdwg.mxu0
      %8051 = vmatpush.bf16.msra.mxu0 %v6385
      %8052 = vmatpush.bf16.msra.mxu0 %v6382
      %8053 = vmatpush.bf16.msra.mxu0 %v6379
      %8054 = vmatpush.bf16.msra.mxu0 %v6376
      %8055 = vmatpush.bf16.msra.mxu0 %v6373
      %8056 = vmatpush.bf16.msra.mxu0 %v6370
      %8057 = vmatpush.bf16.msra.mxu0 %v6367
      %8058 = vmatpush.bf16.msra.mxu0 %v6364
      %8059 = vmatmul.bf16.gmra.mxu0 %v5755
      %v8060 = vpop.f32.mrf.mxu0
      %v8061 = vadd.f32 %v7892, %v8060
      %v8062 = vpop.f32.mrf.mxu0
      %v8063 = vadd.f32 %v7894, %v8062
      %8064 = vmatmul.bf16.gmra.mxu0 %v5759
      %v8065 = vpop.f32.mrf.mxu0
      %v8066 = vadd.f32 %v7897, %v8065
      %v8067 = vpop.f32.mrf.mxu0
      %v8068 = vadd.f32 %v7899, %v8067
      %8069 = vmatmul.bf16.gmra.mxu0 %v5763
      %v8070 = vpop.f32.mrf.mxu0
      %v8071 = vadd.f32 %v7902, %v8070
      %v8072 = vpop.f32.mrf.mxu0
      %v8073 = vadd.f32 %v7904, %v8072
      %8074 = vmatmul.bf16.gmra.mxu0 %v5767
      %v8075 = vpop.f32.mrf.mxu0
      %v8076 = vadd.f32 %v7907, %v8075
      %v8077 = vpop.f32.mrf.mxu0
      %v8078 = vadd.f32 %v7909, %v8077
      %8079 = vmatmul.bf16.gmra.mxu0 %v5771
      %v8080 = vpop.f32.mrf.mxu0
      %v8081 = vadd.f32 %v7912, %v8080
      %v8082 = vpop.f32.mrf.mxu0
      %v8083 = vadd.f32 %v7914, %v8082
      %8084 = vmatmul.bf16.gmra.mxu0 %v5775
      %v8085 = vpop.f32.mrf.mxu0
      %v8086 = vadd.f32 %v7917, %v8085
      %v8087 = vpop.f32.mrf.mxu0
      %v8088 = vadd.f32 %v7919, %v8087
      %8089 = vmatmul.bf16.gmra.mxu0 %v5779
      %v8090 = vpop.f32.mrf.mxu0
      %v8091 = vadd.f32 %v7922, %v8090
      %v8092 = vpop.f32.mrf.mxu0
      %v8093 = vadd.f32 %v7924, %v8092
      %8094 = vmatmul.bf16.gmra.mxu0 %v5783
      %v8095 = vpop.f32.mrf.mxu0
      %v8096 = vadd.f32 %v7927, %v8095
      %v8097 = vpop.f32.mrf.mxu0
      %v8098 = vadd.f32 %v7929, %v8097
      %8099 = vmatmul.bf16.gmra.mxu0 %v5787
      %v8100 = vpop.f32.mrf.mxu0
      %v8101 = vadd.f32 %v7932, %v8100
      %v8102 = vpop.f32.mrf.mxu0
      %v8103 = vadd.f32 %v7934, %v8102
      %8104 = vmatmul.bf16.gmra.mxu0 %v5791
      %v8105 = vpop.f32.mrf.mxu0
      %v8106 = vadd.f32 %v7937, %v8105
      %v8107 = vpop.f32.mrf.mxu0
      %v8108 = vadd.f32 %v7939, %v8107
      %8109 = vmatmul.bf16.gmra.mxu0 %v5795
      %v8110 = vpop.f32.mrf.mxu0
      %v8111 = vadd.f32 %v7942, %v8110
      %v8112 = vpop.f32.mrf.mxu0
      %v8113 = vadd.f32 %v7944, %v8112
      %8114 = vmatmul.bf16.gmra.mxu0 %v5799
      %v8115 = vpop.f32.mrf.mxu0
      %v8116 = vadd.f32 %v7947, %v8115
      %v8117 = vpop.f32.mrf.mxu0
      %v8118 = vadd.f32 %v7949, %v8117
      %8119 = vmatmul.bf16.gmra.mxu0 %v5803
      %v8120 = vpop.f32.mrf.mxu0
      %v8121 = vadd.f32 %v7952, %v8120
      %v8122 = vpop.f32.mrf.mxu0
      %v8123 = vadd.f32 %v7954, %v8122
      %8124 = vmatmul.bf16.gmra.mxu0 %v5807
      %v8125 = vpop.f32.mrf.mxu0
      %v8126 = vadd.f32 %v7957, %v8125
      %v8127 = vpop.f32.mrf.mxu0
      %v8128 = vadd.f32 %v7959, %v8127
      %8129 = vmatmul.bf16.gmra.mxu0 %v5811
      %v8130 = vpop.f32.mrf.mxu0
      %v8131 = vadd.f32 %v7962, %v8130
      %v8132 = vpop.f32.mrf.mxu0
      %v8133 = vadd.f32 %v7964, %v8132
      %8134 = vmatmul.bf16.gmra.mxu0 %v5815
      %v8135 = vpop.f32.mrf.mxu0
      %v8136 = vadd.f32 %v7967, %v8135
      %v8137 = vpop.f32.mrf.mxu0
      %v8138 = vadd.f32 %v7969, %v8137
      %8139 = vmatmul.bf16.gmra.mxu0 %v5819
      %v8140 = vpop.f32.mrf.mxu0
      %v8141 = vadd.f32 %v7972, %v8140
      %v8142 = vpop.f32.mrf.mxu0
      %v8143 = vadd.f32 %v7974, %v8142
      %8144 = vmatmul.bf16.gmra.mxu0 %v5823
      %v8145 = vpop.f32.mrf.mxu0
      %v8146 = vadd.f32 %v7977, %v8145
      %v8147 = vpop.f32.mrf.mxu0
      %v8148 = vadd.f32 %v7979, %v8147
      %8149 = vmatmul.bf16.gmra.mxu0 %v5827
      %v8150 = vpop.f32.mrf.mxu0
      %v8151 = vadd.f32 %v7982, %v8150
      %v8152 = vpop.f32.mrf.mxu0
      %v8153 = vadd.f32 %v7984, %v8152
      %8154 = vmatmul.bf16.gmra.mxu0 %v5831
      %v8155 = vpop.f32.mrf.mxu0
      %v8156 = vadd.f32 %v7987, %v8155
      %v8157 = vpop.f32.mrf.mxu0
      %v8158 = vadd.f32 %v7989, %v8157
      %8159 = vmatmul.bf16.gmra.mxu0 %v5835
      %v8160 = vpop.f32.mrf.mxu0
      %v8161 = vadd.f32 %v7992, %v8160
      %v8162 = vpop.f32.mrf.mxu0
      %v8163 = vadd.f32 %v7994, %v8162
      %8164 = vmatmul.bf16.gmra.mxu0 %v5839
      %v8165 = vpop.f32.mrf.mxu0
      %v8166 = vadd.f32 %v7997, %v8165
      %v8167 = vpop.f32.mrf.mxu0
      %v8168 = vadd.f32 %v7999, %v8167
      %8169 = vmatmul.bf16.gmra.mxu0 %v5843
      %v8170 = vpop.f32.mrf.mxu0
      %v8171 = vadd.f32 %v8002, %v8170
      %v8172 = vpop.f32.mrf.mxu0
      %v8173 = vadd.f32 %v8004, %v8172
      %8174 = vmatmul.bf16.gmra.mxu0 %v5847
      %v8175 = vpop.f32.mrf.mxu0
      %v8176 = vadd.f32 %v8007, %v8175
      %v8177 = vpop.f32.mrf.mxu0
      %v8178 = vadd.f32 %v8009, %v8177
      %8179 = vmatmul.bf16.gmra.mxu0 %v5851
      %v8180 = vpop.f32.mrf.mxu0
      %v8181 = vadd.f32 %v8012, %v8180
      %v8182 = vpop.f32.mrf.mxu0
      %v8183 = vadd.f32 %v8014, %v8182
      %8184 = vmatmul.bf16.gmra.mxu0 %v5855
      %v8185 = vpop.f32.mrf.mxu0
      %v8186 = vadd.f32 %v8017, %v8185
      %v8187 = vpop.f32.mrf.mxu0
      %v8188 = vadd.f32 %v8019, %v8187
      %8189 = vmatmul.bf16.gmra.mxu0 %v5859
      %v8190 = vpop.f32.mrf.mxu0
      %v8191 = vadd.f32 %v8022, %v8190
      %v8192 = vpop.f32.mrf.mxu0
      %v8193 = vadd.f32 %v8024, %v8192
      %8194 = vmatmul.bf16.gmra.mxu0 %v5863
      %v8195 = vpop.f32.mrf.mxu0
      %v8196 = vadd.f32 %v8027, %v8195
      %v8197 = vpop.f32.mrf.mxu0
      %v8198 = vadd.f32 %v8029, %v8197
      %8199 = vmatmul.bf16.gmra.mxu0 %v5867
      %v8200 = vpop.f32.mrf.mxu0
      %v8201 = vadd.f32 %v8032, %v8200
      %v8202 = vpop.f32.mrf.mxu0
      %v8203 = vadd.f32 %v8034, %v8202
      %8204 = vmatmul.bf16.gmra.mxu0 %v5871
      %v8205 = vpop.f32.mrf.mxu0
      %v8206 = vadd.f32 %v8037, %v8205
      %v8207 = vpop.f32.mrf.mxu0
      %v8208 = vadd.f32 %v8039, %v8207
      %8209 = vmatmul.bf16.gmra.mxu0 %v5875
      %v8210 = vpop.f32.mrf.mxu0
      %v8211 = vadd.f32 %v8042, %v8210
      %v8212 = vpop.f32.mrf.mxu0
      %v8213 = vadd.f32 %v8044, %v8212
      %8214 = vmatmul.bf16.gmra.mxu0 %v5879
      %v8215 = vpop.f32.mrf.mxu0
      %v8216 = vadd.f32 %v8047, %v8215
      %v8217 = vpop.f32.mrf.mxu0
      %v8218 = vadd.f32 %v8049, %v8217
      %8219 = vdwg.mxu0
      %8220 = vmatpush.bf16.msra.mxu0 %v6409
      %8221 = vmatpush.bf16.msra.mxu0 %v6406
      %8222 = vmatpush.bf16.msra.mxu0 %v6403
      %8223 = vmatpush.bf16.msra.mxu0 %v6400
      %8224 = vmatpush.bf16.msra.mxu0 %v6397
      %8225 = vmatpush.bf16.msra.mxu0 %v6394
      %8226 = vmatpush.bf16.msra.mxu0 %v6391
      %8227 = vmatpush.bf16.msra.mxu0 %v6388
      %8228 = vmatmul.bf16.gmra.mxu0 %v5756
      %v8229 = vpop.f32.mrf.mxu0
      %v8230 = vadd.f32 %v8061, %v8229
      %v8231 = vpop.f32.mrf.mxu0
      %v8232 = vadd.f32 %v8063, %v8231
      %8233 = vmatmul.bf16.gmra.mxu0 %v5760
      %v8234 = vpop.f32.mrf.mxu0
      %v8235 = vadd.f32 %v8066, %v8234
      %v8236 = vpop.f32.mrf.mxu0
      %v8237 = vadd.f32 %v8068, %v8236
      %8238 = vmatmul.bf16.gmra.mxu0 %v5764
      %v8239 = vpop.f32.mrf.mxu0
      %v8240 = vadd.f32 %v8071, %v8239
      %v8241 = vpop.f32.mrf.mxu0
      %v8242 = vadd.f32 %v8073, %v8241
      %8243 = vmatmul.bf16.gmra.mxu0 %v5768
      %v8244 = vpop.f32.mrf.mxu0
      %v8245 = vadd.f32 %v8076, %v8244
      %v8246 = vpop.f32.mrf.mxu0
      %v8247 = vadd.f32 %v8078, %v8246
      %8248 = vmatmul.bf16.gmra.mxu0 %v5772
      %v8249 = vpop.f32.mrf.mxu0
      %v8250 = vadd.f32 %v8081, %v8249
      %v8251 = vpop.f32.mrf.mxu0
      %v8252 = vadd.f32 %v8083, %v8251
      %8253 = vmatmul.bf16.gmra.mxu0 %v5776
      %v8254 = vpop.f32.mrf.mxu0
      %v8255 = vadd.f32 %v8086, %v8254
      %v8256 = vpop.f32.mrf.mxu0
      %v8257 = vadd.f32 %v8088, %v8256
      %8258 = vmatmul.bf16.gmra.mxu0 %v5780
      %v8259 = vpop.f32.mrf.mxu0
      %v8260 = vadd.f32 %v8091, %v8259
      %v8261 = vpop.f32.mrf.mxu0
      %v8262 = vadd.f32 %v8093, %v8261
      %8263 = vmatmul.bf16.gmra.mxu0 %v5784
      %v8264 = vpop.f32.mrf.mxu0
      %v8265 = vadd.f32 %v8096, %v8264
      %v8266 = vpop.f32.mrf.mxu0
      %v8267 = vadd.f32 %v8098, %v8266
      %8268 = vmatmul.bf16.gmra.mxu0 %v5788
      %v8269 = vpop.f32.mrf.mxu0
      %v8270 = vadd.f32 %v8101, %v8269
      %v8271 = vpop.f32.mrf.mxu0
      %v8272 = vadd.f32 %v8103, %v8271
      %8273 = vmatmul.bf16.gmra.mxu0 %v5792
      %v8274 = vpop.f32.mrf.mxu0
      %v8275 = vadd.f32 %v8106, %v8274
      %v8276 = vpop.f32.mrf.mxu0
      %v8277 = vadd.f32 %v8108, %v8276
      %8278 = vmatmul.bf16.gmra.mxu0 %v5796
      %v8279 = vpop.f32.mrf.mxu0
      %v8280 = vadd.f32 %v8111, %v8279
      %v8281 = vpop.f32.mrf.mxu0
      %v8282 = vadd.f32 %v8113, %v8281
      %8283 = vmatmul.bf16.gmra.mxu0 %v5800
      %v8284 = vpop.f32.mrf.mxu0
      %v8285 = vadd.f32 %v8116, %v8284
      %v8286 = vpop.f32.mrf.mxu0
      %v8287 = vadd.f32 %v8118, %v8286
      %8288 = vmatmul.bf16.gmra.mxu0 %v5804
      %v8289 = vpop.f32.mrf.mxu0
      %v8290 = vadd.f32 %v8121, %v8289
      %v8291 = vpop.f32.mrf.mxu0
      %v8292 = vadd.f32 %v8123, %v8291
      %8293 = vmatmul.bf16.gmra.mxu0 %v5808
      %v8294 = vpop.f32.mrf.mxu0
      %v8295 = vadd.f32 %v8126, %v8294
      %v8296 = vpop.f32.mrf.mxu0
      %v8297 = vadd.f32 %v8128, %v8296
      %8298 = vmatmul.bf16.gmra.mxu0 %v5812
      %v8299 = vpop.f32.mrf.mxu0
      %v8300 = vadd.f32 %v8131, %v8299
      %v8301 = vpop.f32.mrf.mxu0
      %v8302 = vadd.f32 %v8133, %v8301
      %8303 = vmatmul.bf16.gmra.mxu0 %v5816
      %v8304 = vpop.f32.mrf.mxu0
      %v8305 = vadd.f32 %v8136, %v8304
      %v8306 = vpop.f32.mrf.mxu0
      %v8307 = vadd.f32 %v8138, %v8306
      %8308 = vmatmul.bf16.gmra.mxu0 %v5820
      %v8309 = vpop.f32.mrf.mxu0
      %v8310 = vadd.f32 %v8141, %v8309
      %v8311 = vpop.f32.mrf.mxu0
      %v8312 = vadd.f32 %v8143, %v8311
      %8313 = vmatmul.bf16.gmra.mxu0 %v5824
      %v8314 = vpop.f32.mrf.mxu0
      %v8315 = vadd.f32 %v8146, %v8314
      %v8316 = vpop.f32.mrf.mxu0
      %v8317 = vadd.f32 %v8148, %v8316
      %8318 = vmatmul.bf16.gmra.mxu0 %v5828
      %v8319 = vpop.f32.mrf.mxu0
      %v8320 = vadd.f32 %v8151, %v8319
      %v8321 = vpop.f32.mrf.mxu0
      %v8322 = vadd.f32 %v8153, %v8321
      %8323 = vmatmul.bf16.gmra.mxu0 %v5832
      %v8324 = vpop.f32.mrf.mxu0
      %v8325 = vadd.f32 %v8156, %v8324
      %v8326 = vpop.f32.mrf.mxu0
      %v8327 = vadd.f32 %v8158, %v8326
      %8328 = vmatmul.bf16.gmra.mxu0 %v5836
      %v8329 = vpop.f32.mrf.mxu0
      %v8330 = vadd.f32 %v8161, %v8329
      %v8331 = vpop.f32.mrf.mxu0
      %v8332 = vadd.f32 %v8163, %v8331
      %8333 = vmatmul.bf16.gmra.mxu0 %v5840
      %v8334 = vpop.f32.mrf.mxu0
      %v8335 = vadd.f32 %v8166, %v8334
      %v8336 = vpop.f32.mrf.mxu0
      %v8337 = vadd.f32 %v8168, %v8336
      %8338 = vmatmul.bf16.gmra.mxu0 %v5844
      %v8339 = vpop.f32.mrf.mxu0
      %v8340 = vadd.f32 %v8171, %v8339
      %v8341 = vpop.f32.mrf.mxu0
      %v8342 = vadd.f32 %v8173, %v8341
      %8343 = vmatmul.bf16.gmra.mxu0 %v5848
      %v8344 = vpop.f32.mrf.mxu0
      %v8345 = vadd.f32 %v8176, %v8344
      %v8346 = vpop.f32.mrf.mxu0
      %v8347 = vadd.f32 %v8178, %v8346
      %8348 = vmatmul.bf16.gmra.mxu0 %v5852
      %v8349 = vpop.f32.mrf.mxu0
      %v8350 = vadd.f32 %v8181, %v8349
      %v8351 = vpop.f32.mrf.mxu0
      %v8352 = vadd.f32 %v8183, %v8351
      %8353 = vmatmul.bf16.gmra.mxu0 %v5856
      %v8354 = vpop.f32.mrf.mxu0
      %v8355 = vadd.f32 %v8186, %v8354
      %v8356 = vpop.f32.mrf.mxu0
      %v8357 = vadd.f32 %v8188, %v8356
      %8358 = vmatmul.bf16.gmra.mxu0 %v5860
      %v8359 = vpop.f32.mrf.mxu0
      %v8360 = vadd.f32 %v8191, %v8359
      %v8361 = vpop.f32.mrf.mxu0
      %v8362 = vadd.f32 %v8193, %v8361
      %8363 = vmatmul.bf16.gmra.mxu0 %v5864
      %v8364 = vpop.f32.mrf.mxu0
      %v8365 = vadd.f32 %v8196, %v8364
      %v8366 = vpop.f32.mrf.mxu0
      %v8367 = vadd.f32 %v8198, %v8366
      %8368 = vmatmul.bf16.gmra.mxu0 %v5868
      %v8369 = vpop.f32.mrf.mxu0
      %v8370 = vadd.f32 %v8201, %v8369
      %v8371 = vpop.f32.mrf.mxu0
      %v8372 = vadd.f32 %v8203, %v8371
      %8373 = vmatmul.bf16.gmra.mxu0 %v5872
      %v8374 = vpop.f32.mrf.mxu0
      %v8375 = vadd.f32 %v8206, %v8374
      %v8376 = vpop.f32.mrf.mxu0
      %v8377 = vadd.f32 %v8208, %v8376
      %8378 = vmatmul.bf16.gmra.mxu0 %v5876
      %v8379 = vpop.f32.mrf.mxu0
      %v8380 = vadd.f32 %v8211, %v8379
      %v8381 = vpop.f32.mrf.mxu0
      %v8382 = vadd.f32 %v8213, %v8381
      %8383 = vmatmul.bf16.gmra.mxu0 %v5880
      %v8384 = vpop.f32.mrf.mxu0
      %v8385 = vadd.f32 %v8216, %v8384
      %v8386 = vpop.f32.mrf.mxu0
      %v8387 = vadd.f32 %v8218, %v8386
      %8388 = vdwg.mxu0
      %8389 = vmatpush.bf16.msra.mxu0 %v6433
      %8390 = vmatpush.bf16.msra.mxu0 %v6430
      %8391 = vmatpush.bf16.msra.mxu0 %v6427
      %8392 = vmatpush.bf16.msra.mxu0 %v6424
      %8393 = vmatpush.bf16.msra.mxu0 %v6421
      %8394 = vmatpush.bf16.msra.mxu0 %v6418
      %8395 = vmatpush.bf16.msra.mxu0 %v6415
      %8396 = vmatpush.bf16.msra.mxu0 %v6412
      %8397 = vmatmul.bf16.gmra.mxu0 %v5757
      %v8398 = vpop.f32.mrf.mxu0
      %v8399 = vadd.f32 %v8230, %v8398
      %v8400 = vpop.f32.mrf.mxu0
      %v8401 = vadd.f32 %v8232, %v8400
      %8402 = vmatmul.bf16.gmra.mxu0 %v5761
      %v8403 = vpop.f32.mrf.mxu0
      %v8404 = vadd.f32 %v8235, %v8403
      %v8405 = vpop.f32.mrf.mxu0
      %v8406 = vadd.f32 %v8237, %v8405
      %8407 = vmatmul.bf16.gmra.mxu0 %v5765
      %v8408 = vpop.f32.mrf.mxu0
      %v8409 = vadd.f32 %v8240, %v8408
      %v8410 = vpop.f32.mrf.mxu0
      %v8411 = vadd.f32 %v8242, %v8410
      %8412 = vmatmul.bf16.gmra.mxu0 %v5769
      %v8413 = vpop.f32.mrf.mxu0
      %v8414 = vadd.f32 %v8245, %v8413
      %v8415 = vpop.f32.mrf.mxu0
      %v8416 = vadd.f32 %v8247, %v8415
      %8417 = vmatmul.bf16.gmra.mxu0 %v5773
      %v8418 = vpop.f32.mrf.mxu0
      %v8419 = vadd.f32 %v8250, %v8418
      %v8420 = vpop.f32.mrf.mxu0
      %v8421 = vadd.f32 %v8252, %v8420
      %8422 = vmatmul.bf16.gmra.mxu0 %v5777
      %v8423 = vpop.f32.mrf.mxu0
      %v8424 = vadd.f32 %v8255, %v8423
      %v8425 = vpop.f32.mrf.mxu0
      %v8426 = vadd.f32 %v8257, %v8425
      %8427 = vmatmul.bf16.gmra.mxu0 %v5781
      %v8428 = vpop.f32.mrf.mxu0
      %v8429 = vadd.f32 %v8260, %v8428
      %v8430 = vpop.f32.mrf.mxu0
      %v8431 = vadd.f32 %v8262, %v8430
      %8432 = vmatmul.bf16.gmra.mxu0 %v5785
      %v8433 = vpop.f32.mrf.mxu0
      %v8434 = vadd.f32 %v8265, %v8433
      %v8435 = vpop.f32.mrf.mxu0
      %v8436 = vadd.f32 %v8267, %v8435
      %8437 = vmatmul.bf16.gmra.mxu0 %v5789
      %v8438 = vpop.f32.mrf.mxu0
      %v8439 = vadd.f32 %v8270, %v8438
      %v8440 = vpop.f32.mrf.mxu0
      %v8441 = vadd.f32 %v8272, %v8440
      %8442 = vmatmul.bf16.gmra.mxu0 %v5793
      %v8443 = vpop.f32.mrf.mxu0
      %v8444 = vadd.f32 %v8275, %v8443
      %v8445 = vpop.f32.mrf.mxu0
      %v8446 = vadd.f32 %v8277, %v8445
      %8447 = vmatmul.bf16.gmra.mxu0 %v5797
      %v8448 = vpop.f32.mrf.mxu0
      %v8449 = vadd.f32 %v8280, %v8448
      %v8450 = vpop.f32.mrf.mxu0
      %v8451 = vadd.f32 %v8282, %v8450
      %8452 = vmatmul.bf16.gmra.mxu0 %v5801
      %v8453 = vpop.f32.mrf.mxu0
      %v8454 = vadd.f32 %v8285, %v8453
      %v8455 = vpop.f32.mrf.mxu0
      %v8456 = vadd.f32 %v8287, %v8455
      %8457 = vmatmul.bf16.gmra.mxu0 %v5805
      %v8458 = vpop.f32.mrf.mxu0
      %v8459 = vadd.f32 %v8290, %v8458
      %v8460 = vpop.f32.mrf.mxu0
      %v8461 = vadd.f32 %v8292, %v8460
      %8462 = vmatmul.bf16.gmra.mxu0 %v5809
      %v8463 = vpop.f32.mrf.mxu0
      %v8464 = vadd.f32 %v8295, %v8463
      %v8465 = vpop.f32.mrf.mxu0
      %v8466 = vadd.f32 %v8297, %v8465
      %8467 = vmatmul.bf16.gmra.mxu0 %v5813
      %v8468 = vpop.f32.mrf.mxu0
      %v8469 = vadd.f32 %v8300, %v8468
      %v8470 = vpop.f32.mrf.mxu0
      %v8471 = vadd.f32 %v8302, %v8470
      %8472 = vmatmul.bf16.gmra.mxu0 %v5817
      %v8473 = vpop.f32.mrf.mxu0
      %v8474 = vadd.f32 %v8305, %v8473
      %v8475 = vpop.f32.mrf.mxu0
      %v8476 = vadd.f32 %v8307, %v8475
      %8477 = vmatmul.bf16.gmra.mxu0 %v5821
      %v8478 = vpop.f32.mrf.mxu0
      %v8479 = vadd.f32 %v8310, %v8478
      %v8480 = vpop.f32.mrf.mxu0
      %v8481 = vadd.f32 %v8312, %v8480
      %8482 = vmatmul.bf16.gmra.mxu0 %v5825
      %v8483 = vpop.f32.mrf.mxu0
      %v8484 = vadd.f32 %v8315, %v8483
      %v8485 = vpop.f32.mrf.mxu0
      %v8486 = vadd.f32 %v8317, %v8485
      %8487 = vmatmul.bf16.gmra.mxu0 %v5829
      %v8488 = vpop.f32.mrf.mxu0
      %v8489 = vadd.f32 %v8320, %v8488
      %v8490 = vpop.f32.mrf.mxu0
      %v8491 = vadd.f32 %v8322, %v8490
      %8492 = vmatmul.bf16.gmra.mxu0 %v5833
      %v8493 = vpop.f32.mrf.mxu0
      %v8494 = vadd.f32 %v8325, %v8493
      %v8495 = vpop.f32.mrf.mxu0
      %v8496 = vadd.f32 %v8327, %v8495
      %8497 = vmatmul.bf16.gmra.mxu0 %v5837
      %v8498 = vpop.f32.mrf.mxu0
      %v8499 = vadd.f32 %v8330, %v8498
      %v8500 = vpop.f32.mrf.mxu0
      %v8501 = vadd.f32 %v8332, %v8500
      %8502 = vmatmul.bf16.gmra.mxu0 %v5841
      %v8503 = vpop.f32.mrf.mxu0
      %v8504 = vadd.f32 %v8335, %v8503
      %v8505 = vpop.f32.mrf.mxu0
      %v8506 = vadd.f32 %v8337, %v8505
      %8507 = vmatmul.bf16.gmra.mxu0 %v5845
      %v8508 = vpop.f32.mrf.mxu0
      %v8509 = vadd.f32 %v8340, %v8508
      %v8510 = vpop.f32.mrf.mxu0
      %v8511 = vadd.f32 %v8342, %v8510
      %8512 = vmatmul.bf16.gmra.mxu0 %v5849
      %v8513 = vpop.f32.mrf.mxu0
      %v8514 = vadd.f32 %v8345, %v8513
      %v8515 = vpop.f32.mrf.mxu0
      %v8516 = vadd.f32 %v8347, %v8515
      %8517 = vmatmul.bf16.gmra.mxu0 %v5853
      %v8518 = vpop.f32.mrf.mxu0
      %v8519 = vadd.f32 %v8350, %v8518
      %v8520 = vpop.f32.mrf.mxu0
      %v8521 = vadd.f32 %v8352, %v8520
      %8522 = vmatmul.bf16.gmra.mxu0 %v5857
      %v8523 = vpop.f32.mrf.mxu0
      %v8524 = vadd.f32 %v8355, %v8523
      %v8525 = vpop.f32.mrf.mxu0
      %v8526 = vadd.f32 %v8357, %v8525
      %8527 = vmatmul.bf16.gmra.mxu0 %v5861
      %v8528 = vpop.f32.mrf.mxu0
      %v8529 = vadd.f32 %v8360, %v8528
      %v8530 = vpop.f32.mrf.mxu0
      %v8531 = vadd.f32 %v8362, %v8530
      %8532 = vmatmul.bf16.gmra.mxu0 %v5865
      %v8533 = vpop.f32.mrf.mxu0
      %v8534 = vadd.f32 %v8365, %v8533
      %v8535 = vpop.f32.mrf.mxu0
      %v8536 = vadd.f32 %v8367, %v8535
      %8537 = vmatmul.bf16.gmra.mxu0 %v5869
      %v8538 = vpop.f32.mrf.mxu0
      %v8539 = vadd.f32 %v8370, %v8538
      %v8540 = vpop.f32.mrf.mxu0
      %v8541 = vadd.f32 %v8372, %v8540
      %8542 = vmatmul.bf16.gmra.mxu0 %v5873
      %v8543 = vpop.f32.mrf.mxu0
      %v8544 = vadd.f32 %v8375, %v8543
      %v8545 = vpop.f32.mrf.mxu0
      %v8546 = vadd.f32 %v8377, %v8545
      %8547 = vmatmul.bf16.gmra.mxu0 %v5877
      %v8548 = vpop.f32.mrf.mxu0
      %v8549 = vadd.f32 %v8380, %v8548
      %v8550 = vpop.f32.mrf.mxu0
      %v8551 = vadd.f32 %v8382, %v8550
      %8552 = vmatmul.bf16.gmra.mxu0 %v5881
      %v8553 = vpop.f32.mrf.mxu0
      %v8554 = vadd.f32 %v8385, %v8553
      %v8555 = vpop.f32.mrf.mxu0
      %v8556 = vadd.f32 %v8387, %v8555
      %8557 = vdwg.mxu0
      %v8558 = vmax.f32 %v7047, 0.0
      %v8559 = vmax.f32 %v7723, 0.0
      %v8560 = vmax.f32 %v8399, 0.0
      %v8561 = vmax.f32 %v7049, 0.0
      %v8562 = vmax.f32 %v7725, 0.0
      %v8563 = vmax.f32 %v8401, 0.0
      %v8564 = vmax.f32 %v7052, 0.0
      %v8565 = vmax.f32 %v7728, 0.0
      %v8566 = vmax.f32 %v8404, 0.0
      %v8567 = vmax.f32 %v7054, 0.0
      %v8568 = vmax.f32 %v7730, 0.0
      %v8569 = vmax.f32 %v8406, 0.0
      %v8570 = vmax.f32 %v7057, 0.0
      %v8571 = vmax.f32 %v7733, 0.0
      %v8572 = vmax.f32 %v8409, 0.0
      %v8573 = vmax.f32 %v7059, 0.0
      %v8574 = vmax.f32 %v7735, 0.0
      %v8575 = vmax.f32 %v8411, 0.0
      %v8576 = vmax.f32 %v7062, 0.0
      %v8577 = vmax.f32 %v7738, 0.0
      %v8578 = vmax.f32 %v8414, 0.0
      %v8579 = vmax.f32 %v7064, 0.0
      %v8580 = vmax.f32 %v7740, 0.0
      %v8581 = vmax.f32 %v8416, 0.0
      %v8582 = vmax.f32 %v7067, 0.0
      %v8583 = vmax.f32 %v7743, 0.0
      %v8584 = vmax.f32 %v8419, 0.0
      %v8585 = vmax.f32 %v7069, 0.0
      %v8586 = vmax.f32 %v7745, 0.0
      %v8587 = vmax.f32 %v8421, 0.0
      %v8588 = vmax.f32 %v7072, 0.0
      %v8589 = vmax.f32 %v7748, 0.0
      %v8590 = vmax.f32 %v8424, 0.0
      %v8591 = vmax.f32 %v7074, 0.0
      %v8592 = vmax.f32 %v7750, 0.0
      %v8593 = vmax.f32 %v8426, 0.0
      %v8594 = vmax.f32 %v7077, 0.0
      %v8595 = vmax.f32 %v7753, 0.0
      %v8596 = vmax.f32 %v8429, 0.0
      %v8597 = vmax.f32 %v7079, 0.0
      %v8598 = vmax.f32 %v7755, 0.0
      %v8599 = vmax.f32 %v8431, 0.0
      %v8600 = vmax.f32 %v7082, 0.0
      %v8601 = vmax.f32 %v7758, 0.0
      %v8602 = vmax.f32 %v8434, 0.0
      %v8603 = vmax.f32 %v7084, 0.0
      %v8604 = vmax.f32 %v7760, 0.0
      %v8605 = vmax.f32 %v8436, 0.0
      %v8606 = vmax.f32 %v7087, 0.0
      %v8607 = vmax.f32 %v7763, 0.0
      %v8608 = vmax.f32 %v8439, 0.0
      %v8609 = vmax.f32 %v7089, 0.0
      %v8610 = vmax.f32 %v7765, 0.0
      %v8611 = vmax.f32 %v8441, 0.0
      %v8612 = vmax.f32 %v7092, 0.0
      %v8613 = vmax.f32 %v7768, 0.0
      %v8614 = vmax.f32 %v8444, 0.0
      %v8615 = vmax.f32 %v7094, 0.0
      %v8616 = vmax.f32 %v7770, 0.0
      %v8617 = vmax.f32 %v8446, 0.0
      %v8618 = vmax.f32 %v7097, 0.0
      %v8619 = vmax.f32 %v7773, 0.0
      %v8620 = vmax.f32 %v8449, 0.0
      %v8621 = vmax.f32 %v7099, 0.0
      %v8622 = vmax.f32 %v7775, 0.0
      %v8623 = vmax.f32 %v8451, 0.0
      %v8624 = vmax.f32 %v7102, 0.0
      %v8625 = vmax.f32 %v7778, 0.0
      %v8626 = vmax.f32 %v8454, 0.0
      %v8627 = vmax.f32 %v7104, 0.0
      %v8628 = vmax.f32 %v7780, 0.0
      %v8629 = vmax.f32 %v8456, 0.0
      %v8630 = vmax.f32 %v7107, 0.0
      %v8631 = vmax.f32 %v7783, 0.0
      %v8632 = vmax.f32 %v8459, 0.0
      %v8633 = vmax.f32 %v7109, 0.0
      %v8634 = vmax.f32 %v7785, 0.0
      %v8635 = vmax.f32 %v8461, 0.0
      %v8636 = vmax.f32 %v7112, 0.0
      %v8637 = vmax.f32 %v7788, 0.0
      %v8638 = vmax.f32 %v8464, 0.0
      %v8639 = vmax.f32 %v7114, 0.0
      %v8640 = vmax.f32 %v7790, 0.0
      %v8641 = vmax.f32 %v8466, 0.0
      %v8642 = vmax.f32 %v7117, 0.0
      %v8643 = vmax.f32 %v7793, 0.0
      %v8644 = vmax.f32 %v8469, 0.0
      %v8645 = vmax.f32 %v7119, 0.0
      %v8646 = vmax.f32 %v7795, 0.0
      %v8647 = vmax.f32 %v8471, 0.0
      %v8648 = vmax.f32 %v7122, 0.0
      %v8649 = vmax.f32 %v7798, 0.0
      %v8650 = vmax.f32 %v8474, 0.0
      %v8651 = vmax.f32 %v7124, 0.0
      %v8652 = vmax.f32 %v7800, 0.0
      %v8653 = vmax.f32 %v8476, 0.0
      %v8654 = vmax.f32 %v7127, 0.0
      %v8655 = vmax.f32 %v7803, 0.0
      %v8656 = vmax.f32 %v8479, 0.0
      %v8657 = vmax.f32 %v7129, 0.0
      %v8658 = vmax.f32 %v7805, 0.0
      %v8659 = vmax.f32 %v8481, 0.0
      %v8660 = vmax.f32 %v7132, 0.0
      %v8661 = vmax.f32 %v7808, 0.0
      %v8662 = vmax.f32 %v8484, 0.0
      %v8663 = vmax.f32 %v7134, 0.0
      %v8664 = vmax.f32 %v7810, 0.0
      %v8665 = vmax.f32 %v8486, 0.0
      %v8666 = vmax.f32 %v7137, 0.0
      %v8667 = vmax.f32 %v7813, 0.0
      %v8668 = vmax.f32 %v8489, 0.0
      %v8669 = vmax.f32 %v7139, 0.0
      %v8670 = vmax.f32 %v7815, 0.0
      %v8671 = vmax.f32 %v8491, 0.0
      %v8672 = vmax.f32 %v7142, 0.0
      %v8673 = vmax.f32 %v7818, 0.0
      %v8674 = vmax.f32 %v8494, 0.0
      %v8675 = vmax.f32 %v7144, 0.0
      %v8676 = vmax.f32 %v7820, 0.0
      %v8677 = vmax.f32 %v8496, 0.0
      %v8678 = vmax.f32 %v7147, 0.0
      %v8679 = vmax.f32 %v7823, 0.0
      %v8680 = vmax.f32 %v8499, 0.0
      %v8681 = vmax.f32 %v7149, 0.0
      %v8682 = vmax.f32 %v7825, 0.0
      %v8683 = vmax.f32 %v8501, 0.0
      %v8684 = vmax.f32 %v7152, 0.0
      %v8685 = vmax.f32 %v7828, 0.0
      %v8686 = vmax.f32 %v8504, 0.0
      %v8687 = vmax.f32 %v7154, 0.0
      %v8688 = vmax.f32 %v7830, 0.0
      %v8689 = vmax.f32 %v8506, 0.0
      %v8690 = vmax.f32 %v7157, 0.0
      %v8691 = vmax.f32 %v7833, 0.0
      %v8692 = vmax.f32 %v8509, 0.0
      %v8693 = vmax.f32 %v7159, 0.0
      %v8694 = vmax.f32 %v7835, 0.0
      %v8695 = vmax.f32 %v8511, 0.0
      %v8696 = vmax.f32 %v7162, 0.0
      %v8697 = vmax.f32 %v7838, 0.0
      %v8698 = vmax.f32 %v8514, 0.0
      %v8699 = vmax.f32 %v7164, 0.0
      %v8700 = vmax.f32 %v7840, 0.0
      %v8701 = vmax.f32 %v8516, 0.0
      %v8702 = vmax.f32 %v7167, 0.0
      %v8703 = vmax.f32 %v7843, 0.0
      %v8704 = vmax.f32 %v8519, 0.0
      %v8705 = vmax.f32 %v7169, 0.0
      %v8706 = vmax.f32 %v7845, 0.0
      %v8707 = vmax.f32 %v8521, 0.0
      %v8708 = vmax.f32 %v7172, 0.0
      %v8709 = vmax.f32 %v7848, 0.0
      %v8710 = vmax.f32 %v8524, 0.0
      %v8711 = vmax.f32 %v7174, 0.0
      %v8712 = vmax.f32 %v7850, 0.0
      %v8713 = vmax.f32 %v8526, 0.0
      %v8714 = vmax.f32 %v7177, 0.0
      %v8715 = vmax.f32 %v7853, 0.0
      %v8716 = vmax.f32 %v8529, 0.0
      %v8717 = vmax.f32 %v7179, 0.0
      %v8718 = vmax.f32 %v7855, 0.0
      %v8719 = vmax.f32 %v8531, 0.0
      %v8720 = vmax.f32 %v7182, 0.0
      %v8721 = vmax.f32 %v7858, 0.0
      %v8722 = vmax.f32 %v8534, 0.0
      %v8723 = vmax.f32 %v7184, 0.0
      %v8724 = vmax.f32 %v7860, 0.0
      %v8725 = vmax.f32 %v8536, 0.0
      %v8726 = vmax.f32 %v7187, 0.0
      %v8727 = vmax.f32 %v7863, 0.0
      %v8728 = vmax.f32 %v8539, 0.0
      %v8729 = vmax.f32 %v7189, 0.0
      %v8730 = vmax.f32 %v7865, 0.0
      %v8731 = vmax.f32 %v8541, 0.0
      %v8732 = vmax.f32 %v7192, 0.0
      %v8733 = vmax.f32 %v7868, 0.0
      %v8734 = vmax.f32 %v8544, 0.0
      %v8735 = vmax.f32 %v7194, 0.0
      %v8736 = vmax.f32 %v7870, 0.0
      %v8737 = vmax.f32 %v8546, 0.0
      %v8738 = vmax.f32 %v7197, 0.0
      %v8739 = vmax.f32 %v7873, 0.0
      %v8740 = vmax.f32 %v8549, 0.0
      %v8741 = vmax.f32 %v7199, 0.0
      %v8742 = vmax.f32 %v7875, 0.0
      %v8743 = vmax.f32 %v8551, 0.0
      %v8744 = vmax.f32 %v7202, 0.0
      %v8745 = vmax.f32 %v7878, 0.0
      %v8746 = vmax.f32 %v8554, 0.0
      %v8747 = vmax.f32 %v7204, 0.0
      %v8748 = vmax.f32 %v7880, 0.0
      %v8749 = vmax.f32 %v8556, 0.0
      %v8750 = vpack.c.bf16 %v8561, %v8558
      %v8751 = vpack.c.bf16 %v8562, %v8559
      %v8752 = vpack.c.bf16 %v8563, %v8560
      %v8753 = vpack.c.bf16 %v8567, %v8564
      %v8754 = vpack.c.bf16 %v8568, %v8565
      %v8755 = vpack.c.bf16 %v8569, %v8566
      %v8756 = vpack.c.bf16 %v8573, %v8570
      %v8757 = vpack.c.bf16 %v8574, %v8571
      %v8758 = vpack.c.bf16 %v8575, %v8572
      %v8759 = vpack.c.bf16 %v8579, %v8576
      %v8760 = vpack.c.bf16 %v8580, %v8577
      %v8761 = vpack.c.bf16 %v8581, %v8578
      %v8762 = vpack.c.bf16 %v8585, %v8582
      %v8763 = vpack.c.bf16 %v8586, %v8583
      %v8764 = vpack.c.bf16 %v8587, %v8584
      %v8765 = vpack.c.bf16 %v8591, %v8588
      %v8766 = vpack.c.bf16 %v8592, %v8589
      %v8767 = vpack.c.bf16 %v8593, %v8590
      %v8768 = vpack.c.bf16 %v8597, %v8594
      %v8769 = vpack.c.bf16 %v8598, %v8595
      %v8770 = vpack.c.bf16 %v8599, %v8596
      %v8771 = vpack.c.bf16 %v8603, %v8600
      %v8772 = vpack.c.bf16 %v8604, %v8601
      %v8773 = vpack.c.bf16 %v8605, %v8602
      %v8774 = vpack.c.bf16 %v8609, %v8606
      %v8775 = vpack.c.bf16 %v8610, %v8607
      %v8776 = vpack.c.bf16 %v8611, %v8608
      %v8777 = vpack.c.bf16 %v8615, %v8612
      %v8778 = vpack.c.bf16 %v8616, %v8613
      %v8779 = vpack.c.bf16 %v8617, %v8614
      %v8780 = vpack.c.bf16 %v8621, %v8618
      %v8781 = vpack.c.bf16 %v8622, %v8619
      %v8782 = vpack.c.bf16 %v8623, %v8620
      %v8783 = vpack.c.bf16 %v8627, %v8624
      %v8784 = vpack.c.bf16 %v8628, %v8625
      %v8785 = vpack.c.bf16 %v8629, %v8626
      %v8786 = vpack.c.bf16 %v8633, %v8630
      %v8787 = vpack.c.bf16 %v8634, %v8631
      %v8788 = vpack.c.bf16 %v8635, %v8632
      %v8789 = vpack.c.bf16 %v8639, %v8636
      %v8790 = vpack.c.bf16 %v8640, %v8637
      %v8791 = vpack.c.bf16 %v8641, %v8638
      %v8792 = vpack.c.bf16 %v8645, %v8642
      %v8793 = vpack.c.bf16 %v8646, %v8643
      %v8794 = vpack.c.bf16 %v8647, %v8644
      %v8795 = vpack.c.bf16 %v8651, %v8648
      %v8796 = vpack.c.bf16 %v8652, %v8649
      %v8797 = vpack.c.bf16 %v8653, %v8650
      %v8798 = vpack.c.bf16 %v8657, %v8654
      %v8799 = vpack.c.bf16 %v8658, %v8655
      %v8800 = vpack.c.bf16 %v8659, %v8656
      %v8801 = vpack.c.bf16 %v8663, %v8660
      %v8802 = vpack.c.bf16 %v8664, %v8661
      %v8803 = vpack.c.bf16 %v8665, %v8662
      %v8804 = vpack.c.bf16 %v8669, %v8666
      %v8805 = vpack.c.bf16 %v8670, %v8667
      %v8806 = vpack.c.bf16 %v8671, %v8668
      %v8807 = vpack.c.bf16 %v8675, %v8672
      %v8808 = vpack.c.bf16 %v8676, %v8673
      %v8809 = vpack.c.bf16 %v8677, %v8674
      %v8810 = vpack.c.bf16 %v8681, %v8678
      %v8811 = vpack.c.bf16 %v8682, %v8679
      %v8812 = vpack.c.bf16 %v8683, %v8680
      %v8813 = vpack.c.bf16 %v8687, %v8684
      %v8814 = vpack.c.bf16 %v8688, %v8685
      %v8815 = vpack.c.bf16 %v8689, %v8686
      %v8816 = vpack.c.bf16 %v8693, %v8690
      %v8817 = vpack.c.bf16 %v8694, %v8691
      %v8818 = vpack.c.bf16 %v8695, %v8692
      %v8819 = vpack.c.bf16 %v8699, %v8696
      %v8820 = vpack.c.bf16 %v8700, %v8697
      %v8821 = vpack.c.bf16 %v8701, %v8698
      %v8822 = vpack.c.bf16 %v8705, %v8702
      %v8823 = vpack.c.bf16 %v8706, %v8703
      %v8824 = vpack.c.bf16 %v8707, %v8704
      %v8825 = vpack.c.bf16 %v8711, %v8708
      %v8826 = vpack.c.bf16 %v8712, %v8709
      %v8827 = vpack.c.bf16 %v8713, %v8710
      %v8828 = vpack.c.bf16 %v8717, %v8714
      %v8829 = vpack.c.bf16 %v8718, %v8715
      %v8830 = vpack.c.bf16 %v8719, %v8716
      %v8831 = vpack.c.bf16 %v8723, %v8720
      %v8832 = vpack.c.bf16 %v8724, %v8721
      %v8833 = vpack.c.bf16 %v8725, %v8722
      %v8834 = vpack.c.bf16 %v8729, %v8726
      %v8835 = vpack.c.bf16 %v8730, %v8727
      %v8836 = vpack.c.bf16 %v8731, %v8728
      %v8837 = vpack.c.bf16 %v8735, %v8732
      %v8838 = vpack.c.bf16 %v8736, %v8733
      %v8839 = vpack.c.bf16 %v8737, %v8734
      %v8840 = vpack.c.bf16 %v8741, %v8738
      %v8841 = vpack.c.bf16 %v8742, %v8739
      %v8842 = vpack.c.bf16 %v8743, %v8740
      %v8843 = vpack.c.bf16 %v8747, %v8744
      %v8844 = vpack.c.bf16 %v8748, %v8745
      %v8845 = vpack.c.bf16 %v8749, %v8746
      %v8846 = vld [vmem:[%s7] sm:$0xff]
      %v8847 = vld [vmem:[%s7 + $0x8] sm:$0xff]
      %v8848 = vld [vmem:[%s7 + $0x10] sm:$0xff]
      %v8849 = vld [vmem:[%s7 + $0x18] sm:$0xff]
      %v8850 = vld [vmem:[%s7 + $0x20] sm:$0xff]
      %v8851 = vld [vmem:[%s7 + $0x28] sm:$0xff]
      %v8852 = vld [vmem:[%s7 + $0x30] sm:$0xff]
      %v8853 = vld [vmem:[%s7 + $0x38] sm:$0xff]
      %v8854 = vld [vmem:[%s7 + $0x40] sm:$0xff]
      %v8855 = vld [vmem:[%s7 + $0x48] sm:$0xff]
      %v8856 = vld [vmem:[%s7 + $0x50] sm:$0xff]
      %v8857 = vld [vmem:[%s7 + $0x58] sm:$0xff]
      %v8858 = vld [vmem:[%s7 + $0x60] sm:$0xff]
      %v8859 = vld [vmem:[%s7 + $0x68] sm:$0xff]
      %v8860 = vld [vmem:[%s7 + $0x70] sm:$0xff]
      %v8861 = vld [vmem:[%s7 + $0x78] sm:$0xff]
      %v8862 = vld [vmem:[%s7 + $0x80] sm:$0xff]
      %v8863 = vld [vmem:[%s7 + $0x88] sm:$0xff]
      %v8864 = vld [vmem:[%s7 + $0x90] sm:$0xff]
      %v8865 = vld [vmem:[%s7 + $0x98] sm:$0xff]
      %v8866 = vld [vmem:[%s7 + $0xa0] sm:$0xff]
      %v8867 = vld [vmem:[%s7 + $0xa8] sm:$0xff]
      %v8868 = vld [vmem:[%s7 + $0xb0] sm:$0xff]
      %v8869 = vld [vmem:[%s7 + $0xb8] sm:$0xff]
      %v8870 = vld [vmem:[%s7 + $0xc0] sm:$0xff]
      %v8871 = vld [vmem:[%s7 + $0xc8] sm:$0xff]
      %v8872 = vld [vmem:[%s7 + $0xd0] sm:$0xff]
      %v8873 = vld [vmem:[%s7 + $0xd8] sm:$0xff]
      %v8874 = vld [vmem:[%s7 + $0xe0] sm:$0xff]
      %v8875 = vld [vmem:[%s7 + $0xe8] sm:$0xff]
      %v8876 = vld [vmem:[%s7 + $0xf0] sm:$0xff]
      %v8877 = vld [vmem:[%s7 + $0xf8] sm:$0xff]
      %v8878 = vld [vmem:[%s7 + $0x100] sm:$0xff]
      %v8879 = vld [vmem:[%s7 + $0x108] sm:$0xff]
      %v8880 = vld [vmem:[%s7 + $0x110] sm:$0xff]
      %v8881 = vld [vmem:[%s7 + $0x118] sm:$0xff]
      %v8882 = vld [vmem:[%s7 + $0x120] sm:$0xff]
      %v8883 = vld [vmem:[%s7 + $0x128] sm:$0xff]
      %v8884 = vld [vmem:[%s7 + $0x130] sm:$0xff]
      %v8885 = vld [vmem:[%s7 + $0x138] sm:$0xff]
      %v8886 = vld [vmem:[%s7 + $0x140] sm:$0xff]
      %v8887 = vld [vmem:[%s7 + $0x148] sm:$0xff]
      %v8888 = vld [vmem:[%s7 + $0x150] sm:$0xff]
      %v8889 = vld [vmem:[%s7 + $0x158] sm:$0xff]
      %v8890 = vld [vmem:[%s7 + $0x160] sm:$0xff]
      %v8891 = vld [vmem:[%s7 + $0x168] sm:$0xff]
      %v8892 = vld [vmem:[%s7 + $0x170] sm:$0xff]
      %v8893 = vld [vmem:[%s7 + $0x178] sm:$0xff]
      %v8894 = vld [vmem:[%s8] sm:$0x3]
      %v8896 = vperm.slane %v8894, 0
      %v8897 = vperm.slane %v8894, 1
      %v8948 = vunpack.c.l.b16 %v8846
      %v8949 = vunpack.c.h.b16 %v8846
      %v8950 = vunpack.c.l.b16 %v8847
      %v8951 = vunpack.c.h.b16 %v8847
      %v8952 = vunpack.c.l.b16 %v8848
      %v8953 = vunpack.c.h.b16 %v8848
      %v8954 = vunpack.c.l.b16 %v8849
      %v8955 = vunpack.c.h.b16 %v8849
      %v8956 = vunpack.c.l.b16 %v8850
      %v8957 = vunpack.c.h.b16 %v8850
      %v8958 = vunpack.c.l.b16 %v8851
      %v8959 = vunpack.c.h.b16 %v8851
      %v8960 = vunpack.c.l.b16 %v8852
      %v8961 = vunpack.c.h.b16 %v8852
      %v8962 = vunpack.c.l.b16 %v8853
      %v8963 = vunpack.c.h.b16 %v8853
      %v8964 = vunpack.c.l.b16 %v8854
      %v8965 = vunpack.c.h.b16 %v8854
      %v8966 = vunpack.c.l.b16 %v8855
      %v8967 = vunpack.c.h.b16 %v8855
      %v8968 = vunpack.c.l.b16 %v8856
      %v8969 = vunpack.c.h.b16 %v8856
      %v8970 = vunpack.c.l.b16 %v8857
      %v8971 = vunpack.c.h.b16 %v8857
      %v8972 = vunpack.c.l.b16 %v8858
      %v8973 = vunpack.c.h.b16 %v8858
      %v8974 = vunpack.c.l.b16 %v8859
      %v8975 = vunpack.c.h.b16 %v8859
      %v8976 = vunpack.c.l.b16 %v8860
      %v8977 = vunpack.c.h.b16 %v8860
      %v8978 = vunpack.c.l.b16 %v8861
      %v8979 = vunpack.c.h.b16 %v8861
      %v8980 = vunpack.c.l.b16 %v8862
      %v8981 = vunpack.c.h.b16 %v8862
      %v8982 = vunpack.c.l.b16 %v8863
      %v8983 = vunpack.c.h.b16 %v8863
      %v8984 = vunpack.c.l.b16 %v8864
      %v8985 = vunpack.c.h.b16 %v8864
      %v8986 = vunpack.c.l.b16 %v8865
      %v8987 = vunpack.c.h.b16 %v8865
      %v8988 = vunpack.c.l.b16 %v8866
      %v8989 = vunpack.c.h.b16 %v8866
      %v8990 = vunpack.c.l.b16 %v8867
      %v8991 = vunpack.c.h.b16 %v8867
      %v8992 = vunpack.c.l.b16 %v8868
      %v8993 = vunpack.c.h.b16 %v8868
      %v8994 = vunpack.c.l.b16 %v8869
      %v8995 = vunpack.c.h.b16 %v8869
      %v8996 = vunpack.c.l.b16 %v8870
      %v8997 = vunpack.c.h.b16 %v8870
      %v8998 = vunpack.c.l.b16 %v8871
      %v8999 = vunpack.c.h.b16 %v8871
      %v9000 = vunpack.c.l.b16 %v8872
      %v9001 = vunpack.c.h.b16 %v8872
      %v9002 = vunpack.c.l.b16 %v8873
      %v9003 = vunpack.c.h.b16 %v8873
      %v9004 = vunpack.c.l.b16 %v8874
      %v9005 = vunpack.c.h.b16 %v8874
      %v9006 = vunpack.c.l.b16 %v8875
      %v9007 = vunpack.c.h.b16 %v8875
      %v9008 = vunpack.c.l.b16 %v8876
      %v9009 = vunpack.c.h.b16 %v8876
      %v9010 = vunpack.c.l.b16 %v8877
      %v9011 = vunpack.c.h.b16 %v8877
      %v9012 = vunpack.c.l.b16 %v8878
      %v9013 = vunpack.c.h.b16 %v8878
      %v9014 = vunpack.c.l.b16 %v8879
      %v9015 = vunpack.c.h.b16 %v8879
      %v9016 = vunpack.c.l.b16 %v8880
      %v9017 = vunpack.c.h.b16 %v8880
      %v9018 = vunpack.c.l.b16 %v8881
      %v9019 = vunpack.c.h.b16 %v8881
      %v9020 = vunpack.c.l.b16 %v8882
      %v9021 = vunpack.c.h.b16 %v8882
      %v9022 = vunpack.c.l.b16 %v8883
      %v9023 = vunpack.c.h.b16 %v8883
      %v9024 = vunpack.c.l.b16 %v8884
      %v9025 = vunpack.c.h.b16 %v8884
      %v9026 = vunpack.c.l.b16 %v8885
      %v9027 = vunpack.c.h.b16 %v8885
      %v9028 = vunpack.c.l.b16 %v8886
      %v9029 = vunpack.c.h.b16 %v8886
      %v9030 = vunpack.c.l.b16 %v8887
      %v9031 = vunpack.c.h.b16 %v8887
      %v9032 = vunpack.c.l.b16 %v8888
      %v9033 = vunpack.c.h.b16 %v8888
      %v9034 = vunpack.c.l.b16 %v8889
      %v9035 = vunpack.c.h.b16 %v8889
      %v9036 = vunpack.c.l.b16 %v8890
      %v9037 = vunpack.c.h.b16 %v8890
      %v9038 = vunpack.c.l.b16 %v8891
      %v9039 = vunpack.c.h.b16 %v8891
      %v9040 = vunpack.c.l.b16 %v8892
      %v9041 = vunpack.c.h.b16 %v8892
      %v9042 = vunpack.c.l.b16 %v8893
      %v9043 = vunpack.c.h.b16 %v8893
      %v9044 = vpack.c.b16 %v8950, %v8948
      %v9045 = vpack.c.b16 %v8951, %v8949
      %v9046 = vpack.c.b16 %v8954, %v8952
      %v9047 = vpack.c.b16 %v8955, %v8953
      %v9048 = vpack.c.b16 %v8958, %v8956
      %v9049 = vpack.c.b16 %v8959, %v8957
      %v9050 = vpack.c.b16 %v8962, %v8960
      %v9051 = vpack.c.b16 %v8963, %v8961
      %v9052 = vpack.c.b16 %v8966, %v8964
      %v9053 = vpack.c.b16 %v8967, %v8965
      %v9054 = vpack.c.b16 %v8970, %v8968
      %v9055 = vpack.c.b16 %v8971, %v8969
      %v9056 = vpack.c.b16 %v8974, %v8972
      %v9057 = vpack.c.b16 %v8975, %v8973
      %v9058 = vpack.c.b16 %v8978, %v8976
      %v9059 = vpack.c.b16 %v8979, %v8977
      %v9060 = vpack.c.b16 %v8982, %v8980
      %v9061 = vpack.c.b16 %v8983, %v8981
      %v9062 = vpack.c.b16 %v8986, %v8984
      %v9063 = vpack.c.b16 %v8987, %v8985
      %v9064 = vpack.c.b16 %v8990, %v8988
      %v9065 = vpack.c.b16 %v8991, %v8989
      %v9066 = vpack.c.b16 %v8994, %v8992
      %v9067 = vpack.c.b16 %v8995, %v8993
      %v9068 = vpack.c.b16 %v8998, %v8996
      %v9069 = vpack.c.b16 %v8999, %v8997
      %v9070 = vpack.c.b16 %v9002, %v9000
      %v9071 = vpack.c.b16 %v9003, %v9001
      %v9072 = vpack.c.b16 %v9006, %v9004
      %v9073 = vpack.c.b16 %v9007, %v9005
      %v9074 = vpack.c.b16 %v9010, %v9008
      %v9075 = vpack.c.b16 %v9011, %v9009
      %v9076 = vpack.c.b16 %v9014, %v9012
      %v9077 = vpack.c.b16 %v9015, %v9013
      %v9078 = vpack.c.b16 %v9018, %v9016
      %v9079 = vpack.c.b16 %v9019, %v9017
      %v9080 = vpack.c.b16 %v9022, %v9020
      %v9081 = vpack.c.b16 %v9023, %v9021
      %v9082 = vpack.c.b16 %v9026, %v9024
      %v9083 = vpack.c.b16 %v9027, %v9025
      %v9084 = vpack.c.b16 %v9030, %v9028
      %v9085 = vpack.c.b16 %v9031, %v9029
      %v9086 = vpack.c.b16 %v9034, %v9032
      %v9087 = vpack.c.b16 %v9035, %v9033
      %v9088 = vpack.c.b16 %v9038, %v9036
      %v9089 = vpack.c.b16 %v9039, %v9037
      %v9090 = vpack.c.b16 %v9042, %v9040
      %v9091 = vpack.c.b16 %v9043, %v9041
      %9140 = vmatpush.bf16.msra.mxu0 %v9058
      %9141 = vmatpush.bf16.msra.mxu0 %v9056
      %9142 = vmatpush.bf16.msra.mxu0 %v9054
      %9143 = vmatpush.bf16.msra.mxu0 %v9052
      %9144 = vmatpush.bf16.msra.mxu0 %v9050
      %9145 = vmatpush.bf16.msra.mxu0 %v9048
      %9146 = vmatpush.bf16.msra.mxu0 %v9046
      %9147 = vmatpush.bf16.msra.mxu0 %v9044
      %9148 = vmatmul.bf16.gmra.mxu0 %v8750
      %v9149 = vpop.f32.mrf.mxu0
      %v9150 = vadd.f32 %v8896, %v9149
      %v9151 = vpop.f32.mrf.mxu0
      %v9152 = vadd.f32 %v8896, %v9151
      %9153 = vmatmul.bf16.gmra.mxu0 %v8753
      %v9154 = vpop.f32.mrf.mxu0
      %v9155 = vadd.f32 %v8896, %v9154
      %v9156 = vpop.f32.mrf.mxu0
      %v9157 = vadd.f32 %v8896, %v9156
      %9158 = vmatmul.bf16.gmra.mxu0 %v8756
      %v9159 = vpop.f32.mrf.mxu0
      %v9160 = vadd.f32 %v8896, %v9159
      %v9161 = vpop.f32.mrf.mxu0
      %v9162 = vadd.f32 %v8896, %v9161
      %9163 = vmatmul.bf16.gmra.mxu0 %v8759
      %v9164 = vpop.f32.mrf.mxu0
      %v9165 = vadd.f32 %v8896, %v9164
      %v9166 = vpop.f32.mrf.mxu0
      %v9167 = vadd.f32 %v8896, %v9166
      %9168 = vmatmul.bf16.gmra.mxu0 %v8762
      %v9169 = vpop.f32.mrf.mxu0
      %v9170 = vadd.f32 %v8896, %v9169
      %v9171 = vpop.f32.mrf.mxu0
      %v9172 = vadd.f32 %v8896, %v9171
      %9173 = vmatmul.bf16.gmra.mxu0 %v8765
      %v9174 = vpop.f32.mrf.mxu0
      %v9175 = vadd.f32 %v8896, %v9174
      %v9176 = vpop.f32.mrf.mxu0
      %v9177 = vadd.f32 %v8896, %v9176
      %9178 = vmatmul.bf16.gmra.mxu0 %v8768
      %v9179 = vpop.f32.mrf.mxu0
      %v9180 = vadd.f32 %v8896, %v9179
      %v9181 = vpop.f32.mrf.mxu0
      %v9182 = vadd.f32 %v8896, %v9181
      %9183 = vmatmul.bf16.gmra.mxu0 %v8771
      %v9184 = vpop.f32.mrf.mxu0
      %v9185 = vadd.f32 %v8896, %v9184
      %v9186 = vpop.f32.mrf.mxu0
      %v9187 = vadd.f32 %v8896, %v9186
      %9188 = vmatmul.bf16.gmra.mxu0 %v8774
      %v9189 = vpop.f32.mrf.mxu0
      %v9190 = vadd.f32 %v8896, %v9189
      %v9191 = vpop.f32.mrf.mxu0
      %v9192 = vadd.f32 %v8896, %v9191
      %9193 = vmatmul.bf16.gmra.mxu0 %v8777
      %v9194 = vpop.f32.mrf.mxu0
      %v9195 = vadd.f32 %v8896, %v9194
      %v9196 = vpop.f32.mrf.mxu0
      %v9197 = vadd.f32 %v8896, %v9196
      %9198 = vmatmul.bf16.gmra.mxu0 %v8780
      %v9199 = vpop.f32.mrf.mxu0
      %v9200 = vadd.f32 %v8896, %v9199
      %v9201 = vpop.f32.mrf.mxu0
      %v9202 = vadd.f32 %v8896, %v9201
      %9203 = vmatmul.bf16.gmra.mxu0 %v8783
      %v9204 = vpop.f32.mrf.mxu0
      %v9205 = vadd.f32 %v8896, %v9204
      %v9206 = vpop.f32.mrf.mxu0
      %v9207 = vadd.f32 %v8896, %v9206
      %9208 = vmatmul.bf16.gmra.mxu0 %v8786
      %v9209 = vpop.f32.mrf.mxu0
      %v9210 = vadd.f32 %v8896, %v9209
      %v9211 = vpop.f32.mrf.mxu0
      %v9212 = vadd.f32 %v8896, %v9211
      %9213 = vmatmul.bf16.gmra.mxu0 %v8789
      %v9214 = vpop.f32.mrf.mxu0
      %v9215 = vadd.f32 %v8896, %v9214
      %v9216 = vpop.f32.mrf.mxu0
      %v9217 = vadd.f32 %v8896, %v9216
      %9218 = vmatmul.bf16.gmra.mxu0 %v8792
      %v9219 = vpop.f32.mrf.mxu0
      %v9220 = vadd.f32 %v8896, %v9219
      %v9221 = vpop.f32.mrf.mxu0
      %v9222 = vadd.f32 %v8896, %v9221
      %9223 = vmatmul.bf16.gmra.mxu0 %v8795
      %v9224 = vpop.f32.mrf.mxu0
      %v9225 = vadd.f32 %v8896, %v9224
      %v9226 = vpop.f32.mrf.mxu0
      %v9227 = vadd.f32 %v8896, %v9226
      %9228 = vmatmul.bf16.gmra.mxu0 %v8798
      %v9229 = vpop.f32.mrf.mxu0
      %v9230 = vadd.f32 %v8896, %v9229
      %v9231 = vpop.f32.mrf.mxu0
      %v9232 = vadd.f32 %v8896, %v9231
      %9233 = vmatmul.bf16.gmra.mxu0 %v8801
      %v9234 = vpop.f32.mrf.mxu0
      %v9235 = vadd.f32 %v8896, %v9234
      %v9236 = vpop.f32.mrf.mxu0
      %v9237 = vadd.f32 %v8896, %v9236
      %9238 = vmatmul.bf16.gmra.mxu0 %v8804
      %v9239 = vpop.f32.mrf.mxu0
      %v9240 = vadd.f32 %v8896, %v9239
      %v9241 = vpop.f32.mrf.mxu0
      %v9242 = vadd.f32 %v8896, %v9241
      %9243 = vmatmul.bf16.gmra.mxu0 %v8807
      %v9244 = vpop.f32.mrf.mxu0
      %v9245 = vadd.f32 %v8896, %v9244
      %v9246 = vpop.f32.mrf.mxu0
      %v9247 = vadd.f32 %v8896, %v9246
      %9248 = vmatmul.bf16.gmra.mxu0 %v8810
      %v9249 = vpop.f32.mrf.mxu0
      %v9250 = vadd.f32 %v8896, %v9249
      %v9251 = vpop.f32.mrf.mxu0
      %v9252 = vadd.f32 %v8896, %v9251
      %9253 = vmatmul.bf16.gmra.mxu0 %v8813
      %v9254 = vpop.f32.mrf.mxu0
      %v9255 = vadd.f32 %v8896, %v9254
      %v9256 = vpop.f32.mrf.mxu0
      %v9257 = vadd.f32 %v8896, %v9256
      %9258 = vmatmul.bf16.gmra.mxu0 %v8816
      %v9259 = vpop.f32.mrf.mxu0
      %v9260 = vadd.f32 %v8896, %v9259
      %v9261 = vpop.f32.mrf.mxu0
      %v9262 = vadd.f32 %v8896, %v9261
      %9263 = vmatmul.bf16.gmra.mxu0 %v8819
      %v9264 = vpop.f32.mrf.mxu0
      %v9265 = vadd.f32 %v8896, %v9264
      %v9266 = vpop.f32.mrf.mxu0
      %v9267 = vadd.f32 %v8896, %v9266
      %9268 = vmatmul.bf16.gmra.mxu0 %v8822
      %v9269 = vpop.f32.mrf.mxu0
      %v9270 = vadd.f32 %v8896, %v9269
      %v9271 = vpop.f32.mrf.mxu0
      %v9272 = vadd.f32 %v8896, %v9271
      %9273 = vmatmul.bf16.gmra.mxu0 %v8825
      %v9274 = vpop.f32.mrf.mxu0
      %v9275 = vadd.f32 %v8896, %v9274
      %v9276 = vpop.f32.mrf.mxu0
      %v9277 = vadd.f32 %v8896, %v9276
      %9278 = vmatmul.bf16.gmra.mxu0 %v8828
      %v9279 = vpop.f32.mrf.mxu0
      %v9280 = vadd.f32 %v8896, %v9279
      %v9281 = vpop.f32.mrf.mxu0
      %v9282 = vadd.f32 %v8896, %v9281
      %9283 = vmatmul.bf16.gmra.mxu0 %v8831
      %v9284 = vpop.f32.mrf.mxu0
      %v9285 = vadd.f32 %v8896, %v9284
      %v9286 = vpop.f32.mrf.mxu0
      %v9287 = vadd.f32 %v8896, %v9286
      %9288 = vmatmul.bf16.gmra.mxu0 %v8834
      %v9289 = vpop.f32.mrf.mxu0
      %v9290 = vadd.f32 %v8896, %v9289
      %v9291 = vpop.f32.mrf.mxu0
      %v9292 = vadd.f32 %v8896, %v9291
      %9293 = vmatmul.bf16.gmra.mxu0 %v8837
      %v9294 = vpop.f32.mrf.mxu0
      %v9295 = vadd.f32 %v8896, %v9294
      %v9296 = vpop.f32.mrf.mxu0
      %v9297 = vadd.f32 %v8896, %v9296
      %9298 = vmatmul.bf16.gmra.mxu0 %v8840
      %v9299 = vpop.f32.mrf.mxu0
      %v9300 = vadd.f32 %v8896, %v9299
      %v9301 = vpop.f32.mrf.mxu0
      %v9302 = vadd.f32 %v8896, %v9301
      %9303 = vmatmul.bf16.gmra.mxu0 %v8843
      %v9304 = vpop.f32.mrf.mxu0
      %v9305 = vadd.f32 %v8896, %v9304
      %v9306 = vpop.f32.mrf.mxu0
      %v9307 = vadd.f32 %v8896, %v9306
      %9308 = vdwg.mxu0
      %9309 = vmatpush.bf16.msra.mxu0 %v9074
      %9310 = vmatpush.bf16.msra.mxu0 %v9072
      %9311 = vmatpush.bf16.msra.mxu0 %v9070
      %9312 = vmatpush.bf16.msra.mxu0 %v9068
      %9313 = vmatpush.bf16.msra.mxu0 %v9066
      %9314 = vmatpush.bf16.msra.mxu0 %v9064
      %9315 = vmatpush.bf16.msra.mxu0 %v9062
      %9316 = vmatpush.bf16.msra.mxu0 %v9060
      %9317 = vmatmul.bf16.gmra.mxu0 %v8751
      %v9318 = vpop.f32.mrf.mxu0
      %v9319 = vadd.f32 %v9150, %v9318
      %v9320 = vpop.f32.mrf.mxu0
      %v9321 = vadd.f32 %v9152, %v9320
      %9322 = vmatmul.bf16.gmra.mxu0 %v8754
      %v9323 = vpop.f32.mrf.mxu0
      %v9324 = vadd.f32 %v9155, %v9323
      %v9325 = vpop.f32.mrf.mxu0
      %v9326 = vadd.f32 %v9157, %v9325
      %9327 = vmatmul.bf16.gmra.mxu0 %v8757
      %v9328 = vpop.f32.mrf.mxu0
      %v9329 = vadd.f32 %v9160, %v9328
      %v9330 = vpop.f32.mrf.mxu0
      %v9331 = vadd.f32 %v9162, %v9330
      %9332 = vmatmul.bf16.gmra.mxu0 %v8760
      %v9333 = vpop.f32.mrf.mxu0
      %v9334 = vadd.f32 %v9165, %v9333
      %v9335 = vpop.f32.mrf.mxu0
      %v9336 = vadd.f32 %v9167, %v9335
      %9337 = vmatmul.bf16.gmra.mxu0 %v8763
      %v9338 = vpop.f32.mrf.mxu0
      %v9339 = vadd.f32 %v9170, %v9338
      %v9340 = vpop.f32.mrf.mxu0
      %v9341 = vadd.f32 %v9172, %v9340
      %9342 = vmatmul.bf16.gmra.mxu0 %v8766
      %v9343 = vpop.f32.mrf.mxu0
      %v9344 = vadd.f32 %v9175, %v9343
      %v9345 = vpop.f32.mrf.mxu0
      %v9346 = vadd.f32 %v9177, %v9345
      %9347 = vmatmul.bf16.gmra.mxu0 %v8769
      %v9348 = vpop.f32.mrf.mxu0
      %v9349 = vadd.f32 %v9180, %v9348
      %v9350 = vpop.f32.mrf.mxu0
      %v9351 = vadd.f32 %v9182, %v9350
      %9352 = vmatmul.bf16.gmra.mxu0 %v8772
      %v9353 = vpop.f32.mrf.mxu0
      %v9354 = vadd.f32 %v9185, %v9353
      %v9355 = vpop.f32.mrf.mxu0
      %v9356 = vadd.f32 %v9187, %v9355
      %9357 = vmatmul.bf16.gmra.mxu0 %v8775
      %v9358 = vpop.f32.mrf.mxu0
      %v9359 = vadd.f32 %v9190, %v9358
      %v9360 = vpop.f32.mrf.mxu0
      %v9361 = vadd.f32 %v9192, %v9360
      %9362 = vmatmul.bf16.gmra.mxu0 %v8778
      %v9363 = vpop.f32.mrf.mxu0
      %v9364 = vadd.f32 %v9195, %v9363
      %v9365 = vpop.f32.mrf.mxu0
      %v9366 = vadd.f32 %v9197, %v9365
      %9367 = vmatmul.bf16.gmra.mxu0 %v8781
      %v9368 = vpop.f32.mrf.mxu0
      %v9369 = vadd.f32 %v9200, %v9368
      %v9370 = vpop.f32.mrf.mxu0
      %v9371 = vadd.f32 %v9202, %v9370
      %9372 = vmatmul.bf16.gmra.mxu0 %v8784
      %v9373 = vpop.f32.mrf.mxu0
      %v9374 = vadd.f32 %v9205, %v9373
      %v9375 = vpop.f32.mrf.mxu0
      %v9376 = vadd.f32 %v9207, %v9375
      %9377 = vmatmul.bf16.gmra.mxu0 %v8787
      %v9378 = vpop.f32.mrf.mxu0
      %v9379 = vadd.f32 %v9210, %v9378
      %v9380 = vpop.f32.mrf.mxu0
      %v9381 = vadd.f32 %v9212, %v9380
      %9382 = vmatmul.bf16.gmra.mxu0 %v8790
      %v9383 = vpop.f32.mrf.mxu0
      %v9384 = vadd.f32 %v9215, %v9383
      %v9385 = vpop.f32.mrf.mxu0
      %v9386 = vadd.f32 %v9217, %v9385
      %9387 = vmatmul.bf16.gmra.mxu0 %v8793
      %v9388 = vpop.f32.mrf.mxu0
      %v9389 = vadd.f32 %v9220, %v9388
      %v9390 = vpop.f32.mrf.mxu0
      %v9391 = vadd.f32 %v9222, %v9390
      %9392 = vmatmul.bf16.gmra.mxu0 %v8796
      %v9393 = vpop.f32.mrf.mxu0
      %v9394 = vadd.f32 %v9225, %v9393
      %v9395 = vpop.f32.mrf.mxu0
      %v9396 = vadd.f32 %v9227, %v9395
      %9397 = vmatmul.bf16.gmra.mxu0 %v8799
      %v9398 = vpop.f32.mrf.mxu0
      %v9399 = vadd.f32 %v9230, %v9398
      %v9400 = vpop.f32.mrf.mxu0
      %v9401 = vadd.f32 %v9232, %v9400
      %9402 = vmatmul.bf16.gmra.mxu0 %v8802
      %v9403 = vpop.f32.mrf.mxu0
      %v9404 = vadd.f32 %v9235, %v9403
      %v9405 = vpop.f32.mrf.mxu0
      %v9406 = vadd.f32 %v9237, %v9405
      %9407 = vmatmul.bf16.gmra.mxu0 %v8805
      %v9408 = vpop.f32.mrf.mxu0
      %v9409 = vadd.f32 %v9240, %v9408
      %v9410 = vpop.f32.mrf.mxu0
      %v9411 = vadd.f32 %v9242, %v9410
      %9412 = vmatmul.bf16.gmra.mxu0 %v8808
      %v9413 = vpop.f32.mrf.mxu0
      %v9414 = vadd.f32 %v9245, %v9413
      %v9415 = vpop.f32.mrf.mxu0
      %v9416 = vadd.f32 %v9247, %v9415
      %9417 = vmatmul.bf16.gmra.mxu0 %v8811
      %v9418 = vpop.f32.mrf.mxu0
      %v9419 = vadd.f32 %v9250, %v9418
      %v9420 = vpop.f32.mrf.mxu0
      %v9421 = vadd.f32 %v9252, %v9420
      %9422 = vmatmul.bf16.gmra.mxu0 %v8814
      %v9423 = vpop.f32.mrf.mxu0
      %v9424 = vadd.f32 %v9255, %v9423
      %v9425 = vpop.f32.mrf.mxu0
      %v9426 = vadd.f32 %v9257, %v9425
      %9427 = vmatmul.bf16.gmra.mxu0 %v8817
      %v9428 = vpop.f32.mrf.mxu0
      %v9429 = vadd.f32 %v9260, %v9428
      %v9430 = vpop.f32.mrf.mxu0
      %v9431 = vadd.f32 %v9262, %v9430
      %9432 = vmatmul.bf16.gmra.mxu0 %v8820
      %v9433 = vpop.f32.mrf.mxu0
      %v9434 = vadd.f32 %v9265, %v9433
      %v9435 = vpop.f32.mrf.mxu0
      %v9436 = vadd.f32 %v9267, %v9435
      %9437 = vmatmul.bf16.gmra.mxu0 %v8823
      %v9438 = vpop.f32.mrf.mxu0
      %v9439 = vadd.f32 %v9270, %v9438
      %v9440 = vpop.f32.mrf.mxu0
      %v9441 = vadd.f32 %v9272, %v9440
      %9442 = vmatmul.bf16.gmra.mxu0 %v8826
      %v9443 = vpop.f32.mrf.mxu0
      %v9444 = vadd.f32 %v9275, %v9443
      %v9445 = vpop.f32.mrf.mxu0
      %v9446 = vadd.f32 %v9277, %v9445
      %9447 = vmatmul.bf16.gmra.mxu0 %v8829
      %v9448 = vpop.f32.mrf.mxu0
      %v9449 = vadd.f32 %v9280, %v9448
      %v9450 = vpop.f32.mrf.mxu0
      %v9451 = vadd.f32 %v9282, %v9450
      %9452 = vmatmul.bf16.gmra.mxu0 %v8832
      %v9453 = vpop.f32.mrf.mxu0
      %v9454 = vadd.f32 %v9285, %v9453
      %v9455 = vpop.f32.mrf.mxu0
      %v9456 = vadd.f32 %v9287, %v9455
      %9457 = vmatmul.bf16.gmra.mxu0 %v8835
      %v9458 = vpop.f32.mrf.mxu0
      %v9459 = vadd.f32 %v9290, %v9458
      %v9460 = vpop.f32.mrf.mxu0
      %v9461 = vadd.f32 %v9292, %v9460
      %9462 = vmatmul.bf16.gmra.mxu0 %v8838
      %v9463 = vpop.f32.mrf.mxu0
      %v9464 = vadd.f32 %v9295, %v9463
      %v9465 = vpop.f32.mrf.mxu0
      %v9466 = vadd.f32 %v9297, %v9465
      %9467 = vmatmul.bf16.gmra.mxu0 %v8841
      %v9468 = vpop.f32.mrf.mxu0
      %v9469 = vadd.f32 %v9300, %v9468
      %v9470 = vpop.f32.mrf.mxu0
      %v9471 = vadd.f32 %v9302, %v9470
      %9472 = vmatmul.bf16.gmra.mxu0 %v8844
      %v9473 = vpop.f32.mrf.mxu0
      %v9474 = vadd.f32 %v9305, %v9473
      %v9475 = vpop.f32.mrf.mxu0
      %v9476 = vadd.f32 %v9307, %v9475
      %9477 = vdwg.mxu0
      %9478 = vmatpush.bf16.msra.mxu0 %v9090
      %9479 = vmatpush.bf16.msra.mxu0 %v9088
      %9480 = vmatpush.bf16.msra.mxu0 %v9086
      %9481 = vmatpush.bf16.msra.mxu0 %v9084
      %9482 = vmatpush.bf16.msra.mxu0 %v9082
      %9483 = vmatpush.bf16.msra.mxu0 %v9080
      %9484 = vmatpush.bf16.msra.mxu0 %v9078
      %9485 = vmatpush.bf16.msra.mxu0 %v9076
      %9486 = vmatmul.bf16.gmra.mxu0 %v8752
      %v9487 = vpop.f32.mrf.mxu0
      %v9488 = vadd.f32 %v9319, %v9487
      %v9489 = vpop.f32.mrf.mxu0
      %v9490 = vadd.f32 %v9321, %v9489
      %9491 = vmatmul.bf16.gmra.mxu0 %v8755
      %v9492 = vpop.f32.mrf.mxu0
      %v9493 = vadd.f32 %v9324, %v9492
      %v9494 = vpop.f32.mrf.mxu0
      %v9495 = vadd.f32 %v9326, %v9494
      %9496 = vmatmul.bf16.gmra.mxu0 %v8758
      %v9497 = vpop.f32.mrf.mxu0
      %v9498 = vadd.f32 %v9329, %v9497
      %v9499 = vpop.f32.mrf.mxu0
      %v9500 = vadd.f32 %v9331, %v9499
      %9501 = vmatmul.bf16.gmra.mxu0 %v8761
      %v9502 = vpop.f32.mrf.mxu0
      %v9503 = vadd.f32 %v9334, %v9502
      %v9504 = vpop.f32.mrf.mxu0
      %v9505 = vadd.f32 %v9336, %v9504
      %9506 = vmatmul.bf16.gmra.mxu0 %v8764
      %v9507 = vpop.f32.mrf.mxu0
      %v9508 = vadd.f32 %v9339, %v9507
      %v9509 = vpop.f32.mrf.mxu0
      %v9510 = vadd.f32 %v9341, %v9509
      %9511 = vmatmul.bf16.gmra.mxu0 %v8767
      %v9512 = vpop.f32.mrf.mxu0
      %v9513 = vadd.f32 %v9344, %v9512
      %v9514 = vpop.f32.mrf.mxu0
      %v9515 = vadd.f32 %v9346, %v9514
      %9516 = vmatmul.bf16.gmra.mxu0 %v8770
      %v9517 = vpop.f32.mrf.mxu0
      %v9518 = vadd.f32 %v9349, %v9517
      %v9519 = vpop.f32.mrf.mxu0
      %v9520 = vadd.f32 %v9351, %v9519
      %9521 = vmatmul.bf16.gmra.mxu0 %v8773
      %v9522 = vpop.f32.mrf.mxu0
      %v9523 = vadd.f32 %v9354, %v9522
      %v9524 = vpop.f32.mrf.mxu0
      %v9525 = vadd.f32 %v9356, %v9524
      %9526 = vmatmul.bf16.gmra.mxu0 %v8776
      %v9527 = vpop.f32.mrf.mxu0
      %v9528 = vadd.f32 %v9359, %v9527
      %v9529 = vpop.f32.mrf.mxu0
      %v9530 = vadd.f32 %v9361, %v9529
      %9531 = vmatmul.bf16.gmra.mxu0 %v8779
      %v9532 = vpop.f32.mrf.mxu0
      %v9533 = vadd.f32 %v9364, %v9532
      %v9534 = vpop.f32.mrf.mxu0
      %v9535 = vadd.f32 %v9366, %v9534
      %9536 = vmatmul.bf16.gmra.mxu0 %v8782
      %v9537 = vpop.f32.mrf.mxu0
      %v9538 = vadd.f32 %v9369, %v9537
      %v9539 = vpop.f32.mrf.mxu0
      %v9540 = vadd.f32 %v9371, %v9539
      %9541 = vmatmul.bf16.gmra.mxu0 %v8785
      %v9542 = vpop.f32.mrf.mxu0
      %v9543 = vadd.f32 %v9374, %v9542
      %v9544 = vpop.f32.mrf.mxu0
      %v9545 = vadd.f32 %v9376, %v9544
      %9546 = vmatmul.bf16.gmra.mxu0 %v8788
      %v9547 = vpop.f32.mrf.mxu0
      %v9548 = vadd.f32 %v9379, %v9547
      %v9549 = vpop.f32.mrf.mxu0
      %v9550 = vadd.f32 %v9381, %v9549
      %9551 = vmatmul.bf16.gmra.mxu0 %v8791
      %v9552 = vpop.f32.mrf.mxu0
      %v9553 = vadd.f32 %v9384, %v9552
      %v9554 = vpop.f32.mrf.mxu0
      %v9555 = vadd.f32 %v9386, %v9554
      %9556 = vmatmul.bf16.gmra.mxu0 %v8794
      %v9557 = vpop.f32.mrf.mxu0
      %v9558 = vadd.f32 %v9389, %v9557
      %v9559 = vpop.f32.mrf.mxu0
      %v9560 = vadd.f32 %v9391, %v9559
      %9561 = vmatmul.bf16.gmra.mxu0 %v8797
      %v9562 = vpop.f32.mrf.mxu0
      %v9563 = vadd.f32 %v9394, %v9562
      %v9564 = vpop.f32.mrf.mxu0
      %v9565 = vadd.f32 %v9396, %v9564
      %9566 = vmatmul.bf16.gmra.mxu0 %v8800
      %v9567 = vpop.f32.mrf.mxu0
      %v9568 = vadd.f32 %v9399, %v9567
      %v9569 = vpop.f32.mrf.mxu0
      %v9570 = vadd.f32 %v9401, %v9569
      %9571 = vmatmul.bf16.gmra.mxu0 %v8803
      %v9572 = vpop.f32.mrf.mxu0
      %v9573 = vadd.f32 %v9404, %v9572
      %v9574 = vpop.f32.mrf.mxu0
      %v9575 = vadd.f32 %v9406, %v9574
      %9576 = vmatmul.bf16.gmra.mxu0 %v8806
      %v9577 = vpop.f32.mrf.mxu0
      %v9578 = vadd.f32 %v9409, %v9577
      %v9579 = vpop.f32.mrf.mxu0
      %v9580 = vadd.f32 %v9411, %v9579
      %9581 = vmatmul.bf16.gmra.mxu0 %v8809
      %v9582 = vpop.f32.mrf.mxu0
      %v9583 = vadd.f32 %v9414, %v9582
      %v9584 = vpop.f32.mrf.mxu0
      %v9585 = vadd.f32 %v9416, %v9584
      %9586 = vmatmul.bf16.gmra.mxu0 %v8812
      %v9587 = vpop.f32.mrf.mxu0
      %v9588 = vadd.f32 %v9419, %v9587
      %v9589 = vpop.f32.mrf.mxu0
      %v9590 = vadd.f32 %v9421, %v9589
      %9591 = vmatmul.bf16.gmra.mxu0 %v8815
      %v9592 = vpop.f32.mrf.mxu0
      %v9593 = vadd.f32 %v9424, %v9592
      %v9594 = vpop.f32.mrf.mxu0
      %v9595 = vadd.f32 %v9426, %v9594
      %9596 = vmatmul.bf16.gmra.mxu0 %v8818
      %v9597 = vpop.f32.mrf.mxu0
      %v9598 = vadd.f32 %v9429, %v9597
      %v9599 = vpop.f32.mrf.mxu0
      %v9600 = vadd.f32 %v9431, %v9599
      %9601 = vmatmul.bf16.gmra.mxu0 %v8821
      %v9602 = vpop.f32.mrf.mxu0
      %v9603 = vadd.f32 %v9434, %v9602
      %v9604 = vpop.f32.mrf.mxu0
      %v9605 = vadd.f32 %v9436, %v9604
      %9606 = vmatmul.bf16.gmra.mxu0 %v8824
      %v9607 = vpop.f32.mrf.mxu0
      %v9608 = vadd.f32 %v9439, %v9607
      %v9609 = vpop.f32.mrf.mxu0
      %v9610 = vadd.f32 %v9441, %v9609
      %9611 = vmatmul.bf16.gmra.mxu0 %v8827
      %v9612 = vpop.f32.mrf.mxu0
      %v9613 = vadd.f32 %v9444, %v9612
      %v9614 = vpop.f32.mrf.mxu0
      %v9615 = vadd.f32 %v9446, %v9614
      %9616 = vmatmul.bf16.gmra.mxu0 %v8830
      %v9617 = vpop.f32.mrf.mxu0
      %v9618 = vadd.f32 %v9449, %v9617
      %v9619 = vpop.f32.mrf.mxu0
      %v9620 = vadd.f32 %v9451, %v9619
      %9621 = vmatmul.bf16.gmra.mxu0 %v8833
      %v9622 = vpop.f32.mrf.mxu0
      %v9623 = vadd.f32 %v9454, %v9622
      %v9624 = vpop.f32.mrf.mxu0
      %v9625 = vadd.f32 %v9456, %v9624
      %9626 = vmatmul.bf16.gmra.mxu0 %v8836
      %v9627 = vpop.f32.mrf.mxu0
      %v9628 = vadd.f32 %v9459, %v9627
      %v9629 = vpop.f32.mrf.mxu0
      %v9630 = vadd.f32 %v9461, %v9629
      %9631 = vmatmul.bf16.gmra.mxu0 %v8839
      %v9632 = vpop.f32.mrf.mxu0
      %v9633 = vadd.f32 %v9464, %v9632
      %v9634 = vpop.f32.mrf.mxu0
      %v9635 = vadd.f32 %v9466, %v9634
      %9636 = vmatmul.bf16.gmra.mxu0 %v8842
      %v9637 = vpop.f32.mrf.mxu0
      %v9638 = vadd.f32 %v9469, %v9637
      %v9639 = vpop.f32.mrf.mxu0
      %v9640 = vadd.f32 %v9471, %v9639
      %9641 = vmatmul.bf16.gmra.mxu0 %v8845
      %v9642 = vpop.f32.mrf.mxu0
      %v9643 = vadd.f32 %v9474, %v9642
      %v9644 = vpop.f32.mrf.mxu0
      %v9645 = vadd.f32 %v9476, %v9644
      %9646 = vdwg.mxu0
      %9647 = vmatpush.bf16.msra.mxu0 %v9059
      %9648 = vmatpush.bf16.msra.mxu0 %v9057
      %9649 = vmatpush.bf16.msra.mxu0 %v9055
      %9650 = vmatpush.bf16.msra.mxu0 %v9053
      %9651 = vmatpush.bf16.msra.mxu0 %v9051
      %9652 = vmatpush.bf16.msra.mxu0 %v9049
      %9653 = vmatpush.bf16.msra.mxu0 %v9047
      %9654 = vmatpush.bf16.msra.mxu0 %v9045
      %9655 = vmatmul.bf16.gmra.mxu0 %v8750
      %v9656 = vpop.f32.mrf.mxu0
      %v9657 = vadd.f32 %v8897, %v9656
      %v9658 = vpop.f32.mrf.mxu0
      %v9659 = vadd.f32 %v8897, %v9658
      %9660 = vmatmul.bf16.gmra.mxu0 %v8753
      %v9661 = vpop.f32.mrf.mxu0
      %v9662 = vadd.f32 %v8897, %v9661
      %v9663 = vpop.f32.mrf.mxu0
      %v9664 = vadd.f32 %v8897, %v9663
      %9665 = vmatmul.bf16.gmra.mxu0 %v8756
      %v9666 = vpop.f32.mrf.mxu0
      %v9667 = vadd.f32 %v8897, %v9666
      %v9668 = vpop.f32.mrf.mxu0
      %v9669 = vadd.f32 %v8897, %v9668
      %9670 = vmatmul.bf16.gmra.mxu0 %v8759
      %v9671 = vpop.f32.mrf.mxu0
      %v9672 = vadd.f32 %v8897, %v9671
      %v9673 = vpop.f32.mrf.mxu0
      %v9674 = vadd.f32 %v8897, %v9673
      %9675 = vmatmul.bf16.gmra.mxu0 %v8762
      %v9676 = vpop.f32.mrf.mxu0
      %v9677 = vadd.f32 %v8897, %v9676
      %v9678 = vpop.f32.mrf.mxu0
      %v9679 = vadd.f32 %v8897, %v9678
      %9680 = vmatmul.bf16.gmra.mxu0 %v8765
      %v9681 = vpop.f32.mrf.mxu0
      %v9682 = vadd.f32 %v8897, %v9681
      %v9683 = vpop.f32.mrf.mxu0
      %v9684 = vadd.f32 %v8897, %v9683
      %9685 = vmatmul.bf16.gmra.mxu0 %v8768
      %v9686 = vpop.f32.mrf.mxu0
      %v9687 = vadd.f32 %v8897, %v9686
      %v9688 = vpop.f32.mrf.mxu0
      %v9689 = vadd.f32 %v8897, %v9688
      %9690 = vmatmul.bf16.gmra.mxu0 %v8771
      %v9691 = vpop.f32.mrf.mxu0
      %v9692 = vadd.f32 %v8897, %v9691
      %v9693 = vpop.f32.mrf.mxu0
      %v9694 = vadd.f32 %v8897, %v9693
      %9695 = vmatmul.bf16.gmra.mxu0 %v8774
      %v9696 = vpop.f32.mrf.mxu0
      %v9697 = vadd.f32 %v8897, %v9696
      %v9698 = vpop.f32.mrf.mxu0
      %v9699 = vadd.f32 %v8897, %v9698
      %9700 = vmatmul.bf16.gmra.mxu0 %v8777
      %v9701 = vpop.f32.mrf.mxu0
      %v9702 = vadd.f32 %v8897, %v9701
      %v9703 = vpop.f32.mrf.mxu0
      %v9704 = vadd.f32 %v8897, %v9703
      %9705 = vmatmul.bf16.gmra.mxu0 %v8780
      %v9706 = vpop.f32.mrf.mxu0
      %v9707 = vadd.f32 %v8897, %v9706
      %v9708 = vpop.f32.mrf.mxu0
      %v9709 = vadd.f32 %v8897, %v9708
      %9710 = vmatmul.bf16.gmra.mxu0 %v8783
      %v9711 = vpop.f32.mrf.mxu0
      %v9712 = vadd.f32 %v8897, %v9711
      %v9713 = vpop.f32.mrf.mxu0
      %v9714 = vadd.f32 %v8897, %v9713
      %9715 = vmatmul.bf16.gmra.mxu0 %v8786
      %v9716 = vpop.f32.mrf.mxu0
      %v9717 = vadd.f32 %v8897, %v9716
      %v9718 = vpop.f32.mrf.mxu0
      %v9719 = vadd.f32 %v8897, %v9718
      %9720 = vmatmul.bf16.gmra.mxu0 %v8789
      %v9721 = vpop.f32.mrf.mxu0
      %v9722 = vadd.f32 %v8897, %v9721
      %v9723 = vpop.f32.mrf.mxu0
      %v9724 = vadd.f32 %v8897, %v9723
      %9725 = vmatmul.bf16.gmra.mxu0 %v8792
      %v9726 = vpop.f32.mrf.mxu0
      %v9727 = vadd.f32 %v8897, %v9726
      %v9728 = vpop.f32.mrf.mxu0
      %v9729 = vadd.f32 %v8897, %v9728
      %9730 = vmatmul.bf16.gmra.mxu0 %v8795
      %v9731 = vpop.f32.mrf.mxu0
      %v9732 = vadd.f32 %v8897, %v9731
      %v9733 = vpop.f32.mrf.mxu0
      %v9734 = vadd.f32 %v8897, %v9733
      %9735 = vmatmul.bf16.gmra.mxu0 %v8798
      %v9736 = vpop.f32.mrf.mxu0
      %v9737 = vadd.f32 %v8897, %v9736
      %v9738 = vpop.f32.mrf.mxu0
      %v9739 = vadd.f32 %v8897, %v9738
      %9740 = vmatmul.bf16.gmra.mxu0 %v8801
      %v9741 = vpop.f32.mrf.mxu0
      %v9742 = vadd.f32 %v8897, %v9741
      %v9743 = vpop.f32.mrf.mxu0
      %v9744 = vadd.f32 %v8897, %v9743
      %9745 = vmatmul.bf16.gmra.mxu0 %v8804
      %v9746 = vpop.f32.mrf.mxu0
      %v9747 = vadd.f32 %v8897, %v9746
      %v9748 = vpop.f32.mrf.mxu0
      %v9749 = vadd.f32 %v8897, %v9748
      %9750 = vmatmul.bf16.gmra.mxu0 %v8807
      %v9751 = vpop.f32.mrf.mxu0
      %v9752 = vadd.f32 %v8897, %v9751
      %v9753 = vpop.f32.mrf.mxu0
      %v9754 = vadd.f32 %v8897, %v9753
      %9755 = vmatmul.bf16.gmra.mxu0 %v8810
      %v9756 = vpop.f32.mrf.mxu0
      %v9757 = vadd.f32 %v8897, %v9756
      %v9758 = vpop.f32.mrf.mxu0
      %v9759 = vadd.f32 %v8897, %v9758
      %9760 = vmatmul.bf16.gmra.mxu0 %v8813
      %v9761 = vpop.f32.mrf.mxu0
      %v9762 = vadd.f32 %v8897, %v9761
      %v9763 = vpop.f32.mrf.mxu0
      %v9764 = vadd.f32 %v8897, %v9763
      %9765 = vmatmul.bf16.gmra.mxu0 %v8816
      %v9766 = vpop.f32.mrf.mxu0
      %v9767 = vadd.f32 %v8897, %v9766
      %v9768 = vpop.f32.mrf.mxu0
      %v9769 = vadd.f32 %v8897, %v9768
      %9770 = vmatmul.bf16.gmra.mxu0 %v8819
      %v9771 = vpop.f32.mrf.mxu0
      %v9772 = vadd.f32 %v8897, %v9771
      %v9773 = vpop.f32.mrf.mxu0
      %v9774 = vadd.f32 %v8897, %v9773
      %9775 = vmatmul.bf16.gmra.mxu0 %v8822
      %v9776 = vpop.f32.mrf.mxu0
      %v9777 = vadd.f32 %v8897, %v9776
      %v9778 = vpop.f32.mrf.mxu0
      %v9779 = vadd.f32 %v8897, %v9778
      %9780 = vmatmul.bf16.gmra.mxu0 %v8825
      %v9781 = vpop.f32.mrf.mxu0
      %v9782 = vadd.f32 %v8897, %v9781
      %v9783 = vpop.f32.mrf.mxu0
      %v9784 = vadd.f32 %v8897, %v9783
      %9785 = vmatmul.bf16.gmra.mxu0 %v8828
      %v9786 = vpop.f32.mrf.mxu0
      %v9787 = vadd.f32 %v8897, %v9786
      %v9788 = vpop.f32.mrf.mxu0
      %v9789 = vadd.f32 %v8897, %v9788
      %9790 = vmatmul.bf16.gmra.mxu0 %v8831
      %v9791 = vpop.f32.mrf.mxu0
      %v9792 = vadd.f32 %v8897, %v9791
      %v9793 = vpop.f32.mrf.mxu0
      %v9794 = vadd.f32 %v8897, %v9793
      %9795 = vmatmul.bf16.gmra.mxu0 %v8834
      %v9796 = vpop.f32.mrf.mxu0
      %v9797 = vadd.f32 %v8897, %v9796
      %v9798 = vpop.f32.mrf.mxu0
      %v9799 = vadd.f32 %v8897, %v9798
      %9800 = vmatmul.bf16.gmra.mxu0 %v8837
      %v9801 = vpop.f32.mrf.mxu0
      %v9802 = vadd.f32 %v8897, %v9801
      %v9803 = vpop.f32.mrf.mxu0
      %v9804 = vadd.f32 %v8897, %v9803
      %9805 = vmatmul.bf16.gmra.mxu0 %v8840
      %v9806 = vpop.f32.mrf.mxu0
      %v9807 = vadd.f32 %v8897, %v9806
      %v9808 = vpop.f32.mrf.mxu0
      %v9809 = vadd.f32 %v8897, %v9808
      %9810 = vmatmul.bf16.gmra.mxu0 %v8843
      %v9811 = vpop.f32.mrf.mxu0
      %v9812 = vadd.f32 %v8897, %v9811
      %v9813 = vpop.f32.mrf.mxu0
      %v9814 = vadd.f32 %v8897, %v9813
      %9815 = vdwg.mxu0
      %9816 = vmatpush.bf16.msra.mxu0 %v9075
      %9817 = vmatpush.bf16.msra.mxu0 %v9073
      %9818 = vmatpush.bf16.msra.mxu0 %v9071
      %9819 = vmatpush.bf16.msra.mxu0 %v9069
      %9820 = vmatpush.bf16.msra.mxu0 %v9067
      %9821 = vmatpush.bf16.msra.mxu0 %v9065
      %9822 = vmatpush.bf16.msra.mxu0 %v9063
      %9823 = vmatpush.bf16.msra.mxu0 %v9061
      %9824 = vmatmul.bf16.gmra.mxu0 %v8751
      %v9825 = vpop.f32.mrf.mxu0
      %v9826 = vadd.f32 %v9657, %v9825
      %v9827 = vpop.f32.mrf.mxu0
      %v9828 = vadd.f32 %v9659, %v9827
      %9829 = vmatmul.bf16.gmra.mxu0 %v8754
      %v9830 = vpop.f32.mrf.mxu0
      %v9831 = vadd.f32 %v9662, %v9830
      %v9832 = vpop.f32.mrf.mxu0
      %v9833 = vadd.f32 %v9664, %v9832
      %9834 = vmatmul.bf16.gmra.mxu0 %v8757
      %v9835 = vpop.f32.mrf.mxu0
      %v9836 = vadd.f32 %v9667, %v9835
      %v9837 = vpop.f32.mrf.mxu0
      %v9838 = vadd.f32 %v9669, %v9837
      %9839 = vmatmul.bf16.gmra.mxu0 %v8760
      %v9840 = vpop.f32.mrf.mxu0
      %v9841 = vadd.f32 %v9672, %v9840
      %v9842 = vpop.f32.mrf.mxu0
      %v9843 = vadd.f32 %v9674, %v9842
      %9844 = vmatmul.bf16.gmra.mxu0 %v8763
      %v9845 = vpop.f32.mrf.mxu0
      %v9846 = vadd.f32 %v9677, %v9845
      %v9847 = vpop.f32.mrf.mxu0
      %v9848 = vadd.f32 %v9679, %v9847
      %9849 = vmatmul.bf16.gmra.mxu0 %v8766
      %v9850 = vpop.f32.mrf.mxu0
      %v9851 = vadd.f32 %v9682, %v9850
      %v9852 = vpop.f32.mrf.mxu0
      %v9853 = vadd.f32 %v9684, %v9852
      %9854 = vmatmul.bf16.gmra.mxu0 %v8769
      %v9855 = vpop.f32.mrf.mxu0
      %v9856 = vadd.f32 %v9687, %v9855
      %v9857 = vpop.f32.mrf.mxu0
      %v9858 = vadd.f32 %v9689, %v9857
      %9859 = vmatmul.bf16.gmra.mxu0 %v8772
      %v9860 = vpop.f32.mrf.mxu0
      %v9861 = vadd.f32 %v9692, %v9860
      %v9862 = vpop.f32.mrf.mxu0
      %v9863 = vadd.f32 %v9694, %v9862
      %9864 = vmatmul.bf16.gmra.mxu0 %v8775
      %v9865 = vpop.f32.mrf.mxu0
      %v9866 = vadd.f32 %v9697, %v9865
      %v9867 = vpop.f32.mrf.mxu0
      %v9868 = vadd.f32 %v9699, %v9867
      %9869 = vmatmul.bf16.gmra.mxu0 %v8778
      %v9870 = vpop.f32.mrf.mxu0
      %v9871 = vadd.f32 %v9702, %v9870
      %v9872 = vpop.f32.mrf.mxu0
      %v9873 = vadd.f32 %v9704, %v9872
      %9874 = vmatmul.bf16.gmra.mxu0 %v8781
      %v9875 = vpop.f32.mrf.mxu0
      %v9876 = vadd.f32 %v9707, %v9875
      %v9877 = vpop.f32.mrf.mxu0
      %v9878 = vadd.f32 %v9709, %v9877
      %9879 = vmatmul.bf16.gmra.mxu0 %v8784
      %v9880 = vpop.f32.mrf.mxu0
      %v9881 = vadd.f32 %v9712, %v9880
      %v9882 = vpop.f32.mrf.mxu0
      %v9883 = vadd.f32 %v9714, %v9882
      %9884 = vmatmul.bf16.gmra.mxu0 %v8787
      %v9885 = vpop.f32.mrf.mxu0
      %v9886 = vadd.f32 %v9717, %v9885
      %v9887 = vpop.f32.mrf.mxu0
      %v9888 = vadd.f32 %v9719, %v9887
      %9889 = vmatmul.bf16.gmra.mxu0 %v8790
      %v9890 = vpop.f32.mrf.mxu0
      %v9891 = vadd.f32 %v9722, %v9890
      %v9892 = vpop.f32.mrf.mxu0
      %v9893 = vadd.f32 %v9724, %v9892
      %9894 = vmatmul.bf16.gmra.mxu0 %v8793
      %v9895 = vpop.f32.mrf.mxu0
      %v9896 = vadd.f32 %v9727, %v9895
      %v9897 = vpop.f32.mrf.mxu0
      %v9898 = vadd.f32 %v9729, %v9897
      %9899 = vmatmul.bf16.gmra.mxu0 %v8796
      %v9900 = vpop.f32.mrf.mxu0
      %v9901 = vadd.f32 %v9732, %v9900
      %v9902 = vpop.f32.mrf.mxu0
      %v9903 = vadd.f32 %v9734, %v9902
      %9904 = vmatmul.bf16.gmra.mxu0 %v8799
      %v9905 = vpop.f32.mrf.mxu0
      %v9906 = vadd.f32 %v9737, %v9905
      %v9907 = vpop.f32.mrf.mxu0
      %v9908 = vadd.f32 %v9739, %v9907
      %9909 = vmatmul.bf16.gmra.mxu0 %v8802
      %v9910 = vpop.f32.mrf.mxu0
      %v9911 = vadd.f32 %v9742, %v9910
      %v9912 = vpop.f32.mrf.mxu0
      %v9913 = vadd.f32 %v9744, %v9912
      %9914 = vmatmul.bf16.gmra.mxu0 %v8805
      %v9915 = vpop.f32.mrf.mxu0
      %v9916 = vadd.f32 %v9747, %v9915
      %v9917 = vpop.f32.mrf.mxu0
      %v9918 = vadd.f32 %v9749, %v9917
      %9919 = vmatmul.bf16.gmra.mxu0 %v8808
      %v9920 = vpop.f32.mrf.mxu0
      %v9921 = vadd.f32 %v9752, %v9920
      %v9922 = vpop.f32.mrf.mxu0
      %v9923 = vadd.f32 %v9754, %v9922
      %9924 = vmatmul.bf16.gmra.mxu0 %v8811
      %v9925 = vpop.f32.mrf.mxu0
      %v9926 = vadd.f32 %v9757, %v9925
      %v9927 = vpop.f32.mrf.mxu0
      %v9928 = vadd.f32 %v9759, %v9927
      %9929 = vmatmul.bf16.gmra.mxu0 %v8814
      %v9930 = vpop.f32.mrf.mxu0
      %v9931 = vadd.f32 %v9762, %v9930
      %v9932 = vpop.f32.mrf.mxu0
      %v9933 = vadd.f32 %v9764, %v9932
      %9934 = vmatmul.bf16.gmra.mxu0 %v8817
      %v9935 = vpop.f32.mrf.mxu0
      %v9936 = vadd.f32 %v9767, %v9935
      %v9937 = vpop.f32.mrf.mxu0
      %v9938 = vadd.f32 %v9769, %v9937
      %9939 = vmatmul.bf16.gmra.mxu0 %v8820
      %v9940 = vpop.f32.mrf.mxu0
      %v9941 = vadd.f32 %v9772, %v9940
      %v9942 = vpop.f32.mrf.mxu0
      %v9943 = vadd.f32 %v9774, %v9942
      %9944 = vmatmul.bf16.gmra.mxu0 %v8823
      %v9945 = vpop.f32.mrf.mxu0
      %v9946 = vadd.f32 %v9777, %v9945
      %v9947 = vpop.f32.mrf.mxu0
      %v9948 = vadd.f32 %v9779, %v9947
      %9949 = vmatmul.bf16.gmra.mxu0 %v8826
      %v9950 = vpop.f32.mrf.mxu0
      %v9951 = vadd.f32 %v9782, %v9950
      %v9952 = vpop.f32.mrf.mxu0
      %v9953 = vadd.f32 %v9784, %v9952
      %9954 = vmatmul.bf16.gmra.mxu0 %v8829
      %v9955 = vpop.f32.mrf.mxu0
      %v9956 = vadd.f32 %v9787, %v9955
      %v9957 = vpop.f32.mrf.mxu0
      %v9958 = vadd.f32 %v9789, %v9957
      %9959 = vmatmul.bf16.gmra.mxu0 %v8832
      %v9960 = vpop.f32.mrf.mxu0
      %v9961 = vadd.f32 %v9792, %v9960
      %v9962 = vpop.f32.mrf.mxu0
      %v9963 = vadd.f32 %v9794, %v9962
      %9964 = vmatmul.bf16.gmra.mxu0 %v8835
      %v9965 = vpop.f32.mrf.mxu0
      %v9966 = vadd.f32 %v9797, %v9965
      %v9967 = vpop.f32.mrf.mxu0
      %v9968 = vadd.f32 %v9799, %v9967
      %9969 = vmatmul.bf16.gmra.mxu0 %v8838
      %v9970 = vpop.f32.mrf.mxu0
      %v9971 = vadd.f32 %v9802, %v9970
      %v9972 = vpop.f32.mrf.mxu0
      %v9973 = vadd.f32 %v9804, %v9972
      %9974 = vmatmul.bf16.gmra.mxu0 %v8841
      %v9975 = vpop.f32.mrf.mxu0
      %v9976 = vadd.f32 %v9807, %v9975
      %v9977 = vpop.f32.mrf.mxu0
      %v9978 = vadd.f32 %v9809, %v9977
      %9979 = vmatmul.bf16.gmra.mxu0 %v8844
      %v9980 = vpop.f32.mrf.mxu0
      %v9981 = vadd.f32 %v9812, %v9980
      %v9982 = vpop.f32.mrf.mxu0
      %v9983 = vadd.f32 %v9814, %v9982
      %9984 = vdwg.mxu0
      %9985 = vmatpush.bf16.msra.mxu0 %v9091
      %9986 = vmatpush.bf16.msra.mxu0 %v9089
      %9987 = vmatpush.bf16.msra.mxu0 %v9087
      %9988 = vmatpush.bf16.msra.mxu0 %v9085
      %9989 = vmatpush.bf16.msra.mxu0 %v9083
      %9990 = vmatpush.bf16.msra.mxu0 %v9081
      %9991 = vmatpush.bf16.msra.mxu0 %v9079
      %9992 = vmatpush.bf16.msra.mxu0 %v9077
      %9993 = vmatmul.bf16.gmra.mxu0 %v8752
      %v9994 = vpop.f32.mrf.mxu0
      %v9995 = vadd.f32 %v9826, %v9994
      %v9996 = vpop.f32.mrf.mxu0
      %v9997 = vadd.f32 %v9828, %v9996
      %9998 = vmatmul.bf16.gmra.mxu0 %v8755
      %v9999 = vpop.f32.mrf.mxu0
      %v10000 = vadd.f32 %v9831, %v9999
      %v10001 = vpop.f32.mrf.mxu0
      %v10002 = vadd.f32 %v9833, %v10001
      %10003 = vmatmul.bf16.gmra.mxu0 %v8758
      %v10004 = vpop.f32.mrf.mxu0
      %v10005 = vadd.f32 %v9836, %v10004
      %v10006 = vpop.f32.mrf.mxu0
      %v10007 = vadd.f32 %v9838, %v10006
      %10008 = vmatmul.bf16.gmra.mxu0 %v8761
      %v10009 = vpop.f32.mrf.mxu0
      %v10010 = vadd.f32 %v9841, %v10009
      %v10011 = vpop.f32.mrf.mxu0
      %v10012 = vadd.f32 %v9843, %v10011
      %10013 = vmatmul.bf16.gmra.mxu0 %v8764
      %v10014 = vpop.f32.mrf.mxu0
      %v10015 = vadd.f32 %v9846, %v10014
      %v10016 = vpop.f32.mrf.mxu0
      %v10017 = vadd.f32 %v9848, %v10016
      %10018 = vmatmul.bf16.gmra.mxu0 %v8767
      %v10019 = vpop.f32.mrf.mxu0
      %v10020 = vadd.f32 %v9851, %v10019
      %v10021 = vpop.f32.mrf.mxu0
      %v10022 = vadd.f32 %v9853, %v10021
      %10023 = vmatmul.bf16.gmra.mxu0 %v8770
      %v10024 = vpop.f32.mrf.mxu0
      %v10025 = vadd.f32 %v9856, %v10024
      %v10026 = vpop.f32.mrf.mxu0
      %v10027 = vadd.f32 %v9858, %v10026
      %10028 = vmatmul.bf16.gmra.mxu0 %v8773
      %v10029 = vpop.f32.mrf.mxu0
      %v10030 = vadd.f32 %v9861, %v10029
      %v10031 = vpop.f32.mrf.mxu0
      %v10032 = vadd.f32 %v9863, %v10031
      %10033 = vmatmul.bf16.gmra.mxu0 %v8776
      %v10034 = vpop.f32.mrf.mxu0
      %v10035 = vadd.f32 %v9866, %v10034
      %v10036 = vpop.f32.mrf.mxu0
      %v10037 = vadd.f32 %v9868, %v10036
      %10038 = vmatmul.bf16.gmra.mxu0 %v8779
      %v10039 = vpop.f32.mrf.mxu0
      %v10040 = vadd.f32 %v9871, %v10039
      %v10041 = vpop.f32.mrf.mxu0
      %v10042 = vadd.f32 %v9873, %v10041
      %10043 = vmatmul.bf16.gmra.mxu0 %v8782
      %v10044 = vpop.f32.mrf.mxu0
      %v10045 = vadd.f32 %v9876, %v10044
      %v10046 = vpop.f32.mrf.mxu0
      %v10047 = vadd.f32 %v9878, %v10046
      %10048 = vmatmul.bf16.gmra.mxu0 %v8785
      %v10049 = vpop.f32.mrf.mxu0
      %v10050 = vadd.f32 %v9881, %v10049
      %v10051 = vpop.f32.mrf.mxu0
      %v10052 = vadd.f32 %v9883, %v10051
      %10053 = vmatmul.bf16.gmra.mxu0 %v8788
      %v10054 = vpop.f32.mrf.mxu0
      %v10055 = vadd.f32 %v9886, %v10054
      %v10056 = vpop.f32.mrf.mxu0
      %v10057 = vadd.f32 %v9888, %v10056
      %10058 = vmatmul.bf16.gmra.mxu0 %v8791
      %v10059 = vpop.f32.mrf.mxu0
      %v10060 = vadd.f32 %v9891, %v10059
      %v10061 = vpop.f32.mrf.mxu0
      %v10062 = vadd.f32 %v9893, %v10061
      %10063 = vmatmul.bf16.gmra.mxu0 %v8794
      %v10064 = vpop.f32.mrf.mxu0
      %v10065 = vadd.f32 %v9896, %v10064
      %v10066 = vpop.f32.mrf.mxu0
      %v10067 = vadd.f32 %v9898, %v10066
      %10068 = vmatmul.bf16.gmra.mxu0 %v8797
      %v10069 = vpop.f32.mrf.mxu0
      %v10070 = vadd.f32 %v9901, %v10069
      %v10071 = vpop.f32.mrf.mxu0
      %v10072 = vadd.f32 %v9903, %v10071
      %10073 = vmatmul.bf16.gmra.mxu0 %v8800
      %v10074 = vpop.f32.mrf.mxu0
      %v10075 = vadd.f32 %v9906, %v10074
      %v10076 = vpop.f32.mrf.mxu0
      %v10077 = vadd.f32 %v9908, %v10076
      %10078 = vmatmul.bf16.gmra.mxu0 %v8803
      %v10079 = vpop.f32.mrf.mxu0
      %v10080 = vadd.f32 %v9911, %v10079
      %v10081 = vpop.f32.mrf.mxu0
      %v10082 = vadd.f32 %v9913, %v10081
      %10083 = vmatmul.bf16.gmra.mxu0 %v8806
      %v10084 = vpop.f32.mrf.mxu0
      %v10085 = vadd.f32 %v9916, %v10084
      %v10086 = vpop.f32.mrf.mxu0
      %v10087 = vadd.f32 %v9918, %v10086
      %10088 = vmatmul.bf16.gmra.mxu0 %v8809
      %v10089 = vpop.f32.mrf.mxu0
      %v10090 = vadd.f32 %v9921, %v10089
      %v10091 = vpop.f32.mrf.mxu0
      %v10092 = vadd.f32 %v9923, %v10091
      %10093 = vmatmul.bf16.gmra.mxu0 %v8812
      %v10094 = vpop.f32.mrf.mxu0
      %v10095 = vadd.f32 %v9926, %v10094
      %v10096 = vpop.f32.mrf.mxu0
      %v10097 = vadd.f32 %v9928, %v10096
      %10098 = vmatmul.bf16.gmra.mxu0 %v8815
      %v10099 = vpop.f32.mrf.mxu0
      %v10100 = vadd.f32 %v9931, %v10099
      %v10101 = vpop.f32.mrf.mxu0
      %v10102 = vadd.f32 %v9933, %v10101
      %10103 = vmatmul.bf16.gmra.mxu0 %v8818
      %v10104 = vpop.f32.mrf.mxu0
      %v10105 = vadd.f32 %v9936, %v10104
      %v10106 = vpop.f32.mrf.mxu0
      %v10107 = vadd.f32 %v9938, %v10106
      %10108 = vmatmul.bf16.gmra.mxu0 %v8821
      %v10109 = vpop.f32.mrf.mxu0
      %v10110 = vadd.f32 %v9941, %v10109
      %v10111 = vpop.f32.mrf.mxu0
      %v10112 = vadd.f32 %v9943, %v10111
      %10113 = vmatmul.bf16.gmra.mxu0 %v8824
      %v10114 = vpop.f32.mrf.mxu0
      %v10115 = vadd.f32 %v9946, %v10114
      %v10116 = vpop.f32.mrf.mxu0
      %v10117 = vadd.f32 %v9948, %v10116
      %10118 = vmatmul.bf16.gmra.mxu0 %v8827
      %v10119 = vpop.f32.mrf.mxu0
      %v10120 = vadd.f32 %v9951, %v10119
      %v10121 = vpop.f32.mrf.mxu0
      %v10122 = vadd.f32 %v9953, %v10121
      %10123 = vmatmul.bf16.gmra.mxu0 %v8830
      %v10124 = vpop.f32.mrf.mxu0
      %v10125 = vadd.f32 %v9956, %v10124
      %v10126 = vpop.f32.mrf.mxu0
      %v10127 = vadd.f32 %v9958, %v10126
      %10128 = vmatmul.bf16.gmra.mxu0 %v8833
      %v10129 = vpop.f32.mrf.mxu0
      %v10130 = vadd.f32 %v9961, %v10129
      %v10131 = vpop.f32.mrf.mxu0
      %v10132 = vadd.f32 %v9963, %v10131
      %10133 = vmatmul.bf16.gmra.mxu0 %v8836
      %v10134 = vpop.f32.mrf.mxu0
      %v10135 = vadd.f32 %v9966, %v10134
      %v10136 = vpop.f32.mrf.mxu0
      %v10137 = vadd.f32 %v9968, %v10136
      %10138 = vmatmul.bf16.gmra.mxu0 %v8839
      %v10139 = vpop.f32.mrf.mxu0
      %v10140 = vadd.f32 %v9971, %v10139
      %v10141 = vpop.f32.mrf.mxu0
      %v10142 = vadd.f32 %v9973, %v10141
      %10143 = vmatmul.bf16.gmra.mxu0 %v8842
      %v10144 = vpop.f32.mrf.mxu0
      %v10145 = vadd.f32 %v9976, %v10144
      %v10146 = vpop.f32.mrf.mxu0
      %v10147 = vadd.f32 %v9978, %v10146
      %10148 = vmatmul.bf16.gmra.mxu0 %v8845
      %v10149 = vpop.f32.mrf.mxu0
      %v10150 = vadd.f32 %v9981, %v10149
      %v10151 = vpop.f32.mrf.mxu0
      %v10152 = vadd.f32 %v9983, %v10151
      %10153 = vdwg.mxu0
      %v10154 = vmax.f32 %v9488, 0.0
      %v10155 = vmax.f32 %v9995, 0.0
      %v10156 = vmax.f32 %v9490, 0.0
      %v10157 = vmax.f32 %v9997, 0.0
      %v10158 = vmax.f32 %v9493, 0.0
      %v10159 = vmax.f32 %v10000, 0.0
      %v10160 = vmax.f32 %v9495, 0.0
      %v10161 = vmax.f32 %v10002, 0.0
      %v10162 = vmax.f32 %v9498, 0.0
      %v10163 = vmax.f32 %v10005, 0.0
      %v10164 = vmax.f32 %v9500, 0.0
      %v10165 = vmax.f32 %v10007, 0.0
      %v10166 = vmax.f32 %v9503, 0.0
      %v10167 = vmax.f32 %v10010, 0.0
      %v10168 = vmax.f32 %v9505, 0.0
      %v10169 = vmax.f32 %v10012, 0.0
      %v10170 = vmax.f32 %v9508, 0.0
      %v10171 = vmax.f32 %v10015, 0.0
      %v10172 = vmax.f32 %v9510, 0.0
      %v10173 = vmax.f32 %v10017, 0.0
      %v10174 = vmax.f32 %v9513, 0.0
      %v10175 = vmax.f32 %v10020, 0.0
      %v10176 = vmax.f32 %v9515, 0.0
      %v10177 = vmax.f32 %v10022, 0.0
      %v10178 = vmax.f32 %v9518, 0.0
      %v10179 = vmax.f32 %v10025, 0.0
      %v10180 = vmax.f32 %v9520, 0.0
      %v10181 = vmax.f32 %v10027, 0.0
      %v10182 = vmax.f32 %v9523, 0.0
      %v10183 = vmax.f32 %v10030, 0.0
      %v10184 = vmax.f32 %v9525, 0.0
      %v10185 = vmax.f32 %v10032, 0.0
      %v10186 = vmax.f32 %v9528, 0.0
      %v10187 = vmax.f32 %v10035, 0.0
      %v10188 = vmax.f32 %v9530, 0.0
      %v10189 = vmax.f32 %v10037, 0.0
      %v10190 = vmax.f32 %v9533, 0.0
      %v10191 = vmax.f32 %v10040, 0.0
      %v10192 = vmax.f32 %v9535, 0.0
      %v10193 = vmax.f32 %v10042, 0.0
      %v10194 = vmax.f32 %v9538, 0.0
      %v10195 = vmax.f32 %v10045, 0.0
      %v10196 = vmax.f32 %v9540, 0.0
      %v10197 = vmax.f32 %v10047, 0.0
      %v10198 = vmax.f32 %v9543, 0.0
      %v10199 = vmax.f32 %v10050, 0.0
      %v10200 = vmax.f32 %v9545, 0.0
      %v10201 = vmax.f32 %v10052, 0.0
      %v10202 = vmax.f32 %v9548, 0.0
      %v10203 = vmax.f32 %v10055, 0.0
      %v10204 = vmax.f32 %v9550, 0.0
      %v10205 = vmax.f32 %v10057, 0.0
      %v10206 = vmax.f32 %v9553, 0.0
      %v10207 = vmax.f32 %v10060, 0.0
      %v10208 = vmax.f32 %v9555, 0.0
      %v10209 = vmax.f32 %v10062, 0.0
      %v10210 = vmax.f32 %v9558, 0.0
      %v10211 = vmax.f32 %v10065, 0.0
      %v10212 = vmax.f32 %v9560, 0.0
      %v10213 = vmax.f32 %v10067, 0.0
      %v10214 = vmax.f32 %v9563, 0.0
      %v10215 = vmax.f32 %v10070, 0.0
      %v10216 = vmax.f32 %v9565, 0.0
      %v10217 = vmax.f32 %v10072, 0.0
      %v10218 = vmax.f32 %v9568, 0.0
      %v10219 = vmax.f32 %v10075, 0.0
      %v10220 = vmax.f32 %v9570, 0.0
      %v10221 = vmax.f32 %v10077, 0.0
      %v10222 = vmax.f32 %v9573, 0.0
      %v10223 = vmax.f32 %v10080, 0.0
      %v10224 = vmax.f32 %v9575, 0.0
      %v10225 = vmax.f32 %v10082, 0.0
      %v10226 = vmax.f32 %v9578, 0.0
      %v10227 = vmax.f32 %v10085, 0.0
      %v10228 = vmax.f32 %v9580, 0.0
      %v10229 = vmax.f32 %v10087, 0.0
      %v10230 = vmax.f32 %v9583, 0.0
      %v10231 = vmax.f32 %v10090, 0.0
      %v10232 = vmax.f32 %v9585, 0.0
      %v10233 = vmax.f32 %v10092, 0.0
      %v10234 = vmax.f32 %v9588, 0.0
      %v10235 = vmax.f32 %v10095, 0.0
      %v10236 = vmax.f32 %v9590, 0.0
      %v10237 = vmax.f32 %v10097, 0.0
      %v10238 = vmax.f32 %v9593, 0.0
      %v10239 = vmax.f32 %v10100, 0.0
      %v10240 = vmax.f32 %v9595, 0.0
      %v10241 = vmax.f32 %v10102, 0.0
      %v10242 = vmax.f32 %v9598, 0.0
      %v10243 = vmax.f32 %v10105, 0.0
      %v10244 = vmax.f32 %v9600, 0.0
      %v10245 = vmax.f32 %v10107, 0.0
      %v10246 = vmax.f32 %v9603, 0.0
      %v10247 = vmax.f32 %v10110, 0.0
      %v10248 = vmax.f32 %v9605, 0.0
      %v10249 = vmax.f32 %v10112, 0.0
      %v10250 = vmax.f32 %v9608, 0.0
      %v10251 = vmax.f32 %v10115, 0.0
      %v10252 = vmax.f32 %v9610, 0.0
      %v10253 = vmax.f32 %v10117, 0.0
      %v10254 = vmax.f32 %v9613, 0.0
      %v10255 = vmax.f32 %v10120, 0.0
      %v10256 = vmax.f32 %v9615, 0.0
      %v10257 = vmax.f32 %v10122, 0.0
      %v10258 = vmax.f32 %v9618, 0.0
      %v10259 = vmax.f32 %v10125, 0.0
      %v10260 = vmax.f32 %v9620, 0.0
      %v10261 = vmax.f32 %v10127, 0.0
      %v10262 = vmax.f32 %v9623, 0.0
      %v10263 = vmax.f32 %v10130, 0.0
      %v10264 = vmax.f32 %v9625, 0.0
      %v10265 = vmax.f32 %v10132, 0.0
      %v10266 = vmax.f32 %v9628, 0.0
      %v10267 = vmax.f32 %v10135, 0.0
      %v10268 = vmax.f32 %v9630, 0.0
      %v10269 = vmax.f32 %v10137, 0.0
      %v10270 = vmax.f32 %v9633, 0.0
      %v10271 = vmax.f32 %v10140, 0.0
      %v10272 = vmax.f32 %v9635, 0.0
      %v10273 = vmax.f32 %v10142, 0.0
      %v10274 = vmax.f32 %v9638, 0.0
      %v10275 = vmax.f32 %v10145, 0.0
      %v10276 = vmax.f32 %v9640, 0.0
      %v10277 = vmax.f32 %v10147, 0.0
      %v10278 = vmax.f32 %v9643, 0.0
      %v10279 = vmax.f32 %v10150, 0.0
      %v10280 = vmax.f32 %v9645, 0.0
      %v10281 = vmax.f32 %v10152, 0.0
      %v10282 = vpack.c.bf16 %v10156, %v10154
      %v10283 = vpack.c.bf16 %v10157, %v10155
      %v10284 = vpack.c.bf16 %v10160, %v10158
      %v10285 = vpack.c.bf16 %v10161, %v10159
      %v10286 = vpack.c.bf16 %v10164, %v10162
      %v10287 = vpack.c.bf16 %v10165, %v10163
      %v10288 = vpack.c.bf16 %v10168, %v10166
      %v10289 = vpack.c.bf16 %v10169, %v10167
      %v10290 = vpack.c.bf16 %v10172, %v10170
      %v10291 = vpack.c.bf16 %v10173, %v10171
      %v10292 = vpack.c.bf16 %v10176, %v10174
      %v10293 = vpack.c.bf16 %v10177, %v10175
      %v10294 = vpack.c.bf16 %v10180, %v10178
      %v10295 = vpack.c.bf16 %v10181, %v10179
      %v10296 = vpack.c.bf16 %v10184, %v10182
      %v10297 = vpack.c.bf16 %v10185, %v10183
      %v10298 = vpack.c.bf16 %v10188, %v10186
      %v10299 = vpack.c.bf16 %v10189, %v10187
      %v10300 = vpack.c.bf16 %v10192, %v10190
      %v10301 = vpack.c.bf16 %v10193, %v10191
      %v10302 = vpack.c.bf16 %v10196, %v10194
      %v10303 = vpack.c.bf16 %v10197, %v10195
      %v10304 = vpack.c.bf16 %v10200, %v10198
      %v10305 = vpack.c.bf16 %v10201, %v10199
      %v10306 = vpack.c.bf16 %v10204, %v10202
      %v10307 = vpack.c.bf16 %v10205, %v10203
      %v10308 = vpack.c.bf16 %v10208, %v10206
      %v10309 = vpack.c.bf16 %v10209, %v10207
      %v10310 = vpack.c.bf16 %v10212, %v10210
      %v10311 = vpack.c.bf16 %v10213, %v10211
      %v10312 = vpack.c.bf16 %v10216, %v10214
      %v10313 = vpack.c.bf16 %v10217, %v10215
      %v10314 = vpack.c.bf16 %v10220, %v10218
      %v10315 = vpack.c.bf16 %v10221, %v10219
      %v10316 = vpack.c.bf16 %v10224, %v10222
      %v10317 = vpack.c.bf16 %v10225, %v10223
      %v10318 = vpack.c.bf16 %v10228, %v10226
      %v10319 = vpack.c.bf16 %v10229, %v10227
      %v10320 = vpack.c.bf16 %v10232, %v10230
      %v10321 = vpack.c.bf16 %v10233, %v10231
      %v10322 = vpack.c.bf16 %v10236, %v10234
      %v10323 = vpack.c.bf16 %v10237, %v10235
      %v10324 = vpack.c.bf16 %v10240, %v10238
      %v10325 = vpack.c.bf16 %v10241, %v10239
      %v10326 = vpack.c.bf16 %v10244, %v10242
      %v10327 = vpack.c.bf16 %v10245, %v10243
      %v10328 = vpack.c.bf16 %v10248, %v10246
      %v10329 = vpack.c.bf16 %v10249, %v10247
      %v10330 = vpack.c.bf16 %v10252, %v10250
      %v10331 = vpack.c.bf16 %v10253, %v10251
      %v10332 = vpack.c.bf16 %v10256, %v10254
      %v10333 = vpack.c.bf16 %v10257, %v10255
      %v10334 = vpack.c.bf16 %v10260, %v10258
      %v10335 = vpack.c.bf16 %v10261, %v10259
      %v10336 = vpack.c.bf16 %v10264, %v10262
      %v10337 = vpack.c.bf16 %v10265, %v10263
      %v10338 = vpack.c.bf16 %v10268, %v10266
      %v10339 = vpack.c.bf16 %v10269, %v10267
      %v10340 = vpack.c.bf16 %v10272, %v10270
      %v10341 = vpack.c.bf16 %v10273, %v10271
      %v10342 = vpack.c.bf16 %v10276, %v10274
      %v10343 = vpack.c.bf16 %v10277, %v10275
      %v10344 = vpack.c.bf16 %v10280, %v10278
      %v10345 = vpack.c.bf16 %v10281, %v10279
      %v10346 = vld [vmem:[%s9] sm:$0xf]
      %v10347 = vld [vmem:[%s9 + $0x4] sm:$0xf]
      %v10348 = vld [vmem:[%s9 + $0x8] sm:$0xf]
      %v10349 = vld [vmem:[%s9 + $0xc] sm:$0xf]
      %v10350 = vld [vmem:[%s9 + $0x10] sm:$0xf]
      %v10351 = vld [vmem:[%s9 + $0x14] sm:$0xf]
      %v10352 = vld [vmem:[%s9 + $0x18] sm:$0xf]
      %v10353 = vld [vmem:[%s9 + $0x1c] sm:$0xf]
      %v10354 = vld [vmem:[%s9 + $0x20] sm:$0xf]
      %v10355 = vld [vmem:[%s9 + $0x24] sm:$0xf]
      %v10356 = vld [vmem:[%s9 + $0x28] sm:$0xf]
      %v10357 = vld [vmem:[%s9 + $0x2c] sm:$0xf]
      %v10358 = vld [vmem:[%s9 + $0x30] sm:$0xf]
      %v10359 = vld [vmem:[%s9 + $0x34] sm:$0xf]
      %v10360 = vld [vmem:[%s9 + $0x38] sm:$0xf]
      %v10361 = vld [vmem:[%s9 + $0x3c] sm:$0xf]
      %v10362 = vld [vmem:[%s9 + $0x40] sm:$0xf]
      %v10363 = vld [vmem:[%s9 + $0x44] sm:$0xf]
      %v10364 = vld [vmem:[%s9 + $0x48] sm:$0xf]
      %v10365 = vld [vmem:[%s9 + $0x4c] sm:$0xf]
      %v10366 = vld [vmem:[%s9 + $0x50] sm:$0xf]
      %v10367 = vld [vmem:[%s9 + $0x54] sm:$0xf]
      %v10368 = vld [vmem:[%s9 + $0x58] sm:$0xf]
      %v10369 = vld [vmem:[%s9 + $0x5c] sm:$0xf]
      %v10370 = vld [vmem:[%s9 + $0x60] sm:$0xf]
      %v10371 = vld [vmem:[%s9 + $0x64] sm:$0xf]
      %v10372 = vld [vmem:[%s9 + $0x68] sm:$0xf]
      %v10373 = vld [vmem:[%s9 + $0x6c] sm:$0xf]
      %v10374 = vld [vmem:[%s9 + $0x70] sm:$0xf]
      %v10375 = vld [vmem:[%s9 + $0x74] sm:$0xf]
      %v10376 = vld [vmem:[%s9 + $0x78] sm:$0xf]
      %v10377 = vld [vmem:[%s9 + $0x7c] sm:$0xf]
      %v10378 = vld [vmem:[%s10] sm:$0x1]
      %v10380 = vperm.slane %v10378, 0
      %v10414 = vunpack.c.l.b16 %v10346
      %v10415 = vunpack.c.l.b16 %v10347
      %v10416 = vunpack.c.l.b16 %v10348
      %v10417 = vunpack.c.l.b16 %v10349
      %v10418 = vunpack.c.l.b16 %v10350
      %v10419 = vunpack.c.l.b16 %v10351
      %v10420 = vunpack.c.l.b16 %v10352
      %v10421 = vunpack.c.l.b16 %v10353
      %v10422 = vunpack.c.l.b16 %v10354
      %v10423 = vunpack.c.l.b16 %v10355
      %v10424 = vunpack.c.l.b16 %v10356
      %v10425 = vunpack.c.l.b16 %v10357
      %v10426 = vunpack.c.l.b16 %v10358
      %v10427 = vunpack.c.l.b16 %v10359
      %v10428 = vunpack.c.l.b16 %v10360
      %v10429 = vunpack.c.l.b16 %v10361
      %v10430 = vunpack.c.l.b16 %v10362
      %v10431 = vunpack.c.l.b16 %v10363
      %v10432 = vunpack.c.l.b16 %v10364
      %v10433 = vunpack.c.l.b16 %v10365
      %v10434 = vunpack.c.l.b16 %v10366
      %v10435 = vunpack.c.l.b16 %v10367
      %v10436 = vunpack.c.l.b16 %v10368
      %v10437 = vunpack.c.l.b16 %v10369
      %v10438 = vunpack.c.l.b16 %v10370
      %v10439 = vunpack.c.l.b16 %v10371
      %v10440 = vunpack.c.l.b16 %v10372
      %v10441 = vunpack.c.l.b16 %v10373
      %v10442 = vunpack.c.l.b16 %v10374
      %v10443 = vunpack.c.l.b16 %v10375
      %v10444 = vunpack.c.l.b16 %v10376
      %v10445 = vunpack.c.l.b16 %v10377
      %v10446 = vpack.c.b16 %v10415, %v10414
      %v10447 = vpack.c.b16 %v10417, %v10416
      %v10448 = vpack.c.b16 %v10419, %v10418
      %v10449 = vpack.c.b16 %v10421, %v10420
      %v10450 = vpack.c.b16 %v10423, %v10422
      %v10451 = vpack.c.b16 %v10425, %v10424
      %v10452 = vpack.c.b16 %v10427, %v10426
      %v10453 = vpack.c.b16 %v10429, %v10428
      %v10454 = vpack.c.b16 %v10431, %v10430
      %v10455 = vpack.c.b16 %v10433, %v10432
      %v10456 = vpack.c.b16 %v10435, %v10434
      %v10457 = vpack.c.b16 %v10437, %v10436
      %v10458 = vpack.c.b16 %v10439, %v10438
      %v10459 = vpack.c.b16 %v10441, %v10440
      %v10460 = vpack.c.b16 %v10443, %v10442
      %v10461 = vpack.c.b16 %v10445, %v10444
      %10478 = vmatpush.bf16.msra.mxu0 %v10453
      %10479 = vmatpush.bf16.msra.mxu0 %v10452
      %10480 = vmatpush.bf16.msra.mxu0 %v10451
      %10481 = vmatpush.bf16.msra.mxu0 %v10450
      %10482 = vmatpush.bf16.msra.mxu0 %v10449
      %10483 = vmatpush.bf16.msra.mxu0 %v10448
      %10484 = vmatpush.bf16.msra.mxu0 %v10447
      %10485 = vmatpush.bf16.msra.mxu0 %v10446
      %10486 = vmatmul.bf16.gmra.mxu0 %v10282
      %v10487 = vpop.f32.mrf.mxu0
      %v10488 = vadd.f32 %v10380, %v10487
      %v10489 = vpop.f32.mrf.mxu0
      %v10490 = vadd.f32 %v10380, %v10489
      %10491 = vmatmul.bf16.gmra.mxu0 %v10284
      %v10492 = vpop.f32.mrf.mxu0
      %v10493 = vadd.f32 %v10380, %v10492
      %v10494 = vpop.f32.mrf.mxu0
      %v10495 = vadd.f32 %v10380, %v10494
      %10496 = vmatmul.bf16.gmra.mxu0 %v10286
      %v10497 = vpop.f32.mrf.mxu0
      %v10498 = vadd.f32 %v10380, %v10497
      %v10499 = vpop.f32.mrf.mxu0
      %v10500 = vadd.f32 %v10380, %v10499
      %10501 = vmatmul.bf16.gmra.mxu0 %v10288
      %v10502 = vpop.f32.mrf.mxu0
      %v10503 = vadd.f32 %v10380, %v10502
      %v10504 = vpop.f32.mrf.mxu0
      %v10505 = vadd.f32 %v10380, %v10504
      %10506 = vmatmul.bf16.gmra.mxu0 %v10290
      %v10507 = vpop.f32.mrf.mxu0
      %v10508 = vadd.f32 %v10380, %v10507
      %v10509 = vpop.f32.mrf.mxu0
      %v10510 = vadd.f32 %v10380, %v10509
      %10511 = vmatmul.bf16.gmra.mxu0 %v10292
      %v10512 = vpop.f32.mrf.mxu0
      %v10513 = vadd.f32 %v10380, %v10512
      %v10514 = vpop.f32.mrf.mxu0
      %v10515 = vadd.f32 %v10380, %v10514
      %10516 = vmatmul.bf16.gmra.mxu0 %v10294
      %v10517 = vpop.f32.mrf.mxu0
      %v10518 = vadd.f32 %v10380, %v10517
      %v10519 = vpop.f32.mrf.mxu0
      %v10520 = vadd.f32 %v10380, %v10519
      %10521 = vmatmul.bf16.gmra.mxu0 %v10296
      %v10522 = vpop.f32.mrf.mxu0
      %v10523 = vadd.f32 %v10380, %v10522
      %v10524 = vpop.f32.mrf.mxu0
      %v10525 = vadd.f32 %v10380, %v10524
      %10526 = vmatmul.bf16.gmra.mxu0 %v10298
      %v10527 = vpop.f32.mrf.mxu0
      %v10528 = vadd.f32 %v10380, %v10527
      %v10529 = vpop.f32.mrf.mxu0
      %v10530 = vadd.f32 %v10380, %v10529
      %10531 = vmatmul.bf16.gmra.mxu0 %v10300
      %v10532 = vpop.f32.mrf.mxu0
      %v10533 = vadd.f32 %v10380, %v10532
      %v10534 = vpop.f32.mrf.mxu0
      %v10535 = vadd.f32 %v10380, %v10534
      %10536 = vmatmul.bf16.gmra.mxu0 %v10302
      %v10537 = vpop.f32.mrf.mxu0
      %v10538 = vadd.f32 %v10380, %v10537
      %v10539 = vpop.f32.mrf.mxu0
      %v10540 = vadd.f32 %v10380, %v10539
      %10541 = vmatmul.bf16.gmra.mxu0 %v10304
      %v10542 = vpop.f32.mrf.mxu0
      %v10543 = vadd.f32 %v10380, %v10542
      %v10544 = vpop.f32.mrf.mxu0
      %v10545 = vadd.f32 %v10380, %v10544
      %10546 = vmatmul.bf16.gmra.mxu0 %v10306
      %v10547 = vpop.f32.mrf.mxu0
      %v10548 = vadd.f32 %v10380, %v10547
      %v10549 = vpop.f32.mrf.mxu0
      %v10550 = vadd.f32 %v10380, %v10549
      %10551 = vmatmul.bf16.gmra.mxu0 %v10308
      %v10552 = vpop.f32.mrf.mxu0
      %v10553 = vadd.f32 %v10380, %v10552
      %v10554 = vpop.f32.mrf.mxu0
      %v10555 = vadd.f32 %v10380, %v10554
      %10556 = vmatmul.bf16.gmra.mxu0 %v10310
      %v10557 = vpop.f32.mrf.mxu0
      %v10558 = vadd.f32 %v10380, %v10557
      %v10559 = vpop.f32.mrf.mxu0
      %v10560 = vadd.f32 %v10380, %v10559
      %10561 = vmatmul.bf16.gmra.mxu0 %v10312
      %v10562 = vpop.f32.mrf.mxu0
      %v10563 = vadd.f32 %v10380, %v10562
      %v10564 = vpop.f32.mrf.mxu0
      %v10565 = vadd.f32 %v10380, %v10564
      %10566 = vmatmul.bf16.gmra.mxu0 %v10314
      %v10567 = vpop.f32.mrf.mxu0
      %v10568 = vadd.f32 %v10380, %v10567
      %v10569 = vpop.f32.mrf.mxu0
      %v10570 = vadd.f32 %v10380, %v10569
      %10571 = vmatmul.bf16.gmra.mxu0 %v10316
      %v10572 = vpop.f32.mrf.mxu0
      %v10573 = vadd.f32 %v10380, %v10572
      %v10574 = vpop.f32.mrf.mxu0
      %v10575 = vadd.f32 %v10380, %v10574
      %10576 = vmatmul.bf16.gmra.mxu0 %v10318
      %v10577 = vpop.f32.mrf.mxu0
      %v10578 = vadd.f32 %v10380, %v10577
      %v10579 = vpop.f32.mrf.mxu0
      %v10580 = vadd.f32 %v10380, %v10579
      %10581 = vmatmul.bf16.gmra.mxu0 %v10320
      %v10582 = vpop.f32.mrf.mxu0
      %v10583 = vadd.f32 %v10380, %v10582
      %v10584 = vpop.f32.mrf.mxu0
      %v10585 = vadd.f32 %v10380, %v10584
      %10586 = vmatmul.bf16.gmra.mxu0 %v10322
      %v10587 = vpop.f32.mrf.mxu0
      %v10588 = vadd.f32 %v10380, %v10587
      %v10589 = vpop.f32.mrf.mxu0
      %v10590 = vadd.f32 %v10380, %v10589
      %10591 = vmatmul.bf16.gmra.mxu0 %v10324
      %v10592 = vpop.f32.mrf.mxu0
      %v10593 = vadd.f32 %v10380, %v10592
      %v10594 = vpop.f32.mrf.mxu0
      %v10595 = vadd.f32 %v10380, %v10594
      %10596 = vmatmul.bf16.gmra.mxu0 %v10326
      %v10597 = vpop.f32.mrf.mxu0
      %v10598 = vadd.f32 %v10380, %v10597
      %v10599 = vpop.f32.mrf.mxu0
      %v10600 = vadd.f32 %v10380, %v10599
      %10601 = vmatmul.bf16.gmra.mxu0 %v10328
      %v10602 = vpop.f32.mrf.mxu0
      %v10603 = vadd.f32 %v10380, %v10602
      %v10604 = vpop.f32.mrf.mxu0
      %v10605 = vadd.f32 %v10380, %v10604
      %10606 = vmatmul.bf16.gmra.mxu0 %v10330
      %v10607 = vpop.f32.mrf.mxu0
      %v10608 = vadd.f32 %v10380, %v10607
      %v10609 = vpop.f32.mrf.mxu0
      %v10610 = vadd.f32 %v10380, %v10609
      %10611 = vmatmul.bf16.gmra.mxu0 %v10332
      %v10612 = vpop.f32.mrf.mxu0
      %v10613 = vadd.f32 %v10380, %v10612
      %v10614 = vpop.f32.mrf.mxu0
      %v10615 = vadd.f32 %v10380, %v10614
      %10616 = vmatmul.bf16.gmra.mxu0 %v10334
      %v10617 = vpop.f32.mrf.mxu0
      %v10618 = vadd.f32 %v10380, %v10617
      %v10619 = vpop.f32.mrf.mxu0
      %v10620 = vadd.f32 %v10380, %v10619
      %10621 = vmatmul.bf16.gmra.mxu0 %v10336
      %v10622 = vpop.f32.mrf.mxu0
      %v10623 = vadd.f32 %v10380, %v10622
      %v10624 = vpop.f32.mrf.mxu0
      %v10625 = vadd.f32 %v10380, %v10624
      %10626 = vmatmul.bf16.gmra.mxu0 %v10338
      %v10627 = vpop.f32.mrf.mxu0
      %v10628 = vadd.f32 %v10380, %v10627
      %v10629 = vpop.f32.mrf.mxu0
      %v10630 = vadd.f32 %v10380, %v10629
      %10631 = vmatmul.bf16.gmra.mxu0 %v10340
      %v10632 = vpop.f32.mrf.mxu0
      %v10633 = vadd.f32 %v10380, %v10632
      %v10634 = vpop.f32.mrf.mxu0
      %v10635 = vadd.f32 %v10380, %v10634
      %10636 = vmatmul.bf16.gmra.mxu0 %v10342
      %v10637 = vpop.f32.mrf.mxu0
      %v10638 = vadd.f32 %v10380, %v10637
      %v10639 = vpop.f32.mrf.mxu0
      %v10640 = vadd.f32 %v10380, %v10639
      %10641 = vmatmul.bf16.gmra.mxu0 %v10344
      %v10642 = vpop.f32.mrf.mxu0
      %v10643 = vadd.f32 %v10380, %v10642
      %v10644 = vpop.f32.mrf.mxu0
      %v10645 = vadd.f32 %v10380, %v10644
      %10646 = vdwg.mxu0
      %10647 = vmatpush.bf16.msra.mxu0 %v10461
      %10648 = vmatpush.bf16.msra.mxu0 %v10460
      %10649 = vmatpush.bf16.msra.mxu0 %v10459
      %10650 = vmatpush.bf16.msra.mxu0 %v10458
      %10651 = vmatpush.bf16.msra.mxu0 %v10457
      %10652 = vmatpush.bf16.msra.mxu0 %v10456
      %10653 = vmatpush.bf16.msra.mxu0 %v10455
      %10654 = vmatpush.bf16.msra.mxu0 %v10454
      %10655 = vmatmul.bf16.gmra.mxu0 %v10283
      %v10656 = vpop.f32.mrf.mxu0
      %v10657 = vadd.f32 %v10488, %v10656
      %v10658 = vpop.f32.mrf.mxu0
      %v10659 = vadd.f32 %v10490, %v10658
      %10660 = vmatmul.bf16.gmra.mxu0 %v10285
      %v10661 = vpop.f32.mrf.mxu0
      %v10662 = vadd.f32 %v10493, %v10661
      %v10663 = vpop.f32.mrf.mxu0
      %v10664 = vadd.f32 %v10495, %v10663
      %10665 = vmatmul.bf16.gmra.mxu0 %v10287
      %v10666 = vpop.f32.mrf.mxu0
      %v10667 = vadd.f32 %v10498, %v10666
      %v10668 = vpop.f32.mrf.mxu0
      %v10669 = vadd.f32 %v10500, %v10668
      %10670 = vmatmul.bf16.gmra.mxu0 %v10289
      %v10671 = vpop.f32.mrf.mxu0
      %v10672 = vadd.f32 %v10503, %v10671
      %v10673 = vpop.f32.mrf.mxu0
      %v10674 = vadd.f32 %v10505, %v10673
      %10675 = vmatmul.bf16.gmra.mxu0 %v10291
      %v10676 = vpop.f32.mrf.mxu0
      %v10677 = vadd.f32 %v10508, %v10676
      %v10678 = vpop.f32.mrf.mxu0
      %v10679 = vadd.f32 %v10510, %v10678
      %10680 = vmatmul.bf16.gmra.mxu0 %v10293
      %v10681 = vpop.f32.mrf.mxu0
      %v10682 = vadd.f32 %v10513, %v10681
      %v10683 = vpop.f32.mrf.mxu0
      %v10684 = vadd.f32 %v10515, %v10683
      %10685 = vmatmul.bf16.gmra.mxu0 %v10295
      %v10686 = vpop.f32.mrf.mxu0
      %v10687 = vadd.f32 %v10518, %v10686
      %v10688 = vpop.f32.mrf.mxu0
      %v10689 = vadd.f32 %v10520, %v10688
      %10690 = vmatmul.bf16.gmra.mxu0 %v10297
      %v10691 = vpop.f32.mrf.mxu0
      %v10692 = vadd.f32 %v10523, %v10691
      %v10693 = vpop.f32.mrf.mxu0
      %v10694 = vadd.f32 %v10525, %v10693
      %10695 = vmatmul.bf16.gmra.mxu0 %v10299
      %v10696 = vpop.f32.mrf.mxu0
      %v10697 = vadd.f32 %v10528, %v10696
      %v10698 = vpop.f32.mrf.mxu0
      %v10699 = vadd.f32 %v10530, %v10698
      %10700 = vmatmul.bf16.gmra.mxu0 %v10301
      %v10701 = vpop.f32.mrf.mxu0
      %v10702 = vadd.f32 %v10533, %v10701
      %v10703 = vpop.f32.mrf.mxu0
      %v10704 = vadd.f32 %v10535, %v10703
      %10705 = vmatmul.bf16.gmra.mxu0 %v10303
      %v10706 = vpop.f32.mrf.mxu0
      %v10707 = vadd.f32 %v10538, %v10706
      %v10708 = vpop.f32.mrf.mxu0
      %v10709 = vadd.f32 %v10540, %v10708
      %10710 = vmatmul.bf16.gmra.mxu0 %v10305
      %v10711 = vpop.f32.mrf.mxu0
      %v10712 = vadd.f32 %v10543, %v10711
      %v10713 = vpop.f32.mrf.mxu0
      %v10714 = vadd.f32 %v10545, %v10713
      %10715 = vmatmul.bf16.gmra.mxu0 %v10307
      %v10716 = vpop.f32.mrf.mxu0
      %v10717 = vadd.f32 %v10548, %v10716
      %v10718 = vpop.f32.mrf.mxu0
      %v10719 = vadd.f32 %v10550, %v10718
      %10720 = vmatmul.bf16.gmra.mxu0 %v10309
      %v10721 = vpop.f32.mrf.mxu0
      %v10722 = vadd.f32 %v10553, %v10721
      %v10723 = vpop.f32.mrf.mxu0
      %v10724 = vadd.f32 %v10555, %v10723
      %10725 = vmatmul.bf16.gmra.mxu0 %v10311
      %v10726 = vpop.f32.mrf.mxu0
      %v10727 = vadd.f32 %v10558, %v10726
      %v10728 = vpop.f32.mrf.mxu0
      %v10729 = vadd.f32 %v10560, %v10728
      %10730 = vmatmul.bf16.gmra.mxu0 %v10313
      %v10731 = vpop.f32.mrf.mxu0
      %v10732 = vadd.f32 %v10563, %v10731
      %v10733 = vpop.f32.mrf.mxu0
      %v10734 = vadd.f32 %v10565, %v10733
      %10735 = vmatmul.bf16.gmra.mxu0 %v10315
      %v10736 = vpop.f32.mrf.mxu0
      %v10737 = vadd.f32 %v10568, %v10736
      %v10738 = vpop.f32.mrf.mxu0
      %v10739 = vadd.f32 %v10570, %v10738
      %10740 = vmatmul.bf16.gmra.mxu0 %v10317
      %v10741 = vpop.f32.mrf.mxu0
      %v10742 = vadd.f32 %v10573, %v10741
      %v10743 = vpop.f32.mrf.mxu0
      %v10744 = vadd.f32 %v10575, %v10743
      %10745 = vmatmul.bf16.gmra.mxu0 %v10319
      %v10746 = vpop.f32.mrf.mxu0
      %v10747 = vadd.f32 %v10578, %v10746
      %v10748 = vpop.f32.mrf.mxu0
      %v10749 = vadd.f32 %v10580, %v10748
      %10750 = vmatmul.bf16.gmra.mxu0 %v10321
      %v10751 = vpop.f32.mrf.mxu0
      %v10752 = vadd.f32 %v10583, %v10751
      %v10753 = vpop.f32.mrf.mxu0
      %v10754 = vadd.f32 %v10585, %v10753
      %10755 = vmatmul.bf16.gmra.mxu0 %v10323
      %v10756 = vpop.f32.mrf.mxu0
      %v10757 = vadd.f32 %v10588, %v10756
      %v10758 = vpop.f32.mrf.mxu0
      %v10759 = vadd.f32 %v10590, %v10758
      %10760 = vmatmul.bf16.gmra.mxu0 %v10325
      %v10761 = vpop.f32.mrf.mxu0
      %v10762 = vadd.f32 %v10593, %v10761
      %v10763 = vpop.f32.mrf.mxu0
      %v10764 = vadd.f32 %v10595, %v10763
      %10765 = vmatmul.bf16.gmra.mxu0 %v10327
      %v10766 = vpop.f32.mrf.mxu0
      %v10767 = vadd.f32 %v10598, %v10766
      %v10768 = vpop.f32.mrf.mxu0
      %v10769 = vadd.f32 %v10600, %v10768
      %10770 = vmatmul.bf16.gmra.mxu0 %v10329
      %v10771 = vpop.f32.mrf.mxu0
      %v10772 = vadd.f32 %v10603, %v10771
      %v10773 = vpop.f32.mrf.mxu0
      %v10774 = vadd.f32 %v10605, %v10773
      %10775 = vmatmul.bf16.gmra.mxu0 %v10331
      %v10776 = vpop.f32.mrf.mxu0
      %v10777 = vadd.f32 %v10608, %v10776
      %v10778 = vpop.f32.mrf.mxu0
      %v10779 = vadd.f32 %v10610, %v10778
      %10780 = vmatmul.bf16.gmra.mxu0 %v10333
      %v10781 = vpop.f32.mrf.mxu0
      %v10782 = vadd.f32 %v10613, %v10781
      %v10783 = vpop.f32.mrf.mxu0
      %v10784 = vadd.f32 %v10615, %v10783
      %10785 = vmatmul.bf16.gmra.mxu0 %v10335
      %v10786 = vpop.f32.mrf.mxu0
      %v10787 = vadd.f32 %v10618, %v10786
      %v10788 = vpop.f32.mrf.mxu0
      %v10789 = vadd.f32 %v10620, %v10788
      %10790 = vmatmul.bf16.gmra.mxu0 %v10337
      %v10791 = vpop.f32.mrf.mxu0
      %v10792 = vadd.f32 %v10623, %v10791
      %v10793 = vpop.f32.mrf.mxu0
      %v10794 = vadd.f32 %v10625, %v10793
      %10795 = vmatmul.bf16.gmra.mxu0 %v10339
      %v10796 = vpop.f32.mrf.mxu0
      %v10797 = vadd.f32 %v10628, %v10796
      %v10798 = vpop.f32.mrf.mxu0
      %v10799 = vadd.f32 %v10630, %v10798
      %10800 = vmatmul.bf16.gmra.mxu0 %v10341
      %v10801 = vpop.f32.mrf.mxu0
      %v10802 = vadd.f32 %v10633, %v10801
      %v10803 = vpop.f32.mrf.mxu0
      %v10804 = vadd.f32 %v10635, %v10803
      %10805 = vmatmul.bf16.gmra.mxu0 %v10343
      %v10806 = vpop.f32.mrf.mxu0
      %v10807 = vadd.f32 %v10638, %v10806
      %v10808 = vpop.f32.mrf.mxu0
      %v10809 = vadd.f32 %v10640, %v10808
      %10810 = vmatmul.bf16.gmra.mxu0 %v10345
      %v10811 = vpop.f32.mrf.mxu0
      %v10812 = vadd.f32 %v10643, %v10811
      %v10813 = vpop.f32.mrf.mxu0
      %v10814 = vadd.f32 %v10645, %v10813
      %10815 = vdwg.mxu0
      %v10816 = vmax.f32 %v10657, 0.0
      %v10817 = vmax.f32 %v10659, 0.0
      %v10818 = vmax.f32 %v10662, 0.0
      %v10819 = vmax.f32 %v10664, 0.0
      %v10820 = vmax.f32 %v10667, 0.0
      %v10821 = vmax.f32 %v10669, 0.0
      %v10822 = vmax.f32 %v10672, 0.0
      %v10823 = vmax.f32 %v10674, 0.0
      %v10824 = vmax.f32 %v10677, 0.0
      %v10825 = vmax.f32 %v10679, 0.0
      %v10826 = vmax.f32 %v10682, 0.0
      %v10827 = vmax.f32 %v10684, 0.0
      %v10828 = vmax.f32 %v10687, 0.0
      %v10829 = vmax.f32 %v10689, 0.0
      %v10830 = vmax.f32 %v10692, 0.0
      %v10831 = vmax.f32 %v10694, 0.0
      %v10832 = vmax.f32 %v10697, 0.0
      %v10833 = vmax.f32 %v10699, 0.0
      %v10834 = vmax.f32 %v10702, 0.0
      %v10835 = vmax.f32 %v10704, 0.0
      %v10836 = vmax.f32 %v10707, 0.0
      %v10837 = vmax.f32 %v10709, 0.0
      %v10838 = vmax.f32 %v10712, 0.0
      %v10839 = vmax.f32 %v10714, 0.0
      %v10840 = vmax.f32 %v10717, 0.0
      %v10841 = vmax.f32 %v10719, 0.0
      %v10842 = vmax.f32 %v10722, 0.0
      %v10843 = vmax.f32 %v10724, 0.0
      %v10844 = vmax.f32 %v10727, 0.0
      %v10845 = vmax.f32 %v10729, 0.0
      %v10846 = vmax.f32 %v10732, 0.0
      %v10847 = vmax.f32 %v10734, 0.0
      %v10848 = vmax.f32 %v10737, 0.0
      %v10849 = vmax.f32 %v10739, 0.0
      %v10850 = vmax.f32 %v10742, 0.0
      %v10851 = vmax.f32 %v10744, 0.0
      %v10852 = vmax.f32 %v10747, 0.0
      %v10853 = vmax.f32 %v10749, 0.0
      %v10854 = vmax.f32 %v10752, 0.0
      %v10855 = vmax.f32 %v10754, 0.0
      %v10856 = vmax.f32 %v10757, 0.0
      %v10857 = vmax.f32 %v10759, 0.0
      %v10858 = vmax.f32 %v10762, 0.0
      %v10859 = vmax.f32 %v10764, 0.0
      %v10860 = vmax.f32 %v10767, 0.0
      %v10861 = vmax.f32 %v10769, 0.0
      %v10862 = vmax.f32 %v10772, 0.0
      %v10863 = vmax.f32 %v10774, 0.0
      %v10864 = vmax.f32 %v10777, 0.0
      %v10865 = vmax.f32 %v10779, 0.0
      %v10866 = vmax.f32 %v10782, 0.0
      %v10867 = vmax.f32 %v10784, 0.0
      %v10868 = vmax.f32 %v10787, 0.0
      %v10869 = vmax.f32 %v10789, 0.0
      %v10870 = vmax.f32 %v10792, 0.0
      %v10871 = vmax.f32 %v10794, 0.0
      %v10872 = vmax.f32 %v10797, 0.0
      %v10873 = vmax.f32 %v10799, 0.0
      %v10874 = vmax.f32 %v10802, 0.0
      %v10875 = vmax.f32 %v10804, 0.0
      %v10876 = vmax.f32 %v10807, 0.0
      %v10877 = vmax.f32 %v10809, 0.0
      %v10878 = vmax.f32 %v10812, 0.0
      %v10879 = vmax.f32 %v10814, 0.0
      %v10880 = vpack.c.bf16 %v10817, %v10816
      %v10881 = vpack.c.bf16 %v10819, %v10818
      %v10882 = vpack.c.bf16 %v10821, %v10820
      %v10883 = vpack.c.bf16 %v10823, %v10822
      %v10884 = vpack.c.bf16 %v10825, %v10824
      %v10885 = vpack.c.bf16 %v10827, %v10826
      %v10886 = vpack.c.bf16 %v10829, %v10828
      %v10887 = vpack.c.bf16 %v10831, %v10830
      %v10888 = vpack.c.bf16 %v10833, %v10832
      %v10889 = vpack.c.bf16 %v10835, %v10834
      %v10890 = vpack.c.bf16 %v10837, %v10836
      %v10891 = vpack.c.bf16 %v10839, %v10838
      %v10892 = vpack.c.bf16 %v10841, %v10840
      %v10893 = vpack.c.bf16 %v10843, %v10842
      %v10894 = vpack.c.bf16 %v10845, %v10844
      %v10895 = vpack.c.bf16 %v10847, %v10846
      %v10896 = vpack.c.bf16 %v10849, %v10848
      %v10897 = vpack.c.bf16 %v10851, %v10850
      %v10898 = vpack.c.bf16 %v10853, %v10852
      %v10899 = vpack.c.bf16 %v10855, %v10854
      %v10900 = vpack.c.bf16 %v10857, %v10856
      %v10901 = vpack.c.bf16 %v10859, %v10858
      %v10902 = vpack.c.bf16 %v10861, %v10860
      %v10903 = vpack.c.bf16 %v10863, %v10862
      %v10904 = vpack.c.bf16 %v10865, %v10864
      %v10905 = vpack.c.bf16 %v10867, %v10866
      %v10906 = vpack.c.bf16 %v10869, %v10868
      %v10907 = vpack.c.bf16 %v10871, %v10870
      %v10908 = vpack.c.bf16 %v10873, %v10872
      %v10909 = vpack.c.bf16 %v10875, %v10874
      %v10910 = vpack.c.bf16 %v10877, %v10876
      %v10911 = vpack.c.bf16 %v10879, %v10878
      %v10912 = vld [vmem:[%s11] sm:$0xf]
      %v10913 = vld [vmem:[%s11 + $0x4] sm:$0xf]
      %v10914 = vld [vmem:[%s11 + $0x8] sm:$0xf]
      %v10915 = vld [vmem:[%s11 + $0xc] sm:$0xf]
      %v10916 = vld [vmem:[%s11 + $0x10] sm:$0xf]
      %v10917 = vld [vmem:[%s11 + $0x14] sm:$0xf]
      %v10918 = vld [vmem:[%s11 + $0x18] sm:$0xf]
      %v10919 = vld [vmem:[%s11 + $0x1c] sm:$0xf]
      %v10920 = vld [vmem:[%s11 + $0x20] sm:$0xf]
      %v10921 = vld [vmem:[%s11 + $0x24] sm:$0xf]
      %v10922 = vld [vmem:[%s11 + $0x28] sm:$0xf]
      %v10923 = vld [vmem:[%s11 + $0x2c] sm:$0xf]
      %v10924 = vld [vmem:[%s11 + $0x30] sm:$0xf]
      %v10925 = vld [vmem:[%s11 + $0x34] sm:$0xf]
      %v10926 = vld [vmem:[%s11 + $0x38] sm:$0xf]
      %v10927 = vld [vmem:[%s11 + $0x3c] sm:$0xf]
      %v10928 = vld [vmem:[%s12] sm:$0x1]
      %v10930 = vperm.slane %v10928, 0
      %v10948 = vunpack.c.l.b16 %v10912
      %v10949 = vunpack.c.l.b16 %v10913
      %v10950 = vunpack.c.l.b16 %v10914
      %v10951 = vunpack.c.l.b16 %v10915
      %v10952 = vunpack.c.l.b16 %v10916
      %v10953 = vunpack.c.l.b16 %v10917
      %v10954 = vunpack.c.l.b16 %v10918
      %v10955 = vunpack.c.l.b16 %v10919
      %v10956 = vunpack.c.l.b16 %v10920
      %v10957 = vunpack.c.l.b16 %v10921
      %v10958 = vunpack.c.l.b16 %v10922
      %v10959 = vunpack.c.l.b16 %v10923
      %v10960 = vunpack.c.l.b16 %v10924
      %v10961 = vunpack.c.l.b16 %v10925
      %v10962 = vunpack.c.l.b16 %v10926
      %v10963 = vunpack.c.l.b16 %v10927
      %v10964 = vpack.c.b16 %v10949, %v10948
      %v10965 = vpack.c.b16 %v10951, %v10950
      %v10966 = vpack.c.b16 %v10953, %v10952
      %v10967 = vpack.c.b16 %v10955, %v10954
      %v10968 = vpack.c.b16 %v10957, %v10956
      %v10969 = vpack.c.b16 %v10959, %v10958
      %v10970 = vpack.c.b16 %v10961, %v10960
      %v10971 = vpack.c.b16 %v10963, %v10962
      %10980 = vmatpush.bf16.msra.mxu0 %v10971
      %10981 = vmatpush.bf16.msra.mxu0 %v10970
      %10982 = vmatpush.bf16.msra.mxu0 %v10969
      %10983 = vmatpush.bf16.msra.mxu0 %v10968
      %10984 = vmatpush.bf16.msra.mxu0 %v10967
      %10985 = vmatpush.bf16.msra.mxu0 %v10966
      %10986 = vmatpush.bf16.msra.mxu0 %v10965
      %10987 = vmatpush.bf16.msra.mxu0 %v10964
      %10988 = vmatmul.bf16.gmra.mxu0 %v10880
      %v10989 = vpop.f32.mrf.mxu0
      %v10990 = vadd.f32 %v10930, %v10989
      %v10991 = vpop.f32.mrf.mxu0
      %v10992 = vadd.f32 %v10930, %v10991
      %10993 = vmatmul.bf16.gmra.mxu0 %v10881
      %v10994 = vpop.f32.mrf.mxu0
      %v10995 = vadd.f32 %v10930, %v10994
      %v10996 = vpop.f32.mrf.mxu0
      %v10997 = vadd.f32 %v10930, %v10996
      %10998 = vmatmul.bf16.gmra.mxu0 %v10882
      %v10999 = vpop.f32.mrf.mxu0
      %v11000 = vadd.f32 %v10930, %v10999
      %v11001 = vpop.f32.mrf.mxu0
      %v11002 = vadd.f32 %v10930, %v11001
      %11003 = vmatmul.bf16.gmra.mxu0 %v10883
      %v11004 = vpop.f32.mrf.mxu0
      %v11005 = vadd.f32 %v10930, %v11004
      %v11006 = vpop.f32.mrf.mxu0
      %v11007 = vadd.f32 %v10930, %v11006
      %11008 = vmatmul.bf16.gmra.mxu0 %v10884
      %v11009 = vpop.f32.mrf.mxu0
      %v11010 = vadd.f32 %v10930, %v11009
      %v11011 = vpop.f32.mrf.mxu0
      %v11012 = vadd.f32 %v10930, %v11011
      %11013 = vmatmul.bf16.gmra.mxu0 %v10885
      %v11014 = vpop.f32.mrf.mxu0
      %v11015 = vadd.f32 %v10930, %v11014
      %v11016 = vpop.f32.mrf.mxu0
      %v11017 = vadd.f32 %v10930, %v11016
      %11018 = vmatmul.bf16.gmra.mxu0 %v10886
      %v11019 = vpop.f32.mrf.mxu0
      %v11020 = vadd.f32 %v10930, %v11019
      %v11021 = vpop.f32.mrf.mxu0
      %v11022 = vadd.f32 %v10930, %v11021
      %11023 = vmatmul.bf16.gmra.mxu0 %v10887
      %v11024 = vpop.f32.mrf.mxu0
      %v11025 = vadd.f32 %v10930, %v11024
      %v11026 = vpop.f32.mrf.mxu0
      %v11027 = vadd.f32 %v10930, %v11026
      %11028 = vmatmul.bf16.gmra.mxu0 %v10888
      %v11029 = vpop.f32.mrf.mxu0
      %v11030 = vadd.f32 %v10930, %v11029
      %v11031 = vpop.f32.mrf.mxu0
      %v11032 = vadd.f32 %v10930, %v11031
      %11033 = vmatmul.bf16.gmra.mxu0 %v10889
      %v11034 = vpop.f32.mrf.mxu0
      %v11035 = vadd.f32 %v10930, %v11034
      %v11036 = vpop.f32.mrf.mxu0
      %v11037 = vadd.f32 %v10930, %v11036
      %11038 = vmatmul.bf16.gmra.mxu0 %v10890
      %v11039 = vpop.f32.mrf.mxu0
      %v11040 = vadd.f32 %v10930, %v11039
      %v11041 = vpop.f32.mrf.mxu0
      %v11042 = vadd.f32 %v10930, %v11041
      %11043 = vmatmul.bf16.gmra.mxu0 %v10891
      %v11044 = vpop.f32.mrf.mxu0
      %v11045 = vadd.f32 %v10930, %v11044
      %v11046 = vpop.f32.mrf.mxu0
      %v11047 = vadd.f32 %v10930, %v11046
      %11048 = vmatmul.bf16.gmra.mxu0 %v10892
      %v11049 = vpop.f32.mrf.mxu0
      %v11050 = vadd.f32 %v10930, %v11049
      %v11051 = vpop.f32.mrf.mxu0
      %v11052 = vadd.f32 %v10930, %v11051
      %11053 = vmatmul.bf16.gmra.mxu0 %v10893
      %v11054 = vpop.f32.mrf.mxu0
      %v11055 = vadd.f32 %v10930, %v11054
      %v11056 = vpop.f32.mrf.mxu0
      %v11057 = vadd.f32 %v10930, %v11056
      %11058 = vmatmul.bf16.gmra.mxu0 %v10894
      %v11059 = vpop.f32.mrf.mxu0
      %v11060 = vadd.f32 %v10930, %v11059
      %v11061 = vpop.f32.mrf.mxu0
      %v11062 = vadd.f32 %v10930, %v11061
      %11063 = vmatmul.bf16.gmra.mxu0 %v10895
      %v11064 = vpop.f32.mrf.mxu0
      %v11065 = vadd.f32 %v10930, %v11064
      %v11066 = vpop.f32.mrf.mxu0
      %v11067 = vadd.f32 %v10930, %v11066
      %11068 = vmatmul.bf16.gmra.mxu0 %v10896
      %v11069 = vpop.f32.mrf.mxu0
      %v11070 = vadd.f32 %v10930, %v11069
      %v11071 = vpop.f32.mrf.mxu0
      %v11072 = vadd.f32 %v10930, %v11071
      %11073 = vmatmul.bf16.gmra.mxu0 %v10897
      %v11074 = vpop.f32.mrf.mxu0
      %v11075 = vadd.f32 %v10930, %v11074
      %v11076 = vpop.f32.mrf.mxu0
      %v11077 = vadd.f32 %v10930, %v11076
      %11078 = vmatmul.bf16.gmra.mxu0 %v10898
      %v11079 = vpop.f32.mrf.mxu0
      %v11080 = vadd.f32 %v10930, %v11079
      %v11081 = vpop.f32.mrf.mxu0
      %v11082 = vadd.f32 %v10930, %v11081
      %11083 = vmatmul.bf16.gmra.mxu0 %v10899
      %v11084 = vpop.f32.mrf.mxu0
      %v11085 = vadd.f32 %v10930, %v11084
      %v11086 = vpop.f32.mrf.mxu0
      %v11087 = vadd.f32 %v10930, %v11086
      %11088 = vmatmul.bf16.gmra.mxu0 %v10900
      %v11089 = vpop.f32.mrf.mxu0
      %v11090 = vadd.f32 %v10930, %v11089
      %v11091 = vpop.f32.mrf.mxu0
      %v11092 = vadd.f32 %v10930, %v11091
      %11093 = vmatmul.bf16.gmra.mxu0 %v10901
      %v11094 = vpop.f32.mrf.mxu0
      %v11095 = vadd.f32 %v10930, %v11094
      %v11096 = vpop.f32.mrf.mxu0
      %v11097 = vadd.f32 %v10930, %v11096
      %11098 = vmatmul.bf16.gmra.mxu0 %v10902
      %v11099 = vpop.f32.mrf.mxu0
      %v11100 = vadd.f32 %v10930, %v11099
      %v11101 = vpop.f32.mrf.mxu0
      %v11102 = vadd.f32 %v10930, %v11101
      %11103 = vmatmul.bf16.gmra.mxu0 %v10903
      %v11104 = vpop.f32.mrf.mxu0
      %v11105 = vadd.f32 %v10930, %v11104
      %v11106 = vpop.f32.mrf.mxu0
      %v11107 = vadd.f32 %v10930, %v11106
      %11108 = vmatmul.bf16.gmra.mxu0 %v10904
      %v11109 = vpop.f32.mrf.mxu0
      %v11110 = vadd.f32 %v10930, %v11109
      %v11111 = vpop.f32.mrf.mxu0
      %v11112 = vadd.f32 %v10930, %v11111
      %11113 = vmatmul.bf16.gmra.mxu0 %v10905
      %v11114 = vpop.f32.mrf.mxu0
      %v11115 = vadd.f32 %v10930, %v11114
      %v11116 = vpop.f32.mrf.mxu0
      %v11117 = vadd.f32 %v10930, %v11116
      %11118 = vmatmul.bf16.gmra.mxu0 %v10906
      %v11119 = vpop.f32.mrf.mxu0
      %v11120 = vadd.f32 %v10930, %v11119
      %v11121 = vpop.f32.mrf.mxu0
      %v11122 = vadd.f32 %v10930, %v11121
      %11123 = vmatmul.bf16.gmra.mxu0 %v10907
      %v11124 = vpop.f32.mrf.mxu0
      %v11125 = vadd.f32 %v10930, %v11124
      %v11126 = vpop.f32.mrf.mxu0
      %v11127 = vadd.f32 %v10930, %v11126
      %11128 = vmatmul.bf16.gmra.mxu0 %v10908
      %v11129 = vpop.f32.mrf.mxu0
      %v11130 = vadd.f32 %v10930, %v11129
      %v11131 = vpop.f32.mrf.mxu0
      %v11132 = vadd.f32 %v10930, %v11131
      %11133 = vmatmul.bf16.gmra.mxu0 %v10909
      %v11134 = vpop.f32.mrf.mxu0
      %v11135 = vadd.f32 %v10930, %v11134
      %v11136 = vpop.f32.mrf.mxu0
      %v11137 = vadd.f32 %v10930, %v11136
      %11138 = vmatmul.bf16.gmra.mxu0 %v10910
      %v11139 = vpop.f32.mrf.mxu0
      %v11140 = vadd.f32 %v10930, %v11139
      %v11141 = vpop.f32.mrf.mxu0
      %v11142 = vadd.f32 %v10930, %v11141
      %11143 = vmatmul.bf16.gmra.mxu0 %v10911
      %v11144 = vpop.f32.mrf.mxu0
      %v11145 = vadd.f32 %v10930, %v11144
      %v11146 = vpop.f32.mrf.mxu0
      %v11147 = vadd.f32 %v10930, %v11146
      %11148 = vdwg.mxu0
      %v11149 = vmax.f32 %v10990, 0.0
      %v11150 = vmax.f32 %v10992, 0.0
      %v11151 = vmax.f32 %v10995, 0.0
      %v11152 = vmax.f32 %v10997, 0.0
      %v11153 = vmax.f32 %v11000, 0.0
      %v11154 = vmax.f32 %v11002, 0.0
      %v11155 = vmax.f32 %v11005, 0.0
      %v11156 = vmax.f32 %v11007, 0.0
      %v11157 = vmax.f32 %v11010, 0.0
      %v11158 = vmax.f32 %v11012, 0.0
      %v11159 = vmax.f32 %v11015, 0.0
      %v11160 = vmax.f32 %v11017, 0.0
      %v11161 = vmax.f32 %v11020, 0.0
      %v11162 = vmax.f32 %v11022, 0.0
      %v11163 = vmax.f32 %v11025, 0.0
      %v11164 = vmax.f32 %v11027, 0.0
      %v11165 = vmax.f32 %v11030, 0.0
      %v11166 = vmax.f32 %v11032, 0.0
      %v11167 = vmax.f32 %v11035, 0.0
      %v11168 = vmax.f32 %v11037, 0.0
      %v11169 = vmax.f32 %v11040, 0.0
      %v11170 = vmax.f32 %v11042, 0.0
      %v11171 = vmax.f32 %v11045, 0.0
      %v11172 = vmax.f32 %v11047, 0.0
      %v11173 = vmax.f32 %v11050, 0.0
      %v11174 = vmax.f32 %v11052, 0.0
      %v11175 = vmax.f32 %v11055, 0.0
      %v11176 = vmax.f32 %v11057, 0.0
      %v11177 = vmax.f32 %v11060, 0.0
      %v11178 = vmax.f32 %v11062, 0.0
      %v11179 = vmax.f32 %v11065, 0.0
      %v11180 = vmax.f32 %v11067, 0.0
      %v11181 = vmax.f32 %v11070, 0.0
      %v11182 = vmax.f32 %v11072, 0.0
      %v11183 = vmax.f32 %v11075, 0.0
      %v11184 = vmax.f32 %v11077, 0.0
      %v11185 = vmax.f32 %v11080, 0.0
      %v11186 = vmax.f32 %v11082, 0.0
      %v11187 = vmax.f32 %v11085, 0.0
      %v11188 = vmax.f32 %v11087, 0.0
      %v11189 = vmax.f32 %v11090, 0.0
      %v11190 = vmax.f32 %v11092, 0.0
      %v11191 = vmax.f32 %v11095, 0.0
      %v11192 = vmax.f32 %v11097, 0.0
      %v11193 = vmax.f32 %v11100, 0.0
      %v11194 = vmax.f32 %v11102, 0.0
      %v11195 = vmax.f32 %v11105, 0.0
      %v11196 = vmax.f32 %v11107, 0.0
      %v11197 = vmax.f32 %v11110, 0.0
      %v11198 = vmax.f32 %v11112, 0.0
      %v11199 = vmax.f32 %v11115, 0.0
      %v11200 = vmax.f32 %v11117, 0.0
      %v11201 = vmax.f32 %v11120, 0.0
      %v11202 = vmax.f32 %v11122, 0.0
      %v11203 = vmax.f32 %v11125, 0.0
      %v11204 = vmax.f32 %v11127, 0.0
      %v11205 = vmax.f32 %v11130, 0.0
      %v11206 = vmax.f32 %v11132, 0.0
      %v11207 = vmax.f32 %v11135, 0.0
      %v11208 = vmax.f32 %v11137, 0.0
      %v11209 = vmax.f32 %v11140, 0.0
      %v11210 = vmax.f32 %v11142, 0.0
      %v11211 = vmax.f32 %v11145, 0.0
      %v11212 = vmax.f32 %v11147, 0.0
      %v11213 = vpack.c.bf16 %v11150, %v11149
      %v11214 = vpack.c.bf16 %v11152, %v11151
      %v11215 = vpack.c.bf16 %v11154, %v11153
      %v11216 = vpack.c.bf16 %v11156, %v11155
      %v11217 = vpack.c.bf16 %v11158, %v11157
      %v11218 = vpack.c.bf16 %v11160, %v11159
      %v11219 = vpack.c.bf16 %v11162, %v11161
      %v11220 = vpack.c.bf16 %v11164, %v11163
      %v11221 = vpack.c.bf16 %v11166, %v11165
      %v11222 = vpack.c.bf16 %v11168, %v11167
      %v11223 = vpack.c.bf16 %v11170, %v11169
      %v11224 = vpack.c.bf16 %v11172, %v11171
      %v11225 = vpack.c.bf16 %v11174, %v11173
      %v11226 = vpack.c.bf16 %v11176, %v11175
      %v11227 = vpack.c.bf16 %v11178, %v11177
      %v11228 = vpack.c.bf16 %v11180, %v11179
      %v11229 = vpack.c.bf16 %v11182, %v11181
      %v11230 = vpack.c.bf16 %v11184, %v11183
      %v11231 = vpack.c.bf16 %v11186, %v11185
      %v11232 = vpack.c.bf16 %v11188, %v11187
      %v11233 = vpack.c.bf16 %v11190, %v11189
      %v11234 = vpack.c.bf16 %v11192, %v11191
      %v11235 = vpack.c.bf16 %v11194, %v11193
      %v11236 = vpack.c.bf16 %v11196, %v11195
      %v11237 = vpack.c.bf16 %v11198, %v11197
      %v11238 = vpack.c.bf16 %v11200, %v11199
      %v11239 = vpack.c.bf16 %v11202, %v11201
      %v11240 = vpack.c.bf16 %v11204, %v11203
      %v11241 = vpack.c.bf16 %v11206, %v11205
      %v11242 = vpack.c.bf16 %v11208, %v11207
      %v11243 = vpack.c.bf16 %v11210, %v11209
      %v11244 = vpack.c.bf16 %v11212, %v11211
      %v11245 = vld [vmem:[%s13] sm:$0xf]
      %v11246 = vld [vmem:[%s13 + $0x4] sm:$0xf]
      %v11247 = vld [vmem:[%s13 + $0x8] sm:$0xf]
      %v11248 = vld [vmem:[%s13 + $0xc] sm:$0xf]
      %v11249 = vld [vmem:[%s13 + $0x10] sm:$0xf]
      %v11250 = vld [vmem:[%s13 + $0x14] sm:$0xf]
      %v11251 = vld [vmem:[%s13 + $0x18] sm:$0xf]
      %v11252 = vld [vmem:[%s13 + $0x1c] sm:$0xf]
      %v11253 = vld [vmem:[%s13 + $0x20] sm:$0xf]
      %v11254 = vld [vmem:[%s13 + $0x24] sm:$0xf]
      %v11255 = vld [vmem:[%s13 + $0x28] sm:$0xf]
      %v11256 = vld [vmem:[%s13 + $0x2c] sm:$0xf]
      %v11257 = vld [vmem:[%s13 + $0x30] sm:$0xf]
      %v11258 = vld [vmem:[%s13 + $0x34] sm:$0xf]
      %v11259 = vld [vmem:[%s13 + $0x38] sm:$0xf]
      %v11260 = vld [vmem:[%s13 + $0x3c] sm:$0xf]
      %v11261 = vld [vmem:[%s14] sm:$0x1]
      %v11263 = vperm.slane %v11261, 0
      %v11281 = vunpack.c.l.b16 %v11245
      %v11282 = vunpack.c.l.b16 %v11246
      %v11283 = vunpack.c.l.b16 %v11247
      %v11284 = vunpack.c.l.b16 %v11248
      %v11285 = vunpack.c.l.b16 %v11249
      %v11286 = vunpack.c.l.b16 %v11250
      %v11287 = vunpack.c.l.b16 %v11251
      %v11288 = vunpack.c.l.b16 %v11252
      %v11289 = vunpack.c.l.b16 %v11253
      %v11290 = vunpack.c.l.b16 %v11254
      %v11291 = vunpack.c.l.b16 %v11255
      %v11292 = vunpack.c.l.b16 %v11256
      %v11293 = vunpack.c.l.b16 %v11257
      %v11294 = vunpack.c.l.b16 %v11258
      %v11295 = vunpack.c.l.b16 %v11259
      %v11296 = vunpack.c.l.b16 %v11260
      %v11297 = vpack.c.b16 %v11282, %v11281
      %v11298 = vpack.c.b16 %v11284, %v11283
      %v11299 = vpack.c.b16 %v11286, %v11285
      %v11300 = vpack.c.b16 %v11288, %v11287
      %v11301 = vpack.c.b16 %v11290, %v11289
      %v11302 = vpack.c.b16 %v11292, %v11291
      %v11303 = vpack.c.b16 %v11294, %v11293
      %v11304 = vpack.c.b16 %v11296, %v11295
      %11313 = vmatpush.bf16.msra.mxu0 %v11304
      %11314 = vmatpush.bf16.msra.mxu0 %v11303
      %11315 = vmatpush.bf16.msra.mxu0 %v11302
      %11316 = vmatpush.bf16.msra.mxu0 %v11301
      %11317 = vmatpush.bf16.msra.mxu0 %v11300
      %11318 = vmatpush.bf16.msra.mxu0 %v11299
      %11319 = vmatpush.bf16.msra.mxu0 %v11298
      %11320 = vmatpush.bf16.msra.mxu0 %v11297
      %11321 = vmatmul.bf16.gmra.mxu0 %v11213
      %v11322 = vpop.f32.mrf.mxu0
      %v11323 = vadd.f32 %v11263, %v11322
      %v11324 = vpop.f32.mrf.mxu0
      %v11325 = vadd.f32 %v11263, %v11324
      %11326 = vmatmul.bf16.gmra.mxu0 %v11214
      %v11327 = vpop.f32.mrf.mxu0
      %v11328 = vadd.f32 %v11263, %v11327
      %v11329 = vpop.f32.mrf.mxu0
      %v11330 = vadd.f32 %v11263, %v11329
      %11331 = vmatmul.bf16.gmra.mxu0 %v11215
      %v11332 = vpop.f32.mrf.mxu0
      %v11333 = vadd.f32 %v11263, %v11332
      %v11334 = vpop.f32.mrf.mxu0
      %v11335 = vadd.f32 %v11263, %v11334
      %11336 = vmatmul.bf16.gmra.mxu0 %v11216
      %v11337 = vpop.f32.mrf.mxu0
      %v11338 = vadd.f32 %v11263, %v11337
      %v11339 = vpop.f32.mrf.mxu0
      %v11340 = vadd.f32 %v11263, %v11339
      %11341 = vmatmul.bf16.gmra.mxu0 %v11217
      %v11342 = vpop.f32.mrf.mxu0
      %v11343 = vadd.f32 %v11263, %v11342
      %v11344 = vpop.f32.mrf.mxu0
      %v11345 = vadd.f32 %v11263, %v11344
      %11346 = vmatmul.bf16.gmra.mxu0 %v11218
      %v11347 = vpop.f32.mrf.mxu0
      %v11348 = vadd.f32 %v11263, %v11347
      %v11349 = vpop.f32.mrf.mxu0
      %v11350 = vadd.f32 %v11263, %v11349
      %11351 = vmatmul.bf16.gmra.mxu0 %v11219
      %v11352 = vpop.f32.mrf.mxu0
      %v11353 = vadd.f32 %v11263, %v11352
      %v11354 = vpop.f32.mrf.mxu0
      %v11355 = vadd.f32 %v11263, %v11354
      %11356 = vmatmul.bf16.gmra.mxu0 %v11220
      %v11357 = vpop.f32.mrf.mxu0
      %v11358 = vadd.f32 %v11263, %v11357
      %v11359 = vpop.f32.mrf.mxu0
      %v11360 = vadd.f32 %v11263, %v11359
      %11361 = vmatmul.bf16.gmra.mxu0 %v11221
      %v11362 = vpop.f32.mrf.mxu0
      %v11363 = vadd.f32 %v11263, %v11362
      %v11364 = vpop.f32.mrf.mxu0
      %v11365 = vadd.f32 %v11263, %v11364
      %11366 = vmatmul.bf16.gmra.mxu0 %v11222
      %v11367 = vpop.f32.mrf.mxu0
      %v11368 = vadd.f32 %v11263, %v11367
      %v11369 = vpop.f32.mrf.mxu0
      %v11370 = vadd.f32 %v11263, %v11369
      %11371 = vmatmul.bf16.gmra.mxu0 %v11223
      %v11372 = vpop.f32.mrf.mxu0
      %v11373 = vadd.f32 %v11263, %v11372
      %v11374 = vpop.f32.mrf.mxu0
      %v11375 = vadd.f32 %v11263, %v11374
      %11376 = vmatmul.bf16.gmra.mxu0 %v11224
      %v11377 = vpop.f32.mrf.mxu0
      %v11378 = vadd.f32 %v11263, %v11377
      %v11379 = vpop.f32.mrf.mxu0
      %v11380 = vadd.f32 %v11263, %v11379
      %11381 = vmatmul.bf16.gmra.mxu0 %v11225
      %v11382 = vpop.f32.mrf.mxu0
      %v11383 = vadd.f32 %v11263, %v11382
      %v11384 = vpop.f32.mrf.mxu0
      %v11385 = vadd.f32 %v11263, %v11384
      %11386 = vmatmul.bf16.gmra.mxu0 %v11226
      %v11387 = vpop.f32.mrf.mxu0
      %v11388 = vadd.f32 %v11263, %v11387
      %v11389 = vpop.f32.mrf.mxu0
      %v11390 = vadd.f32 %v11263, %v11389
      %11391 = vmatmul.bf16.gmra.mxu0 %v11227
      %v11392 = vpop.f32.mrf.mxu0
      %v11393 = vadd.f32 %v11263, %v11392
      %v11394 = vpop.f32.mrf.mxu0
      %v11395 = vadd.f32 %v11263, %v11394
      %11396 = vmatmul.bf16.gmra.mxu0 %v11228
      %v11397 = vpop.f32.mrf.mxu0
      %v11398 = vadd.f32 %v11263, %v11397
      %v11399 = vpop.f32.mrf.mxu0
      %v11400 = vadd.f32 %v11263, %v11399
      %11401 = vmatmul.bf16.gmra.mxu0 %v11229
      %v11402 = vpop.f32.mrf.mxu0
      %v11403 = vadd.f32 %v11263, %v11402
      %v11404 = vpop.f32.mrf.mxu0
      %v11405 = vadd.f32 %v11263, %v11404
      %11406 = vmatmul.bf16.gmra.mxu0 %v11230
      %v11407 = vpop.f32.mrf.mxu0
      %v11408 = vadd.f32 %v11263, %v11407
      %v11409 = vpop.f32.mrf.mxu0
      %v11410 = vadd.f32 %v11263, %v11409
      %11411 = vmatmul.bf16.gmra.mxu0 %v11231
      %v11412 = vpop.f32.mrf.mxu0
      %v11413 = vadd.f32 %v11263, %v11412
      %v11414 = vpop.f32.mrf.mxu0
      %v11415 = vadd.f32 %v11263, %v11414
      %11416 = vmatmul.bf16.gmra.mxu0 %v11232
      %v11417 = vpop.f32.mrf.mxu0
      %v11418 = vadd.f32 %v11263, %v11417
      %v11419 = vpop.f32.mrf.mxu0
      %v11420 = vadd.f32 %v11263, %v11419
      %11421 = vmatmul.bf16.gmra.mxu0 %v11233
      %v11422 = vpop.f32.mrf.mxu0
      %v11423 = vadd.f32 %v11263, %v11422
      %v11424 = vpop.f32.mrf.mxu0
      %v11425 = vadd.f32 %v11263, %v11424
      %11426 = vmatmul.bf16.gmra.mxu0 %v11234
      %v11427 = vpop.f32.mrf.mxu0
      %v11428 = vadd.f32 %v11263, %v11427
      %v11429 = vpop.f32.mrf.mxu0
      %v11430 = vadd.f32 %v11263, %v11429
      %11431 = vmatmul.bf16.gmra.mxu0 %v11235
      %v11432 = vpop.f32.mrf.mxu0
      %v11433 = vadd.f32 %v11263, %v11432
      %v11434 = vpop.f32.mrf.mxu0
      %v11435 = vadd.f32 %v11263, %v11434
      %11436 = vmatmul.bf16.gmra.mxu0 %v11236
      %v11437 = vpop.f32.mrf.mxu0
      %v11438 = vadd.f32 %v11263, %v11437
      %v11439 = vpop.f32.mrf.mxu0
      %v11440 = vadd.f32 %v11263, %v11439
      %11441 = vmatmul.bf16.gmra.mxu0 %v11237
      %v11442 = vpop.f32.mrf.mxu0
      %v11443 = vadd.f32 %v11263, %v11442
      %v11444 = vpop.f32.mrf.mxu0
      %v11445 = vadd.f32 %v11263, %v11444
      %11446 = vmatmul.bf16.gmra.mxu0 %v11238
      %v11447 = vpop.f32.mrf.mxu0
      %v11448 = vadd.f32 %v11263, %v11447
      %v11449 = vpop.f32.mrf.mxu0
      %v11450 = vadd.f32 %v11263, %v11449
      %11451 = vmatmul.bf16.gmra.mxu0 %v11239
      %v11452 = vpop.f32.mrf.mxu0
      %v11453 = vadd.f32 %v11263, %v11452
      %v11454 = vpop.f32.mrf.mxu0
      %v11455 = vadd.f32 %v11263, %v11454
      %11456 = vmatmul.bf16.gmra.mxu0 %v11240
      %v11457 = vpop.f32.mrf.mxu0
      %v11458 = vadd.f32 %v11263, %v11457
      %v11459 = vpop.f32.mrf.mxu0
      %v11460 = vadd.f32 %v11263, %v11459
      %11461 = vmatmul.bf16.gmra.mxu0 %v11241
      %v11462 = vpop.f32.mrf.mxu0
      %v11463 = vadd.f32 %v11263, %v11462
      %v11464 = vpop.f32.mrf.mxu0
      %v11465 = vadd.f32 %v11263, %v11464
      %11466 = vmatmul.bf16.gmra.mxu0 %v11242
      %v11467 = vpop.f32.mrf.mxu0
      %v11468 = vadd.f32 %v11263, %v11467
      %v11469 = vpop.f32.mrf.mxu0
      %v11470 = vadd.f32 %v11263, %v11469
      %11471 = vmatmul.bf16.gmra.mxu0 %v11243
      %v11472 = vpop.f32.mrf.mxu0
      %v11473 = vadd.f32 %v11263, %v11472
      %v11474 = vpop.f32.mrf.mxu0
      %v11475 = vadd.f32 %v11263, %v11474
      %11476 = vmatmul.bf16.gmra.mxu0 %v11244
      %v11477 = vpop.f32.mrf.mxu0
      %v11478 = vadd.f32 %v11263, %v11477
      %v11479 = vpop.f32.mrf.mxu0
      %v11480 = vadd.f32 %v11263, %v11479
      %11481 = vdwg.mxu0
      %11482 = vmax.xlane.f32.xlu0 %v11323
      %v11483 = vpop.xlane.xlu0 %11482
      %11484 = vmax.xlane.f32.xlu0 %v11325
      %v11485 = vpop.xlane.xlu0 %11484
      %11486 = vmax.xlane.f32.xlu0 %v11328
      %v11487 = vpop.xlane.xlu0 %11486
      %11488 = vmax.xlane.f32.xlu0 %v11330
      %v11489 = vpop.xlane.xlu0 %11488
      %11490 = vmax.xlane.f32.xlu0 %v11333
      %v11491 = vpop.xlane.xlu0 %11490
      %11492 = vmax.xlane.f32.xlu0 %v11335
      %v11493 = vpop.xlane.xlu0 %11492
      %11494 = vmax.xlane.f32.xlu0 %v11338
      %v11495 = vpop.xlane.xlu0 %11494
      %11496 = vmax.xlane.f32.xlu0 %v11340
      %v11497 = vpop.xlane.xlu0 %11496
      %11498 = vmax.xlane.f32.xlu0 %v11343
      %v11499 = vpop.xlane.xlu0 %11498
      %11500 = vmax.xlane.f32.xlu0 %v11345
      %v11501 = vpop.xlane.xlu0 %11500
      %11502 = vmax.xlane.f32.xlu0 %v11348
      %v11503 = vpop.xlane.xlu0 %11502
      %11504 = vmax.xlane.f32.xlu0 %v11350
      %v11505 = vpop.xlane.xlu0 %11504
      %11506 = vmax.xlane.f32.xlu0 %v11353
      %v11507 = vpop.xlane.xlu0 %11506
      %11508 = vmax.xlane.f32.xlu0 %v11355
      %v11509 = vpop.xlane.xlu0 %11508
      %11510 = vmax.xlane.f32.xlu0 %v11358
      %v11511 = vpop.xlane.xlu0 %11510
      %11512 = vmax.xlane.f32.xlu0 %v11360
      %v11513 = vpop.xlane.xlu0 %11512
      %11514 = vmax.xlane.f32.xlu0 %v11363
      %v11515 = vpop.xlane.xlu0 %11514
      %11516 = vmax.xlane.f32.xlu0 %v11365
      %v11517 = vpop.xlane.xlu0 %11516
      %11518 = vmax.xlane.f32.xlu0 %v11368
      %v11519 = vpop.xlane.xlu0 %11518
      %11520 = vmax.xlane.f32.xlu0 %v11370
      %v11521 = vpop.xlane.xlu0 %11520
      %11522 = vmax.xlane.f32.xlu0 %v11373
      %v11523 = vpop.xlane.xlu0 %11522
      %11524 = vmax.xlane.f32.xlu0 %v11375
      %v11525 = vpop.xlane.xlu0 %11524
      %11526 = vmax.xlane.f32.xlu0 %v11378
      %v11527 = vpop.xlane.xlu0 %11526
      %11528 = vmax.xlane.f32.xlu0 %v11380
      %v11529 = vpop.xlane.xlu0 %11528
      %11530 = vmax.xlane.f32.xlu0 %v11383
      %v11531 = vpop.xlane.xlu0 %11530
      %11532 = vmax.xlane.f32.xlu0 %v11385
      %v11533 = vpop.xlane.xlu0 %11532
      %11534 = vmax.xlane.f32.xlu0 %v11388
      %v11535 = vpop.xlane.xlu0 %11534
      %11536 = vmax.xlane.f32.xlu0 %v11390
      %v11537 = vpop.xlane.xlu0 %11536
      %11538 = vmax.xlane.f32.xlu0 %v11393
      %v11539 = vpop.xlane.xlu0 %11538
      %11540 = vmax.xlane.f32.xlu0 %v11395
      %v11541 = vpop.xlane.xlu0 %11540
      %11542 = vmax.xlane.f32.xlu0 %v11398
      %v11543 = vpop.xlane.xlu0 %11542
      %11544 = vmax.xlane.f32.xlu0 %v11400
      %v11545 = vpop.xlane.xlu0 %11544
      %11546 = vmax.xlane.f32.xlu0 %v11403
      %v11547 = vpop.xlane.xlu0 %11546
      %11548 = vmax.xlane.f32.xlu0 %v11405
      %v11549 = vpop.xlane.xlu0 %11548
      %11550 = vmax.xlane.f32.xlu0 %v11408
      %v11551 = vpop.xlane.xlu0 %11550
      %11552 = vmax.xlane.f32.xlu0 %v11410
      %v11553 = vpop.xlane.xlu0 %11552
      %11554 = vmax.xlane.f32.xlu0 %v11413
      %v11555 = vpop.xlane.xlu0 %11554
      %11556 = vmax.xlane.f32.xlu0 %v11415
      %v11557 = vpop.xlane.xlu0 %11556
      %11558 = vmax.xlane.f32.xlu0 %v11418
      %v11559 = vpop.xlane.xlu0 %11558
      %11560 = vmax.xlane.f32.xlu0 %v11420
      %v11561 = vpop.xlane.xlu0 %11560
      %11562 = vmax.xlane.f32.xlu0 %v11423
      %v11563 = vpop.xlane.xlu0 %11562
      %11564 = vmax.xlane.f32.xlu0 %v11425
      %v11565 = vpop.xlane.xlu0 %11564
      %11566 = vmax.xlane.f32.xlu0 %v11428
      %v11567 = vpop.xlane.xlu0 %11566
      %11568 = vmax.xlane.f32.xlu0 %v11430
      %v11569 = vpop.xlane.xlu0 %11568
      %11570 = vmax.xlane.f32.xlu0 %v11433
      %v11571 = vpop.xlane.xlu0 %11570
      %11572 = vmax.xlane.f32.xlu0 %v11435
      %v11573 = vpop.xlane.xlu0 %11572
      %11574 = vmax.xlane.f32.xlu0 %v11438
      %v11575 = vpop.xlane.xlu0 %11574
      %11576 = vmax.xlane.f32.xlu0 %v11440
      %v11577 = vpop.xlane.xlu0 %11576
      %11578 = vmax.xlane.f32.xlu0 %v11443
      %v11579 = vpop.xlane.xlu0 %11578
      %11580 = vmax.xlane.f32.xlu0 %v11445
      %v11581 = vpop.xlane.xlu0 %11580
      %11582 = vmax.xlane.f32.xlu0 %v11448
      %v11583 = vpop.xlane.xlu0 %11582
      %11584 = vmax.xlane.f32.xlu0 %v11450
      %v11585 = vpop.xlane.xlu0 %11584
      %11586 = vmax.xlane.f32.xlu0 %v11453
      %v11587 = vpop.xlane.xlu0 %11586
      %11588 = vmax.xlane.f32.xlu0 %v11455
      %v11589 = vpop.xlane.xlu0 %11588
      %11590 = vmax.xlane.f32.xlu0 %v11458
      %v11591 = vpop.xlane.xlu0 %11590
      %11592 = vmax.xlane.f32.xlu0 %v11460
      %v11593 = vpop.xlane.xlu0 %11592
      %11594 = vmax.xlane.f32.xlu0 %v11463
      %v11595 = vpop.xlane.xlu0 %11594
      %11596 = vmax.xlane.f32.xlu0 %v11465
      %v11597 = vpop.xlane.xlu0 %11596
      %11598 = vmax.xlane.f32.xlu0 %v11468
      %v11599 = vpop.xlane.xlu0 %11598
      %11600 = vmax.xlane.f32.xlu0 %v11470
      %v11601 = vpop.xlane.xlu0 %11600
      %11602 = vmax.xlane.f32.xlu0 %v11473
      %v11603 = vpop.xlane.xlu0 %11602
      %11604 = vmax.xlane.f32.xlu0 %v11475
      %v11605 = vpop.xlane.xlu0 %11604
      %11606 = vmax.xlane.f32.xlu0 %v11478
      %v11607 = vpop.xlane.xlu0 %11606
      %11608 = vmax.xlane.f32.xlu0 %v11480
      %v11609 = vpop.xlane.xlu0 %11608
      %v11610 = vsub.f32 %v11323, %v11483
      %v11611 = vsub.f32 %v11325, %v11485
      %v11612 = vsub.f32 %v11328, %v11487
      %v11613 = vsub.f32 %v11330, %v11489
      %v11614 = vsub.f32 %v11333, %v11491
      %v11615 = vsub.f32 %v11335, %v11493
      %v11616 = vsub.f32 %v11338, %v11495
      %v11617 = vsub.f32 %v11340, %v11497
      %v11618 = vsub.f32 %v11343, %v11499
      %v11619 = vsub.f32 %v11345, %v11501
      %v11620 = vsub.f32 %v11348, %v11503
      %v11621 = vsub.f32 %v11350, %v11505
      %v11622 = vsub.f32 %v11353, %v11507
      %v11623 = vsub.f32 %v11355, %v11509
      %v11624 = vsub.f32 %v11358, %v11511
      %v11625 = vsub.f32 %v11360, %v11513
      %v11626 = vsub.f32 %v11363, %v11515
      %v11627 = vsub.f32 %v11365, %v11517
      %v11628 = vsub.f32 %v11368, %v11519
      %v11629 = vsub.f32 %v11370, %v11521
      %v11630 = vsub.f32 %v11373, %v11523
      %v11631 = vsub.f32 %v11375, %v11525
      %v11632 = vsub.f32 %v11378, %v11527
      %v11633 = vsub.f32 %v11380, %v11529
      %v11634 = vsub.f32 %v11383, %v11531
      %v11635 = vsub.f32 %v11385, %v11533
      %v11636 = vsub.f32 %v11388, %v11535
      %v11637 = vsub.f32 %v11390, %v11537
      %v11638 = vsub.f32 %v11393, %v11539
      %v11639 = vsub.f32 %v11395, %v11541
      %v11640 = vsub.f32 %v11398, %v11543
      %v11641 = vsub.f32 %v11400, %v11545
      %v11642 = vsub.f32 %v11403, %v11547
      %v11643 = vsub.f32 %v11405, %v11549
      %v11644 = vsub.f32 %v11408, %v11551
      %v11645 = vsub.f32 %v11410, %v11553
      %v11646 = vsub.f32 %v11413, %v11555
      %v11647 = vsub.f32 %v11415, %v11557
      %v11648 = vsub.f32 %v11418, %v11559
      %v11649 = vsub.f32 %v11420, %v11561
      %v11650 = vsub.f32 %v11423, %v11563
      %v11651 = vsub.f32 %v11425, %v11565
      %v11652 = vsub.f32 %v11428, %v11567
      %v11653 = vsub.f32 %v11430, %v11569
      %v11654 = vsub.f32 %v11433, %v11571
      %v11655 = vsub.f32 %v11435, %v11573
      %v11656 = vsub.f32 %v11438, %v11575
      %v11657 = vsub.f32 %v11440, %v11577
      %v11658 = vsub.f32 %v11443, %v11579
      %v11659 = vsub.f32 %v11445, %v11581
      %v11660 = vsub.f32 %v11448, %v11583
      %v11661 = vsub.f32 %v11450, %v11585
      %v11662 = vsub.f32 %v11453, %v11587
      %v11663 = vsub.f32 %v11455, %v11589
      %v11664 = vsub.f32 %v11458, %v11591
      %v11665 = vsub.f32 %v11460, %v11593
      %v11666 = vsub.f32 %v11463, %v11595
      %v11667 = vsub.f32 %v11465, %v11597
      %v11668 = vsub.f32 %v11468, %v11599
      %v11669 = vsub.f32 %v11470, %v11601
      %v11670 = vsub.f32 %v11473, %v11603
      %v11671 = vsub.f32 %v11475, %v11605
      %v11672 = vsub.f32 %v11478, %v11607
      %v11673 = vsub.f32 %v11480, %v11609
      %v11674 = vmul.f32 %v11610, 1.442695
      %v11675 = vpow.pop %v11674
      %v11676 = vmul.f32 %v11611, 1.442695
      %v11677 = vpow.pop %v11676
      %v11678 = vmul.f32 %v11612, 1.442695
      %v11679 = vpow.pop %v11678
      %v11680 = vmul.f32 %v11613, 1.442695
      %v11681 = vpow.pop %v11680
      %v11682 = vmul.f32 %v11614, 1.442695
      %v11683 = vpow.pop %v11682
      %v11684 = vmul.f32 %v11615, 1.442695
      %v11685 = vpow.pop %v11684
      %v11686 = vmul.f32 %v11616, 1.442695
      %v11687 = vpow.pop %v11686
      %v11688 = vmul.f32 %v11617, 1.442695
      %v11689 = vpow.pop %v11688
      %v11690 = vmul.f32 %v11618, 1.442695
      %v11691 = vpow.pop %v11690
      %v11692 = vmul.f32 %v11619, 1.442695
      %v11693 = vpow.pop %v11692
      %v11694 = vmul.f32 %v11620, 1.442695
      %v11695 = vpow.pop %v11694
      %v11696 = vmul.f32 %v11621, 1.442695
      %v11697 = vpow.pop %v11696
      %v11698 = vmul.f32 %v11622, 1.442695
      %v11699 = vpow.pop %v11698
      %v11700 = vmul.f32 %v11623, 1.442695
      %v11701 = vpow.pop %v11700
      %v11702 = vmul.f32 %v11624, 1.442695
      %v11703 = vpow.pop %v11702
      %v11704 = vmul.f32 %v11625, 1.442695
      %v11705 = vpow.pop %v11704
      %v11706 = vmul.f32 %v11626, 1.442695
      %v11707 = vpow.pop %v11706
      %v11708 = vmul.f32 %v11627, 1.442695
      %v11709 = vpow.pop %v11708
      %v11710 = vmul.f32 %v11628, 1.442695
      %v11711 = vpow.pop %v11710
      %v11712 = vmul.f32 %v11629, 1.442695
      %v11713 = vpow.pop %v11712
      %v11714 = vmul.f32 %v11630, 1.442695
      %v11715 = vpow.pop %v11714
      %v11716 = vmul.f32 %v11631, 1.442695
      %v11717 = vpow.pop %v11716
      %v11718 = vmul.f32 %v11632, 1.442695
      %v11719 = vpow.pop %v11718
      %v11720 = vmul.f32 %v11633, 1.442695
      %v11721 = vpow.pop %v11720
      %v11722 = vmul.f32 %v11634, 1.442695
      %v11723 = vpow.pop %v11722
      %v11724 = vmul.f32 %v11635, 1.442695
      %v11725 = vpow.pop %v11724
      %v11726 = vmul.f32 %v11636, 1.442695
      %v11727 = vpow.pop %v11726
      %v11728 = vmul.f32 %v11637, 1.442695
      %v11729 = vpow.pop %v11728
      %v11730 = vmul.f32 %v11638, 1.442695
      %v11731 = vpow.pop %v11730
      %v11732 = vmul.f32 %v11639, 1.442695
      %v11733 = vpow.pop %v11732
      %v11734 = vmul.f32 %v11640, 1.442695
      %v11735 = vpow.pop %v11734
      %v11736 = vmul.f32 %v11641, 1.442695
      %v11737 = vpow.pop %v11736
      %v11738 = vmul.f32 %v11642, 1.442695
      %v11739 = vpow.pop %v11738
      %v11740 = vmul.f32 %v11643, 1.442695
      %v11741 = vpow.pop %v11740
      %v11742 = vmul.f32 %v11644, 1.442695
      %v11743 = vpow.pop %v11742
      %v11744 = vmul.f32 %v11645, 1.442695
      %v11745 = vpow.pop %v11744
      %v11746 = vmul.f32 %v11646, 1.442695
      %v11747 = vpow.pop %v11746
      %v11748 = vmul.f32 %v11647, 1.442695
      %v11749 = vpow.pop %v11748
      %v11750 = vmul.f32 %v11648, 1.442695
      %v11751 = vpow.pop %v11750
      %v11752 = vmul.f32 %v11649, 1.442695
      %v11753 = vpow.pop %v11752
      %v11754 = vmul.f32 %v11650, 1.442695
      %v11755 = vpow.pop %v11754
      %v11756 = vmul.f32 %v11651, 1.442695
      %v11757 = vpow.pop %v11756
      %v11758 = vmul.f32 %v11652, 1.442695
      %v11759 = vpow.pop %v11758
      %v11760 = vmul.f32 %v11653, 1.442695
      %v11761 = vpow.pop %v11760
      %v11762 = vmul.f32 %v11654, 1.442695
      %v11763 = vpow.pop %v11762
      %v11764 = vmul.f32 %v11655, 1.442695
      %v11765 = vpow.pop %v11764
      %v11766 = vmul.f32 %v11656, 1.442695
      %v11767 = vpow.pop %v11766
      %v11768 = vmul.f32 %v11657, 1.442695
      %v11769 = vpow.pop %v11768
      %v11770 = vmul.f32 %v11658, 1.442695
      %v11771 = vpow.pop %v11770
      %v11772 = vmul.f32 %v11659, 1.442695
      %v11773 = vpow.pop %v11772
      %v11774 = vmul.f32 %v11660, 1.442695
      %v11775 = vpow.pop %v11774
      %v11776 = vmul.f32 %v11661, 1.442695
      %v11777 = vpow.pop %v11776
      %v11778 = vmul.f32 %v11662, 1.442695
      %v11779 = vpow.pop %v11778
      %v11780 = vmul.f32 %v11663, 1.442695
      %v11781 = vpow.pop %v11780
      %v11782 = vmul.f32 %v11664, 1.442695
      %v11783 = vpow.pop %v11782
      %v11784 = vmul.f32 %v11665, 1.442695
      %v11785 = vpow.pop %v11784
      %v11786 = vmul.f32 %v11666, 1.442695
      %v11787 = vpow.pop %v11786
      %v11788 = vmul.f32 %v11667, 1.442695
      %v11789 = vpow.pop %v11788
      %v11790 = vmul.f32 %v11668, 1.442695
      %v11791 = vpow.pop %v11790
      %v11792 = vmul.f32 %v11669, 1.442695
      %v11793 = vpow.pop %v11792
      %v11794 = vmul.f32 %v11670, 1.442695
      %v11795 = vpow.pop %v11794
      %v11796 = vmul.f32 %v11671, 1.442695
      %v11797 = vpow.pop %v11796
      %v11798 = vmul.f32 %v11672, 1.442695
      %v11799 = vpow.pop %v11798
      %v11800 = vmul.f32 %v11673, 1.442695
      %v11801 = vpow.pop %v11800
      %11802 = vadd.xlane.f32.xlu0 %v11675
      %v11803 = vpop.xlane.xlu0 %11802
      %11804 = vadd.xlane.f32.xlu0 %v11677
      %v11805 = vpop.xlane.xlu0 %11804
      %11806 = vadd.xlane.f32.xlu0 %v11679
      %v11807 = vpop.xlane.xlu0 %11806
      %11808 = vadd.xlane.f32.xlu0 %v11681
      %v11809 = vpop.xlane.xlu0 %11808
      %11810 = vadd.xlane.f32.xlu0 %v11683
      %v11811 = vpop.xlane.xlu0 %11810
      %11812 = vadd.xlane.f32.xlu0 %v11685
      %v11813 = vpop.xlane.xlu0 %11812
      %11814 = vadd.xlane.f32.xlu0 %v11687
      %v11815 = vpop.xlane.xlu0 %11814
      %11816 = vadd.xlane.f32.xlu0 %v11689
      %v11817 = vpop.xlane.xlu0 %11816
      %11818 = vadd.xlane.f32.xlu0 %v11691
      %v11819 = vpop.xlane.xlu0 %11818
      %11820 = vadd.xlane.f32.xlu0 %v11693
      %v11821 = vpop.xlane.xlu0 %11820
      %11822 = vadd.xlane.f32.xlu0 %v11695
      %v11823 = vpop.xlane.xlu0 %11822
      %11824 = vadd.xlane.f32.xlu0 %v11697
      %v11825 = vpop.xlane.xlu0 %11824
      %11826 = vadd.xlane.f32.xlu0 %v11699
      %v11827 = vpop.xlane.xlu0 %11826
      %11828 = vadd.xlane.f32.xlu0 %v11701
      %v11829 = vpop.xlane.xlu0 %11828
      %11830 = vadd.xlane.f32.xlu0 %v11703
      %v11831 = vpop.xlane.xlu0 %11830
      %11832 = vadd.xlane.f32.xlu0 %v11705
      %v11833 = vpop.xlane.xlu0 %11832
      %11834 = vadd.xlane.f32.xlu0 %v11707
      %v11835 = vpop.xlane.xlu0 %11834
      %11836 = vadd.xlane.f32.xlu0 %v11709
      %v11837 = vpop.xlane.xlu0 %11836
      %11838 = vadd.xlane.f32.xlu0 %v11711
      %v11839 = vpop.xlane.xlu0 %11838
      %11840 = vadd.xlane.f32.xlu0 %v11713
      %v11841 = vpop.xlane.xlu0 %11840
      %11842 = vadd.xlane.f32.xlu0 %v11715
      %v11843 = vpop.xlane.xlu0 %11842
      %11844 = vadd.xlane.f32.xlu0 %v11717
      %v11845 = vpop.xlane.xlu0 %11844
      %11846 = vadd.xlane.f32.xlu0 %v11719
      %v11847 = vpop.xlane.xlu0 %11846
      %11848 = vadd.xlane.f32.xlu0 %v11721
      %v11849 = vpop.xlane.xlu0 %11848
      %11850 = vadd.xlane.f32.xlu0 %v11723
      %v11851 = vpop.xlane.xlu0 %11850
      %11852 = vadd.xlane.f32.xlu0 %v11725
      %v11853 = vpop.xlane.xlu0 %11852
      %11854 = vadd.xlane.f32.xlu0 %v11727
      %v11855 = vpop.xlane.xlu0 %11854
      %11856 = vadd.xlane.f32.xlu0 %v11729
      %v11857 = vpop.xlane.xlu0 %11856
      %11858 = vadd.xlane.f32.xlu0 %v11731
      %v11859 = vpop.xlane.xlu0 %11858
      %11860 = vadd.xlane.f32.xlu0 %v11733
      %v11861 = vpop.xlane.xlu0 %11860
      %11862 = vadd.xlane.f32.xlu0 %v11735
      %v11863 = vpop.xlane.xlu0 %11862
      %11864 = vadd.xlane.f32.xlu0 %v11737
      %v11865 = vpop.xlane.xlu0 %11864
      %11866 = vadd.xlane.f32.xlu0 %v11739
      %v11867 = vpop.xlane.xlu0 %11866
      %11868 = vadd.xlane.f32.xlu0 %v11741
      %v11869 = vpop.xlane.xlu0 %11868
      %11870 = vadd.xlane.f32.xlu0 %v11743
      %v11871 = vpop.xlane.xlu0 %11870
      %11872 = vadd.xlane.f32.xlu0 %v11745
      %v11873 = vpop.xlane.xlu0 %11872
      %11874 = vadd.xlane.f32.xlu0 %v11747
      %v11875 = vpop.xlane.xlu0 %11874
      %11876 = vadd.xlane.f32.xlu0 %v11749
      %v11877 = vpop.xlane.xlu0 %11876
      %11878 = vadd.xlane.f32.xlu0 %v11751
      %v11879 = vpop.xlane.xlu0 %11878
      %11880 = vadd.xlane.f32.xlu0 %v11753
      %v11881 = vpop.xlane.xlu0 %11880
      %11882 = vadd.xlane.f32.xlu0 %v11755
      %v11883 = vpop.xlane.xlu0 %11882
      %11884 = vadd.xlane.f32.xlu0 %v11757
      %v11885 = vpop.xlane.xlu0 %11884
      %11886 = vadd.xlane.f32.xlu0 %v11759
      %v11887 = vpop.xlane.xlu0 %11886
      %11888 = vadd.xlane.f32.xlu0 %v11761
      %v11889 = vpop.xlane.xlu0 %11888
      %11890 = vadd.xlane.f32.xlu0 %v11763
      %v11891 = vpop.xlane.xlu0 %11890
      %11892 = vadd.xlane.f32.xlu0 %v11765
      %v11893 = vpop.xlane.xlu0 %11892
      %11894 = vadd.xlane.f32.xlu0 %v11767
      %v11895 = vpop.xlane.xlu0 %11894
      %11896 = vadd.xlane.f32.xlu0 %v11769
      %v11897 = vpop.xlane.xlu0 %11896
      %11898 = vadd.xlane.f32.xlu0 %v11771
      %v11899 = vpop.xlane.xlu0 %11898
      %11900 = vadd.xlane.f32.xlu0 %v11773
      %v11901 = vpop.xlane.xlu0 %11900
      %11902 = vadd.xlane.f32.xlu0 %v11775
      %v11903 = vpop.xlane.xlu0 %11902
      %11904 = vadd.xlane.f32.xlu0 %v11777
      %v11905 = vpop.xlane.xlu0 %11904
      %11906 = vadd.xlane.f32.xlu0 %v11779
      %v11907 = vpop.xlane.xlu0 %11906
      %11908 = vadd.xlane.f32.xlu0 %v11781
      %v11909 = vpop.xlane.xlu0 %11908
      %11910 = vadd.xlane.f32.xlu0 %v11783
      %v11911 = vpop.xlane.xlu0 %11910
      %11912 = vadd.xlane.f32.xlu0 %v11785
      %v11913 = vpop.xlane.xlu0 %11912
      %11914 = vadd.xlane.f32.xlu0 %v11787
      %v11915 = vpop.xlane.xlu0 %11914
      %11916 = vadd.xlane.f32.xlu0 %v11789
      %v11917 = vpop.xlane.xlu0 %11916
      %11918 = vadd.xlane.f32.xlu0 %v11791
      %v11919 = vpop.xlane.xlu0 %11918
      %11920 = vadd.xlane.f32.xlu0 %v11793
      %v11921 = vpop.xlane.xlu0 %11920
      %11922 = vadd.xlane.f32.xlu0 %v11795
      %v11923 = vpop.xlane.xlu0 %11922
      %11924 = vadd.xlane.f32.xlu0 %v11797
      %v11925 = vpop.xlane.xlu0 %11924
      %11926 = vadd.xlane.f32.xlu0 %v11799
      %v11927 = vpop.xlane.xlu0 %11926
      %11928 = vadd.xlane.f32.xlu0 %v11801
      %v11929 = vpop.xlane.xlu0 %11928
      %v11930 = vrcp.pop %v11803
      %v11931 = vrcp.pop %v11805
      %v11932 = vrcp.pop %v11807
      %v11933 = vrcp.pop %v11809
      %v11934 = vrcp.pop %v11811
      %v11935 = vrcp.pop %v11813
      %v11936 = vrcp.pop %v11815
      %v11937 = vrcp.pop %v11817
      %v11938 = vrcp.pop %v11819
      %v11939 = vrcp.pop %v11821
      %v11940 = vrcp.pop %v11823
      %v11941 = vrcp.pop %v11825
      %v11942 = vrcp.pop %v11827
      %v11943 = vrcp.pop %v11829
      %v11944 = vrcp.pop %v11831
      %v11945 = vrcp.pop %v11833
      %v11946 = vrcp.pop %v11835
      %v11947 = vrcp.pop %v11837
      %v11948 = vrcp.pop %v11839
      %v11949 = vrcp.pop %v11841
      %v11950 = vrcp.pop %v11843
      %v11951 = vrcp.pop %v11845
      %v11952 = vrcp.pop %v11847
      %v11953 = vrcp.pop %v11849
      %v11954 = vrcp.pop %v11851
      %v11955 = vrcp.pop %v11853
      %v11956 = vrcp.pop %v11855
      %v11957 = vrcp.pop %v11857
      %v11958 = vrcp.pop %v11859
      %v11959 = vrcp.pop %v11861
      %v11960 = vrcp.pop %v11863
      %v11961 = vrcp.pop %v11865
      %v11962 = vrcp.pop %v11867
      %v11963 = vrcp.pop %v11869
      %v11964 = vrcp.pop %v11871
      %v11965 = vrcp.pop %v11873
      %v11966 = vrcp.pop %v11875
      %v11967 = vrcp.pop %v11877
      %v11968 = vrcp.pop %v11879
      %v11969 = vrcp.pop %v11881
      %v11970 = vrcp.pop %v11883
      %v11971 = vrcp.pop %v11885
      %v11972 = vrcp.pop %v11887
      %v11973 = vrcp.pop %v11889
      %v11974 = vrcp.pop %v11891
      %v11975 = vrcp.pop %v11893
      %v11976 = vrcp.pop %v11895
      %v11977 = vrcp.pop %v11897
      %v11978 = vrcp.pop %v11899
      %v11979 = vrcp.pop %v11901
      %v11980 = vrcp.pop %v11903
      %v11981 = vrcp.pop %v11905
      %v11982 = vrcp.pop %v11907
      %v11983 = vrcp.pop %v11909
      %v11984 = vrcp.pop %v11911
      %v11985 = vrcp.pop %v11913
      %v11986 = vrcp.pop %v11915
      %v11987 = vrcp.pop %v11917
      %v11988 = vrcp.pop %v11919
      %v11989 = vrcp.pop %v11921
      %v11990 = vrcp.pop %v11923
      %v11991 = vrcp.pop %v11925
      %v11992 = vrcp.pop %v11927
      %v11993 = vrcp.pop %v11929
      %v11994 = vmul.f32 %v11675, %v11930
      %v11995 = vmul.f32 %v11677, %v11931
      %v11996 = vmul.f32 %v11679, %v11932
      %v11997 = vmul.f32 %v11681, %v11933
      %v11998 = vmul.f32 %v11683, %v11934
      %v11999 = vmul.f32 %v11685, %v11935
      %v12000 = vmul.f32 %v11687, %v11936
      %v12001 = vmul.f32 %v11689, %v11937
      %v12002 = vmul.f32 %v11691, %v11938
      %v12003 = vmul.f32 %v11693, %v11939
      %v12004 = vmul.f32 %v11695, %v11940
      %v12005 = vmul.f32 %v11697, %v11941
      %v12006 = vmul.f32 %v11699, %v11942
      %v12007 = vmul.f32 %v11701, %v11943
      %v12008 = vmul.f32 %v11703, %v11944
      %v12009 = vmul.f32 %v11705, %v11945
      %v12010 = vmul.f32 %v11707, %v11946
      %v12011 = vmul.f32 %v11709, %v11947
      %v12012 = vmul.f32 %v11711, %v11948
      %v12013 = vmul.f32 %v11713, %v11949
      %v12014 = vmul.f32 %v11715, %v11950
      %v12015 = vmul.f32 %v11717, %v11951
      %v12016 = vmul.f32 %v11719, %v11952
      %v12017 = vmul.f32 %v11721, %v11953
      %v12018 = vmul.f32 %v11723, %v11954
      %v12019 = vmul.f32 %v11725, %v11955
      %v12020 = vmul.f32 %v11727, %v11956
      %v12021 = vmul.f32 %v11729, %v11957
      %v12022 = vmul.f32 %v11731, %v11958
      %v12023 = vmul.f32 %v11733, %v11959
      %v12024 = vmul.f32 %v11735, %v11960
      %v12025 = vmul.f32 %v11737, %v11961
      %v12026 = vmul.f32 %v11739, %v11962
      %v12027 = vmul.f32 %v11741, %v11963
      %v12028 = vmul.f32 %v11743, %v11964
      %v12029 = vmul.f32 %v11745, %v11965
      %v12030 = vmul.f32 %v11747, %v11966
      %v12031 = vmul.f32 %v11749, %v11967
      %v12032 = vmul.f32 %v11751, %v11968
      %v12033 = vmul.f32 %v11753, %v11969
      %v12034 = vmul.f32 %v11755, %v11970
      %v12035 = vmul.f32 %v11757, %v11971
      %v12036 = vmul.f32 %v11759, %v11972
      %v12037 = vmul.f32 %v11761, %v11973
      %v12038 = vmul.f32 %v11763, %v11974
      %v12039 = vmul.f32 %v11765, %v11975
      %v12040 = vmul.f32 %v11767, %v11976
      %v12041 = vmul.f32 %v11769, %v11977
      %v12042 = vmul.f32 %v11771, %v11978
      %v12043 = vmul.f32 %v11773, %v11979
      %v12044 = vmul.f32 %v11775, %v11980
      %v12045 = vmul.f32 %v11777, %v11981
      %v12046 = vmul.f32 %v11779, %v11982
      %v12047 = vmul.f32 %v11781, %v11983
      %v12048 = vmul.f32 %v11783, %v11984
      %v12049 = vmul.f32 %v11785, %v11985
      %v12050 = vmul.f32 %v11787, %v11986
      %v12051 = vmul.f32 %v11789, %v11987
      %v12052 = vmul.f32 %v11791, %v11988
      %v12053 = vmul.f32 %v11793, %v11989
      %v12054 = vmul.f32 %v11795, %v11990
      %v12055 = vmul.f32 %v11797, %v11991
      %v12056 = vmul.f32 %v11799, %v11992
      %v12057 = vmul.f32 %v11801, %v11993
      %12058 = vst [vmem:[%s496] sm:$0xff] %v11994
      %12059 = vst [vmem:[%s496 + $0x8] sm:$0xff] %v11995
      %12060 = vst [vmem:[%s496 + $0x10] sm:$0xff] %v11996
      %12061 = vst [vmem:[%s496 + $0x18] sm:$0xff] %v11997
      %12062 = vst [vmem:[%s496 + $0x20] sm:$0xff] %v11998
      %12063 = vst [vmem:[%s496 + $0x28] sm:$0xff] %v11999
      %12064 = vst [vmem:[%s496 + $0x30] sm:$0xff] %v12000
      %12065 = vst [vmem:[%s496 + $0x38] sm:$0xff] %v12001
      %12066 = vst [vmem:[%s496 + $0x40] sm:$0xff] %v12002
      %12067 = vst [vmem:[%s496 + $0x48] sm:$0xff] %v12003
      %12068 = vst [vmem:[%s496 + $0x50] sm:$0xff] %v12004
      %12069 = vst [vmem:[%s496 + $0x58] sm:$0xff] %v12005
      %12070 = vst [vmem:[%s496 + $0x60] sm:$0xff] %v12006
      %12071 = vst [vmem:[%s496 + $0x68] sm:$0xff] %v12007
      %12072 = vst [vmem:[%s496 + $0x70] sm:$0xff] %v12008
      %12073 = vst [vmem:[%s496 + $0x78] sm:$0xff] %v12009
      %12074 = vst [vmem:[%s496 + $0x80] sm:$0xff] %v12010
      %12075 = vst [vmem:[%s496 + $0x88] sm:$0xff] %v12011
      %12076 = vst [vmem:[%s496 + $0x90] sm:$0xff] %v12012
      %12077 = vst [vmem:[%s496 + $0x98] sm:$0xff] %v12013
      %12078 = vst [vmem:[%s496 + $0xa0] sm:$0xff] %v12014
      %12079 = vst [vmem:[%s496 + $0xa8] sm:$0xff] %v12015
      %12080 = vst [vmem:[%s496 + $0xb0] sm:$0xff] %v12016
      %12081 = vst [vmem:[%s496 + $0xb8] sm:$0xff] %v12017
      %12082 = vst [vmem:[%s496 + $0xc0] sm:$0xff] %v12018
      %12083 = vst [vmem:[%s496 + $0xc8] sm:$0xff] %v12019
      %12084 = vst [vmem:[%s496 + $0xd0] sm:$0xff] %v12020
      %12085 = vst [vmem:[%s496 + $0xd8] sm:$0xff] %v12021
      %12086 = vst [vmem:[%s496 + $0xe0] sm:$0xff] %v12022
      %12087 = vst [vmem:[%s496 + $0xe8] sm:$0xff] %v12023
      %12088 = vst [vmem:[%s496 + $0xf0] sm:$0xff] %v12024
      %12089 = vst [vmem:[%s496 + $0xf8] sm:$0xff] %v12025
      %12090 = vst [vmem:[%s496 + $0x100] sm:$0xff] %v12026
      %12091 = vst [vmem:[%s496 + $0x108] sm:$0xff] %v12027
      %12092 = vst [vmem:[%s496 + $0x110] sm:$0xff] %v12028
      %12093 = vst [vmem:[%s496 + $0x118] sm:$0xff] %v12029
      %12094 = vst [vmem:[%s496 + $0x120] sm:$0xff] %v12030
      %12095 = vst [vmem:[%s496 + $0x128] sm:$0xff] %v12031
      %12096 = vst [vmem:[%s496 + $0x130] sm:$0xff] %v12032
      %12097 = vst [vmem:[%s496 + $0x138] sm:$0xff] %v12033
      %12098 = vst [vmem:[%s496 + $0x140] sm:$0xff] %v12034
      %12099 = vst [vmem:[%s496 + $0x148] sm:$0xff] %v12035
      %12100 = vst [vmem:[%s496 + $0x150] sm:$0xff] %v12036
      %12101 = vst [vmem:[%s496 + $0x158] sm:$0xff] %v12037
      %12102 = vst [vmem:[%s496 + $0x160] sm:$0xff] %v12038
      %12103 = vst [vmem:[%s496 + $0x168] sm:$0xff] %v12039
      %12104 = vst [vmem:[%s496 + $0x170] sm:$0xff] %v12040
      %12105 = vst [vmem:[%s496 + $0x178] sm:$0xff] %v12041
      %12106 = vst [vmem:[%s496 + $0x180] sm:$0xff] %v12042
      %12107 = vst [vmem:[%s496 + $0x188] sm:$0xff] %v12043
      %12108 = vst [vmem:[%s496 + $0x190] sm:$0xff] %v12044
      %12109 = vst [vmem:[%s496 + $0x198] sm:$0xff] %v12045
      %12110 = vst [vmem:[%s496 + $0x1a0] sm:$0xff] %v12046
      %12111 = vst [vmem:[%s496 + $0x1a8] sm:$0xff] %v12047
      %12112 = vst [vmem:[%s496 + $0x1b0] sm:$0xff] %v12048
      %12113 = vst [vmem:[%s496 + $0x1b8] sm:$0xff] %v12049
      %12114 = vst [vmem:[%s496 + $0x1c0] sm:$0xff] %v12050
      %12115 = vst [vmem:[%s496 + $0x1c8] sm:$0xff] %v12051
      %12116 = vst [vmem:[%s496 + $0x1d0] sm:$0xff] %v12052
      %12117 = vst [vmem:[%s496 + $0x1d8] sm:$0xff] %v12053
      %12118 = vst [vmem:[%s496 + $0x1e0] sm:$0xff] %v12054
      %12119 = vst [vmem:[%s496 + $0x1e8] sm:$0xff] %v12055
      %12120 = vst [vmem:[%s496 + $0x1f0] sm:$0xff] %v12056
      %12121 = vst [vmem:[%s496 + $0x1f8] sm:$0xff] %v12057
      %s12122 = smul.u32 64, %s26
      %p12123 = scmp.lt.s32.totalorder %s12122, 127
      %s12124 = scalar_select %p12123, %s12122, 127
      %s12125 = smul.addr %s12124, 8
      %s12126 = scalar_lea.vmem %s15, %s12125
      // Predicated region
      $region81: #{_fc_forward_jit.1} parent=79 // pred_check
        %p12127 = pneg %p364
      $region82: #{_fc_forward_jit.1} parent=79 // pred_check_branch
        %12129 = sbr.rel (%p12127) target = $region84
      $region83: #{_fc_forward_jit.1} parent=79 // pred_region
        %s12130 = smul.u32 64, %s26
      $region84: #{_fc_forward_jit.1} parent=79 // pred_fallthru
        _
    $region80: #{_fc_forward_jit.1} parent=5 // pred_fallthru
      _
    %p12131 = scmp.le.s32.totalorder 2, %s21
    // Predicated region
    $region85: #{_fc_forward_jit.1} parent=5 // pred_check
      %p12132 = pneg %p12131
    $region86: #{_fc_forward_jit.1} parent=5 // pred_check_branch
      %12134 = sbr.rel (%p12132) target = $region88
    $region87: #{_fc_forward_jit.1} parent=5 // pred_region
      %s12135 = ssub.s32 %s21, 2
      // Predicated region
      $region89: #{_fc_forward_jit.1} parent=87 // pred_check
        %p12136 = pneg %p370
      $region90: #{_fc_forward_jit.1} parent=87 // pred_check_branch
        %12138 = sbr.rel (%p12136) target = $region92
      $region91: #{_fc_forward_jit.1} parent=87 // pred_region
        %s12139 = smul.u32 64, %s27
        %p12140 = scmp.lt.s32.totalorder %s12139, 127
        %s12141 = scalar_select %p12140, %s12139, 127
        %s12142 = smul.addr %s12141, 8
        %s12143 = scalar_lea.vmem %s15, %s12142
      $region92: #{_fc_forward_jit.1} parent=87 // pred_fallthru
        _
    $region88: #{_fc_forward_jit.1} parent=5 // pred_fallthru
      _
  $region6: #{_fc_forward_jit.1} parent=0 // loop_footer
    %s25 = sadd.s32 1, %s21
  $region7: #{_fc_forward_jit.1} parent=0 // loop_footer_branch
    %20 = sbr.rel target = $region3
  $region8: #{_fc_forward_jit.1} parent=0 // loop_exit
    _

</llo_original>
